<compile_context>
chip_gen: v6e
topology: v6e:2x2x1
jax: 0.10.0
libtpu: 0.0.40
codegen_flags: <defaults>
</compile_context>

<pallas_src>
import math

import jax
import jax.numpy as jnp
from jax.experimental import pallas as pl
from jax.experimental.pallas import tpu as pltpu


# ----------------------------------------------------------------------------
# Model configuration (mirrors the PyTorch TransformerModel)
# ----------------------------------------------------------------------------
EMBED_DIM = 4          # embed_dim default in TransformerModel.__init__
NUM_HEADS = 4
NUM_LAYERS = 3
HIDDEN_SIZE = 512      # dim_feedforward
INPUT_SIZE = 1
OUTPUT_SIZE = 6
LN_EPS = 1e-5
VMEM_LIMIT_BYTES = 32 * 1024 * 1024   # safe on v5e/v6e/v7x


def make_positional_encoding(d_model: int, max_len: int = 5000) -> jnp.ndarray:
    """(max_len, d_model) sinusoidal table, identical to the PyTorch __init__."""
    position = jnp.arange(0, max_len, dtype=jnp.float32)[:, None]
    div_term = jnp.exp(jnp.arange(0, d_model, 2, dtype=jnp.float32)
                       * (-(math.log(10000.0) / d_model)))
    angles = position * div_term
    enc = jnp.zeros((max_len, d_model), dtype=jnp.float32)
    enc = enc.at[:, 0::2].set(jnp.sin(angles))
    enc = enc.at[:, 1::2].set(jnp.cos(angles)[:, : d_model // 2])
    return enc


# ----------------------------------------------------------------------------
# Fused forward kernel
# ----------------------------------------------------------------------------
def _make_fused_kernel(*, num_heads, num_layers, bsz, seq, ln_eps=LN_EPS):
    def layer_norm(xv, g, b):
        mu = jnp.mean(xv, axis=-1, keepdims=True)
        cen = xv - mu
        var = jnp.mean(cen * cen, axis=-1, keepdims=True)
        return cen * jax.lax.rsqrt(var + ln_eps) * g + b

    def kernel(src_col_ref, pe_ref, bias_ref, w_emb_ref, b_emb_ref,
               w_in_ref, b_in_ref, w_out_ref, b_out_ref,
               ln1_g_ref, ln1_b_ref, w1_ref, b1_ref, w2_ref, b2_ref,
               ln2_g_ref, ln2_b_ref, w_fc_ref, b_fc_ref, o_ref):
        f32 = jnp.float32

        # --- embedding Linear(1->E) + positional encoding, flat (N, E) layout.
        # Row n = s*B + b  <=>  element (s, b) of the permuted (S, B, E) tensor.
        x = (src_col_ref[...].astype(f32) * w_emb_ref[...].astype(f32)
             + b_emb_ref[...].astype(f32) + pe_ref[...].astype(f32))     # (N, E)
        n, e = x.shape
        hd = e // num_heads
        scale = 1.0 / math.sqrt(hd)
        attn_bias = bias_ref[...].astype(f32)       # (N, N): 0 in-block, -1e9 off

        for l in range(num_layers):
            # ---- self-attention (over B within each seq position, block-diag) -
            qkv = (jnp.dot(x, w_in_ref[l].astype(f32),
                           preferred_element_type=f32)
                   + b_in_ref[l].astype(f32))                            # (N, 3E)
            q = qkv[:, 0:e]
            k = qkv[:, e:2 * e]
            v = qkv[:, 2 * e:3 * e]
            w_out = w_out_ref[l].astype(f32)                             # (E, E)

            attn = b_out_ref[l].astype(f32)                              # (1, E)
            for h in range(num_heads):
                lo = h * hd
                qh = q[:, lo:lo + hd]
                kh = k[:, lo:lo + hd]
                vh = v[:, lo:lo + hd]
                sc = jax.lax.dot_general(
                    qh, kh, (((1,), (1,)), ((), ())),
                    preferred_element_type=f32) * scale + attn_bias      # (N, N)
                sc = sc - jnp.max(sc, axis=-1, keepdims=True)
                p_h = jnp.exp(sc)
                p_h = p_h * pl.reciprocal(
                    jnp.sum(p_h, axis=-1, keepdims=True), approx=True)
                ctx = jnp.dot(p_h, vh, preferred_element_type=f32)       # (N, hd)
                attn = attn + jnp.dot(ctx, w_out[lo:lo + hd, :],
                                      preferred_element_type=f32)        # (N, E)

            # ---- residual + LayerNorm1 (post-norm) ---------------------------
            h1 = layer_norm(x + attn,
                            ln1_g_ref[l].astype(f32), ln1_b_ref[l].astype(f32))

            # ---- feed-forward: (N,E)@(E,H) -> relu -> (N,H)@(H,E) ------------
            ff = jnp.maximum(jnp.dot(h1, w1_ref[l].astype(f32),
                                     preferred_element_type=f32)
                             + b1_ref[l].astype(f32), 0.0)               # (N, H)
            ff2 = (jnp.dot(ff, w2_ref[l].astype(f32),
                           preferred_element_type=f32)
                   + b2_ref[l].astype(f32))                              # (N, E)

            # ---- residual + LayerNorm2 ---------------------------------------
            x = layer_norm(h1 + ff2,
                           ln2_g_ref[l].astype(f32), ln2_b_ref[l].astype(f32))

        # ---- transformer_output[-1]  (rows with s == S-1)  +  fc_out ---------
        x_last = x[(seq - 1) * bsz: seq * bsz, :]                        # (B, E)
        out = (jnp.dot(x_last, w_fc_ref[...].astype(f32),
                       preferred_element_type=f32)
               + b_fc_ref[...].astype(f32))                              # (B, OUT)
        o_ref[...] = out.astype(o_ref.dtype)

    return kernel


def _fused_forward(src_col, pe_rep, attn_bias, p, *, num_heads, bsz, seq):
    e = p['w_emb'].shape[-1]
    num_layers = p['w_in_t'].shape[0]
    out_sz = p['w_fc_t'].shape[-1]

    def full(shape):
        zeros = (0,) * len(shape)
        return pl.BlockSpec(shape, lambda i, z=zeros: z)

    kernel = _make_fused_kernel(num_heads=num_heads, num_layers=num_layers,
                                bsz=bsz, seq=seq)

    args = (src_col, pe_rep, attn_bias,
            p['w_emb'], p['b_emb'],
            p['w_in_t'], p['b_in'], p['w_out_t'], p['b_out'],
            p['ln1_g'], p['ln1_b'], p['w1_t'], p['b1'],
            p['w2_t'], p['b2'], p['ln2_g'], p['ln2_b'],
            p['w_fc_t'], p['b_fc'])

    return pl.pallas_call(
        kernel,
        out_shape=jax.ShapeDtypeStruct((bsz, out_sz), jnp.float32),
        grid=(1,),
        in_specs=[full(a.shape) for a in args],
        out_specs=full((bsz, out_sz)),
        compiler_params=pltpu.CompilerParams(
            dimension_semantics=("arbitrary",),
            vmem_limit_bytes=VMEM_LIMIT_BYTES),
    )(*args)


def transformer_model_forward(src, params, *, num_heads=NUM_HEADS):
    """src: (B, S, 1)  ->  (B, OUTPUT_SIZE). Same semantics as the PyTorch forward."""
    bsz, s, _ = src.shape
    n = s * bsz

    # One-time layout plumbing (tiny XLA ops on the inputs):
    #   src_col[n]  = src[b, s, 0]      with n = s*B + b   (the permute(1,0,2))
    #   pe_rep[n,:] = pe[s, :]
    #   attn_bias   = 0 where rows share the same s, -1e9 otherwise
    #     (attention of the quirky batch_first layer runs over B within each s).
    src_col = jnp.transpose(src[..., 0]).reshape(n, 1).astype(jnp.float32)
    pe_rep = jnp.repeat(params['pe'][:s], bsz, axis=0)                   # (N, E)
    gid = jnp.repeat(jnp.arange(s, dtype=jnp.int32), bsz)                # (N,)
    attn_bias = jnp.where(gid[:, None] == gid[None, :],
                          jnp.float32(0.0), jnp.float32(-1e9))           # (N, N)

    return _fused_forward(src_col, pe_rep, attn_bias, params,
                          num_heads=num_heads, bsz=bsz, seq=s)


# ----------------------------------------------------------------------------
# Parameter init (layer weights pre-stacked along L, w2 pre-transposed)
# ----------------------------------------------------------------------------
def init_params(key, *, embed_dim=EMBED_DIM, hidden=HIDDEN_SIZE,
                num_layers=NUM_LAYERS, out_size=OUTPUT_SIZE, max_len=5000):
    e, h, L = embed_dim, hidden, num_layers
    keys = iter(jax.random.split(key, 16))

    def w(shape, scale):
        return jax.random.normal(next(keys), shape, jnp.float32) * scale

    return {
        'w_emb': w((1, e), 0.5),
        'b_emb': w((1, e), 0.1),
        'pe': make_positional_encoding(e, max_len),
        'w_in_t': w((L, e, 3 * e), 0.5),     # in_proj_weight.T, stacked
        'b_in': w((L, 1, 3 * e), 0.1),
        'w_out_t': w((L, e, e), 0.5),        # out_proj.weight.T
        'b_out': w((L, 1, e), 0.1),
        'ln1_g': jnp.ones((L, 1, e), jnp.float32),
        'ln1_b': jnp.zeros((L, 1, e), jnp.float32),
        'w1_t': w((L, e, h), 0.3),           # linear1.weight.T
        'b1': w((L, 1, h), 0.1),
        'w2_t': w((L, h, e), 0.05),          # linear2.weight.T  (H, E), host-side
        'b2': w((L, 1, e), 0.1),
        'ln2_g': jnp.ones((L, 1, e), jnp.float32),
        'ln2_b': jnp.zeros((L, 1, e), jnp.float32),
        'w_fc_t': w((e, out_size), 0.5),
        'b_fc': w((1, out_size), 0.1),
    }


# ----------------------------------------------------------------------------
# Pure-JAX reference (mirrors the PyTorch forward, eval mode)
# ----------------------------------------------------------------------------
def _ref_layer_norm(x, g, b, eps=LN_EPS):
    mu = jnp.mean(x, axis=-1, keepdims=True)
    var = jnp.mean((x - mu) ** 2, axis=-1, keepdims=True)
    return (x - mu) / jnp.sqrt(var + eps) * g + b


def reference_forward(src, params, *, num_heads=NUM_HEADS):
    p = params
    bsz, s, _ = src.shape
    e = p['w_emb'].shape[-1]
    hd = e // num_heads
    num_layers = p['w_in_t'].shape[0]

    x = src * p['w_emb'].reshape(1, 1, e) + p['b_emb'].reshape(1, 1, e)  # (B,S,E)
    x = x + p['pe'][:s][None, :, :]
    x = jnp.transpose(x, (1, 0, 2))                                      # (S,B,E)

    for l in range(num_layers):
        n = s * bsz
        x2 = x.reshape(n, e)
        qkv = x2 @ p['w_in_t'][l] + p['b_in'][l].reshape(-1)
        q = qkv[:, 0:e].reshape(s, bsz, num_heads, hd)
        k = qkv[:, e:2 * e].reshape(s, bsz, num_heads, hd)
        v = qkv[:, 2 * e:].reshape(s, bsz, num_heads, hd)
        scores = jnp.einsum('sbhd,schd->shbc', q, k) / math.sqrt(hd)
        pattn = jax.nn.softmax(scores, axis=-1)
        ctx = jnp.einsum('shbc,schd->sbhd', pattn, v).reshape(n, e)
        attn = ctx @ p['w_out_t'][l] + p['b_out'][l].reshape(-1)
        h1 = _ref_layer_norm(x2 + attn, p['ln1_g'][l].reshape(-1),
                             p['ln1_b'][l].reshape(-1))
        ff = jnp.maximum(h1 @ p['w1_t'][l] + p['b1'][l].reshape(-1), 0.0)
        ff = ff @ p['w2_t'][l] + p['b2'][l].reshape(-1)
        h2 = _ref_layer_norm(h1 + ff, p['ln2_g'][l].reshape(-1),
                             p['ln2_b'][l].reshape(-1))
        x = h2.reshape(s, bsz, e)

    return x[-1] @ p['w_fc_t'] + p['b_fc'].reshape(-1)


# ----------------------------------------------------------------------------
# Demo
# ----------------------------------------------------------------------------
if __name__ == "__main__":
    key = jax.random.PRNGKey(0)
    k_param, k_src = jax.random.split(key)

    batch, seq = 2, 16
    params = init_params(k_param)
    src = jax.random.normal(k_src, (batch, seq, INPUT_SIZE), dtype=jnp.float32)

    out = transformer_model_forward(src, params, num_heads=NUM_HEADS)
    out = jax.block_until_ready(out)

    ref = jax.block_until_ready(reference_forward(src, params,
                                                  num_heads=NUM_HEADS))

    assert out.shape == (batch, OUTPUT_SIZE)
    err = float(jnp.max(jnp.abs(out - ref)))
    # approx softmax reciprocal (EUP) -> slightly looser tolerance than exact div
    assert jnp.allclose(out, ref, atol=2e-3, rtol=2e-3), \
        f"mismatch vs reference, max abs err = {err}"

    print("KERNEL_OK")
</pallas_src>

<mosaic_0001>
module attributes {stable_mosaic.version = 11 : i64} {
  func.func @kernel(%arg0: i32, %arg1: memref<32x1xf32, #tpu.memory_space<vmem>>, %arg2: memref<32x4xf32, #tpu.memory_space<vmem>>, %arg3: memref<32x32xf32, #tpu.memory_space<vmem>>, %arg4: memref<1x4xf32, #tpu.memory_space<vmem>>, %arg5: memref<1x4xf32, #tpu.memory_space<vmem>>, %arg6: memref<3x4x12xf32, #tpu.memory_space<vmem>>, %arg7: memref<3x1x12xf32, #tpu.memory_space<vmem>>, %arg8: memref<3x4x4xf32, #tpu.memory_space<vmem>>, %arg9: memref<3x1x4xf32, #tpu.memory_space<vmem>>, %arg10: memref<3x1x4xf32, #tpu.memory_space<vmem>>, %arg11: memref<3x1x4xf32, #tpu.memory_space<vmem>>, %arg12: memref<3x4x512xf32, #tpu.memory_space<vmem>>, %arg13: memref<3x1x512xf32, #tpu.memory_space<vmem>>, %arg14: memref<3x512x4xf32, #tpu.memory_space<vmem>>, %arg15: memref<3x1x4xf32, #tpu.memory_space<vmem>>, %arg16: memref<3x1x4xf32, #tpu.memory_space<vmem>>, %arg17: memref<3x1x4xf32, #tpu.memory_space<vmem>>, %arg18: memref<4x6xf32, #tpu.memory_space<vmem>>, %arg19: memref<1x6xf32, #tpu.memory_space<vmem>>, %arg20: memref<2x6xf32, #tpu.memory_space<vmem>>) attributes {dimension_semantics = [#tpu.dimension_semantics<arbitrary>], iteration_bounds = array<i64: 1>, scalar_prefetch = 0 : i64, scratch_operands = 0 : i64, tpu.core_type = #tpu.core_type<tc>, window_params = [{pipeline_mode = #tpu.pipeline_mode<synchronous>, transform_indices = @transform_0, window_bounds = array<i64: 32, 1>}, {pipeline_mode = #tpu.pipeline_mode<synchronous>, transform_indices = @transform_1, window_bounds = array<i64: 32, 4>}, {pipeline_mode = #tpu.pipeline_mode<synchronous>, transform_indices = @transform_2, window_bounds = array<i64: 32, 32>}, {pipeline_mode = #tpu.pipeline_mode<synchronous>, transform_indices = @transform_3, window_bounds = array<i64: 1, 4>}, {pipeline_mode = #tpu.pipeline_mode<synchronous>, transform_indices = @transform_4, window_bounds = array<i64: 1, 4>}, {pipeline_mode = #tpu.pipeline_mode<synchronous>, transform_indices = @transform_5, window_bounds = array<i64: 3, 4, 12>}, {pipeline_mode = #tpu.pipeline_mode<synchronous>, transform_indices = @transform_6, window_bounds = array<i64: 3, 1, 12>}, {pipeline_mode = #tpu.pipeline_mode<synchronous>, transform_indices = @transform_7, window_bounds = array<i64: 3, 4, 4>}, {pipeline_mode = #tpu.pipeline_mode<synchronous>, transform_indices = @transform_8, window_bounds = array<i64: 3, 1, 4>}, {pipeline_mode = #tpu.pipeline_mode<synchronous>, transform_indices = @transform_9, window_bounds = array<i64: 3, 1, 4>}, {pipeline_mode = #tpu.pipeline_mode<synchronous>, transform_indices = @transform_10, window_bounds = array<i64: 3, 1, 4>}, {pipeline_mode = #tpu.pipeline_mode<synchronous>, transform_indices = @transform_11, window_bounds = array<i64: 3, 4, 512>}, {pipeline_mode = #tpu.pipeline_mode<synchronous>, transform_indices = @transform_12, window_bounds = array<i64: 3, 1, 512>}, {pipeline_mode = #tpu.pipeline_mode<synchronous>, transform_indices = @transform_13, window_bounds = array<i64: 3, 512, 4>}, {pipeline_mode = #tpu.pipeline_mode<synchronous>, transform_indices = @transform_14, window_bounds = array<i64: 3, 1, 4>}, {pipeline_mode = #tpu.pipeline_mode<synchronous>, transform_indices = @transform_15, window_bounds = array<i64: 3, 1, 4>}, {pipeline_mode = #tpu.pipeline_mode<synchronous>, transform_indices = @transform_16, window_bounds = array<i64: 3, 1, 4>}, {pipeline_mode = #tpu.pipeline_mode<synchronous>, transform_indices = @transform_17, window_bounds = array<i64: 4, 6>}, {pipeline_mode = #tpu.pipeline_mode<synchronous>, transform_indices = @transform_18, window_bounds = array<i64: 1, 6>}, {pipeline_mode = #tpu.pipeline_mode<synchronous>, transform_indices = @transform_19, window_bounds = array<i64: 2, 6>}]} {
    %c0 = arith.constant 0 : index
    %c0_0 = arith.constant 0 : index
    %0 = vector.load %arg1[%c0, %c0_0] : memref<32x1xf32, #tpu.memory_space<vmem>>, vector<32x1xf32>
    %c0_1 = arith.constant 0 : index
    %c0_2 = arith.constant 0 : index
    %1 = vector.load %arg4[%c0_1, %c0_2] : memref<1x4xf32, #tpu.memory_space<vmem>>, vector<1x4xf32>
    %2 = vector.broadcast %0 : vector<32x1xf32> to vector<32x4xf32>
    %3 = vector.broadcast %1 : vector<1x4xf32> to vector<32x4xf32>
    %4 = arith.mulf %2, %3 : vector<32x4xf32>
    %c0_3 = arith.constant 0 : index
    %c0_4 = arith.constant 0 : index
    %5 = vector.load %arg5[%c0_3, %c0_4] : memref<1x4xf32, #tpu.memory_space<vmem>>, vector<1x4xf32>
    %6 = vector.broadcast %5 : vector<1x4xf32> to vector<32x4xf32>
    %7 = arith.addf %4, %6 : vector<32x4xf32>
    %c0_5 = arith.constant 0 : index
    %c0_6 = arith.constant 0 : index
    %8 = vector.load %arg2[%c0_5, %c0_6] : memref<32x4xf32, #tpu.memory_space<vmem>>, vector<32x4xf32>
    %9 = arith.addf %7, %8 : vector<32x4xf32>
    %c0_7 = arith.constant 0 : index
    %c0_8 = arith.constant 0 : index
    %10 = vector.load %arg3[%c0_7, %c0_8] : memref<32x32xf32, #tpu.memory_space<vmem>>, vector<32x32xf32>
    %c0_9 = arith.constant 0 : index
    %c0_10 = arith.constant 0 : index
    %c0_11 = arith.constant 0 : index
    %11 = vector.load %arg6[%c0_9, %c0_10, %c0_11] : memref<3x4x12xf32, #tpu.memory_space<vmem>>, vector<1x4x12xf32>
    %12 = vector.shape_cast %11 : vector<1x4x12xf32> to vector<4x12xf32>
    %cst = arith.constant dense<0.000000e+00> : vector<32x12xf32>
    %13 = tpu.matmul %9, %12, %cst {dimension_numbers = #tpu.dot_dimension_numbers<[1], [0], [0], [1], [0, 0, 1, 1], [], []>} : vector<32x4xf32>, vector<4x12xf32>, vector<32x12xf32> -> vector<32x12xf32>
    %c0_12 = arith.constant 0 : index
    %c0_13 = arith.constant 0 : index
    %c0_14 = arith.constant 0 : index
    %14 = vector.load %arg7[%c0_12, %c0_13, %c0_14] : memref<3x1x12xf32, #tpu.memory_space<vmem>>, vector<1x1x12xf32>
    %15 = vector.shape_cast %14 : vector<1x1x12xf32> to vector<1x12xf32>
    %16 = vector.broadcast %15 : vector<1x12xf32> to vector<32x12xf32>
    %17 = arith.addf %13, %16 : vector<32x12xf32>
    %18 = vector.extract_strided_slice %17 {offsets = [0, 0], sizes = [32, 4], strides = [1, 1]} : vector<32x12xf32> to vector<32x4xf32>
    %19 = vector.extract_strided_slice %17 {offsets = [0, 4], sizes = [32, 4], strides = [1, 1]} : vector<32x12xf32> to vector<32x4xf32>
    %20 = vector.extract_strided_slice %17 {offsets = [0, 8], sizes = [32, 4], strides = [1, 1]} : vector<32x12xf32> to vector<32x4xf32>
    %c0_15 = arith.constant 0 : index
    %c0_16 = arith.constant 0 : index
    %c0_17 = arith.constant 0 : index
    %21 = vector.load %arg8[%c0_15, %c0_16, %c0_17] : memref<3x4x4xf32, #tpu.memory_space<vmem>>, vector<1x4x4xf32>
    %22 = vector.shape_cast %21 : vector<1x4x4xf32> to vector<4x4xf32>
    %c0_18 = arith.constant 0 : index
    %c0_19 = arith.constant 0 : index
    %c0_20 = arith.constant 0 : index
    %23 = vector.load %arg9[%c0_18, %c0_19, %c0_20] : memref<3x1x4xf32, #tpu.memory_space<vmem>>, vector<1x1x4xf32>
    %24 = vector.shape_cast %23 : vector<1x1x4xf32> to vector<1x4xf32>
    %25 = vector.extract_strided_slice %18 {offsets = [0, 0], sizes = [32, 1], strides = [1, 1]} : vector<32x4xf32> to vector<32x1xf32>
    %26 = vector.extract_strided_slice %19 {offsets = [0, 0], sizes = [32, 1], strides = [1, 1]} : vector<32x4xf32> to vector<32x1xf32>
    %27 = vector.extract_strided_slice %20 {offsets = [0, 0], sizes = [32, 1], strides = [1, 1]} : vector<32x4xf32> to vector<32x1xf32>
    %cst_21 = arith.constant dense<0.000000e+00> : vector<32x32xf32>
    %28 = tpu.matmul %25, %26, %cst_21 {dimension_numbers = #tpu.dot_dimension_numbers<[1], [1], [0], [0], [0, 0, 1, 0], [], []>} : vector<32x1xf32>, vector<32x1xf32>, vector<32x32xf32> -> vector<32x32xf32>
    %cst_22 = arith.constant 1.000000e+00 : f32
    %29 = vector.broadcast %cst_22 : f32 to vector<32x32xf32>
    %30 = arith.mulf %28, %29 : vector<32x32xf32>
    %31 = arith.addf %30, %10 : vector<32x32xf32>
    %cst_23 = arith.constant dense<0xFF800000> : vector<32xf32>
    %32 = vector.multi_reduction <maximumf>, %31, %cst_23 [1] : vector<32x32xf32> to vector<32xf32>
    %33 = vector.shape_cast %32 : vector<32xf32> to vector<32x1xf32>
    %34 = vector.broadcast %33 : vector<32x1xf32> to vector<32x32xf32>
    %35 = arith.subf %31, %34 : vector<32x32xf32>
    %36 = math.exp %35 : vector<32x32xf32>
    %cst_24 = arith.constant dense<0.000000e+00> : vector<32xf32>
    %37 = vector.multi_reduction <add>, %36, %cst_24 [1] : vector<32x32xf32> to vector<32xf32>
    %38 = vector.shape_cast %37 : vector<32xf32> to vector<32x1xf32>
    %39 = tpu.reciprocal %38 {approx = true} : vector<32x1xf32> -> vector<32x1xf32>
    %40 = vector.broadcast %39 : vector<32x1xf32> to vector<32x32xf32>
    %41 = arith.mulf %36, %40 : vector<32x32xf32>
    %cst_25 = arith.constant dense<0.000000e+00> : vector<32x1xf32>
    %42 = tpu.matmul %41, %27, %cst_25 {dimension_numbers = #tpu.dot_dimension_numbers<[1], [0], [0], [1], [0, 0, 1, 1], [], []>} : vector<32x32xf32>, vector<32x1xf32>, vector<32x1xf32> -> vector<32x1xf32>
    %43 = vector.extract_strided_slice %22 {offsets = [0, 0], sizes = [1, 4], strides = [1, 1]} : vector<4x4xf32> to vector<1x4xf32>
    %cst_26 = arith.constant dense<0.000000e+00> : vector<32x4xf32>
    %44 = tpu.matmul %42, %43, %cst_26 {dimension_numbers = #tpu.dot_dimension_numbers<[1], [0], [0], [1], [0, 0, 1, 1], [], []>} : vector<32x1xf32>, vector<1x4xf32>, vector<32x4xf32> -> vector<32x4xf32>
    %45 = vector.broadcast %24 : vector<1x4xf32> to vector<32x4xf32>
    %46 = arith.addf %45, %44 : vector<32x4xf32>
    %47 = vector.extract_strided_slice %18 {offsets = [0, 1], sizes = [32, 1], strides = [1, 1]} : vector<32x4xf32> to vector<32x1xf32>
    %48 = vector.extract_strided_slice %19 {offsets = [0, 1], sizes = [32, 1], strides = [1, 1]} : vector<32x4xf32> to vector<32x1xf32>
    %49 = vector.extract_strided_slice %20 {offsets = [0, 1], sizes = [32, 1], strides = [1, 1]} : vector<32x4xf32> to vector<32x1xf32>
    %cst_27 = arith.constant dense<0.000000e+00> : vector<32x32xf32>
    %50 = tpu.matmul %47, %48, %cst_27 {dimension_numbers = #tpu.dot_dimension_numbers<[1], [1], [0], [0], [0, 0, 1, 0], [], []>} : vector<32x1xf32>, vector<32x1xf32>, vector<32x32xf32> -> vector<32x32xf32>
    %cst_28 = arith.constant 1.000000e+00 : f32
    %51 = vector.broadcast %cst_28 : f32 to vector<32x32xf32>
    %52 = arith.mulf %50, %51 : vector<32x32xf32>
    %53 = arith.addf %52, %10 : vector<32x32xf32>
    %cst_29 = arith.constant dense<0xFF800000> : vector<32xf32>
    %54 = vector.multi_reduction <maximumf>, %53, %cst_29 [1] : vector<32x32xf32> to vector<32xf32>
    %55 = vector.shape_cast %54 : vector<32xf32> to vector<32x1xf32>
    %56 = vector.broadcast %55 : vector<32x1xf32> to vector<32x32xf32>
    %57 = arith.subf %53, %56 : vector<32x32xf32>
    %58 = math.exp %57 : vector<32x32xf32>
    %cst_30 = arith.constant dense<0.000000e+00> : vector<32xf32>
    %59 = vector.multi_reduction <add>, %58, %cst_30 [1] : vector<32x32xf32> to vector<32xf32>
    %60 = vector.shape_cast %59 : vector<32xf32> to vector<32x1xf32>
    %61 = tpu.reciprocal %60 {approx = true} : vector<32x1xf32> -> vector<32x1xf32>
    %62 = vector.broadcast %61 : vector<32x1xf32> to vector<32x32xf32>
    %63 = arith.mulf %58, %62 : vector<32x32xf32>
    %cst_31 = arith.constant dense<0.000000e+00> : vector<32x1xf32>
    %64 = tpu.matmul %63, %49, %cst_31 {dimension_numbers = #tpu.dot_dimension_numbers<[1], [0], [0], [1], [0, 0, 1, 1], [], []>} : vector<32x32xf32>, vector<32x1xf32>, vector<32x1xf32> -> vector<32x1xf32>
    %65 = vector.extract_strided_slice %22 {offsets = [1, 0], sizes = [1, 4], strides = [1, 1]} : vector<4x4xf32> to vector<1x4xf32>
    %cst_32 = arith.constant dense<0.000000e+00> : vector<32x4xf32>
    %66 = tpu.matmul %64, %65, %cst_32 {dimension_numbers = #tpu.dot_dimension_numbers<[1], [0], [0], [1], [0, 0, 1, 1], [], []>} : vector<32x1xf32>, vector<1x4xf32>, vector<32x4xf32> -> vector<32x4xf32>
    %67 = arith.addf %46, %66 : vector<32x4xf32>
    %68 = vector.extract_strided_slice %18 {offsets = [0, 2], sizes = [32, 1], strides = [1, 1]} : vector<32x4xf32> to vector<32x1xf32>
    %69 = vector.extract_strided_slice %19 {offsets = [0, 2], sizes = [32, 1], strides = [1, 1]} : vector<32x4xf32> to vector<32x1xf32>
    %70 = vector.extract_strided_slice %20 {offsets = [0, 2], sizes = [32, 1], strides = [1, 1]} : vector<32x4xf32> to vector<32x1xf32>
    %cst_33 = arith.constant dense<0.000000e+00> : vector<32x32xf32>
    %71 = tpu.matmul %68, %69, %cst_33 {dimension_numbers = #tpu.dot_dimension_numbers<[1], [1], [0], [0], [0, 0, 1, 0], [], []>} : vector<32x1xf32>, vector<32x1xf32>, vector<32x32xf32> -> vector<32x32xf32>
    %cst_34 = arith.constant 1.000000e+00 : f32
    %72 = vector.broadcast %cst_34 : f32 to vector<32x32xf32>
    %73 = arith.mulf %71, %72 : vector<32x32xf32>
    %74 = arith.addf %73, %10 : vector<32x32xf32>
    %cst_35 = arith.constant dense<0xFF800000> : vector<32xf32>
    %75 = vector.multi_reduction <maximumf>, %74, %cst_35 [1] : vector<32x32xf32> to vector<32xf32>
    %76 = vector.shape_cast %75 : vector<32xf32> to vector<32x1xf32>
    %77 = vector.broadcast %76 : vector<32x1xf32> to vector<32x32xf32>
    %78 = arith.subf %74, %77 : vector<32x32xf32>
    %79 = math.exp %78 : vector<32x32xf32>
    %cst_36 = arith.constant dense<0.000000e+00> : vector<32xf32>
    %80 = vector.multi_reduction <add>, %79, %cst_36 [1] : vector<32x32xf32> to vector<32xf32>
    %81 = vector.shape_cast %80 : vector<32xf32> to vector<32x1xf32>
    %82 = tpu.reciprocal %81 {approx = true} : vector<32x1xf32> -> vector<32x1xf32>
    %83 = vector.broadcast %82 : vector<32x1xf32> to vector<32x32xf32>
    %84 = arith.mulf %79, %83 : vector<32x32xf32>
    %cst_37 = arith.constant dense<0.000000e+00> : vector<32x1xf32>
    %85 = tpu.matmul %84, %70, %cst_37 {dimension_numbers = #tpu.dot_dimension_numbers<[1], [0], [0], [1], [0, 0, 1, 1], [], []>} : vector<32x32xf32>, vector<32x1xf32>, vector<32x1xf32> -> vector<32x1xf32>
    %86 = vector.extract_strided_slice %22 {offsets = [2, 0], sizes = [1, 4], strides = [1, 1]} : vector<4x4xf32> to vector<1x4xf32>
    %cst_38 = arith.constant dense<0.000000e+00> : vector<32x4xf32>
    %87 = tpu.matmul %85, %86, %cst_38 {dimension_numbers = #tpu.dot_dimension_numbers<[1], [0], [0], [1], [0, 0, 1, 1], [], []>} : vector<32x1xf32>, vector<1x4xf32>, vector<32x4xf32> -> vector<32x4xf32>
    %88 = arith.addf %67, %87 : vector<32x4xf32>
    %89 = vector.extract_strided_slice %18 {offsets = [0, 3], sizes = [32, 1], strides = [1, 1]} : vector<32x4xf32> to vector<32x1xf32>
    %90 = vector.extract_strided_slice %19 {offsets = [0, 3], sizes = [32, 1], strides = [1, 1]} : vector<32x4xf32> to vector<32x1xf32>
    %91 = vector.extract_strided_slice %20 {offsets = [0, 3], sizes = [32, 1], strides = [1, 1]} : vector<32x4xf32> to vector<32x1xf32>
    %cst_39 = arith.constant dense<0.000000e+00> : vector<32x32xf32>
    %92 = tpu.matmul %89, %90, %cst_39 {dimension_numbers = #tpu.dot_dimension_numbers<[1], [1], [0], [0], [0, 0, 1, 0], [], []>} : vector<32x1xf32>, vector<32x1xf32>, vector<32x32xf32> -> vector<32x32xf32>
    %cst_40 = arith.constant 1.000000e+00 : f32
    %93 = vector.broadcast %cst_40 : f32 to vector<32x32xf32>
    %94 = arith.mulf %92, %93 : vector<32x32xf32>
    %95 = arith.addf %94, %10 : vector<32x32xf32>
    %cst_41 = arith.constant dense<0xFF800000> : vector<32xf32>
    %96 = vector.multi_reduction <maximumf>, %95, %cst_41 [1] : vector<32x32xf32> to vector<32xf32>
    %97 = vector.shape_cast %96 : vector<32xf32> to vector<32x1xf32>
    %98 = vector.broadcast %97 : vector<32x1xf32> to vector<32x32xf32>
    %99 = arith.subf %95, %98 : vector<32x32xf32>
    %100 = math.exp %99 : vector<32x32xf32>
    %cst_42 = arith.constant dense<0.000000e+00> : vector<32xf32>
    %101 = vector.multi_reduction <add>, %100, %cst_42 [1] : vector<32x32xf32> to vector<32xf32>
    %102 = vector.shape_cast %101 : vector<32xf32> to vector<32x1xf32>
    %103 = tpu.reciprocal %102 {approx = true} : vector<32x1xf32> -> vector<32x1xf32>
    %104 = vector.broadcast %103 : vector<32x1xf32> to vector<32x32xf32>
    %105 = arith.mulf %100, %104 : vector<32x32xf32>
    %cst_43 = arith.constant dense<0.000000e+00> : vector<32x1xf32>
    %106 = tpu.matmul %105, %91, %cst_43 {dimension_numbers = #tpu.dot_dimension_numbers<[1], [0], [0], [1], [0, 0, 1, 1], [], []>} : vector<32x32xf32>, vector<32x1xf32>, vector<32x1xf32> -> vector<32x1xf32>
    %107 = vector.extract_strided_slice %22 {offsets = [3, 0], sizes = [1, 4], strides = [1, 1]} : vector<4x4xf32> to vector<1x4xf32>
    %cst_44 = arith.constant dense<0.000000e+00> : vector<32x4xf32>
    %108 = tpu.matmul %106, %107, %cst_44 {dimension_numbers = #tpu.dot_dimension_numbers<[1], [0], [0], [1], [0, 0, 1, 1], [], []>} : vector<32x1xf32>, vector<1x4xf32>, vector<32x4xf32> -> vector<32x4xf32>
    %109 = arith.addf %88, %108 : vector<32x4xf32>
    %110 = arith.addf %9, %109 : vector<32x4xf32>
    %c0_45 = arith.constant 0 : index
    %c0_46 = arith.constant 0 : index
    %c0_47 = arith.constant 0 : index
    %111 = vector.load %arg10[%c0_45, %c0_46, %c0_47] : memref<3x1x4xf32, #tpu.memory_space<vmem>>, vector<1x1x4xf32>
    %112 = vector.shape_cast %111 : vector<1x1x4xf32> to vector<1x4xf32>
    %c0_48 = arith.constant 0 : index
    %c0_49 = arith.constant 0 : index
    %c0_50 = arith.constant 0 : index
    %113 = vector.load %arg11[%c0_48, %c0_49, %c0_50] : memref<3x1x4xf32, #tpu.memory_space<vmem>>, vector<1x1x4xf32>
    %114 = vector.shape_cast %113 : vector<1x1x4xf32> to vector<1x4xf32>
    %cst_51 = arith.constant dense<0.000000e+00> : vector<32xf32>
    %115 = vector.multi_reduction <add>, %110, %cst_51 [1] : vector<32x4xf32> to vector<32xf32>
    %116 = vector.shape_cast %115 : vector<32xf32> to vector<32x1xf32>
    %cst_52 = arith.constant 4.000000e+00 : f32
    %117 = vector.broadcast %cst_52 : f32 to vector<32x1xf32>
    %118 = arith.divf %116, %117 : vector<32x1xf32>
    %119 = vector.broadcast %118 : vector<32x1xf32> to vector<32x4xf32>
    %120 = arith.subf %110, %119 : vector<32x4xf32>
    %121 = arith.mulf %120, %120 : vector<32x4xf32>
    %cst_53 = arith.constant dense<0.000000e+00> : vector<32xf32>
    %122 = vector.multi_reduction <add>, %121, %cst_53 [1] : vector<32x4xf32> to vector<32xf32>
    %123 = vector.shape_cast %122 : vector<32xf32> to vector<32x1xf32>
    %cst_54 = arith.constant 4.000000e+00 : f32
    %124 = vector.broadcast %cst_54 : f32 to vector<32x1xf32>
    %125 = arith.divf %123, %124 : vector<32x1xf32>
    %cst_55 = arith.constant 9.99999974E-6 : f32
    %126 = vector.broadcast %cst_55 : f32 to vector<32x1xf32>
    %127 = arith.addf %125, %126 : vector<32x1xf32>
    %128 = math.rsqrt %127 : vector<32x1xf32>
    %129 = vector.broadcast %128 : vector<32x1xf32> to vector<32x4xf32>
    %130 = arith.mulf %120, %129 : vector<32x4xf32>
    %131 = vector.broadcast %112 : vector<1x4xf32> to vector<32x4xf32>
    %132 = arith.mulf %130, %131 : vector<32x4xf32>
    %133 = vector.broadcast %114 : vector<1x4xf32> to vector<32x4xf32>
    %134 = arith.addf %132, %133 : vector<32x4xf32>
    %c0_56 = arith.constant 0 : index
    %c0_57 = arith.constant 0 : index
    %c0_58 = arith.constant 0 : index
    %135 = vector.load %arg12[%c0_56, %c0_57, %c0_58] : memref<3x4x512xf32, #tpu.memory_space<vmem>>, vector<1x4x512xf32>
    %136 = vector.shape_cast %135 : vector<1x4x512xf32> to vector<4x512xf32>
    %cst_59 = arith.constant dense<0.000000e+00> : vector<32x512xf32>
    %137 = tpu.matmul %134, %136, %cst_59 {dimension_numbers = #tpu.dot_dimension_numbers<[1], [0], [0], [1], [0, 0, 1, 1], [], []>} : vector<32x4xf32>, vector<4x512xf32>, vector<32x512xf32> -> vector<32x512xf32>
    %c0_60 = arith.constant 0 : index
    %c0_61 = arith.constant 0 : index
    %c0_62 = arith.constant 0 : index
    %138 = vector.load %arg13[%c0_60, %c0_61, %c0_62] : memref<3x1x512xf32, #tpu.memory_space<vmem>>, vector<1x1x512xf32>
    %139 = vector.shape_cast %138 : vector<1x1x512xf32> to vector<1x512xf32>
    %140 = vector.broadcast %139 : vector<1x512xf32> to vector<32x512xf32>
    %141 = arith.addf %137, %140 : vector<32x512xf32>
    %cst_63 = arith.constant 0.000000e+00 : f32
    %142 = vector.broadcast %cst_63 : f32 to vector<32x512xf32>
    %143 = arith.maximumf %141, %142 : vector<32x512xf32>
    %c0_64 = arith.constant 0 : index
    %c0_65 = arith.constant 0 : index
    %c0_66 = arith.constant 0 : index
    %144 = vector.load %arg14[%c0_64, %c0_65, %c0_66] : memref<3x512x4xf32, #tpu.memory_space<vmem>>, vector<1x512x4xf32>
    %145 = vector.shape_cast %144 : vector<1x512x4xf32> to vector<512x4xf32>
    %cst_67 = arith.constant dense<0.000000e+00> : vector<32x4xf32>
    %146 = tpu.matmul %143, %145, %cst_67 {dimension_numbers = #tpu.dot_dimension_numbers<[1], [0], [0], [1], [0, 0, 1, 1], [], []>} : vector<32x512xf32>, vector<512x4xf32>, vector<32x4xf32> -> vector<32x4xf32>
    %c0_68 = arith.constant 0 : index
    %c0_69 = arith.constant 0 : index
    %c0_70 = arith.constant 0 : index
    %147 = vector.load %arg15[%c0_68, %c0_69, %c0_70] : memref<3x1x4xf32, #tpu.memory_space<vmem>>, vector<1x1x4xf32>
    %148 = vector.shape_cast %147 : vector<1x1x4xf32> to vector<1x4xf32>
    %149 = vector.broadcast %148 : vector<1x4xf32> to vector<32x4xf32>
    %150 = arith.addf %146, %149 : vector<32x4xf32>
    %151 = arith.addf %134, %150 : vector<32x4xf32>
    %c0_71 = arith.constant 0 : index
    %c0_72 = arith.constant 0 : index
    %c0_73 = arith.constant 0 : index
    %152 = vector.load %arg16[%c0_71, %c0_72, %c0_73] : memref<3x1x4xf32, #tpu.memory_space<vmem>>, vector<1x1x4xf32>
    %153 = vector.shape_cast %152 : vector<1x1x4xf32> to vector<1x4xf32>
    %c0_74 = arith.constant 0 : index
    %c0_75 = arith.constant 0 : index
    %c0_76 = arith.constant 0 : index
    %154 = vector.load %arg17[%c0_74, %c0_75, %c0_76] : memref<3x1x4xf32, #tpu.memory_space<vmem>>, vector<1x1x4xf32>
    %155 = vector.shape_cast %154 : vector<1x1x4xf32> to vector<1x4xf32>
    %cst_77 = arith.constant dense<0.000000e+00> : vector<32xf32>
    %156 = vector.multi_reduction <add>, %151, %cst_77 [1] : vector<32x4xf32> to vector<32xf32>
    %157 = vector.shape_cast %156 : vector<32xf32> to vector<32x1xf32>
    %cst_78 = arith.constant 4.000000e+00 : f32
    %158 = vector.broadcast %cst_78 : f32 to vector<32x1xf32>
    %159 = arith.divf %157, %158 : vector<32x1xf32>
    %160 = vector.broadcast %159 : vector<32x1xf32> to vector<32x4xf32>
    %161 = arith.subf %151, %160 : vector<32x4xf32>
    %162 = arith.mulf %161, %161 : vector<32x4xf32>
    %cst_79 = arith.constant dense<0.000000e+00> : vector<32xf32>
    %163 = vector.multi_reduction <add>, %162, %cst_79 [1] : vector<32x4xf32> to vector<32xf32>
    %164 = vector.shape_cast %163 : vector<32xf32> to vector<32x1xf32>
    %cst_80 = arith.constant 4.000000e+00 : f32
    %165 = vector.broadcast %cst_80 : f32 to vector<32x1xf32>
    %166 = arith.divf %164, %165 : vector<32x1xf32>
    %cst_81 = arith.constant 9.99999974E-6 : f32
    %167 = vector.broadcast %cst_81 : f32 to vector<32x1xf32>
    %168 = arith.addf %166, %167 : vector<32x1xf32>
    %169 = math.rsqrt %168 : vector<32x1xf32>
    %170 = vector.broadcast %169 : vector<32x1xf32> to vector<32x4xf32>
    %171 = arith.mulf %161, %170 : vector<32x4xf32>
    %172 = vector.broadcast %153 : vector<1x4xf32> to vector<32x4xf32>
    %173 = arith.mulf %171, %172 : vector<32x4xf32>
    %174 = vector.broadcast %155 : vector<1x4xf32> to vector<32x4xf32>
    %175 = arith.addf %173, %174 : vector<32x4xf32>
    %c1 = arith.constant 1 : index
    %c0_82 = arith.constant 0 : index
    %c0_83 = arith.constant 0 : index
    %176 = vector.load %arg6[%c1, %c0_82, %c0_83] : memref<3x4x12xf32, #tpu.memory_space<vmem>>, vector<1x4x12xf32>
    %177 = vector.shape_cast %176 : vector<1x4x12xf32> to vector<4x12xf32>
    %cst_84 = arith.constant dense<0.000000e+00> : vector<32x12xf32>
    %178 = tpu.matmul %175, %177, %cst_84 {dimension_numbers = #tpu.dot_dimension_numbers<[1], [0], [0], [1], [0, 0, 1, 1], [], []>} : vector<32x4xf32>, vector<4x12xf32>, vector<32x12xf32> -> vector<32x12xf32>
    %c1_85 = arith.constant 1 : index
    %c0_86 = arith.constant 0 : index
    %c0_87 = arith.constant 0 : index
    %179 = vector.load %arg7[%c1_85, %c0_86, %c0_87] : memref<3x1x12xf32, #tpu.memory_space<vmem>>, vector<1x1x12xf32>
    %180 = vector.shape_cast %179 : vector<1x1x12xf32> to vector<1x12xf32>
    %181 = vector.broadcast %180 : vector<1x12xf32> to vector<32x12xf32>
    %182 = arith.addf %178, %181 : vector<32x12xf32>
    %183 = vector.extract_strided_slice %182 {offsets = [0, 0], sizes = [32, 4], strides = [1, 1]} : vector<32x12xf32> to vector<32x4xf32>
    %184 = vector.extract_strided_slice %182 {offsets = [0, 4], sizes = [32, 4], strides = [1, 1]} : vector<32x12xf32> to vector<32x4xf32>
    %185 = vector.extract_strided_slice %182 {offsets = [0, 8], sizes = [32, 4], strides = [1, 1]} : vector<32x12xf32> to vector<32x4xf32>
    %c1_88 = arith.constant 1 : index
    %c0_89 = arith.constant 0 : index
    %c0_90 = arith.constant 0 : index
    %186 = vector.load %arg8[%c1_88, %c0_89, %c0_90] : memref<3x4x4xf32, #tpu.memory_space<vmem>>, vector<1x4x4xf32>
    %187 = vector.shape_cast %186 : vector<1x4x4xf32> to vector<4x4xf32>
    %c1_91 = arith.constant 1 : index
    %c0_92 = arith.constant 0 : index
    %c0_93 = arith.constant 0 : index
    %188 = vector.load %arg9[%c1_91, %c0_92, %c0_93] : memref<3x1x4xf32, #tpu.memory_space<vmem>>, vector<1x1x4xf32>
    %189 = vector.shape_cast %188 : vector<1x1x4xf32> to vector<1x4xf32>
    %190 = vector.extract_strided_slice %183 {offsets = [0, 0], sizes = [32, 1], strides = [1, 1]} : vector<32x4xf32> to vector<32x1xf32>
    %191 = vector.extract_strided_slice %184 {offsets = [0, 0], sizes = [32, 1], strides = [1, 1]} : vector<32x4xf32> to vector<32x1xf32>
    %192 = vector.extract_strided_slice %185 {offsets = [0, 0], sizes = [32, 1], strides = [1, 1]} : vector<32x4xf32> to vector<32x1xf32>
    %cst_94 = arith.constant dense<0.000000e+00> : vector<32x32xf32>
    %193 = tpu.matmul %190, %191, %cst_94 {dimension_numbers = #tpu.dot_dimension_numbers<[1], [1], [0], [0], [0, 0, 1, 0], [], []>} : vector<32x1xf32>, vector<32x1xf32>, vector<32x32xf32> -> vector<32x32xf32>
    %cst_95 = arith.constant 1.000000e+00 : f32
    %194 = vector.broadcast %cst_95 : f32 to vector<32x32xf32>
    %195 = arith.mulf %193, %194 : vector<32x32xf32>
    %196 = arith.addf %195, %10 : vector<32x32xf32>
    %cst_96 = arith.constant dense<0xFF800000> : vector<32xf32>
    %197 = vector.multi_reduction <maximumf>, %196, %cst_96 [1] : vector<32x32xf32> to vector<32xf32>
    %198 = vector.shape_cast %197 : vector<32xf32> to vector<32x1xf32>
    %199 = vector.broadcast %198 : vector<32x1xf32> to vector<32x32xf32>
    %200 = arith.subf %196, %199 : vector<32x32xf32>
    %201 = math.exp %200 : vector<32x32xf32>
    %cst_97 = arith.constant dense<0.000000e+00> : vector<32xf32>
    %202 = vector.multi_reduction <add>, %201, %cst_97 [1] : vector<32x32xf32> to vector<32xf32>
    %203 = vector.shape_cast %202 : vector<32xf32> to vector<32x1xf32>
    %204 = tpu.reciprocal %203 {approx = true} : vector<32x1xf32> -> vector<32x1xf32>
    %205 = vector.broadcast %204 : vector<32x1xf32> to vector<32x32xf32>
    %206 = arith.mulf %201, %205 : vector<32x32xf32>
    %cst_98 = arith.constant dense<0.000000e+00> : vector<32x1xf32>
    %207 = tpu.matmul %206, %192, %cst_98 {dimension_numbers = #tpu.dot_dimension_numbers<[1], [0], [0], [1], [0, 0, 1, 1], [], []>} : vector<32x32xf32>, vector<32x1xf32>, vector<32x1xf32> -> vector<32x1xf32>
    %208 = vector.extract_strided_slice %187 {offsets = [0, 0], sizes = [1, 4], strides = [1, 1]} : vector<4x4xf32> to vector<1x4xf32>
    %cst_99 = arith.constant dense<0.000000e+00> : vector<32x4xf32>
    %209 = tpu.matmul %207, %208, %cst_99 {dimension_numbers = #tpu.dot_dimension_numbers<[1], [0], [0], [1], [0, 0, 1, 1], [], []>} : vector<32x1xf32>, vector<1x4xf32>, vector<32x4xf32> -> vector<32x4xf32>
    %210 = vector.broadcast %189 : vector<1x4xf32> to vector<32x4xf32>
    %211 = arith.addf %210, %209 : vector<32x4xf32>
    %212 = vector.extract_strided_slice %183 {offsets = [0, 1], sizes = [32, 1], strides = [1, 1]} : vector<32x4xf32> to vector<32x1xf32>
    %213 = vector.extract_strided_slice %184 {offsets = [0, 1], sizes = [32, 1], strides = [1, 1]} : vector<32x4xf32> to vector<32x1xf32>
    %214 = vector.extract_strided_slice %185 {offsets = [0, 1], sizes = [32, 1], strides = [1, 1]} : vector<32x4xf32> to vector<32x1xf32>
    %cst_100 = arith.constant dense<0.000000e+00> : vector<32x32xf32>
    %215 = tpu.matmul %212, %213, %cst_100 {dimension_numbers = #tpu.dot_dimension_numbers<[1], [1], [0], [0], [0, 0, 1, 0], [], []>} : vector<32x1xf32>, vector<32x1xf32>, vector<32x32xf32> -> vector<32x32xf32>
    %cst_101 = arith.constant 1.000000e+00 : f32
    %216 = vector.broadcast %cst_101 : f32 to vector<32x32xf32>
    %217 = arith.mulf %215, %216 : vector<32x32xf32>
    %218 = arith.addf %217, %10 : vector<32x32xf32>
    %cst_102 = arith.constant dense<0xFF800000> : vector<32xf32>
    %219 = vector.multi_reduction <maximumf>, %218, %cst_102 [1] : vector<32x32xf32> to vector<32xf32>
    %220 = vector.shape_cast %219 : vector<32xf32> to vector<32x1xf32>
    %221 = vector.broadcast %220 : vector<32x1xf32> to vector<32x32xf32>
    %222 = arith.subf %218, %221 : vector<32x32xf32>
    %223 = math.exp %222 : vector<32x32xf32>
    %cst_103 = arith.constant dense<0.000000e+00> : vector<32xf32>
    %224 = vector.multi_reduction <add>, %223, %cst_103 [1] : vector<32x32xf32> to vector<32xf32>
    %225 = vector.shape_cast %224 : vector<32xf32> to vector<32x1xf32>
    %226 = tpu.reciprocal %225 {approx = true} : vector<32x1xf32> -> vector<32x1xf32>
    %227 = vector.broadcast %226 : vector<32x1xf32> to vector<32x32xf32>
    %228 = arith.mulf %223, %227 : vector<32x32xf32>
    %cst_104 = arith.constant dense<0.000000e+00> : vector<32x1xf32>
    %229 = tpu.matmul %228, %214, %cst_104 {dimension_numbers = #tpu.dot_dimension_numbers<[1], [0], [0], [1], [0, 0, 1, 1], [], []>} : vector<32x32xf32>, vector<32x1xf32>, vector<32x1xf32> -> vector<32x1xf32>
    %230 = vector.extract_strided_slice %187 {offsets = [1, 0], sizes = [1, 4], strides = [1, 1]} : vector<4x4xf32> to vector<1x4xf32>
    %cst_105 = arith.constant dense<0.000000e+00> : vector<32x4xf32>
    %231 = tpu.matmul %229, %230, %cst_105 {dimension_numbers = #tpu.dot_dimension_numbers<[1], [0], [0], [1], [0, 0, 1, 1], [], []>} : vector<32x1xf32>, vector<1x4xf32>, vector<32x4xf32> -> vector<32x4xf32>
    %232 = arith.addf %211, %231 : vector<32x4xf32>
    %233 = vector.extract_strided_slice %183 {offsets = [0, 2], sizes = [32, 1], strides = [1, 1]} : vector<32x4xf32> to vector<32x1xf32>
    %234 = vector.extract_strided_slice %184 {offsets = [0, 2], sizes = [32, 1], strides = [1, 1]} : vector<32x4xf32> to vector<32x1xf32>
    %235 = vector.extract_strided_slice %185 {offsets = [0, 2], sizes = [32, 1], strides = [1, 1]} : vector<32x4xf32> to vector<32x1xf32>
    %cst_106 = arith.constant dense<0.000000e+00> : vector<32x32xf32>
    %236 = tpu.matmul %233, %234, %cst_106 {dimension_numbers = #tpu.dot_dimension_numbers<[1], [1], [0], [0], [0, 0, 1, 0], [], []>} : vector<32x1xf32>, vector<32x1xf32>, vector<32x32xf32> -> vector<32x32xf32>
    %cst_107 = arith.constant 1.000000e+00 : f32
    %237 = vector.broadcast %cst_107 : f32 to vector<32x32xf32>
    %238 = arith.mulf %236, %237 : vector<32x32xf32>
    %239 = arith.addf %238, %10 : vector<32x32xf32>
    %cst_108 = arith.constant dense<0xFF800000> : vector<32xf32>
    %240 = vector.multi_reduction <maximumf>, %239, %cst_108 [1] : vector<32x32xf32> to vector<32xf32>
    %241 = vector.shape_cast %240 : vector<32xf32> to vector<32x1xf32>
    %242 = vector.broadcast %241 : vector<32x1xf32> to vector<32x32xf32>
    %243 = arith.subf %239, %242 : vector<32x32xf32>
    %244 = math.exp %243 : vector<32x32xf32>
    %cst_109 = arith.constant dense<0.000000e+00> : vector<32xf32>
    %245 = vector.multi_reduction <add>, %244, %cst_109 [1] : vector<32x32xf32> to vector<32xf32>
    %246 = vector.shape_cast %245 : vector<32xf32> to vector<32x1xf32>
    %247 = tpu.reciprocal %246 {approx = true} : vector<32x1xf32> -> vector<32x1xf32>
    %248 = vector.broadcast %247 : vector<32x1xf32> to vector<32x32xf32>
    %249 = arith.mulf %244, %248 : vector<32x32xf32>
    %cst_110 = arith.constant dense<0.000000e+00> : vector<32x1xf32>
    %250 = tpu.matmul %249, %235, %cst_110 {dimension_numbers = #tpu.dot_dimension_numbers<[1], [0], [0], [1], [0, 0, 1, 1], [], []>} : vector<32x32xf32>, vector<32x1xf32>, vector<32x1xf32> -> vector<32x1xf32>
    %251 = vector.extract_strided_slice %187 {offsets = [2, 0], sizes = [1, 4], strides = [1, 1]} : vector<4x4xf32> to vector<1x4xf32>
    %cst_111 = arith.constant dense<0.000000e+00> : vector<32x4xf32>
    %252 = tpu.matmul %250, %251, %cst_111 {dimension_numbers = #tpu.dot_dimension_numbers<[1], [0], [0], [1], [0, 0, 1, 1], [], []>} : vector<32x1xf32>, vector<1x4xf32>, vector<32x4xf32> -> vector<32x4xf32>
    %253 = arith.addf %232, %252 : vector<32x4xf32>
    %254 = vector.extract_strided_slice %183 {offsets = [0, 3], sizes = [32, 1], strides = [1, 1]} : vector<32x4xf32> to vector<32x1xf32>
    %255 = vector.extract_strided_slice %184 {offsets = [0, 3], sizes = [32, 1], strides = [1, 1]} : vector<32x4xf32> to vector<32x1xf32>
    %256 = vector.extract_strided_slice %185 {offsets = [0, 3], sizes = [32, 1], strides = [1, 1]} : vector<32x4xf32> to vector<32x1xf32>
    %cst_112 = arith.constant dense<0.000000e+00> : vector<32x32xf32>
    %257 = tpu.matmul %254, %255, %cst_112 {dimension_numbers = #tpu.dot_dimension_numbers<[1], [1], [0], [0], [0, 0, 1, 0], [], []>} : vector<32x1xf32>, vector<32x1xf32>, vector<32x32xf32> -> vector<32x32xf32>
    %cst_113 = arith.constant 1.000000e+00 : f32
    %258 = vector.broadcast %cst_113 : f32 to vector<32x32xf32>
    %259 = arith.mulf %257, %258 : vector<32x32xf32>
    %260 = arith.addf %259, %10 : vector<32x32xf32>
    %cst_114 = arith.constant dense<0xFF800000> : vector<32xf32>
    %261 = vector.multi_reduction <maximumf>, %260, %cst_114 [1] : vector<32x32xf32> to vector<32xf32>
    %262 = vector.shape_cast %261 : vector<32xf32> to vector<32x1xf32>
    %263 = vector.broadcast %262 : vector<32x1xf32> to vector<32x32xf32>
    %264 = arith.subf %260, %263 : vector<32x32xf32>
    %265 = math.exp %264 : vector<32x32xf32>
    %cst_115 = arith.constant dense<0.000000e+00> : vector<32xf32>
    %266 = vector.multi_reduction <add>, %265, %cst_115 [1] : vector<32x32xf32> to vector<32xf32>
    %267 = vector.shape_cast %266 : vector<32xf32> to vector<32x1xf32>
    %268 = tpu.reciprocal %267 {approx = true} : vector<32x1xf32> -> vector<32x1xf32>
    %269 = vector.broadcast %268 : vector<32x1xf32> to vector<32x32xf32>
    %270 = arith.mulf %265, %269 : vector<32x32xf32>
    %cst_116 = arith.constant dense<0.000000e+00> : vector<32x1xf32>
    %271 = tpu.matmul %270, %256, %cst_116 {dimension_numbers = #tpu.dot_dimension_numbers<[1], [0], [0], [1], [0, 0, 1, 1], [], []>} : vector<32x32xf32>, vector<32x1xf32>, vector<32x1xf32> -> vector<32x1xf32>
    %272 = vector.extract_strided_slice %187 {offsets = [3, 0], sizes = [1, 4], strides = [1, 1]} : vector<4x4xf32> to vector<1x4xf32>
    %cst_117 = arith.constant dense<0.000000e+00> : vector<32x4xf32>
    %273 = tpu.matmul %271, %272, %cst_117 {dimension_numbers = #tpu.dot_dimension_numbers<[1], [0], [0], [1], [0, 0, 1, 1], [], []>} : vector<32x1xf32>, vector<1x4xf32>, vector<32x4xf32> -> vector<32x4xf32>
    %274 = arith.addf %253, %273 : vector<32x4xf32>
    %275 = arith.addf %175, %274 : vector<32x4xf32>
    %c1_118 = arith.constant 1 : index
    %c0_119 = arith.constant 0 : index
    %c0_120 = arith.constant 0 : index
    %276 = vector.load %arg10[%c1_118, %c0_119, %c0_120] : memref<3x1x4xf32, #tpu.memory_space<vmem>>, vector<1x1x4xf32>
    %277 = vector.shape_cast %276 : vector<1x1x4xf32> to vector<1x4xf32>
    %c1_121 = arith.constant 1 : index
    %c0_122 = arith.constant 0 : index
    %c0_123 = arith.constant 0 : index
    %278 = vector.load %arg11[%c1_121, %c0_122, %c0_123] : memref<3x1x4xf32, #tpu.memory_space<vmem>>, vector<1x1x4xf32>
    %279 = vector.shape_cast %278 : vector<1x1x4xf32> to vector<1x4xf32>
    %cst_124 = arith.constant dense<0.000000e+00> : vector<32xf32>
    %280 = vector.multi_reduction <add>, %275, %cst_124 [1] : vector<32x4xf32> to vector<32xf32>
    %281 = vector.shape_cast %280 : vector<32xf32> to vector<32x1xf32>
    %cst_125 = arith.constant 4.000000e+00 : f32
    %282 = vector.broadcast %cst_125 : f32 to vector<32x1xf32>
    %283 = arith.divf %281, %282 : vector<32x1xf32>
    %284 = vector.broadcast %283 : vector<32x1xf32> to vector<32x4xf32>
    %285 = arith.subf %275, %284 : vector<32x4xf32>
    %286 = arith.mulf %285, %285 : vector<32x4xf32>
    %cst_126 = arith.constant dense<0.000000e+00> : vector<32xf32>
    %287 = vector.multi_reduction <add>, %286, %cst_126 [1] : vector<32x4xf32> to vector<32xf32>
    %288 = vector.shape_cast %287 : vector<32xf32> to vector<32x1xf32>
    %cst_127 = arith.constant 4.000000e+00 : f32
    %289 = vector.broadcast %cst_127 : f32 to vector<32x1xf32>
    %290 = arith.divf %288, %289 : vector<32x1xf32>
    %cst_128 = arith.constant 9.99999974E-6 : f32
    %291 = vector.broadcast %cst_128 : f32 to vector<32x1xf32>
    %292 = arith.addf %290, %291 : vector<32x1xf32>
    %293 = math.rsqrt %292 : vector<32x1xf32>
    %294 = vector.broadcast %293 : vector<32x1xf32> to vector<32x4xf32>
    %295 = arith.mulf %285, %294 : vector<32x4xf32>
    %296 = vector.broadcast %277 : vector<1x4xf32> to vector<32x4xf32>
    %297 = arith.mulf %295, %296 : vector<32x4xf32>
    %298 = vector.broadcast %279 : vector<1x4xf32> to vector<32x4xf32>
    %299 = arith.addf %297, %298 : vector<32x4xf32>
    %c1_129 = arith.constant 1 : index
    %c0_130 = arith.constant 0 : index
    %c0_131 = arith.constant 0 : index
    %300 = vector.load %arg12[%c1_129, %c0_130, %c0_131] : memref<3x4x512xf32, #tpu.memory_space<vmem>>, vector<1x4x512xf32>
    %301 = vector.shape_cast %300 : vector<1x4x512xf32> to vector<4x512xf32>
    %cst_132 = arith.constant dense<0.000000e+00> : vector<32x512xf32>
    %302 = tpu.matmul %299, %301, %cst_132 {dimension_numbers = #tpu.dot_dimension_numbers<[1], [0], [0], [1], [0, 0, 1, 1], [], []>} : vector<32x4xf32>, vector<4x512xf32>, vector<32x512xf32> -> vector<32x512xf32>
    %c1_133 = arith.constant 1 : index
    %c0_134 = arith.constant 0 : index
    %c0_135 = arith.constant 0 : index
    %303 = vector.load %arg13[%c1_133, %c0_134, %c0_135] : memref<3x1x512xf32, #tpu.memory_space<vmem>>, vector<1x1x512xf32>
    %304 = vector.shape_cast %303 : vector<1x1x512xf32> to vector<1x512xf32>
    %305 = vector.broadcast %304 : vector<1x512xf32> to vector<32x512xf32>
    %306 = arith.addf %302, %305 : vector<32x512xf32>
    %cst_136 = arith.constant 0.000000e+00 : f32
    %307 = vector.broadcast %cst_136 : f32 to vector<32x512xf32>
    %308 = arith.maximumf %306, %307 : vector<32x512xf32>
    %c1_137 = arith.constant 1 : index
    %c0_138 = arith.constant 0 : index
    %c0_139 = arith.constant 0 : index
    %309 = vector.load %arg14[%c1_137, %c0_138, %c0_139] : memref<3x512x4xf32, #tpu.memory_space<vmem>>, vector<1x512x4xf32>
    %310 = vector.shape_cast %309 : vector<1x512x4xf32> to vector<512x4xf32>
    %cst_140 = arith.constant dense<0.000000e+00> : vector<32x4xf32>
    %311 = tpu.matmul %308, %310, %cst_140 {dimension_numbers = #tpu.dot_dimension_numbers<[1], [0], [0], [1], [0, 0, 1, 1], [], []>} : vector<32x512xf32>, vector<512x4xf32>, vector<32x4xf32> -> vector<32x4xf32>
    %c1_141 = arith.constant 1 : index
    %c0_142 = arith.constant 0 : index
    %c0_143 = arith.constant 0 : index
    %312 = vector.load %arg15[%c1_141, %c0_142, %c0_143] : memref<3x1x4xf32, #tpu.memory_space<vmem>>, vector<1x1x4xf32>
    %313 = vector.shape_cast %312 : vector<1x1x4xf32> to vector<1x4xf32>
    %314 = vector.broadcast %313 : vector<1x4xf32> to vector<32x4xf32>
    %315 = arith.addf %311, %314 : vector<32x4xf32>
    %316 = arith.addf %299, %315 : vector<32x4xf32>
    %c1_144 = arith.constant 1 : index
    %c0_145 = arith.constant 0 : index
    %c0_146 = arith.constant 0 : index
    %317 = vector.load %arg16[%c1_144, %c0_145, %c0_146] : memref<3x1x4xf32, #tpu.memory_space<vmem>>, vector<1x1x4xf32>
    %318 = vector.shape_cast %317 : vector<1x1x4xf32> to vector<1x4xf32>
    %c1_147 = arith.constant 1 : index
    %c0_148 = arith.constant 0 : index
    %c0_149 = arith.constant 0 : index
    %319 = vector.load %arg17[%c1_147, %c0_148, %c0_149] : memref<3x1x4xf32, #tpu.memory_space<vmem>>, vector<1x1x4xf32>
    %320 = vector.shape_cast %319 : vector<1x1x4xf32> to vector<1x4xf32>
    %cst_150 = arith.constant dense<0.000000e+00> : vector<32xf32>
    %321 = vector.multi_reduction <add>, %316, %cst_150 [1] : vector<32x4xf32> to vector<32xf32>
    %322 = vector.shape_cast %321 : vector<32xf32> to vector<32x1xf32>
    %cst_151 = arith.constant 4.000000e+00 : f32
    %323 = vector.broadcast %cst_151 : f32 to vector<32x1xf32>
    %324 = arith.divf %322, %323 : vector<32x1xf32>
    %325 = vector.broadcast %324 : vector<32x1xf32> to vector<32x4xf32>
    %326 = arith.subf %316, %325 : vector<32x4xf32>
    %327 = arith.mulf %326, %326 : vector<32x4xf32>
    %cst_152 = arith.constant dense<0.000000e+00> : vector<32xf32>
    %328 = vector.multi_reduction <add>, %327, %cst_152 [1] : vector<32x4xf32> to vector<32xf32>
    %329 = vector.shape_cast %328 : vector<32xf32> to vector<32x1xf32>
    %cst_153 = arith.constant 4.000000e+00 : f32
    %330 = vector.broadcast %cst_153 : f32 to vector<32x1xf32>
    %331 = arith.divf %329, %330 : vector<32x1xf32>
    %cst_154 = arith.constant 9.99999974E-6 : f32
    %332 = vector.broadcast %cst_154 : f32 to vector<32x1xf32>
    %333 = arith.addf %331, %332 : vector<32x1xf32>
    %334 = math.rsqrt %333 : vector<32x1xf32>
    %335 = vector.broadcast %334 : vector<32x1xf32> to vector<32x4xf32>
    %336 = arith.mulf %326, %335 : vector<32x4xf32>
    %337 = vector.broadcast %318 : vector<1x4xf32> to vector<32x4xf32>
    %338 = arith.mulf %336, %337 : vector<32x4xf32>
    %339 = vector.broadcast %320 : vector<1x4xf32> to vector<32x4xf32>
    %340 = arith.addf %338, %339 : vector<32x4xf32>
    %c2 = arith.constant 2 : index
    %c0_155 = arith.constant 0 : index
    %c0_156 = arith.constant 0 : index
    %341 = vector.load %arg6[%c2, %c0_155, %c0_156] : memref<3x4x12xf32, #tpu.memory_space<vmem>>, vector<1x4x12xf32>
    %342 = vector.shape_cast %341 : vector<1x4x12xf32> to vector<4x12xf32>
    %cst_157 = arith.constant dense<0.000000e+00> : vector<32x12xf32>
    %343 = tpu.matmul %340, %342, %cst_157 {dimension_numbers = #tpu.dot_dimension_numbers<[1], [0], [0], [1], [0, 0, 1, 1], [], []>} : vector<32x4xf32>, vector<4x12xf32>, vector<32x12xf32> -> vector<32x12xf32>
    %c2_158 = arith.constant 2 : index
    %c0_159 = arith.constant 0 : index
    %c0_160 = arith.constant 0 : index
    %344 = vector.load %arg7[%c2_158, %c0_159, %c0_160] : memref<3x1x12xf32, #tpu.memory_space<vmem>>, vector<1x1x12xf32>
    %345 = vector.shape_cast %344 : vector<1x1x12xf32> to vector<1x12xf32>
    %346 = vector.broadcast %345 : vector<1x12xf32> to vector<32x12xf32>
    %347 = arith.addf %343, %346 : vector<32x12xf32>
    %348 = vector.extract_strided_slice %347 {offsets = [0, 0], sizes = [32, 4], strides = [1, 1]} : vector<32x12xf32> to vector<32x4xf32>
    %349 = vector.extract_strided_slice %347 {offsets = [0, 4], sizes = [32, 4], strides = [1, 1]} : vector<32x12xf32> to vector<32x4xf32>
    %350 = vector.extract_strided_slice %347 {offsets = [0, 8], sizes = [32, 4], strides = [1, 1]} : vector<32x12xf32> to vector<32x4xf32>
    %c2_161 = arith.constant 2 : index
    %c0_162 = arith.constant 0 : index
    %c0_163 = arith.constant 0 : index
    %351 = vector.load %arg8[%c2_161, %c0_162, %c0_163] : memref<3x4x4xf32, #tpu.memory_space<vmem>>, vector<1x4x4xf32>
    %352 = vector.shape_cast %351 : vector<1x4x4xf32> to vector<4x4xf32>
    %c2_164 = arith.constant 2 : index
    %c0_165 = arith.constant 0 : index
    %c0_166 = arith.constant 0 : index
    %353 = vector.load %arg9[%c2_164, %c0_165, %c0_166] : memref<3x1x4xf32, #tpu.memory_space<vmem>>, vector<1x1x4xf32>
    %354 = vector.shape_cast %353 : vector<1x1x4xf32> to vector<1x4xf32>
    %355 = vector.extract_strided_slice %348 {offsets = [0, 0], sizes = [32, 1], strides = [1, 1]} : vector<32x4xf32> to vector<32x1xf32>
    %356 = vector.extract_strided_slice %349 {offsets = [0, 0], sizes = [32, 1], strides = [1, 1]} : vector<32x4xf32> to vector<32x1xf32>
    %357 = vector.extract_strided_slice %350 {offsets = [0, 0], sizes = [32, 1], strides = [1, 1]} : vector<32x4xf32> to vector<32x1xf32>
    %cst_167 = arith.constant dense<0.000000e+00> : vector<32x32xf32>
    %358 = tpu.matmul %355, %356, %cst_167 {dimension_numbers = #tpu.dot_dimension_numbers<[1], [1], [0], [0], [0, 0, 1, 0], [], []>} : vector<32x1xf32>, vector<32x1xf32>, vector<32x32xf32> -> vector<32x32xf32>
    %cst_168 = arith.constant 1.000000e+00 : f32
    %359 = vector.broadcast %cst_168 : f32 to vector<32x32xf32>
    %360 = arith.mulf %358, %359 : vector<32x32xf32>
    %361 = arith.addf %360, %10 : vector<32x32xf32>
    %cst_169 = arith.constant dense<0xFF800000> : vector<32xf32>
    %362 = vector.multi_reduction <maximumf>, %361, %cst_169 [1] : vector<32x32xf32> to vector<32xf32>
    %363 = vector.shape_cast %362 : vector<32xf32> to vector<32x1xf32>
    %364 = vector.broadcast %363 : vector<32x1xf32> to vector<32x32xf32>
    %365 = arith.subf %361, %364 : vector<32x32xf32>
    %366 = math.exp %365 : vector<32x32xf32>
    %cst_170 = arith.constant dense<0.000000e+00> : vector<32xf32>
    %367 = vector.multi_reduction <add>, %366, %cst_170 [1] : vector<32x32xf32> to vector<32xf32>
    %368 = vector.shape_cast %367 : vector<32xf32> to vector<32x1xf32>
    %369 = tpu.reciprocal %368 {approx = true} : vector<32x1xf32> -> vector<32x1xf32>
    %370 = vector.broadcast %369 : vector<32x1xf32> to vector<32x32xf32>
    %371 = arith.mulf %366, %370 : vector<32x32xf32>
    %cst_171 = arith.constant dense<0.000000e+00> : vector<32x1xf32>
    %372 = tpu.matmul %371, %357, %cst_171 {dimension_numbers = #tpu.dot_dimension_numbers<[1], [0], [0], [1], [0, 0, 1, 1], [], []>} : vector<32x32xf32>, vector<32x1xf32>, vector<32x1xf32> -> vector<32x1xf32>
    %373 = vector.extract_strided_slice %352 {offsets = [0, 0], sizes = [1, 4], strides = [1, 1]} : vector<4x4xf32> to vector<1x4xf32>
    %cst_172 = arith.constant dense<0.000000e+00> : vector<32x4xf32>
    %374 = tpu.matmul %372, %373, %cst_172 {dimension_numbers = #tpu.dot_dimension_numbers<[1], [0], [0], [1], [0, 0, 1, 1], [], []>} : vector<32x1xf32>, vector<1x4xf32>, vector<32x4xf32> -> vector<32x4xf32>
    %375 = vector.broadcast %354 : vector<1x4xf32> to vector<32x4xf32>
    %376 = arith.addf %375, %374 : vector<32x4xf32>
    %377 = vector.extract_strided_slice %348 {offsets = [0, 1], sizes = [32, 1], strides = [1, 1]} : vector<32x4xf32> to vector<32x1xf32>
    %378 = vector.extract_strided_slice %349 {offsets = [0, 1], sizes = [32, 1], strides = [1, 1]} : vector<32x4xf32> to vector<32x1xf32>
    %379 = vector.extract_strided_slice %350 {offsets = [0, 1], sizes = [32, 1], strides = [1, 1]} : vector<32x4xf32> to vector<32x1xf32>
    %cst_173 = arith.constant dense<0.000000e+00> : vector<32x32xf32>
    %380 = tpu.matmul %377, %378, %cst_173 {dimension_numbers = #tpu.dot_dimension_numbers<[1], [1], [0], [0], [0, 0, 1, 0], [], []>} : vector<32x1xf32>, vector<32x1xf32>, vector<32x32xf32> -> vector<32x32xf32>
    %cst_174 = arith.constant 1.000000e+00 : f32
    %381 = vector.broadcast %cst_174 : f32 to vector<32x32xf32>
    %382 = arith.mulf %380, %381 : vector<32x32xf32>
    %383 = arith.addf %382, %10 : vector<32x32xf32>
    %cst_175 = arith.constant dense<0xFF800000> : vector<32xf32>
    %384 = vector.multi_reduction <maximumf>, %383, %cst_175 [1] : vector<32x32xf32> to vector<32xf32>
    %385 = vector.shape_cast %384 : vector<32xf32> to vector<32x1xf32>
    %386 = vector.broadcast %385 : vector<32x1xf32> to vector<32x32xf32>
    %387 = arith.subf %383, %386 : vector<32x32xf32>
    %388 = math.exp %387 : vector<32x32xf32>
    %cst_176 = arith.constant dense<0.000000e+00> : vector<32xf32>
    %389 = vector.multi_reduction <add>, %388, %cst_176 [1] : vector<32x32xf32> to vector<32xf32>
    %390 = vector.shape_cast %389 : vector<32xf32> to vector<32x1xf32>
    %391 = tpu.reciprocal %390 {approx = true} : vector<32x1xf32> -> vector<32x1xf32>
    %392 = vector.broadcast %391 : vector<32x1xf32> to vector<32x32xf32>
    %393 = arith.mulf %388, %392 : vector<32x32xf32>
    %cst_177 = arith.constant dense<0.000000e+00> : vector<32x1xf32>
    %394 = tpu.matmul %393, %379, %cst_177 {dimension_numbers = #tpu.dot_dimension_numbers<[1], [0], [0], [1], [0, 0, 1, 1], [], []>} : vector<32x32xf32>, vector<32x1xf32>, vector<32x1xf32> -> vector<32x1xf32>
    %395 = vector.extract_strided_slice %352 {offsets = [1, 0], sizes = [1, 4], strides = [1, 1]} : vector<4x4xf32> to vector<1x4xf32>
    %cst_178 = arith.constant dense<0.000000e+00> : vector<32x4xf32>
    %396 = tpu.matmul %394, %395, %cst_178 {dimension_numbers = #tpu.dot_dimension_numbers<[1], [0], [0], [1], [0, 0, 1, 1], [], []>} : vector<32x1xf32>, vector<1x4xf32>, vector<32x4xf32> -> vector<32x4xf32>
    %397 = arith.addf %376, %396 : vector<32x4xf32>
    %398 = vector.extract_strided_slice %348 {offsets = [0, 2], sizes = [32, 1], strides = [1, 1]} : vector<32x4xf32> to vector<32x1xf32>
    %399 = vector.extract_strided_slice %349 {offsets = [0, 2], sizes = [32, 1], strides = [1, 1]} : vector<32x4xf32> to vector<32x1xf32>
    %400 = vector.extract_strided_slice %350 {offsets = [0, 2], sizes = [32, 1], strides = [1, 1]} : vector<32x4xf32> to vector<32x1xf32>
    %cst_179 = arith.constant dense<0.000000e+00> : vector<32x32xf32>
    %401 = tpu.matmul %398, %399, %cst_179 {dimension_numbers = #tpu.dot_dimension_numbers<[1], [1], [0], [0], [0, 0, 1, 0], [], []>} : vector<32x1xf32>, vector<32x1xf32>, vector<32x32xf32> -> vector<32x32xf32>
    %cst_180 = arith.constant 1.000000e+00 : f32
    %402 = vector.broadcast %cst_180 : f32 to vector<32x32xf32>
    %403 = arith.mulf %401, %402 : vector<32x32xf32>
    %404 = arith.addf %403, %10 : vector<32x32xf32>
    %cst_181 = arith.constant dense<0xFF800000> : vector<32xf32>
    %405 = vector.multi_reduction <maximumf>, %404, %cst_181 [1] : vector<32x32xf32> to vector<32xf32>
    %406 = vector.shape_cast %405 : vector<32xf32> to vector<32x1xf32>
    %407 = vector.broadcast %406 : vector<32x1xf32> to vector<32x32xf32>
    %408 = arith.subf %404, %407 : vector<32x32xf32>
    %409 = math.exp %408 : vector<32x32xf32>
    %cst_182 = arith.constant dense<0.000000e+00> : vector<32xf32>
    %410 = vector.multi_reduction <add>, %409, %cst_182 [1] : vector<32x32xf32> to vector<32xf32>
    %411 = vector.shape_cast %410 : vector<32xf32> to vector<32x1xf32>
    %412 = tpu.reciprocal %411 {approx = true} : vector<32x1xf32> -> vector<32x1xf32>
    %413 = vector.broadcast %412 : vector<32x1xf32> to vector<32x32xf32>
    %414 = arith.mulf %409, %413 : vector<32x32xf32>
    %cst_183 = arith.constant dense<0.000000e+00> : vector<32x1xf32>
    %415 = tpu.matmul %414, %400, %cst_183 {dimension_numbers = #tpu.dot_dimension_numbers<[1], [0], [0], [1], [0, 0, 1, 1], [], []>} : vector<32x32xf32>, vector<32x1xf32>, vector<32x1xf32> -> vector<32x1xf32>
    %416 = vector.extract_strided_slice %352 {offsets = [2, 0], sizes = [1, 4], strides = [1, 1]} : vector<4x4xf32> to vector<1x4xf32>
    %cst_184 = arith.constant dense<0.000000e+00> : vector<32x4xf32>
    %417 = tpu.matmul %415, %416, %cst_184 {dimension_numbers = #tpu.dot_dimension_numbers<[1], [0], [0], [1], [0, 0, 1, 1], [], []>} : vector<32x1xf32>, vector<1x4xf32>, vector<32x4xf32> -> vector<32x4xf32>
    %418 = arith.addf %397, %417 : vector<32x4xf32>
    %419 = vector.extract_strided_slice %348 {offsets = [0, 3], sizes = [32, 1], strides = [1, 1]} : vector<32x4xf32> to vector<32x1xf32>
    %420 = vector.extract_strided_slice %349 {offsets = [0, 3], sizes = [32, 1], strides = [1, 1]} : vector<32x4xf32> to vector<32x1xf32>
    %421 = vector.extract_strided_slice %350 {offsets = [0, 3], sizes = [32, 1], strides = [1, 1]} : vector<32x4xf32> to vector<32x1xf32>
    %cst_185 = arith.constant dense<0.000000e+00> : vector<32x32xf32>
    %422 = tpu.matmul %419, %420, %cst_185 {dimension_numbers = #tpu.dot_dimension_numbers<[1], [1], [0], [0], [0, 0, 1, 0], [], []>} : vector<32x1xf32>, vector<32x1xf32>, vector<32x32xf32> -> vector<32x32xf32>
    %cst_186 = arith.constant 1.000000e+00 : f32
    %423 = vector.broadcast %cst_186 : f32 to vector<32x32xf32>
    %424 = arith.mulf %422, %423 : vector<32x32xf32>
    %425 = arith.addf %424, %10 : vector<32x32xf32>
    %cst_187 = arith.constant dense<0xFF800000> : vector<32xf32>
    %426 = vector.multi_reduction <maximumf>, %425, %cst_187 [1] : vector<32x32xf32> to vector<32xf32>
    %427 = vector.shape_cast %426 : vector<32xf32> to vector<32x1xf32>
    %428 = vector.broadcast %427 : vector<32x1xf32> to vector<32x32xf32>
    %429 = arith.subf %425, %428 : vector<32x32xf32>
    %430 = math.exp %429 : vector<32x32xf32>
    %cst_188 = arith.constant dense<0.000000e+00> : vector<32xf32>
    %431 = vector.multi_reduction <add>, %430, %cst_188 [1] : vector<32x32xf32> to vector<32xf32>
    %432 = vector.shape_cast %431 : vector<32xf32> to vector<32x1xf32>
    %433 = tpu.reciprocal %432 {approx = true} : vector<32x1xf32> -> vector<32x1xf32>
    %434 = vector.broadcast %433 : vector<32x1xf32> to vector<32x32xf32>
    %435 = arith.mulf %430, %434 : vector<32x32xf32>
    %cst_189 = arith.constant dense<0.000000e+00> : vector<32x1xf32>
    %436 = tpu.matmul %435, %421, %cst_189 {dimension_numbers = #tpu.dot_dimension_numbers<[1], [0], [0], [1], [0, 0, 1, 1], [], []>} : vector<32x32xf32>, vector<32x1xf32>, vector<32x1xf32> -> vector<32x1xf32>
    %437 = vector.extract_strided_slice %352 {offsets = [3, 0], sizes = [1, 4], strides = [1, 1]} : vector<4x4xf32> to vector<1x4xf32>
    %cst_190 = arith.constant dense<0.000000e+00> : vector<32x4xf32>
    %438 = tpu.matmul %436, %437, %cst_190 {dimension_numbers = #tpu.dot_dimension_numbers<[1], [0], [0], [1], [0, 0, 1, 1], [], []>} : vector<32x1xf32>, vector<1x4xf32>, vector<32x4xf32> -> vector<32x4xf32>
    %439 = arith.addf %418, %438 : vector<32x4xf32>
    %440 = arith.addf %340, %439 : vector<32x4xf32>
    %c2_191 = arith.constant 2 : index
    %c0_192 = arith.constant 0 : index
    %c0_193 = arith.constant 0 : index
    %441 = vector.load %arg10[%c2_191, %c0_192, %c0_193] : memref<3x1x4xf32, #tpu.memory_space<vmem>>, vector<1x1x4xf32>
    %442 = vector.shape_cast %441 : vector<1x1x4xf32> to vector<1x4xf32>
    %c2_194 = arith.constant 2 : index
    %c0_195 = arith.constant 0 : index
    %c0_196 = arith.constant 0 : index
    %443 = vector.load %arg11[%c2_194, %c0_195, %c0_196] : memref<3x1x4xf32, #tpu.memory_space<vmem>>, vector<1x1x4xf32>
    %444 = vector.shape_cast %443 : vector<1x1x4xf32> to vector<1x4xf32>
    %cst_197 = arith.constant dense<0.000000e+00> : vector<32xf32>
    %445 = vector.multi_reduction <add>, %440, %cst_197 [1] : vector<32x4xf32> to vector<32xf32>
    %446 = vector.shape_cast %445 : vector<32xf32> to vector<32x1xf32>
    %cst_198 = arith.constant 4.000000e+00 : f32
    %447 = vector.broadcast %cst_198 : f32 to vector<32x1xf32>
    %448 = arith.divf %446, %447 : vector<32x1xf32>
    %449 = vector.broadcast %448 : vector<32x1xf32> to vector<32x4xf32>
    %450 = arith.subf %440, %449 : vector<32x4xf32>
    %451 = arith.mulf %450, %450 : vector<32x4xf32>
    %cst_199 = arith.constant dense<0.000000e+00> : vector<32xf32>
    %452 = vector.multi_reduction <add>, %451, %cst_199 [1] : vector<32x4xf32> to vector<32xf32>
    %453 = vector.shape_cast %452 : vector<32xf32> to vector<32x1xf32>
    %cst_200 = arith.constant 4.000000e+00 : f32
    %454 = vector.broadcast %cst_200 : f32 to vector<32x1xf32>
    %455 = arith.divf %453, %454 : vector<32x1xf32>
    %cst_201 = arith.constant 9.99999974E-6 : f32
    %456 = vector.broadcast %cst_201 : f32 to vector<32x1xf32>
    %457 = arith.addf %455, %456 : vector<32x1xf32>
    %458 = math.rsqrt %457 : vector<32x1xf32>
    %459 = vector.broadcast %458 : vector<32x1xf32> to vector<32x4xf32>
    %460 = arith.mulf %450, %459 : vector<32x4xf32>
    %461 = vector.broadcast %442 : vector<1x4xf32> to vector<32x4xf32>
    %462 = arith.mulf %460, %461 : vector<32x4xf32>
    %463 = vector.broadcast %444 : vector<1x4xf32> to vector<32x4xf32>
    %464 = arith.addf %462, %463 : vector<32x4xf32>
    %c2_202 = arith.constant 2 : index
    %c0_203 = arith.constant 0 : index
    %c0_204 = arith.constant 0 : index
    %465 = vector.load %arg12[%c2_202, %c0_203, %c0_204] : memref<3x4x512xf32, #tpu.memory_space<vmem>>, vector<1x4x512xf32>
    %466 = vector.shape_cast %465 : vector<1x4x512xf32> to vector<4x512xf32>
    %cst_205 = arith.constant dense<0.000000e+00> : vector<32x512xf32>
    %467 = tpu.matmul %464, %466, %cst_205 {dimension_numbers = #tpu.dot_dimension_numbers<[1], [0], [0], [1], [0, 0, 1, 1], [], []>} : vector<32x4xf32>, vector<4x512xf32>, vector<32x512xf32> -> vector<32x512xf32>
    %c2_206 = arith.constant 2 : index
    %c0_207 = arith.constant 0 : index
    %c0_208 = arith.constant 0 : index
    %468 = vector.load %arg13[%c2_206, %c0_207, %c0_208] : memref<3x1x512xf32, #tpu.memory_space<vmem>>, vector<1x1x512xf32>
    %469 = vector.shape_cast %468 : vector<1x1x512xf32> to vector<1x512xf32>
    %470 = vector.broadcast %469 : vector<1x512xf32> to vector<32x512xf32>
    %471 = arith.addf %467, %470 : vector<32x512xf32>
    %cst_209 = arith.constant 0.000000e+00 : f32
    %472 = vector.broadcast %cst_209 : f32 to vector<32x512xf32>
    %473 = arith.maximumf %471, %472 : vector<32x512xf32>
    %c2_210 = arith.constant 2 : index
    %c0_211 = arith.constant 0 : index
    %c0_212 = arith.constant 0 : index
    %474 = vector.load %arg14[%c2_210, %c0_211, %c0_212] : memref<3x512x4xf32, #tpu.memory_space<vmem>>, vector<1x512x4xf32>
    %475 = vector.shape_cast %474 : vector<1x512x4xf32> to vector<512x4xf32>
    %cst_213 = arith.constant dense<0.000000e+00> : vector<32x4xf32>
    %476 = tpu.matmul %473, %475, %cst_213 {dimension_numbers = #tpu.dot_dimension_numbers<[1], [0], [0], [1], [0, 0, 1, 1], [], []>} : vector<32x512xf32>, vector<512x4xf32>, vector<32x4xf32> -> vector<32x4xf32>
    %c2_214 = arith.constant 2 : index
    %c0_215 = arith.constant 0 : index
    %c0_216 = arith.constant 0 : index
    %477 = vector.load %arg15[%c2_214, %c0_215, %c0_216] : memref<3x1x4xf32, #tpu.memory_space<vmem>>, vector<1x1x4xf32>
    %478 = vector.shape_cast %477 : vector<1x1x4xf32> to vector<1x4xf32>
    %479 = vector.broadcast %478 : vector<1x4xf32> to vector<32x4xf32>
    %480 = arith.addf %476, %479 : vector<32x4xf32>
    %481 = arith.addf %464, %480 : vector<32x4xf32>
    %c2_217 = arith.constant 2 : index
    %c0_218 = arith.constant 0 : index
    %c0_219 = arith.constant 0 : index
    %482 = vector.load %arg16[%c2_217, %c0_218, %c0_219] : memref<3x1x4xf32, #tpu.memory_space<vmem>>, vector<1x1x4xf32>
    %483 = vector.shape_cast %482 : vector<1x1x4xf32> to vector<1x4xf32>
    %c2_220 = arith.constant 2 : index
    %c0_221 = arith.constant 0 : index
    %c0_222 = arith.constant 0 : index
    %484 = vector.load %arg17[%c2_220, %c0_221, %c0_222] : memref<3x1x4xf32, #tpu.memory_space<vmem>>, vector<1x1x4xf32>
    %485 = vector.shape_cast %484 : vector<1x1x4xf32> to vector<1x4xf32>
    %cst_223 = arith.constant dense<0.000000e+00> : vector<32xf32>
    %486 = vector.multi_reduction <add>, %481, %cst_223 [1] : vector<32x4xf32> to vector<32xf32>
    %487 = vector.shape_cast %486 : vector<32xf32> to vector<32x1xf32>
    %cst_224 = arith.constant 4.000000e+00 : f32
    %488 = vector.broadcast %cst_224 : f32 to vector<32x1xf32>
    %489 = arith.divf %487, %488 : vector<32x1xf32>
    %490 = vector.broadcast %489 : vector<32x1xf32> to vector<32x4xf32>
    %491 = arith.subf %481, %490 : vector<32x4xf32>
    %492 = arith.mulf %491, %491 : vector<32x4xf32>
    %cst_225 = arith.constant dense<0.000000e+00> : vector<32xf32>
    %493 = vector.multi_reduction <add>, %492, %cst_225 [1] : vector<32x4xf32> to vector<32xf32>
    %494 = vector.shape_cast %493 : vector<32xf32> to vector<32x1xf32>
    %cst_226 = arith.constant 4.000000e+00 : f32
    %495 = vector.broadcast %cst_226 : f32 to vector<32x1xf32>
    %496 = arith.divf %494, %495 : vector<32x1xf32>
    %cst_227 = arith.constant 9.99999974E-6 : f32
    %497 = vector.broadcast %cst_227 : f32 to vector<32x1xf32>
    %498 = arith.addf %496, %497 : vector<32x1xf32>
    %499 = math.rsqrt %498 : vector<32x1xf32>
    %500 = vector.broadcast %499 : vector<32x1xf32> to vector<32x4xf32>
    %501 = arith.mulf %491, %500 : vector<32x4xf32>
    %502 = vector.broadcast %483 : vector<1x4xf32> to vector<32x4xf32>
    %503 = arith.mulf %501, %502 : vector<32x4xf32>
    %504 = vector.broadcast %485 : vector<1x4xf32> to vector<32x4xf32>
    %505 = arith.addf %503, %504 : vector<32x4xf32>
    %506 = vector.extract_strided_slice %505 {offsets = [30, 0], sizes = [2, 4], strides = [1, 1]} : vector<32x4xf32> to vector<2x4xf32>
    %c0_228 = arith.constant 0 : index
    %c0_229 = arith.constant 0 : index
    %507 = vector.load %arg18[%c0_228, %c0_229] : memref<4x6xf32, #tpu.memory_space<vmem>>, vector<4x6xf32>
    %cst_230 = arith.constant dense<0.000000e+00> : vector<2x6xf32>
    %508 = tpu.matmul %506, %507, %cst_230 {dimension_numbers = #tpu.dot_dimension_numbers<[1], [0], [0], [1], [0, 0, 1, 1], [], []>} : vector<2x4xf32>, vector<4x6xf32>, vector<2x6xf32> -> vector<2x6xf32>
    %c0_231 = arith.constant 0 : index
    %c0_232 = arith.constant 0 : index
    %509 = vector.load %arg19[%c0_231, %c0_232] : memref<1x6xf32, #tpu.memory_space<vmem>>, vector<1x6xf32>
    %510 = vector.broadcast %509 : vector<1x6xf32> to vector<2x6xf32>
    %511 = arith.addf %508, %510 : vector<2x6xf32>
    %c0_233 = arith.constant 0 : index
    %c0_234 = arith.constant 0 : index
    %512 = vector.load %arg20[%c0_233, %c0_234] : memref<2x6xf32, #tpu.memory_space<vmem>>, vector<2x6xf32>
    tpu.vector_store %arg20[%c0_233, %c0_234], %511 {strides = array<i32>} : memref<2x6xf32, #tpu.memory_space<vmem>>, vector<2x6xf32>,
    return
  }
  func.func @transform_0(%arg0: i32) -> (i32, i32) {
    %c0_i32 = arith.constant 0 : i32
    %c0_i32_0 = arith.constant 0 : i32
    %c0_i32_1 = arith.constant 0 : i32
    return %c0_i32, %c0_i32_0 : i32, i32
  }
  func.func @transform_1(%arg0: i32) -> (i32, i32) {
    %c0_i32 = arith.constant 0 : i32
    %c0_i32_0 = arith.constant 0 : i32
    %c0_i32_1 = arith.constant 0 : i32
    return %c0_i32, %c0_i32_0 : i32, i32
  }
  func.func @transform_2(%arg0: i32) -> (i32, i32) {
    %c0_i32 = arith.constant 0 : i32
    %c0_i32_0 = arith.constant 0 : i32
    %c0_i32_1 = arith.constant 0 : i32
    return %c0_i32, %c0_i32_0 : i32, i32
  }
  func.func @transform_3(%arg0: i32) -> (i32, i32) {
    %c0_i32 = arith.constant 0 : i32
    %c0_i32_0 = arith.constant 0 : i32
    %c0_i32_1 = arith.constant 0 : i32
    return %c0_i32, %c0_i32_0 : i32, i32
  }
  func.func @transform_4(%arg0: i32) -> (i32, i32) {
    %c0_i32 = arith.constant 0 : i32
    %c0_i32_0 = arith.constant 0 : i32
    %c0_i32_1 = arith.constant 0 : i32
    return %c0_i32, %c0_i32_0 : i32, i32
  }
  func.func @transform_5(%arg0: i32) -> (i32, i32, i32) {
    %c0_i32 = arith.constant 0 : i32
    %c0_i32_0 = arith.constant 0 : i32
    %c0_i32_1 = arith.constant 0 : i32
    %c0_i32_2 = arith.constant 0 : i32
    return %c0_i32, %c0_i32_0, %c0_i32_1 : i32, i32, i32
  }
  func.func @transform_6(%arg0: i32) -> (i32, i32, i32) {
    %c0_i32 = arith.constant 0 : i32
    %c0_i32_0 = arith.constant 0 : i32
    %c0_i32_1 = arith.constant 0 : i32
    %c0_i32_2 = arith.constant 0 : i32
    return %c0_i32, %c0_i32_0, %c0_i32_1 : i32, i32, i32
  }
  func.func @transform_7(%arg0: i32) -> (i32, i32, i32) {
    %c0_i32 = arith.constant 0 : i32
    %c0_i32_0 = arith.constant 0 : i32
    %c0_i32_1 = arith.constant 0 : i32
    %c0_i32_2 = arith.constant 0 : i32
    return %c0_i32, %c0_i32_0, %c0_i32_1 : i32, i32, i32
  }
  func.func @transform_8(%arg0: i32) -> (i32, i32, i32) {
    %c0_i32 = arith.constant 0 : i32
    %c0_i32_0 = arith.constant 0 : i32
    %c0_i32_1 = arith.constant 0 : i32
    %c0_i32_2 = arith.constant 0 : i32
    return %c0_i32, %c0_i32_0, %c0_i32_1 : i32, i32, i32
  }
  func.func @transform_9(%arg0: i32) -> (i32, i32, i32) {
    %c0_i32 = arith.constant 0 : i32
    %c0_i32_0 = arith.constant 0 : i32
    %c0_i32_1 = arith.constant 0 : i32
    %c0_i32_2 = arith.constant 0 : i32
    return %c0_i32, %c0_i32_0, %c0_i32_1 : i32, i32, i32
  }
  func.func @transform_10(%arg0: i32) -> (i32, i32, i32) {
    %c0_i32 = arith.constant 0 : i32
    %c0_i32_0 = arith.constant 0 : i32
    %c0_i32_1 = arith.constant 0 : i32
    %c0_i32_2 = arith.constant 0 : i32
    return %c0_i32, %c0_i32_0, %c0_i32_1 : i32, i32, i32
  }
  func.func @transform_11(%arg0: i32) -> (i32, i32, i32) {
    %c0_i32 = arith.constant 0 : i32
    %c0_i32_0 = arith.constant 0 : i32
    %c0_i32_1 = arith.constant 0 : i32
    %c0_i32_2 = arith.constant 0 : i32
    return %c0_i32, %c0_i32_0, %c0_i32_1 : i32, i32, i32
  }
  func.func @transform_12(%arg0: i32) -> (i32, i32, i32) {
    %c0_i32 = arith.constant 0 : i32
    %c0_i32_0 = arith.constant 0 : i32
    %c0_i32_1 = arith.constant 0 : i32
    %c0_i32_2 = arith.constant 0 : i32
    return %c0_i32, %c0_i32_0, %c0_i32_1 : i32, i32, i32
  }
  func.func @transform_13(%arg0: i32) -> (i32, i32, i32) {
    %c0_i32 = arith.constant 0 : i32
    %c0_i32_0 = arith.constant 0 : i32
    %c0_i32_1 = arith.constant 0 : i32
    %c0_i32_2 = arith.constant 0 : i32
    return %c0_i32, %c0_i32_0, %c0_i32_1 : i32, i32, i32
  }
  func.func @transform_14(%arg0: i32) -> (i32, i32, i32) {
    %c0_i32 = arith.constant 0 : i32
    %c0_i32_0 = arith.constant 0 : i32
    %c0_i32_1 = arith.constant 0 : i32
    %c0_i32_2 = arith.constant 0 : i32
    return %c0_i32, %c0_i32_0, %c0_i32_1 : i32, i32, i32
  }
  func.func @transform_15(%arg0: i32) -> (i32, i32, i32) {
    %c0_i32 = arith.constant 0 : i32
    %c0_i32_0 = arith.constant 0 : i32
    %c0_i32_1 = arith.constant 0 : i32
    %c0_i32_2 = arith.constant 0 : i32
    return %c0_i32, %c0_i32_0, %c0_i32_1 : i32, i32, i32
  }
  func.func @transform_16(%arg0: i32) -> (i32, i32, i32) {
    %c0_i32 = arith.constant 0 : i32
    %c0_i32_0 = arith.constant 0 : i32
    %c0_i32_1 = arith.constant 0 : i32
    %c0_i32_2 = arith.constant 0 : i32
    return %c0_i32, %c0_i32_0, %c0_i32_1 : i32, i32, i32
  }
  func.func @transform_17(%arg0: i32) -> (i32, i32) {
    %c0_i32 = arith.constant 0 : i32
    %c0_i32_0 = arith.constant 0 : i32
    %c0_i32_1 = arith.constant 0 : i32
    return %c0_i32, %c0_i32_0 : i32, i32
  }
  func.func @transform_18(%arg0: i32) -> (i32, i32) {
    %c0_i32 = arith.constant 0 : i32
    %c0_i32_0 = arith.constant 0 : i32
    %c0_i32_1 = arith.constant 0 : i32
    return %c0_i32, %c0_i32_0 : i32, i32
  }
  func.func @transform_19(%arg0: i32) -> (i32, i32) {
    %c0_i32 = arith.constant 0 : i32
    %c0_i32_0 = arith.constant 0 : i32
    %c0_i32_1 = arith.constant 0 : i32
    return %c0_i32, %c0_i32_0 : i32, i32
  }
}

</mosaic_0001>

<llo_original>
// kernel: tpu_custom_call.1
$region0: #{tpu_custom_call.1}
  #allocation0 [shape = 'u32[]', space=smem, size = 0x4, offset = 0x4, fixed_abs, tag = 'smem constant byte address 0x4 - core index']
  #allocation1 [shape = 'u32[144,128]{1,0:T(1,128)}', space=vmem, size = 0x12000, scoped, tag = 'internal scratch']
  %s0 = inlined_call_operand.vmem [shape: f32[32,1], index: 0, kind: input, shape index: {}]
  %s1 = inlined_call_operand.vmem [shape: f32[32,4], index: 1, kind: input, shape index: {}]
  %s2 = inlined_call_operand.vmem [shape: f32[32,32], index: 2, kind: input, shape index: {}]
  %s3 = inlined_call_operand.vmem [shape: f32[1,4], index: 3, kind: input, shape index: {}]
  %s4 = inlined_call_operand.vmem [shape: f32[1,4], index: 4, kind: input, shape index: {}]
  %s5 = inlined_call_operand.vmem [shape: f32[3,4,12], index: 5, kind: input, shape index: {}]
  %s6 = inlined_call_operand.vmem [shape: f32[3,1,12], index: 6, kind: input, shape index: {}]
  %s7 = inlined_call_operand.vmem [shape: f32[3,4,4], index: 7, kind: input, shape index: {}]
  %s8 = inlined_call_operand.vmem [shape: f32[3,1,4], index: 8, kind: input, shape index: {}]
  %s9 = inlined_call_operand.vmem [shape: f32[3,1,4], index: 9, kind: input, shape index: {}]
  %s10 = inlined_call_operand.vmem [shape: f32[3,1,4], index: 10, kind: input, shape index: {}]
  %s11 = inlined_call_operand.vmem [shape: f32[3,4,512], index: 11, kind: input, shape index: {}]
  %s12 = inlined_call_operand.vmem [shape: f32[3,1,512], index: 12, kind: input, shape index: {}]
  %s13 = inlined_call_operand.vmem [shape: f32[3,512,4], index: 13, kind: input, shape index: {}]
  %s14 = inlined_call_operand.vmem [shape: f32[3,1,4], index: 14, kind: input, shape index: {}]
  %s15 = inlined_call_operand.vmem [shape: f32[3,1,4], index: 15, kind: input, shape index: {}]
  %s16 = inlined_call_operand.vmem [shape: f32[3,1,4], index: 16, kind: input, shape index: {}]
  %s17 = inlined_call_operand.vmem [shape: f32[4,6], index: 17, kind: input, shape index: {}]
  %s18 = inlined_call_operand.vmem [shape: f32[1,6], index: 18, kind: input, shape index: {}]
  %s19 = inlined_call_operand.hbm [shape: f32[2,6], index: 19, kind: output, shape index: {}]
  %s20 = sld [smem:[#allocation0]]
  $region86: #{tpu_custom_call.1} parent=0
    _
  %s22 = ssub.s32 1, %s20
  %s23 = scalar_select 0, %s22, %s20
  $region1: #{tpu_custom_call.1} parent=0
    #allocation2 [shape = 'u8[1024]{0}', space=vmem, size = 0x400, scoped, tag = 'output window, operand 0, single buffered']
    #allocation3 [shape = 's32[1]{0}', space=sflag, size = 0x4, scoped, tag = 'scoped memory for tpu_custom_call.1']
    %24 = vsyncpa [#allocation3], 0
    // Predicated region
    $region2: #{tpu_custom_call.1} parent=1 // pred_check
      _
    $region3: #{tpu_custom_call.1} parent=1 // pred_check_branch
      %26 = sbr.rel (0) target = $region5
    $region4: #{tpu_custom_call.1} parent=1 // pred_region
      _
    $region5: #{tpu_custom_call.1} parent=1 // pred_fallthru
      _
    // Predicated region
    $region6: #{tpu_custom_call.1} parent=1 // pred_check
      _
    $region7: #{tpu_custom_call.1} parent=1 // pred_check_branch
      %28 = sbr.rel (0) target = $region9
    $region8: #{tpu_custom_call.1} parent=1 // pred_region
      _
    $region9: #{tpu_custom_call.1} parent=1 // pred_fallthru
      _
    // Predicated region
    $region10: #{tpu_custom_call.1} parent=1 // pred_check
      _
    $region11: #{tpu_custom_call.1} parent=1 // pred_check_branch
      %30 = sbr.rel (0) target = $region13
    $region12: #{tpu_custom_call.1} parent=1 // pred_region
      _
    $region13: #{tpu_custom_call.1} parent=1 // pred_fallthru
      _
    // Predicated region
    $region14: #{tpu_custom_call.1} parent=1 // pred_check
      _
    $region15: #{tpu_custom_call.1} parent=1 // pred_check_branch
      %32 = sbr.rel (0) target = $region17
    $region16: #{tpu_custom_call.1} parent=1 // pred_region
      _
    $region17: #{tpu_custom_call.1} parent=1 // pred_fallthru
      _
    // Predicated region
    $region18: #{tpu_custom_call.1} parent=1 // pred_check
      _
    $region19: #{tpu_custom_call.1} parent=1 // pred_check_branch
      %34 = sbr.rel (0) target = $region21
    $region20: #{tpu_custom_call.1} parent=1 // pred_region
      _
    $region21: #{tpu_custom_call.1} parent=1 // pred_fallthru
      _
    // Predicated region
    $region22: #{tpu_custom_call.1} parent=1 // pred_check
      _
    $region23: #{tpu_custom_call.1} parent=1 // pred_check_branch
      %36 = sbr.rel (0) target = $region25
    $region24: #{tpu_custom_call.1} parent=1 // pred_region
      _
    $region25: #{tpu_custom_call.1} parent=1 // pred_fallthru
      _
    // Predicated region
    $region26: #{tpu_custom_call.1} parent=1 // pred_check
      _
    $region27: #{tpu_custom_call.1} parent=1 // pred_check_branch
      %38 = sbr.rel (0) target = $region29
    $region28: #{tpu_custom_call.1} parent=1 // pred_region
      _
    $region29: #{tpu_custom_call.1} parent=1 // pred_fallthru
      _
    // Predicated region
    $region30: #{tpu_custom_call.1} parent=1 // pred_check
      _
    $region31: #{tpu_custom_call.1} parent=1 // pred_check_branch
      %40 = sbr.rel (0) target = $region33
    $region32: #{tpu_custom_call.1} parent=1 // pred_region
      _
    $region33: #{tpu_custom_call.1} parent=1 // pred_fallthru
      _
    // Predicated region
    $region34: #{tpu_custom_call.1} parent=1 // pred_check
      _
    $region35: #{tpu_custom_call.1} parent=1 // pred_check_branch
      %42 = sbr.rel (0) target = $region37
    $region36: #{tpu_custom_call.1} parent=1 // pred_region
      _
    $region37: #{tpu_custom_call.1} parent=1 // pred_fallthru
      _
    // Predicated region
    $region38: #{tpu_custom_call.1} parent=1 // pred_check
      _
    $region39: #{tpu_custom_call.1} parent=1 // pred_check_branch
      %44 = sbr.rel (0) target = $region41
    $region40: #{tpu_custom_call.1} parent=1 // pred_region
      _
    $region41: #{tpu_custom_call.1} parent=1 // pred_fallthru
      _
    // Predicated region
    $region42: #{tpu_custom_call.1} parent=1 // pred_check
      _
    $region43: #{tpu_custom_call.1} parent=1 // pred_check_branch
      %46 = sbr.rel (0) target = $region45
    $region44: #{tpu_custom_call.1} parent=1 // pred_region
      _
    $region45: #{tpu_custom_call.1} parent=1 // pred_fallthru
      _
    // Predicated region
    $region46: #{tpu_custom_call.1} parent=1 // pred_check
      _
    $region47: #{tpu_custom_call.1} parent=1 // pred_check_branch
      %48 = sbr.rel (0) target = $region49
    $region48: #{tpu_custom_call.1} parent=1 // pred_region
      _
    $region49: #{tpu_custom_call.1} parent=1 // pred_fallthru
      _
    // Predicated region
    $region50: #{tpu_custom_call.1} parent=1 // pred_check
      _
    $region51: #{tpu_custom_call.1} parent=1 // pred_check_branch
      %50 = sbr.rel (0) target = $region53
    $region52: #{tpu_custom_call.1} parent=1 // pred_region
      _
    $region53: #{tpu_custom_call.1} parent=1 // pred_fallthru
      _
    // Predicated region
    $region54: #{tpu_custom_call.1} parent=1 // pred_check
      _
    $region55: #{tpu_custom_call.1} parent=1 // pred_check_branch
      %52 = sbr.rel (0) target = $region57
    $region56: #{tpu_custom_call.1} parent=1 // pred_region
      _
    $region57: #{tpu_custom_call.1} parent=1 // pred_fallthru
      _
    // Predicated region
    $region58: #{tpu_custom_call.1} parent=1 // pred_check
      _
    $region59: #{tpu_custom_call.1} parent=1 // pred_check_branch
      %54 = sbr.rel (0) target = $region61
    $region60: #{tpu_custom_call.1} parent=1 // pred_region
      _
    $region61: #{tpu_custom_call.1} parent=1 // pred_fallthru
      _
    // Predicated region
    $region62: #{tpu_custom_call.1} parent=1 // pred_check
      _
    $region63: #{tpu_custom_call.1} parent=1 // pred_check_branch
      %56 = sbr.rel (0) target = $region65
    $region64: #{tpu_custom_call.1} parent=1 // pred_region
      _
    $region65: #{tpu_custom_call.1} parent=1 // pred_fallthru
      _
    // Predicated region
    $region66: #{tpu_custom_call.1} parent=1 // pred_check
      _
    $region67: #{tpu_custom_call.1} parent=1 // pred_check_branch
      %58 = sbr.rel (0) target = $region69
    $region68: #{tpu_custom_call.1} parent=1 // pred_region
      _
    $region69: #{tpu_custom_call.1} parent=1 // pred_fallthru
      _
    // Predicated region
    $region70: #{tpu_custom_call.1} parent=1 // pred_check
      _
    $region71: #{tpu_custom_call.1} parent=1 // pred_check_branch
      %60 = sbr.rel (0) target = $region73
    $region72: #{tpu_custom_call.1} parent=1 // pred_region
      _
    $region73: #{tpu_custom_call.1} parent=1 // pred_fallthru
      _
    // Predicated region
    $region74: #{tpu_custom_call.1} parent=1 // pred_check
      _
    $region75: #{tpu_custom_call.1} parent=1 // pred_check_branch
      %62 = sbr.rel (0) target = $region77
    $region76: #{tpu_custom_call.1} parent=1 // pred_region
      _
    $region77: #{tpu_custom_call.1} parent=1 // pred_fallthru
      _
    %v63 = vld [vmem:[%s0] sm:$0xff]
    %v64 = vld [vmem:[%s0 + $0x8] sm:$0xff]
    %v65 = vld [vmem:[%s0 + $0x10] sm:$0xff]
    %v66 = vld [vmem:[%s0 + $0x18] sm:$0xff]
    %v67 = vld [vmem:[%s3] sm:$0x1]
    %69 = vset.pattern.permute.xlu0 0
    %70 = vperm.xlu0 %69, %v63
    %v71 = vpop.permute.xlu0 %70
    %74 = vset.pattern.permute.xlu0 0
    %75 = vperm.xlu0 %74, %v64
    %v76 = vpop.permute.xlu0 %75
    %79 = vset.pattern.permute.xlu0 0
    %80 = vperm.xlu0 %79, %v65
    %v81 = vpop.permute.xlu0 %80
    %84 = vset.pattern.permute.xlu0 0
    %85 = vperm.xlu0 %84, %v66
    %v86 = vpop.permute.xlu0 %85
    %v89 = vlaneseq
    %v90 = vshrl.u32 %v89, 7
    %v91 = vsub.s32 0, %v90
    %v92 = vrot.slane %v67, %v91
    %v94 = vmul.f32 %v71, %v92
    %v95 = vmul.f32 %v76, %v92
    %v96 = vmul.f32 %v81, %v92
    %v97 = vmul.f32 %v86, %v92
    %v98 = vld [vmem:[%s4] sm:$0x1]
    %v100 = vlaneseq
    %v101 = vshrl.u32 %v100, 7
    %v102 = vsub.s32 0, %v101
    %v103 = vrot.slane %v98, %v102
    %v105 = vadd.f32 %v94, %v103
    %v106 = vadd.f32 %v95, %v103
    %v107 = vadd.f32 %v96, %v103
    %v108 = vadd.f32 %v97, %v103
    %v109 = vld [vmem:[%s1] sm:$0xff]
    %v110 = vld [vmem:[%s1 + $0x8] sm:$0xff]
    %v111 = vld [vmem:[%s1 + $0x10] sm:$0xff]
    %v112 = vld [vmem:[%s1 + $0x18] sm:$0xff]
    %v113 = vadd.f32 %v105, %v109
    %v114 = vadd.f32 %v106, %v110
    %v115 = vadd.f32 %v107, %v111
    %v116 = vadd.f32 %v108, %v112
    %v117 = vld [vmem:[%s2] sm:$0xff]
    %v118 = vld [vmem:[%s2 + $0x8] sm:$0xff]
    %v119 = vld [vmem:[%s2 + $0x10] sm:$0xff]
    %v120 = vld [vmem:[%s2 + $0x18] sm:$0xff]
    %v121 = vld [vmem:[%s5] sm:$0xf]
    %v122 = vld [vmem:[%s6] sm:$0x1]
    %v124 = vlaneseq
    %v125 = vshrl.u32 %v124, 7
    %v126 = vsub.s32 0, %v125
    %v127 = vrot.slane %v122, %v126
    %vm129 = vcmask 31744
    %v131 = vsel %vm129, %v113, 0
    %v134 = vsel %vm129, %v114, 0
    %v137 = vsel %vm129, %v115, 0
    %v140 = vsel %vm129, %v116, 0
    %vm142 = vcmask 1043456
    %v144 = vsel %vm142, %v121, 0
    %146 = vmatprep.subr.mxu0 0.0
    %147 = vmatpush1.msra.mxu0 0.0
    %148 = vmatprep.subr.mxu0 0.0
    %149 = vmatpush1.msra.mxu0 0.0
    %150 = vmatprep.subr.mxu0 0.0
    %151 = vmatpush1.msra.mxu0 0.0
    %152 = vmatprep.subr.mxu0 0.0
    %153 = vmatpush1.msra.mxu0 0.0
    %154 = vmatprep.subr.mxu0 0.0
    %155 = vmatpush1.msra.mxu0 0.0
    %156 = vmatprep.subr.mxu0 0.0
    %157 = vmatpush1.msra.mxu0 0.0
    %158 = vmatprep.subr.mxu0 0.0
    %159 = vmatpush1.msra.mxu0 0.0
    %160 = vmatprep.subr.mxu0 0.0
    %161 = vmatpush1.msra.mxu0 0.0
    %162 = vmatprep.subr.mxu0 0.0
    %163 = vmatpush1.msra.mxu0 0.0
    %164 = vmatprep.subr.mxu0 0.0
    %165 = vmatpush1.msra.mxu0 0.0
    %166 = vmatprep.subr.mxu0 0.0
    %167 = vmatpush1.msra.mxu0 0.0
    %168 = vmatprep.subr.mxu0 0.0
    %169 = vmatpush1.msra.mxu0 0.0
    %170 = vmatprep.subr.mxu0 0.0
    %171 = vmatpush1.msra.mxu0 0.0
    %172 = vmatprep.subr.mxu0 0.0
    %173 = vmatpush1.msra.mxu0 0.0
    %174 = vmatprep.subr.mxu0 0.0
    %175 = vmatpush1.msra.mxu0 0.0
    %176 = vmatprep.subr.mxu0 0.0
    %177 = vmatpush1.msra.mxu0 %v144
    %178 = vmatprep.subr.mxu0 0.0
    %179 = vmatpush2.msra.mxu0 0.0
    %180 = vmatprep.subr.mxu0 0.0
    %181 = vmatpush2.msra.mxu0 0.0
    %182 = vmatprep.subr.mxu0 0.0
    %183 = vmatpush2.msra.mxu0 0.0
    %184 = vmatprep.subr.mxu0 0.0
    %185 = vmatpush2.msra.mxu0 0.0
    %186 = vmatprep.subr.mxu0 0.0
    %187 = vmatpush2.msra.mxu0 0.0
    %188 = vmatprep.subr.mxu0 0.0
    %189 = vmatpush2.msra.mxu0 0.0
    %190 = vmatprep.subr.mxu0 0.0
    %191 = vmatpush2.msra.mxu0 0.0
    %192 = vmatprep.subr.mxu0 0.0
    %193 = vmatpush2.msra.mxu0 0.0
    %194 = vmatprep.subr.mxu0 0.0
    %195 = vmatpush2.msra.mxu0 0.0
    %196 = vmatprep.subr.mxu0 0.0
    %197 = vmatpush2.msra.mxu0 0.0
    %198 = vmatprep.subr.mxu0 0.0
    %199 = vmatpush2.msra.mxu0 0.0
    %200 = vmatprep.subr.mxu0 0.0
    %201 = vmatpush2.msra.mxu0 0.0
    %202 = vmatprep.subr.mxu0 0.0
    %203 = vmatpush2.msra.mxu0 0.0
    %204 = vmatprep.subr.mxu0 0.0
    %205 = vmatpush2.msra.mxu0 0.0
    %206 = vmatprep.subr.mxu0 0.0
    %207 = vmatpush2.msra.mxu0 0.0
    %208 = vmatprep.subr.mxu0 0.0
    %209 = vmatpush2.msra.mxu0 0.0
    %210 = vmatprep.mubr.f32.mxu0 0.0
    %211 = vmatmul.mubr.f32.gmra.mxu0 %v131
    %v212 = vpop.f32.mrf.mxu0
    %v213 = vadd.f32 %v127, %v212
    %v214 = vpop.f32.mrf.mxu0
    %215 = vmatprep.mubr.f32.mxu0 0.0
    %216 = vmatmul.mubr.f32.gmra.mxu0 %v134
    %v217 = vpop.f32.mrf.mxu0
    %v218 = vadd.f32 %v127, %v217
    %v219 = vpop.f32.mrf.mxu0
    %220 = vmatprep.mubr.f32.mxu0 0.0
    %221 = vmatmul.mubr.f32.gmra.mxu0 %v137
    %v222 = vpop.f32.mrf.mxu0
    %v223 = vadd.f32 %v127, %v222
    %v224 = vpop.f32.mrf.mxu0
    %225 = vmatprep.mubr.f32.mxu0 0.0
    %226 = vmatmul.mubr.f32.gmra.mxu0 %v140
    %v227 = vpop.f32.mrf.mxu0
    %v228 = vadd.f32 %v127, %v227
    %v229 = vpop.f32.mrf.mxu0
    %230 = vdwg.mxu0
    %v231 = vld [vmem:[%s7] sm:$0xf]
    %v232 = vld [vmem:[%s8] sm:$0x1]
    %237 = vrot.lane.b32.xlu0 %v213, 124
    %v238 = vpop.permute.xlu0 %237
    %239 = vrot.lane.b32.xlu0 %v218, 124
    %v240 = vpop.permute.xlu0 %239
    %241 = vrot.lane.b32.xlu0 %v223, 124
    %v242 = vpop.permute.xlu0 %241
    %243 = vrot.lane.b32.xlu0 %v228, 124
    %v244 = vpop.permute.xlu0 %243
    %vm245 = vcmask 7168
    %v246 = vsel %vm245, %v213, 0
    %v248 = vsel %vm245, %v218, 0
    %v250 = vsel %vm245, %v223, 0
    %v252 = vsel %vm245, %v228, 0
    %v254 = vsel %vm245, %v238, 0
    %v256 = vsel %vm245, %v240, 0
    %v258 = vsel %vm245, %v242, 0
    %v260 = vsel %vm245, %v244, 0
    %262 = vmatprep.subr.mxu0 0.0
    %263 = vmatpush1.xpose.msra.mxu0 0.0
    %264 = vmatprep.subr.mxu0 0.0
    %265 = vmatpush1.xpose.msra.mxu0 0.0
    %266 = vmatprep.subr.mxu0 0.0
    %267 = vmatpush1.xpose.msra.mxu0 0.0
    %268 = vmatprep.subr.mxu0 0.0
    %269 = vmatpush1.xpose.msra.mxu0 0.0
    %270 = vmatprep.subr.mxu0 0.0
    %271 = vmatpush1.xpose.msra.mxu0 0.0
    %272 = vmatprep.subr.mxu0 0.0
    %273 = vmatpush1.xpose.msra.mxu0 0.0
    %274 = vmatprep.subr.mxu0 0.0
    %275 = vmatpush1.xpose.msra.mxu0 0.0
    %276 = vmatprep.subr.mxu0 0.0
    %277 = vmatpush1.xpose.msra.mxu0 0.0
    %278 = vmatprep.subr.mxu0 0.0
    %279 = vmatpush1.xpose.msra.mxu0 0.0
    %280 = vmatprep.subr.mxu0 0.0
    %281 = vmatpush1.xpose.msra.mxu0 0.0
    %282 = vmatprep.subr.mxu0 0.0
    %283 = vmatpush1.xpose.msra.mxu0 0.0
    %284 = vmatprep.subr.mxu0 0.0
    %285 = vmatpush1.xpose.msra.mxu0 0.0
    %286 = vmatprep.subr.mxu0 0.0
    %287 = vmatpush1.xpose.msra.mxu0 %v260
    %288 = vmatprep.subr.mxu0 0.0
    %289 = vmatpush1.xpose.msra.mxu0 %v258
    %290 = vmatprep.subr.mxu0 0.0
    %291 = vmatpush1.xpose.msra.mxu0 %v256
    %292 = vmatprep.subr.mxu0 0.0
    %293 = vmatpush1.xpose.msra.mxu0 %v254
    %294 = vmatprep.subr.mxu0 0.0
    %295 = vmatpush2.xpose.msra.mxu0 0.0
    %296 = vmatprep.subr.mxu0 0.0
    %297 = vmatpush2.xpose.msra.mxu0 0.0
    %298 = vmatprep.subr.mxu0 0.0
    %299 = vmatpush2.xpose.msra.mxu0 0.0
    %300 = vmatprep.subr.mxu0 0.0
    %301 = vmatpush2.xpose.msra.mxu0 0.0
    %302 = vmatprep.subr.mxu0 0.0
    %303 = vmatpush2.xpose.msra.mxu0 0.0
    %304 = vmatprep.subr.mxu0 0.0
    %305 = vmatpush2.xpose.msra.mxu0 0.0
    %306 = vmatprep.subr.mxu0 0.0
    %307 = vmatpush2.xpose.msra.mxu0 0.0
    %308 = vmatprep.subr.mxu0 0.0
    %309 = vmatpush2.xpose.msra.mxu0 0.0
    %310 = vmatprep.subr.mxu0 0.0
    %311 = vmatpush2.xpose.msra.mxu0 0.0
    %312 = vmatprep.subr.mxu0 0.0
    %313 = vmatpush2.xpose.msra.mxu0 0.0
    %314 = vmatprep.subr.mxu0 0.0
    %315 = vmatpush2.xpose.msra.mxu0 0.0
    %316 = vmatprep.subr.mxu0 0.0
    %317 = vmatpush2.xpose.msra.mxu0 0.0
    %318 = vmatprep.subr.mxu0 0.0
    %319 = vmatpush2.xpose.msra.mxu0 0.0
    %320 = vmatprep.subr.mxu0 0.0
    %321 = vmatpush2.xpose.msra.mxu0 0.0
    %322 = vmatprep.subr.mxu0 0.0
    %323 = vmatpush2.xpose.msra.mxu0 0.0
    %324 = vmatprep.subr.mxu0 0.0
    %325 = vmatpush2.xpose.msra.mxu0 0.0
    %326 = vmatprep.mubr.f32.mxu0 0.0
    %327 = vmatmul.mubr.f32.gmra.mxu0 %v246
    %v328 = vpop.f32.mrf.mxu0
    %v329 = vadd.f32 %v117, %v328
    %v330 = vpop.f32.mrf.mxu0
    %331 = vmatprep.mubr.f32.mxu0 0.0
    %332 = vmatmul.mubr.f32.gmra.mxu0 %v248
    %v333 = vpop.f32.mrf.mxu0
    %v334 = vadd.f32 %v118, %v333
    %v335 = vpop.f32.mrf.mxu0
    %336 = vmatprep.mubr.f32.mxu0 0.0
    %337 = vmatmul.mubr.f32.gmra.mxu0 %v250
    %v338 = vpop.f32.mrf.mxu0
    %v339 = vadd.f32 %v119, %v338
    %v340 = vpop.f32.mrf.mxu0
    %341 = vmatprep.mubr.f32.mxu0 0.0
    %342 = vmatmul.mubr.f32.gmra.mxu0 %v252
    %v343 = vpop.f32.mrf.mxu0
    %v344 = vadd.f32 %v120, %v343
    %v345 = vpop.f32.mrf.mxu0
    %346 = vdwg.mxu0
    %vm347 = vcmask 261120
    %v348 = vsel %vm347, %v329, -inf
    %349 = vmax.xlane.f32.xlu0 %v348
    %v350 = vpop.xlane.xlu0 %349
    %v351 = vsel %vm347, %v334, -inf
    %352 = vmax.xlane.f32.xlu0 %v351
    %v353 = vpop.xlane.xlu0 %352
    %v354 = vsel %vm347, %v339, -inf
    %355 = vmax.xlane.f32.xlu0 %v354
    %v356 = vpop.xlane.xlu0 %355
    %v357 = vsel %vm347, %v344, -inf
    %358 = vmax.xlane.f32.xlu0 %v357
    %v359 = vpop.xlane.xlu0 %358
    %v360 = vsub.f32 %v329, %v350
    %v361 = vsub.f32 %v334, %v353
    %v362 = vsub.f32 %v339, %v356
    %v363 = vsub.f32 %v344, %v359
    %v364 = vmul.f32 %v360, 1.442695
    %v365 = vpow.pop %v364
    %v366 = vmul.f32 %v361, 1.442695
    %v367 = vpow.pop %v366
    %v368 = vmul.f32 %v362, 1.442695
    %v369 = vpow.pop %v368
    %v370 = vmul.f32 %v363, 1.442695
    %v371 = vpow.pop %v370
    %v372 = vsel %vm347, %v365, 0.0
    %373 = vadd.xlane.f32.xlu0 %v372
    %v374 = vpop.xlane.xlu0 %373
    %v375 = vsel %vm347, %v367, 0.0
    %376 = vadd.xlane.f32.xlu0 %v375
    %v377 = vpop.xlane.xlu0 %376
    %v378 = vsel %vm347, %v369, 0.0
    %379 = vadd.xlane.f32.xlu0 %v378
    %v380 = vpop.xlane.xlu0 %379
    %v381 = vsel %vm347, %v371, 0.0
    %382 = vadd.xlane.f32.xlu0 %v381
    %v383 = vpop.xlane.xlu0 %382
    %v384 = vrcp.pop %v374
    %v385 = vrcp.pop %v377
    %v386 = vrcp.pop %v380
    %v387 = vrcp.pop %v383
    %v388 = vmul.f32 %v365, %v384
    %v389 = vmul.f32 %v367, %v385
    %v390 = vmul.f32 %v369, %v386
    %v391 = vmul.f32 %v371, %v387
    %392 = vrot.lane.b32.xlu0 %v213, 120
    %v393 = vpop.permute.xlu0 %392
    %394 = vrot.lane.b32.xlu0 %v218, 120
    %v395 = vpop.permute.xlu0 %394
    %396 = vrot.lane.b32.xlu0 %v223, 120
    %v397 = vpop.permute.xlu0 %396
    %398 = vrot.lane.b32.xlu0 %v228, 120
    %v399 = vpop.permute.xlu0 %398
    %v405 = vsel %vm347, %v388, 0
    %v408 = vsel %vm347, %v389, 0
    %v411 = vsel %vm347, %v390, 0
    %v414 = vsel %vm347, %v391, 0
    %416 = vmatprep.subr.mxu0 0.0
    %417 = vmatpush1.msra.mxu0 0.0
    %418 = vmatprep.subr.mxu0 0.0
    %419 = vmatpush1.msra.mxu0 0.0
    %420 = vmatprep.subr.mxu0 0.0
    %421 = vmatpush1.msra.mxu0 0.0
    %422 = vmatprep.subr.mxu0 0.0
    %423 = vmatpush1.msra.mxu0 0.0
    %424 = vmatprep.subr.mxu0 0.0
    %425 = vmatpush1.msra.mxu0 0.0
    %426 = vmatprep.subr.mxu0 0.0
    %427 = vmatpush1.msra.mxu0 0.0
    %428 = vmatprep.subr.mxu0 0.0
    %429 = vmatpush1.msra.mxu0 0.0
    %430 = vmatprep.subr.mxu0 0.0
    %431 = vmatpush1.msra.mxu0 0.0
    %432 = vmatprep.subr.mxu0 0.0
    %433 = vmatpush1.msra.mxu0 0.0
    %434 = vmatprep.subr.mxu0 0.0
    %435 = vmatpush1.msra.mxu0 0.0
    %436 = vmatprep.subr.mxu0 0.0
    %437 = vmatpush1.msra.mxu0 0.0
    %438 = vmatprep.subr.mxu0 0.0
    %439 = vmatpush1.msra.mxu0 0.0
    %440 = vmatprep.subr.mxu0 0.0
    %441 = vmatpush1.msra.mxu0 %v399
    %442 = vmatprep.subr.mxu0 0.0
    %443 = vmatpush1.msra.mxu0 %v397
    %444 = vmatprep.subr.mxu0 0.0
    %445 = vmatpush1.msra.mxu0 %v395
    %446 = vmatprep.subr.mxu0 0.0
    %447 = vmatpush1.msra.mxu0 %v393
    %448 = vmatprep.subr.mxu0 0.0
    %449 = vmatpush2.msra.mxu0 0.0
    %450 = vmatprep.subr.mxu0 0.0
    %451 = vmatpush2.msra.mxu0 0.0
    %452 = vmatprep.subr.mxu0 0.0
    %453 = vmatpush2.msra.mxu0 0.0
    %454 = vmatprep.subr.mxu0 0.0
    %455 = vmatpush2.msra.mxu0 0.0
    %456 = vmatprep.subr.mxu0 0.0
    %457 = vmatpush2.msra.mxu0 0.0
    %458 = vmatprep.subr.mxu0 0.0
    %459 = vmatpush2.msra.mxu0 0.0
    %460 = vmatprep.subr.mxu0 0.0
    %461 = vmatpush2.msra.mxu0 0.0
    %462 = vmatprep.subr.mxu0 0.0
    %463 = vmatpush2.msra.mxu0 0.0
    %464 = vmatprep.subr.mxu0 0.0
    %465 = vmatpush2.msra.mxu0 0.0
    %466 = vmatprep.subr.mxu0 0.0
    %467 = vmatpush2.msra.mxu0 0.0
    %468 = vmatprep.subr.mxu0 0.0
    %469 = vmatpush2.msra.mxu0 0.0
    %470 = vmatprep.subr.mxu0 0.0
    %471 = vmatpush2.msra.mxu0 0.0
    %472 = vmatprep.subr.mxu0 0.0
    %473 = vmatpush2.msra.mxu0 0.0
    %474 = vmatprep.subr.mxu0 0.0
    %475 = vmatpush2.msra.mxu0 0.0
    %476 = vmatprep.subr.mxu0 0.0
    %477 = vmatpush2.msra.mxu0 0.0
    %478 = vmatprep.subr.mxu0 0.0
    %479 = vmatpush2.msra.mxu0 0.0
    %480 = vmatprep.mubr.f32.mxu0 0.0
    %481 = vmatmul.mubr.f32.gmra.mxu0 %v405
    %v482 = vpop.f32.mrf.mxu0
    %v483 = vadd.f32 0.0, %v482
    %v484 = vpop.f32.mrf.mxu0
    %485 = vmatprep.mubr.f32.mxu0 0.0
    %486 = vmatmul.mubr.f32.gmra.mxu0 %v408
    %v487 = vpop.f32.mrf.mxu0
    %v488 = vadd.f32 0.0, %v487
    %v489 = vpop.f32.mrf.mxu0
    %490 = vmatprep.mubr.f32.mxu0 0.0
    %491 = vmatmul.mubr.f32.gmra.mxu0 %v411
    %v492 = vpop.f32.mrf.mxu0
    %v493 = vadd.f32 0.0, %v492
    %v494 = vpop.f32.mrf.mxu0
    %495 = vmatprep.mubr.f32.mxu0 0.0
    %496 = vmatmul.mubr.f32.gmra.mxu0 %v414
    %v497 = vpop.f32.mrf.mxu0
    %v498 = vadd.f32 0.0, %v497
    %v499 = vpop.f32.mrf.mxu0
    %500 = vdwg.mxu0
    %v502 = vsel %vm245, %v483, 0
    %v505 = vsel %vm245, %v488, 0
    %v508 = vsel %vm245, %v493, 0
    %v511 = vsel %vm245, %v498, 0
    %vm513 = vcmask 1040384
    %v515 = vsel %vm513, %v231, 0
    %517 = vmatprep.subr.mxu0 0.0
    %518 = vmatpush1.msra.mxu0 0.0
    %519 = vmatprep.subr.mxu0 0.0
    %520 = vmatpush1.msra.mxu0 0.0
    %521 = vmatprep.subr.mxu0 0.0
    %522 = vmatpush1.msra.mxu0 0.0
    %523 = vmatprep.subr.mxu0 0.0
    %524 = vmatpush1.msra.mxu0 0.0
    %525 = vmatprep.subr.mxu0 0.0
    %526 = vmatpush1.msra.mxu0 0.0
    %527 = vmatprep.subr.mxu0 0.0
    %528 = vmatpush1.msra.mxu0 0.0
    %529 = vmatprep.subr.mxu0 0.0
    %530 = vmatpush1.msra.mxu0 0.0
    %531 = vmatprep.subr.mxu0 0.0
    %532 = vmatpush1.msra.mxu0 0.0
    %533 = vmatprep.subr.mxu0 0.0
    %534 = vmatpush1.msra.mxu0 0.0
    %535 = vmatprep.subr.mxu0 0.0
    %536 = vmatpush1.msra.mxu0 0.0
    %537 = vmatprep.subr.mxu0 0.0
    %538 = vmatpush1.msra.mxu0 0.0
    %539 = vmatprep.subr.mxu0 0.0
    %540 = vmatpush1.msra.mxu0 0.0
    %541 = vmatprep.subr.mxu0 0.0
    %542 = vmatpush1.msra.mxu0 0.0
    %543 = vmatprep.subr.mxu0 0.0
    %544 = vmatpush1.msra.mxu0 0.0
    %545 = vmatprep.subr.mxu0 0.0
    %546 = vmatpush1.msra.mxu0 0.0
    %547 = vmatprep.subr.mxu0 0.0
    %548 = vmatpush1.msra.mxu0 %v515
    %549 = vmatprep.subr.mxu0 0.0
    %550 = vmatpush2.msra.mxu0 0.0
    %551 = vmatprep.subr.mxu0 0.0
    %552 = vmatpush2.msra.mxu0 0.0
    %553 = vmatprep.subr.mxu0 0.0
    %554 = vmatpush2.msra.mxu0 0.0
    %555 = vmatprep.subr.mxu0 0.0
    %556 = vmatpush2.msra.mxu0 0.0
    %557 = vmatprep.subr.mxu0 0.0
    %558 = vmatpush2.msra.mxu0 0.0
    %559 = vmatprep.subr.mxu0 0.0
    %560 = vmatpush2.msra.mxu0 0.0
    %561 = vmatprep.subr.mxu0 0.0
    %562 = vmatpush2.msra.mxu0 0.0
    %563 = vmatprep.subr.mxu0 0.0
    %564 = vmatpush2.msra.mxu0 0.0
    %565 = vmatprep.subr.mxu0 0.0
    %566 = vmatpush2.msra.mxu0 0.0
    %567 = vmatprep.subr.mxu0 0.0
    %568 = vmatpush2.msra.mxu0 0.0
    %569 = vmatprep.subr.mxu0 0.0
    %570 = vmatpush2.msra.mxu0 0.0
    %571 = vmatprep.subr.mxu0 0.0
    %572 = vmatpush2.msra.mxu0 0.0
    %573 = vmatprep.subr.mxu0 0.0
    %574 = vmatpush2.msra.mxu0 0.0
    %575 = vmatprep.subr.mxu0 0.0
    %576 = vmatpush2.msra.mxu0 0.0
    %577 = vmatprep.subr.mxu0 0.0
    %578 = vmatpush2.msra.mxu0 0.0
    %579 = vmatprep.subr.mxu0 0.0
    %580 = vmatpush2.msra.mxu0 0.0
    %581 = vmatprep.mubr.f32.mxu0 0.0
    %582 = vmatmul.mubr.f32.gmra.mxu0 %v502
    %v583 = vpop.f32.mrf.mxu0
    %v584 = vadd.f32 0.0, %v583
    %v585 = vpop.f32.mrf.mxu0
    %586 = vmatprep.mubr.f32.mxu0 0.0
    %587 = vmatmul.mubr.f32.gmra.mxu0 %v505
    %v588 = vpop.f32.mrf.mxu0
    %v589 = vadd.f32 0.0, %v588
    %v590 = vpop.f32.mrf.mxu0
    %591 = vmatprep.mubr.f32.mxu0 0.0
    %592 = vmatmul.mubr.f32.gmra.mxu0 %v508
    %v593 = vpop.f32.mrf.mxu0
    %v594 = vadd.f32 0.0, %v593
    %v595 = vpop.f32.mrf.mxu0
    %596 = vmatprep.mubr.f32.mxu0 0.0
    %597 = vmatmul.mubr.f32.gmra.mxu0 %v511
    %v598 = vpop.f32.mrf.mxu0
    %v599 = vadd.f32 0.0, %v598
    %v600 = vpop.f32.mrf.mxu0
    %601 = vdwg.mxu0
    %v603 = vlaneseq
    %v604 = vshrl.u32 %v603, 7
    %v605 = vsub.s32 0, %v604
    %v606 = vrot.slane %v232, %v605
    %v608 = vadd.f32 %v606, %v584
    %v609 = vadd.f32 %v606, %v589
    %v610 = vadd.f32 %v606, %v594
    %v611 = vadd.f32 %v606, %v599
    %612 = vrot.lane.b32.xlu0 %v213, 127
    %v613 = vpop.permute.xlu0 %612
    %614 = vrot.lane.b32.xlu0 %v218, 127
    %v615 = vpop.permute.xlu0 %614
    %616 = vrot.lane.b32.xlu0 %v223, 127
    %v617 = vpop.permute.xlu0 %616
    %618 = vrot.lane.b32.xlu0 %v228, 127
    %v619 = vpop.permute.xlu0 %618
    %620 = vrot.lane.b32.xlu0 %v213, 123
    %v621 = vpop.permute.xlu0 %620
    %622 = vrot.lane.b32.xlu0 %v218, 123
    %v623 = vpop.permute.xlu0 %622
    %624 = vrot.lane.b32.xlu0 %v223, 123
    %v625 = vpop.permute.xlu0 %624
    %626 = vrot.lane.b32.xlu0 %v228, 123
    %v627 = vpop.permute.xlu0 %626
    %v628 = vsel %vm245, %v613, 0
    %v630 = vsel %vm245, %v615, 0
    %v632 = vsel %vm245, %v617, 0
    %v634 = vsel %vm245, %v619, 0
    %v636 = vsel %vm245, %v621, 0
    %v638 = vsel %vm245, %v623, 0
    %v640 = vsel %vm245, %v625, 0
    %v642 = vsel %vm245, %v627, 0
    %644 = vmatprep.subr.mxu0 0.0
    %645 = vmatpush1.xpose.msra.mxu0 0.0
    %646 = vmatprep.subr.mxu0 0.0
    %647 = vmatpush1.xpose.msra.mxu0 0.0
    %648 = vmatprep.subr.mxu0 0.0
    %649 = vmatpush1.xpose.msra.mxu0 0.0
    %650 = vmatprep.subr.mxu0 0.0
    %651 = vmatpush1.xpose.msra.mxu0 0.0
    %652 = vmatprep.subr.mxu0 0.0
    %653 = vmatpush1.xpose.msra.mxu0 0.0
    %654 = vmatprep.subr.mxu0 0.0
    %655 = vmatpush1.xpose.msra.mxu0 0.0
    %656 = vmatprep.subr.mxu0 0.0
    %657 = vmatpush1.xpose.msra.mxu0 0.0
    %658 = vmatprep.subr.mxu0 0.0
    %659 = vmatpush1.xpose.msra.mxu0 0.0
    %660 = vmatprep.subr.mxu0 0.0
    %661 = vmatpush1.xpose.msra.mxu0 0.0
    %662 = vmatprep.subr.mxu0 0.0
    %663 = vmatpush1.xpose.msra.mxu0 0.0
    %664 = vmatprep.subr.mxu0 0.0
    %665 = vmatpush1.xpose.msra.mxu0 0.0
    %666 = vmatprep.subr.mxu0 0.0
    %667 = vmatpush1.xpose.msra.mxu0 0.0
    %668 = vmatprep.subr.mxu0 0.0
    %669 = vmatpush1.xpose.msra.mxu0 %v642
    %670 = vmatprep.subr.mxu0 0.0
    %671 = vmatpush1.xpose.msra.mxu0 %v640
    %672 = vmatprep.subr.mxu0 0.0
    %673 = vmatpush1.xpose.msra.mxu0 %v638
    %674 = vmatprep.subr.mxu0 0.0
    %675 = vmatpush1.xpose.msra.mxu0 %v636
    %676 = vmatprep.subr.mxu0 0.0
    %677 = vmatpush2.xpose.msra.mxu0 0.0
    %678 = vmatprep.subr.mxu0 0.0
    %679 = vmatpush2.xpose.msra.mxu0 0.0
    %680 = vmatprep.subr.mxu0 0.0
    %681 = vmatpush2.xpose.msra.mxu0 0.0
    %682 = vmatprep.subr.mxu0 0.0
    %683 = vmatpush2.xpose.msra.mxu0 0.0
    %684 = vmatprep.subr.mxu0 0.0
    %685 = vmatpush2.xpose.msra.mxu0 0.0
    %686 = vmatprep.subr.mxu0 0.0
    %687 = vmatpush2.xpose.msra.mxu0 0.0
    %688 = vmatprep.subr.mxu0 0.0
    %689 = vmatpush2.xpose.msra.mxu0 0.0
    %690 = vmatprep.subr.mxu0 0.0
    %691 = vmatpush2.xpose.msra.mxu0 0.0
    %692 = vmatprep.subr.mxu0 0.0
    %693 = vmatpush2.xpose.msra.mxu0 0.0
    %694 = vmatprep.subr.mxu0 0.0
    %695 = vmatpush2.xpose.msra.mxu0 0.0
    %696 = vmatprep.subr.mxu0 0.0
    %697 = vmatpush2.xpose.msra.mxu0 0.0
    %698 = vmatprep.subr.mxu0 0.0
    %699 = vmatpush2.xpose.msra.mxu0 0.0
    %700 = vmatprep.subr.mxu0 0.0
    %701 = vmatpush2.xpose.msra.mxu0 0.0
    %702 = vmatprep.subr.mxu0 0.0
    %703 = vmatpush2.xpose.msra.mxu0 0.0
    %704 = vmatprep.subr.mxu0 0.0
    %705 = vmatpush2.xpose.msra.mxu0 0.0
    %706 = vmatprep.subr.mxu0 0.0
    %707 = vmatpush2.xpose.msra.mxu0 0.0
    %708 = vmatprep.mubr.f32.mxu0 0.0
    %709 = vmatmul.mubr.f32.gmra.mxu0 %v628
    %v710 = vpop.f32.mrf.mxu0
    %v711 = vadd.f32 %v117, %v710
    %v712 = vpop.f32.mrf.mxu0
    %713 = vmatprep.mubr.f32.mxu0 0.0
    %714 = vmatmul.mubr.f32.gmra.mxu0 %v630
    %v715 = vpop.f32.mrf.mxu0
    %v716 = vadd.f32 %v118, %v715
    %v717 = vpop.f32.mrf.mxu0
    %718 = vmatprep.mubr.f32.mxu0 0.0
    %719 = vmatmul.mubr.f32.gmra.mxu0 %v632
    %v720 = vpop.f32.mrf.mxu0
    %v721 = vadd.f32 %v119, %v720
    %v722 = vpop.f32.mrf.mxu0
    %723 = vmatprep.mubr.f32.mxu0 0.0
    %724 = vmatmul.mubr.f32.gmra.mxu0 %v634
    %v725 = vpop.f32.mrf.mxu0
    %v726 = vadd.f32 %v120, %v725
    %v727 = vpop.f32.mrf.mxu0
    %728 = vdwg.mxu0
    %v729 = vsel %vm347, %v711, -inf
    %730 = vmax.xlane.f32.xlu0 %v729
    %v731 = vpop.xlane.xlu0 %730
    %v732 = vsel %vm347, %v716, -inf
    %733 = vmax.xlane.f32.xlu0 %v732
    %v734 = vpop.xlane.xlu0 %733
    %v735 = vsel %vm347, %v721, -inf
    %736 = vmax.xlane.f32.xlu0 %v735
    %v737 = vpop.xlane.xlu0 %736
    %v738 = vsel %vm347, %v726, -inf
    %739 = vmax.xlane.f32.xlu0 %v738
    %v740 = vpop.xlane.xlu0 %739
    %v741 = vsub.f32 %v711, %v731
    %v742 = vsub.f32 %v716, %v734
    %v743 = vsub.f32 %v721, %v737
    %v744 = vsub.f32 %v726, %v740
    %v745 = vmul.f32 %v741, 1.442695
    %v746 = vpow.pop %v745
    %v747 = vmul.f32 %v742, 1.442695
    %v748 = vpow.pop %v747
    %v749 = vmul.f32 %v743, 1.442695
    %v750 = vpow.pop %v749
    %v751 = vmul.f32 %v744, 1.442695
    %v752 = vpow.pop %v751
    %v753 = vsel %vm347, %v746, 0.0
    %754 = vadd.xlane.f32.xlu0 %v753
    %v755 = vpop.xlane.xlu0 %754
    %v756 = vsel %vm347, %v748, 0.0
    %757 = vadd.xlane.f32.xlu0 %v756
    %v758 = vpop.xlane.xlu0 %757
    %v759 = vsel %vm347, %v750, 0.0
    %760 = vadd.xlane.f32.xlu0 %v759
    %v761 = vpop.xlane.xlu0 %760
    %v762 = vsel %vm347, %v752, 0.0
    %763 = vadd.xlane.f32.xlu0 %v762
    %v764 = vpop.xlane.xlu0 %763
    %v765 = vrcp.pop %v755
    %v766 = vrcp.pop %v758
    %v767 = vrcp.pop %v761
    %v768 = vrcp.pop %v764
    %v769 = vmul.f32 %v746, %v765
    %v770 = vmul.f32 %v748, %v766
    %v771 = vmul.f32 %v750, %v767
    %v772 = vmul.f32 %v752, %v768
    %773 = vrot.lane.b32.xlu0 %v213, 119
    %v774 = vpop.permute.xlu0 %773
    %775 = vrot.lane.b32.xlu0 %v218, 119
    %v776 = vpop.permute.xlu0 %775
    %777 = vrot.lane.b32.xlu0 %v223, 119
    %v778 = vpop.permute.xlu0 %777
    %779 = vrot.lane.b32.xlu0 %v228, 119
    %v780 = vpop.permute.xlu0 %779
    %v786 = vsel %vm347, %v769, 0
    %v789 = vsel %vm347, %v770, 0
    %v792 = vsel %vm347, %v771, 0
    %v795 = vsel %vm347, %v772, 0
    %797 = vmatprep.subr.mxu0 0.0
    %798 = vmatpush1.msra.mxu0 0.0
    %799 = vmatprep.subr.mxu0 0.0
    %800 = vmatpush1.msra.mxu0 0.0
    %801 = vmatprep.subr.mxu0 0.0
    %802 = vmatpush1.msra.mxu0 0.0
    %803 = vmatprep.subr.mxu0 0.0
    %804 = vmatpush1.msra.mxu0 0.0
    %805 = vmatprep.subr.mxu0 0.0
    %806 = vmatpush1.msra.mxu0 0.0
    %807 = vmatprep.subr.mxu0 0.0
    %808 = vmatpush1.msra.mxu0 0.0
    %809 = vmatprep.subr.mxu0 0.0
    %810 = vmatpush1.msra.mxu0 0.0
    %811 = vmatprep.subr.mxu0 0.0
    %812 = vmatpush1.msra.mxu0 0.0
    %813 = vmatprep.subr.mxu0 0.0
    %814 = vmatpush1.msra.mxu0 0.0
    %815 = vmatprep.subr.mxu0 0.0
    %816 = vmatpush1.msra.mxu0 0.0
    %817 = vmatprep.subr.mxu0 0.0
    %818 = vmatpush1.msra.mxu0 0.0
    %819 = vmatprep.subr.mxu0 0.0
    %820 = vmatpush1.msra.mxu0 0.0
    %821 = vmatprep.subr.mxu0 0.0
    %822 = vmatpush1.msra.mxu0 %v780
    %823 = vmatprep.subr.mxu0 0.0
    %824 = vmatpush1.msra.mxu0 %v778
    %825 = vmatprep.subr.mxu0 0.0
    %826 = vmatpush1.msra.mxu0 %v776
    %827 = vmatprep.subr.mxu0 0.0
    %828 = vmatpush1.msra.mxu0 %v774
    %829 = vmatprep.subr.mxu0 0.0
    %830 = vmatpush2.msra.mxu0 0.0
    %831 = vmatprep.subr.mxu0 0.0
    %832 = vmatpush2.msra.mxu0 0.0
    %833 = vmatprep.subr.mxu0 0.0
    %834 = vmatpush2.msra.mxu0 0.0
    %835 = vmatprep.subr.mxu0 0.0
    %836 = vmatpush2.msra.mxu0 0.0
    %837 = vmatprep.subr.mxu0 0.0
    %838 = vmatpush2.msra.mxu0 0.0
    %839 = vmatprep.subr.mxu0 0.0
    %840 = vmatpush2.msra.mxu0 0.0
    %841 = vmatprep.subr.mxu0 0.0
    %842 = vmatpush2.msra.mxu0 0.0
    %843 = vmatprep.subr.mxu0 0.0
    %844 = vmatpush2.msra.mxu0 0.0
    %845 = vmatprep.subr.mxu0 0.0
    %846 = vmatpush2.msra.mxu0 0.0
    %847 = vmatprep.subr.mxu0 0.0
    %848 = vmatpush2.msra.mxu0 0.0
    %849 = vmatprep.subr.mxu0 0.0
    %850 = vmatpush2.msra.mxu0 0.0
    %851 = vmatprep.subr.mxu0 0.0
    %852 = vmatpush2.msra.mxu0 0.0
    %853 = vmatprep.subr.mxu0 0.0
    %854 = vmatpush2.msra.mxu0 0.0
    %855 = vmatprep.subr.mxu0 0.0
    %856 = vmatpush2.msra.mxu0 0.0
    %857 = vmatprep.subr.mxu0 0.0
    %858 = vmatpush2.msra.mxu0 0.0
    %859 = vmatprep.subr.mxu0 0.0
    %860 = vmatpush2.msra.mxu0 0.0
    %861 = vmatprep.mubr.f32.mxu0 0.0
    %862 = vmatmul.mubr.f32.gmra.mxu0 %v786
    %v863 = vpop.f32.mrf.mxu0
    %v864 = vadd.f32 0.0, %v863
    %v865 = vpop.f32.mrf.mxu0
    %866 = vmatprep.mubr.f32.mxu0 0.0
    %867 = vmatmul.mubr.f32.gmra.mxu0 %v789
    %v868 = vpop.f32.mrf.mxu0
    %v869 = vadd.f32 0.0, %v868
    %v870 = vpop.f32.mrf.mxu0
    %871 = vmatprep.mubr.f32.mxu0 0.0
    %872 = vmatmul.mubr.f32.gmra.mxu0 %v792
    %v873 = vpop.f32.mrf.mxu0
    %v874 = vadd.f32 0.0, %v873
    %v875 = vpop.f32.mrf.mxu0
    %876 = vmatprep.mubr.f32.mxu0 0.0
    %877 = vmatmul.mubr.f32.gmra.mxu0 %v795
    %v878 = vpop.f32.mrf.mxu0
    %v879 = vadd.f32 0.0, %v878
    %v880 = vpop.f32.mrf.mxu0
    %881 = vdwg.mxu0
    %v882 = vrot.slane %v231, 1
    %v884 = vsel %vm245, %v864, 0
    %v887 = vsel %vm245, %v869, 0
    %v890 = vsel %vm245, %v874, 0
    %v893 = vsel %vm245, %v879, 0
    %v895 = vsel %vm513, %v882, 0
    %897 = vmatprep.subr.mxu0 0.0
    %898 = vmatpush1.msra.mxu0 0.0
    %899 = vmatprep.subr.mxu0 0.0
    %900 = vmatpush1.msra.mxu0 0.0
    %901 = vmatprep.subr.mxu0 0.0
    %902 = vmatpush1.msra.mxu0 0.0
    %903 = vmatprep.subr.mxu0 0.0
    %904 = vmatpush1.msra.mxu0 0.0
    %905 = vmatprep.subr.mxu0 0.0
    %906 = vmatpush1.msra.mxu0 0.0
    %907 = vmatprep.subr.mxu0 0.0
    %908 = vmatpush1.msra.mxu0 0.0
    %909 = vmatprep.subr.mxu0 0.0
    %910 = vmatpush1.msra.mxu0 0.0
    %911 = vmatprep.subr.mxu0 0.0
    %912 = vmatpush1.msra.mxu0 0.0
    %913 = vmatprep.subr.mxu0 0.0
    %914 = vmatpush1.msra.mxu0 0.0
    %915 = vmatprep.subr.mxu0 0.0
    %916 = vmatpush1.msra.mxu0 0.0
    %917 = vmatprep.subr.mxu0 0.0
    %918 = vmatpush1.msra.mxu0 0.0
    %919 = vmatprep.subr.mxu0 0.0
    %920 = vmatpush1.msra.mxu0 0.0
    %921 = vmatprep.subr.mxu0 0.0
    %922 = vmatpush1.msra.mxu0 0.0
    %923 = vmatprep.subr.mxu0 0.0
    %924 = vmatpush1.msra.mxu0 0.0
    %925 = vmatprep.subr.mxu0 0.0
    %926 = vmatpush1.msra.mxu0 0.0
    %927 = vmatprep.subr.mxu0 0.0
    %928 = vmatpush1.msra.mxu0 %v895
    %929 = vmatprep.subr.mxu0 0.0
    %930 = vmatpush2.msra.mxu0 0.0
    %931 = vmatprep.subr.mxu0 0.0
    %932 = vmatpush2.msra.mxu0 0.0
    %933 = vmatprep.subr.mxu0 0.0
    %934 = vmatpush2.msra.mxu0 0.0
    %935 = vmatprep.subr.mxu0 0.0
    %936 = vmatpush2.msra.mxu0 0.0
    %937 = vmatprep.subr.mxu0 0.0
    %938 = vmatpush2.msra.mxu0 0.0
    %939 = vmatprep.subr.mxu0 0.0
    %940 = vmatpush2.msra.mxu0 0.0
    %941 = vmatprep.subr.mxu0 0.0
    %942 = vmatpush2.msra.mxu0 0.0
    %943 = vmatprep.subr.mxu0 0.0
    %944 = vmatpush2.msra.mxu0 0.0
    %945 = vmatprep.subr.mxu0 0.0
    %946 = vmatpush2.msra.mxu0 0.0
    %947 = vmatprep.subr.mxu0 0.0
    %948 = vmatpush2.msra.mxu0 0.0
    %949 = vmatprep.subr.mxu0 0.0
    %950 = vmatpush2.msra.mxu0 0.0
    %951 = vmatprep.subr.mxu0 0.0
    %952 = vmatpush2.msra.mxu0 0.0
    %953 = vmatprep.subr.mxu0 0.0
    %954 = vmatpush2.msra.mxu0 0.0
    %955 = vmatprep.subr.mxu0 0.0
    %956 = vmatpush2.msra.mxu0 0.0
    %957 = vmatprep.subr.mxu0 0.0
    %958 = vmatpush2.msra.mxu0 0.0
    %959 = vmatprep.subr.mxu0 0.0
    %960 = vmatpush2.msra.mxu0 0.0
    %961 = vmatprep.mubr.f32.mxu0 0.0
    %962 = vmatmul.mubr.f32.gmra.mxu0 %v884
    %v963 = vpop.f32.mrf.mxu0
    %v964 = vadd.f32 0.0, %v963
    %v965 = vpop.f32.mrf.mxu0
    %966 = vmatprep.mubr.f32.mxu0 0.0
    %967 = vmatmul.mubr.f32.gmra.mxu0 %v887
    %v968 = vpop.f32.mrf.mxu0
    %v969 = vadd.f32 0.0, %v968
    %v970 = vpop.f32.mrf.mxu0
    %971 = vmatprep.mubr.f32.mxu0 0.0
    %972 = vmatmul.mubr.f32.gmra.mxu0 %v890
    %v973 = vpop.f32.mrf.mxu0
    %v974 = vadd.f32 0.0, %v973
    %v975 = vpop.f32.mrf.mxu0
    %976 = vmatprep.mubr.f32.mxu0 0.0
    %977 = vmatmul.mubr.f32.gmra.mxu0 %v893
    %v978 = vpop.f32.mrf.mxu0
    %v979 = vadd.f32 0.0, %v978
    %v980 = vpop.f32.mrf.mxu0
    %981 = vdwg.mxu0
    %v982 = vadd.f32 %v608, %v964
    %v983 = vadd.f32 %v609, %v969
    %v984 = vadd.f32 %v610, %v974
    %v985 = vadd.f32 %v611, %v979
    %986 = vrot.lane.b32.xlu0 %v213, 126
    %v987 = vpop.permute.xlu0 %986
    %988 = vrot.lane.b32.xlu0 %v218, 126
    %v989 = vpop.permute.xlu0 %988
    %990 = vrot.lane.b32.xlu0 %v223, 126
    %v991 = vpop.permute.xlu0 %990
    %992 = vrot.lane.b32.xlu0 %v228, 126
    %v993 = vpop.permute.xlu0 %992
    %994 = vrot.lane.b32.xlu0 %v213, 122
    %v995 = vpop.permute.xlu0 %994
    %996 = vrot.lane.b32.xlu0 %v218, 122
    %v997 = vpop.permute.xlu0 %996
    %998 = vrot.lane.b32.xlu0 %v223, 122
    %v999 = vpop.permute.xlu0 %998
    %1000 = vrot.lane.b32.xlu0 %v228, 122
    %v1001 = vpop.permute.xlu0 %1000
    %v1002 = vsel %vm245, %v987, 0
    %v1004 = vsel %vm245, %v989, 0
    %v1006 = vsel %vm245, %v991, 0
    %v1008 = vsel %vm245, %v993, 0
    %v1010 = vsel %vm245, %v995, 0
    %v1012 = vsel %vm245, %v997, 0
    %v1014 = vsel %vm245, %v999, 0
    %v1016 = vsel %vm245, %v1001, 0
    %1018 = vmatprep.subr.mxu0 0.0
    %1019 = vmatpush1.xpose.msra.mxu0 0.0
    %1020 = vmatprep.subr.mxu0 0.0
    %1021 = vmatpush1.xpose.msra.mxu0 0.0
    %1022 = vmatprep.subr.mxu0 0.0
    %1023 = vmatpush1.xpose.msra.mxu0 0.0
    %1024 = vmatprep.subr.mxu0 0.0
    %1025 = vmatpush1.xpose.msra.mxu0 0.0
    %1026 = vmatprep.subr.mxu0 0.0
    %1027 = vmatpush1.xpose.msra.mxu0 0.0
    %1028 = vmatprep.subr.mxu0 0.0
    %1029 = vmatpush1.xpose.msra.mxu0 0.0
    %1030 = vmatprep.subr.mxu0 0.0
    %1031 = vmatpush1.xpose.msra.mxu0 0.0
    %1032 = vmatprep.subr.mxu0 0.0
    %1033 = vmatpush1.xpose.msra.mxu0 0.0
    %1034 = vmatprep.subr.mxu0 0.0
    %1035 = vmatpush1.xpose.msra.mxu0 0.0
    %1036 = vmatprep.subr.mxu0 0.0
    %1037 = vmatpush1.xpose.msra.mxu0 0.0
    %1038 = vmatprep.subr.mxu0 0.0
    %1039 = vmatpush1.xpose.msra.mxu0 0.0
    %1040 = vmatprep.subr.mxu0 0.0
    %1041 = vmatpush1.xpose.msra.mxu0 0.0
    %1042 = vmatprep.subr.mxu0 0.0
    %1043 = vmatpush1.xpose.msra.mxu0 %v1016
    %1044 = vmatprep.subr.mxu0 0.0
    %1045 = vmatpush1.xpose.msra.mxu0 %v1014
    %1046 = vmatprep.subr.mxu0 0.0
    %1047 = vmatpush1.xpose.msra.mxu0 %v1012
    %1048 = vmatprep.subr.mxu0 0.0
    %1049 = vmatpush1.xpose.msra.mxu0 %v1010
    %1050 = vmatprep.subr.mxu0 0.0
    %1051 = vmatpush2.xpose.msra.mxu0 0.0
    %1052 = vmatprep.subr.mxu0 0.0
    %1053 = vmatpush2.xpose.msra.mxu0 0.0
    %1054 = vmatprep.subr.mxu0 0.0
    %1055 = vmatpush2.xpose.msra.mxu0 0.0
    %1056 = vmatprep.subr.mxu0 0.0
    %1057 = vmatpush2.xpose.msra.mxu0 0.0
    %1058 = vmatprep.subr.mxu0 0.0
    %1059 = vmatpush2.xpose.msra.mxu0 0.0
    %1060 = vmatprep.subr.mxu0 0.0
    %1061 = vmatpush2.xpose.msra.mxu0 0.0
    %1062 = vmatprep.subr.mxu0 0.0
    %1063 = vmatpush2.xpose.msra.mxu0 0.0
    %1064 = vmatprep.subr.mxu0 0.0
    %1065 = vmatpush2.xpose.msra.mxu0 0.0
    %1066 = vmatprep.subr.mxu0 0.0
    %1067 = vmatpush2.xpose.msra.mxu0 0.0
    %1068 = vmatprep.subr.mxu0 0.0
    %1069 = vmatpush2.xpose.msra.mxu0 0.0
    %1070 = vmatprep.subr.mxu0 0.0
    %1071 = vmatpush2.xpose.msra.mxu0 0.0
    %1072 = vmatprep.subr.mxu0 0.0
    %1073 = vmatpush2.xpose.msra.mxu0 0.0
    %1074 = vmatprep.subr.mxu0 0.0
    %1075 = vmatpush2.xpose.msra.mxu0 0.0
    %1076 = vmatprep.subr.mxu0 0.0
    %1077 = vmatpush2.xpose.msra.mxu0 0.0
    %1078 = vmatprep.subr.mxu0 0.0
    %1079 = vmatpush2.xpose.msra.mxu0 0.0
    %1080 = vmatprep.subr.mxu0 0.0
    %1081 = vmatpush2.xpose.msra.mxu0 0.0
    %1082 = vmatprep.mubr.f32.mxu0 0.0
    %1083 = vmatmul.mubr.f32.gmra.mxu0 %v1002
    %v1084 = vpop.f32.mrf.mxu0
    %v1085 = vadd.f32 %v117, %v1084
    %v1086 = vpop.f32.mrf.mxu0
    %1087 = vmatprep.mubr.f32.mxu0 0.0
    %1088 = vmatmul.mubr.f32.gmra.mxu0 %v1004
    %v1089 = vpop.f32.mrf.mxu0
    %v1090 = vadd.f32 %v118, %v1089
    %v1091 = vpop.f32.mrf.mxu0
    %1092 = vmatprep.mubr.f32.mxu0 0.0
    %1093 = vmatmul.mubr.f32.gmra.mxu0 %v1006
    %v1094 = vpop.f32.mrf.mxu0
    %v1095 = vadd.f32 %v119, %v1094
    %v1096 = vpop.f32.mrf.mxu0
    %1097 = vmatprep.mubr.f32.mxu0 0.0
    %1098 = vmatmul.mubr.f32.gmra.mxu0 %v1008
    %v1099 = vpop.f32.mrf.mxu0
    %v1100 = vadd.f32 %v120, %v1099
    %v1101 = vpop.f32.mrf.mxu0
    %1102 = vdwg.mxu0
    %v1103 = vsel %vm347, %v1085, -inf
    %1104 = vmax.xlane.f32.xlu0 %v1103
    %v1105 = vpop.xlane.xlu0 %1104
    %v1106 = vsel %vm347, %v1090, -inf
    %1107 = vmax.xlane.f32.xlu0 %v1106
    %v1108 = vpop.xlane.xlu0 %1107
    %v1109 = vsel %vm347, %v1095, -inf
    %1110 = vmax.xlane.f32.xlu0 %v1109
    %v1111 = vpop.xlane.xlu0 %1110
    %v1112 = vsel %vm347, %v1100, -inf
    %1113 = vmax.xlane.f32.xlu0 %v1112
    %v1114 = vpop.xlane.xlu0 %1113
    %v1115 = vsub.f32 %v1085, %v1105
    %v1116 = vsub.f32 %v1090, %v1108
    %v1117 = vsub.f32 %v1095, %v1111
    %v1118 = vsub.f32 %v1100, %v1114
    %v1119 = vmul.f32 %v1115, 1.442695
    %v1120 = vpow.pop %v1119
    %v1121 = vmul.f32 %v1116, 1.442695
    %v1122 = vpow.pop %v1121
    %v1123 = vmul.f32 %v1117, 1.442695
    %v1124 = vpow.pop %v1123
    %v1125 = vmul.f32 %v1118, 1.442695
    %v1126 = vpow.pop %v1125
    %v1127 = vsel %vm347, %v1120, 0.0
    %1128 = vadd.xlane.f32.xlu0 %v1127
    %v1129 = vpop.xlane.xlu0 %1128
    %v1130 = vsel %vm347, %v1122, 0.0
    %1131 = vadd.xlane.f32.xlu0 %v1130
    %v1132 = vpop.xlane.xlu0 %1131
    %v1133 = vsel %vm347, %v1124, 0.0
    %1134 = vadd.xlane.f32.xlu0 %v1133
    %v1135 = vpop.xlane.xlu0 %1134
    %v1136 = vsel %vm347, %v1126, 0.0
    %1137 = vadd.xlane.f32.xlu0 %v1136
    %v1138 = vpop.xlane.xlu0 %1137
    %v1139 = vrcp.pop %v1129
    %v1140 = vrcp.pop %v1132
    %v1141 = vrcp.pop %v1135
    %v1142 = vrcp.pop %v1138
    %v1143 = vmul.f32 %v1120, %v1139
    %v1144 = vmul.f32 %v1122, %v1140
    %v1145 = vmul.f32 %v1124, %v1141
    %v1146 = vmul.f32 %v1126, %v1142
    %1147 = vrot.lane.b32.xlu0 %v213, 118
    %v1148 = vpop.permute.xlu0 %1147
    %1149 = vrot.lane.b32.xlu0 %v218, 118
    %v1150 = vpop.permute.xlu0 %1149
    %1151 = vrot.lane.b32.xlu0 %v223, 118
    %v1152 = vpop.permute.xlu0 %1151
    %1153 = vrot.lane.b32.xlu0 %v228, 118
    %v1154 = vpop.permute.xlu0 %1153
    %v1160 = vsel %vm347, %v1143, 0
    %v1163 = vsel %vm347, %v1144, 0
    %v1166 = vsel %vm347, %v1145, 0
    %v1169 = vsel %vm347, %v1146, 0
    %1171 = vmatprep.subr.mxu0 0.0
    %1172 = vmatpush1.msra.mxu0 0.0
    %1173 = vmatprep.subr.mxu0 0.0
    %1174 = vmatpush1.msra.mxu0 0.0
    %1175 = vmatprep.subr.mxu0 0.0
    %1176 = vmatpush1.msra.mxu0 0.0
    %1177 = vmatprep.subr.mxu0 0.0
    %1178 = vmatpush1.msra.mxu0 0.0
    %1179 = vmatprep.subr.mxu0 0.0
    %1180 = vmatpush1.msra.mxu0 0.0
    %1181 = vmatprep.subr.mxu0 0.0
    %1182 = vmatpush1.msra.mxu0 0.0
    %1183 = vmatprep.subr.mxu0 0.0
    %1184 = vmatpush1.msra.mxu0 0.0
    %1185 = vmatprep.subr.mxu0 0.0
    %1186 = vmatpush1.msra.mxu0 0.0
    %1187 = vmatprep.subr.mxu0 0.0
    %1188 = vmatpush1.msra.mxu0 0.0
    %1189 = vmatprep.subr.mxu0 0.0
    %1190 = vmatpush1.msra.mxu0 0.0
    %1191 = vmatprep.subr.mxu0 0.0
    %1192 = vmatpush1.msra.mxu0 0.0
    %1193 = vmatprep.subr.mxu0 0.0
    %1194 = vmatpush1.msra.mxu0 0.0
    %1195 = vmatprep.subr.mxu0 0.0
    %1196 = vmatpush1.msra.mxu0 %v1154
    %1197 = vmatprep.subr.mxu0 0.0
    %1198 = vmatpush1.msra.mxu0 %v1152
    %1199 = vmatprep.subr.mxu0 0.0
    %1200 = vmatpush1.msra.mxu0 %v1150
    %1201 = vmatprep.subr.mxu0 0.0
    %1202 = vmatpush1.msra.mxu0 %v1148
    %1203 = vmatprep.subr.mxu0 0.0
    %1204 = vmatpush2.msra.mxu0 0.0
    %1205 = vmatprep.subr.mxu0 0.0
    %1206 = vmatpush2.msra.mxu0 0.0
    %1207 = vmatprep.subr.mxu0 0.0
    %1208 = vmatpush2.msra.mxu0 0.0
    %1209 = vmatprep.subr.mxu0 0.0
    %1210 = vmatpush2.msra.mxu0 0.0
    %1211 = vmatprep.subr.mxu0 0.0
    %1212 = vmatpush2.msra.mxu0 0.0
    %1213 = vmatprep.subr.mxu0 0.0
    %1214 = vmatpush2.msra.mxu0 0.0
    %1215 = vmatprep.subr.mxu0 0.0
    %1216 = vmatpush2.msra.mxu0 0.0
    %1217 = vmatprep.subr.mxu0 0.0
    %1218 = vmatpush2.msra.mxu0 0.0
    %1219 = vmatprep.subr.mxu0 0.0
    %1220 = vmatpush2.msra.mxu0 0.0
    %1221 = vmatprep.subr.mxu0 0.0
    %1222 = vmatpush2.msra.mxu0 0.0
    %1223 = vmatprep.subr.mxu0 0.0
    %1224 = vmatpush2.msra.mxu0 0.0
    %1225 = vmatprep.subr.mxu0 0.0
    %1226 = vmatpush2.msra.mxu0 0.0
    %1227 = vmatprep.subr.mxu0 0.0
    %1228 = vmatpush2.msra.mxu0 0.0
    %1229 = vmatprep.subr.mxu0 0.0
    %1230 = vmatpush2.msra.mxu0 0.0
    %1231 = vmatprep.subr.mxu0 0.0
    %1232 = vmatpush2.msra.mxu0 0.0
    %1233 = vmatprep.subr.mxu0 0.0
    %1234 = vmatpush2.msra.mxu0 0.0
    %1235 = vmatprep.mubr.f32.mxu0 0.0
    %1236 = vmatmul.mubr.f32.gmra.mxu0 %v1160
    %v1237 = vpop.f32.mrf.mxu0
    %v1238 = vadd.f32 0.0, %v1237
    %v1239 = vpop.f32.mrf.mxu0
    %1240 = vmatprep.mubr.f32.mxu0 0.0
    %1241 = vmatmul.mubr.f32.gmra.mxu0 %v1163
    %v1242 = vpop.f32.mrf.mxu0
    %v1243 = vadd.f32 0.0, %v1242
    %v1244 = vpop.f32.mrf.mxu0
    %1245 = vmatprep.mubr.f32.mxu0 0.0
    %1246 = vmatmul.mubr.f32.gmra.mxu0 %v1166
    %v1247 = vpop.f32.mrf.mxu0
    %v1248 = vadd.f32 0.0, %v1247
    %v1249 = vpop.f32.mrf.mxu0
    %1250 = vmatprep.mubr.f32.mxu0 0.0
    %1251 = vmatmul.mubr.f32.gmra.mxu0 %v1169
    %v1252 = vpop.f32.mrf.mxu0
    %v1253 = vadd.f32 0.0, %v1252
    %v1254 = vpop.f32.mrf.mxu0
    %1255 = vdwg.mxu0
    %v1256 = vrot.slane %v231, 2
    %v1258 = vsel %vm245, %v1238, 0
    %v1261 = vsel %vm245, %v1243, 0
    %v1264 = vsel %vm245, %v1248, 0
    %v1267 = vsel %vm245, %v1253, 0
    %v1269 = vsel %vm513, %v1256, 0
    %1271 = vmatprep.subr.mxu0 0.0
    %1272 = vmatpush1.msra.mxu0 0.0
    %1273 = vmatprep.subr.mxu0 0.0
    %1274 = vmatpush1.msra.mxu0 0.0
    %1275 = vmatprep.subr.mxu0 0.0
    %1276 = vmatpush1.msra.mxu0 0.0
    %1277 = vmatprep.subr.mxu0 0.0
    %1278 = vmatpush1.msra.mxu0 0.0
    %1279 = vmatprep.subr.mxu0 0.0
    %1280 = vmatpush1.msra.mxu0 0.0
    %1281 = vmatprep.subr.mxu0 0.0
    %1282 = vmatpush1.msra.mxu0 0.0
    %1283 = vmatprep.subr.mxu0 0.0
    %1284 = vmatpush1.msra.mxu0 0.0
    %1285 = vmatprep.subr.mxu0 0.0
    %1286 = vmatpush1.msra.mxu0 0.0
    %1287 = vmatprep.subr.mxu0 0.0
    %1288 = vmatpush1.msra.mxu0 0.0
    %1289 = vmatprep.subr.mxu0 0.0
    %1290 = vmatpush1.msra.mxu0 0.0
    %1291 = vmatprep.subr.mxu0 0.0
    %1292 = vmatpush1.msra.mxu0 0.0
    %1293 = vmatprep.subr.mxu0 0.0
    %1294 = vmatpush1.msra.mxu0 0.0
    %1295 = vmatprep.subr.mxu0 0.0
    %1296 = vmatpush1.msra.mxu0 0.0
    %1297 = vmatprep.subr.mxu0 0.0
    %1298 = vmatpush1.msra.mxu0 0.0
    %1299 = vmatprep.subr.mxu0 0.0
    %1300 = vmatpush1.msra.mxu0 0.0
    %1301 = vmatprep.subr.mxu0 0.0
    %1302 = vmatpush1.msra.mxu0 %v1269
    %1303 = vmatprep.subr.mxu0 0.0
    %1304 = vmatpush2.msra.mxu0 0.0
    %1305 = vmatprep.subr.mxu0 0.0
    %1306 = vmatpush2.msra.mxu0 0.0
    %1307 = vmatprep.subr.mxu0 0.0
    %1308 = vmatpush2.msra.mxu0 0.0
    %1309 = vmatprep.subr.mxu0 0.0
    %1310 = vmatpush2.msra.mxu0 0.0
    %1311 = vmatprep.subr.mxu0 0.0
    %1312 = vmatpush2.msra.mxu0 0.0
    %1313 = vmatprep.subr.mxu0 0.0
    %1314 = vmatpush2.msra.mxu0 0.0
    %1315 = vmatprep.subr.mxu0 0.0
    %1316 = vmatpush2.msra.mxu0 0.0
    %1317 = vmatprep.subr.mxu0 0.0
    %1318 = vmatpush2.msra.mxu0 0.0
    %1319 = vmatprep.subr.mxu0 0.0
    %1320 = vmatpush2.msra.mxu0 0.0
    %1321 = vmatprep.subr.mxu0 0.0
    %1322 = vmatpush2.msra.mxu0 0.0
    %1323 = vmatprep.subr.mxu0 0.0
    %1324 = vmatpush2.msra.mxu0 0.0
    %1325 = vmatprep.subr.mxu0 0.0
    %1326 = vmatpush2.msra.mxu0 0.0
    %1327 = vmatprep.subr.mxu0 0.0
    %1328 = vmatpush2.msra.mxu0 0.0
    %1329 = vmatprep.subr.mxu0 0.0
    %1330 = vmatpush2.msra.mxu0 0.0
    %1331 = vmatprep.subr.mxu0 0.0
    %1332 = vmatpush2.msra.mxu0 0.0
    %1333 = vmatprep.subr.mxu0 0.0
    %1334 = vmatpush2.msra.mxu0 0.0
    %1335 = vmatprep.mubr.f32.mxu0 0.0
    %1336 = vmatmul.mubr.f32.gmra.mxu0 %v1258
    %v1337 = vpop.f32.mrf.mxu0
    %v1338 = vadd.f32 0.0, %v1337
    %v1339 = vpop.f32.mrf.mxu0
    %1340 = vmatprep.mubr.f32.mxu0 0.0
    %1341 = vmatmul.mubr.f32.gmra.mxu0 %v1261
    %v1342 = vpop.f32.mrf.mxu0
    %v1343 = vadd.f32 0.0, %v1342
    %v1344 = vpop.f32.mrf.mxu0
    %1345 = vmatprep.mubr.f32.mxu0 0.0
    %1346 = vmatmul.mubr.f32.gmra.mxu0 %v1264
    %v1347 = vpop.f32.mrf.mxu0
    %v1348 = vadd.f32 0.0, %v1347
    %v1349 = vpop.f32.mrf.mxu0
    %1350 = vmatprep.mubr.f32.mxu0 0.0
    %1351 = vmatmul.mubr.f32.gmra.mxu0 %v1267
    %v1352 = vpop.f32.mrf.mxu0
    %v1353 = vadd.f32 0.0, %v1352
    %v1354 = vpop.f32.mrf.mxu0
    %1355 = vdwg.mxu0
    %v1356 = vadd.f32 %v982, %v1338
    %v1357 = vadd.f32 %v983, %v1343
    %v1358 = vadd.f32 %v984, %v1348
    %v1359 = vadd.f32 %v985, %v1353
    %1360 = vrot.lane.b32.xlu0 %v213, 125
    %v1361 = vpop.permute.xlu0 %1360
    %1362 = vrot.lane.b32.xlu0 %v218, 125
    %v1363 = vpop.permute.xlu0 %1362
    %1364 = vrot.lane.b32.xlu0 %v223, 125
    %v1365 = vpop.permute.xlu0 %1364
    %1366 = vrot.lane.b32.xlu0 %v228, 125
    %v1367 = vpop.permute.xlu0 %1366
    %1368 = vrot.lane.b32.xlu0 %v213, 121
    %v1369 = vpop.permute.xlu0 %1368
    %1370 = vrot.lane.b32.xlu0 %v218, 121
    %v1371 = vpop.permute.xlu0 %1370
    %1372 = vrot.lane.b32.xlu0 %v223, 121
    %v1373 = vpop.permute.xlu0 %1372
    %1374 = vrot.lane.b32.xlu0 %v228, 121
    %v1375 = vpop.permute.xlu0 %1374
    %v1376 = vsel %vm245, %v1361, 0
    %v1378 = vsel %vm245, %v1363, 0
    %v1380 = vsel %vm245, %v1365, 0
    %v1382 = vsel %vm245, %v1367, 0
    %v1384 = vsel %vm245, %v1369, 0
    %v1386 = vsel %vm245, %v1371, 0
    %v1388 = vsel %vm245, %v1373, 0
    %v1390 = vsel %vm245, %v1375, 0
    %1392 = vmatprep.subr.mxu0 0.0
    %1393 = vmatpush1.xpose.msra.mxu0 0.0
    %1394 = vmatprep.subr.mxu0 0.0
    %1395 = vmatpush1.xpose.msra.mxu0 0.0
    %1396 = vmatprep.subr.mxu0 0.0
    %1397 = vmatpush1.xpose.msra.mxu0 0.0
    %1398 = vmatprep.subr.mxu0 0.0
    %1399 = vmatpush1.xpose.msra.mxu0 0.0
    %1400 = vmatprep.subr.mxu0 0.0
    %1401 = vmatpush1.xpose.msra.mxu0 0.0
    %1402 = vmatprep.subr.mxu0 0.0
    %1403 = vmatpush1.xpose.msra.mxu0 0.0
    %1404 = vmatprep.subr.mxu0 0.0
    %1405 = vmatpush1.xpose.msra.mxu0 0.0
    %1406 = vmatprep.subr.mxu0 0.0
    %1407 = vmatpush1.xpose.msra.mxu0 0.0
    %1408 = vmatprep.subr.mxu0 0.0
    %1409 = vmatpush1.xpose.msra.mxu0 0.0
    %1410 = vmatprep.subr.mxu0 0.0
    %1411 = vmatpush1.xpose.msra.mxu0 0.0
    %1412 = vmatprep.subr.mxu0 0.0
    %1413 = vmatpush1.xpose.msra.mxu0 0.0
    %1414 = vmatprep.subr.mxu0 0.0
    %1415 = vmatpush1.xpose.msra.mxu0 0.0
    %1416 = vmatprep.subr.mxu0 0.0
    %1417 = vmatpush1.xpose.msra.mxu0 %v1390
    %1418 = vmatprep.subr.mxu0 0.0
    %1419 = vmatpush1.xpose.msra.mxu0 %v1388
    %1420 = vmatprep.subr.mxu0 0.0
    %1421 = vmatpush1.xpose.msra.mxu0 %v1386
    %1422 = vmatprep.subr.mxu0 0.0
    %1423 = vmatpush1.xpose.msra.mxu0 %v1384
    %1424 = vmatprep.subr.mxu0 0.0
    %1425 = vmatpush2.xpose.msra.mxu0 0.0
    %1426 = vmatprep.subr.mxu0 0.0
    %1427 = vmatpush2.xpose.msra.mxu0 0.0
    %1428 = vmatprep.subr.mxu0 0.0
    %1429 = vmatpush2.xpose.msra.mxu0 0.0
    %1430 = vmatprep.subr.mxu0 0.0
    %1431 = vmatpush2.xpose.msra.mxu0 0.0
    %1432 = vmatprep.subr.mxu0 0.0
    %1433 = vmatpush2.xpose.msra.mxu0 0.0
    %1434 = vmatprep.subr.mxu0 0.0
    %1435 = vmatpush2.xpose.msra.mxu0 0.0
    %1436 = vmatprep.subr.mxu0 0.0
    %1437 = vmatpush2.xpose.msra.mxu0 0.0
    %1438 = vmatprep.subr.mxu0 0.0
    %1439 = vmatpush2.xpose.msra.mxu0 0.0
    %1440 = vmatprep.subr.mxu0 0.0
    %1441 = vmatpush2.xpose.msra.mxu0 0.0
    %1442 = vmatprep.subr.mxu0 0.0
    %1443 = vmatpush2.xpose.msra.mxu0 0.0
    %1444 = vmatprep.subr.mxu0 0.0
    %1445 = vmatpush2.xpose.msra.mxu0 0.0
    %1446 = vmatprep.subr.mxu0 0.0
    %1447 = vmatpush2.xpose.msra.mxu0 0.0
    %1448 = vmatprep.subr.mxu0 0.0
    %1449 = vmatpush2.xpose.msra.mxu0 0.0
    %1450 = vmatprep.subr.mxu0 0.0
    %1451 = vmatpush2.xpose.msra.mxu0 0.0
    %1452 = vmatprep.subr.mxu0 0.0
    %1453 = vmatpush2.xpose.msra.mxu0 0.0
    %1454 = vmatprep.subr.mxu0 0.0
    %1455 = vmatpush2.xpose.msra.mxu0 0.0
    %1456 = vmatprep.mubr.f32.mxu0 0.0
    %1457 = vmatmul.mubr.f32.gmra.mxu0 %v1376
    %v1458 = vpop.f32.mrf.mxu0
    %v1459 = vadd.f32 %v117, %v1458
    %v1460 = vpop.f32.mrf.mxu0
    %1461 = vmatprep.mubr.f32.mxu0 0.0
    %1462 = vmatmul.mubr.f32.gmra.mxu0 %v1378
    %v1463 = vpop.f32.mrf.mxu0
    %v1464 = vadd.f32 %v118, %v1463
    %v1465 = vpop.f32.mrf.mxu0
    %1466 = vmatprep.mubr.f32.mxu0 0.0
    %1467 = vmatmul.mubr.f32.gmra.mxu0 %v1380
    %v1468 = vpop.f32.mrf.mxu0
    %v1469 = vadd.f32 %v119, %v1468
    %v1470 = vpop.f32.mrf.mxu0
    %1471 = vmatprep.mubr.f32.mxu0 0.0
    %1472 = vmatmul.mubr.f32.gmra.mxu0 %v1382
    %v1473 = vpop.f32.mrf.mxu0
    %v1474 = vadd.f32 %v120, %v1473
    %v1475 = vpop.f32.mrf.mxu0
    %1476 = vdwg.mxu0
    %v1477 = vsel %vm347, %v1459, -inf
    %1478 = vmax.xlane.f32.xlu0 %v1477
    %v1479 = vpop.xlane.xlu0 %1478
    %v1480 = vsel %vm347, %v1464, -inf
    %1481 = vmax.xlane.f32.xlu0 %v1480
    %v1482 = vpop.xlane.xlu0 %1481
    %v1483 = vsel %vm347, %v1469, -inf
    %1484 = vmax.xlane.f32.xlu0 %v1483
    %v1485 = vpop.xlane.xlu0 %1484
    %v1486 = vsel %vm347, %v1474, -inf
    %1487 = vmax.xlane.f32.xlu0 %v1486
    %v1488 = vpop.xlane.xlu0 %1487
    %v1489 = vsub.f32 %v1459, %v1479
    %v1490 = vsub.f32 %v1464, %v1482
    %v1491 = vsub.f32 %v1469, %v1485
    %v1492 = vsub.f32 %v1474, %v1488
    %v1493 = vmul.f32 %v1489, 1.442695
    %v1494 = vpow.pop %v1493
    %v1495 = vmul.f32 %v1490, 1.442695
    %v1496 = vpow.pop %v1495
    %v1497 = vmul.f32 %v1491, 1.442695
    %v1498 = vpow.pop %v1497
    %v1499 = vmul.f32 %v1492, 1.442695
    %v1500 = vpow.pop %v1499
    %v1501 = vsel %vm347, %v1494, 0.0
    %1502 = vadd.xlane.f32.xlu0 %v1501
    %v1503 = vpop.xlane.xlu0 %1502
    %v1504 = vsel %vm347, %v1496, 0.0
    %1505 = vadd.xlane.f32.xlu0 %v1504
    %v1506 = vpop.xlane.xlu0 %1505
    %v1507 = vsel %vm347, %v1498, 0.0
    %1508 = vadd.xlane.f32.xlu0 %v1507
    %v1509 = vpop.xlane.xlu0 %1508
    %v1510 = vsel %vm347, %v1500, 0.0
    %1511 = vadd.xlane.f32.xlu0 %v1510
    %v1512 = vpop.xlane.xlu0 %1511
    %v1513 = vrcp.pop %v1503
    %v1514 = vrcp.pop %v1506
    %v1515 = vrcp.pop %v1509
    %v1516 = vrcp.pop %v1512
    %v1517 = vmul.f32 %v1494, %v1513
    %v1518 = vmul.f32 %v1496, %v1514
    %v1519 = vmul.f32 %v1498, %v1515
    %v1520 = vmul.f32 %v1500, %v1516
    %1521 = vrot.lane.b32.xlu0 %v213, 117
    %v1522 = vpop.permute.xlu0 %1521
    %1523 = vrot.lane.b32.xlu0 %v218, 117
    %v1524 = vpop.permute.xlu0 %1523
    %1525 = vrot.lane.b32.xlu0 %v223, 117
    %v1526 = vpop.permute.xlu0 %1525
    %1527 = vrot.lane.b32.xlu0 %v228, 117
    %v1528 = vpop.permute.xlu0 %1527
    %v1534 = vsel %vm347, %v1517, 0
    %v1537 = vsel %vm347, %v1518, 0
    %v1540 = vsel %vm347, %v1519, 0
    %v1543 = vsel %vm347, %v1520, 0
    %1545 = vmatprep.subr.mxu0 0.0
    %1546 = vmatpush1.msra.mxu0 0.0
    %1547 = vmatprep.subr.mxu0 0.0
    %1548 = vmatpush1.msra.mxu0 0.0
    %1549 = vmatprep.subr.mxu0 0.0
    %1550 = vmatpush1.msra.mxu0 0.0
    %1551 = vmatprep.subr.mxu0 0.0
    %1552 = vmatpush1.msra.mxu0 0.0
    %1553 = vmatprep.subr.mxu0 0.0
    %1554 = vmatpush1.msra.mxu0 0.0
    %1555 = vmatprep.subr.mxu0 0.0
    %1556 = vmatpush1.msra.mxu0 0.0
    %1557 = vmatprep.subr.mxu0 0.0
    %1558 = vmatpush1.msra.mxu0 0.0
    %1559 = vmatprep.subr.mxu0 0.0
    %1560 = vmatpush1.msra.mxu0 0.0
    %1561 = vmatprep.subr.mxu0 0.0
    %1562 = vmatpush1.msra.mxu0 0.0
    %1563 = vmatprep.subr.mxu0 0.0
    %1564 = vmatpush1.msra.mxu0 0.0
    %1565 = vmatprep.subr.mxu0 0.0
    %1566 = vmatpush1.msra.mxu0 0.0
    %1567 = vmatprep.subr.mxu0 0.0
    %1568 = vmatpush1.msra.mxu0 0.0
    %1569 = vmatprep.subr.mxu0 0.0
    %1570 = vmatpush1.msra.mxu0 %v1528
    %1571 = vmatprep.subr.mxu0 0.0
    %1572 = vmatpush1.msra.mxu0 %v1526
    %1573 = vmatprep.subr.mxu0 0.0
    %1574 = vmatpush1.msra.mxu0 %v1524
    %1575 = vmatprep.subr.mxu0 0.0
    %1576 = vmatpush1.msra.mxu0 %v1522
    %1577 = vmatprep.subr.mxu0 0.0
    %1578 = vmatpush2.msra.mxu0 0.0
    %1579 = vmatprep.subr.mxu0 0.0
    %1580 = vmatpush2.msra.mxu0 0.0
    %1581 = vmatprep.subr.mxu0 0.0
    %1582 = vmatpush2.msra.mxu0 0.0
    %1583 = vmatprep.subr.mxu0 0.0
    %1584 = vmatpush2.msra.mxu0 0.0
    %1585 = vmatprep.subr.mxu0 0.0
    %1586 = vmatpush2.msra.mxu0 0.0
    %1587 = vmatprep.subr.mxu0 0.0
    %1588 = vmatpush2.msra.mxu0 0.0
    %1589 = vmatprep.subr.mxu0 0.0
    %1590 = vmatpush2.msra.mxu0 0.0
    %1591 = vmatprep.subr.mxu0 0.0
    %1592 = vmatpush2.msra.mxu0 0.0
    %1593 = vmatprep.subr.mxu0 0.0
    %1594 = vmatpush2.msra.mxu0 0.0
    %1595 = vmatprep.subr.mxu0 0.0
    %1596 = vmatpush2.msra.mxu0 0.0
    %1597 = vmatprep.subr.mxu0 0.0
    %1598 = vmatpush2.msra.mxu0 0.0
    %1599 = vmatprep.subr.mxu0 0.0
    %1600 = vmatpush2.msra.mxu0 0.0
    %1601 = vmatprep.subr.mxu0 0.0
    %1602 = vmatpush2.msra.mxu0 0.0
    %1603 = vmatprep.subr.mxu0 0.0
    %1604 = vmatpush2.msra.mxu0 0.0
    %1605 = vmatprep.subr.mxu0 0.0
    %1606 = vmatpush2.msra.mxu0 0.0
    %1607 = vmatprep.subr.mxu0 0.0
    %1608 = vmatpush2.msra.mxu0 0.0
    %1609 = vmatprep.mubr.f32.mxu0 0.0
    %1610 = vmatmul.mubr.f32.gmra.mxu0 %v1534
    %v1611 = vpop.f32.mrf.mxu0
    %v1612 = vadd.f32 0.0, %v1611
    %v1613 = vpop.f32.mrf.mxu0
    %1614 = vmatprep.mubr.f32.mxu0 0.0
    %1615 = vmatmul.mubr.f32.gmra.mxu0 %v1537
    %v1616 = vpop.f32.mrf.mxu0
    %v1617 = vadd.f32 0.0, %v1616
    %v1618 = vpop.f32.mrf.mxu0
    %1619 = vmatprep.mubr.f32.mxu0 0.0
    %1620 = vmatmul.mubr.f32.gmra.mxu0 %v1540
    %v1621 = vpop.f32.mrf.mxu0
    %v1622 = vadd.f32 0.0, %v1621
    %v1623 = vpop.f32.mrf.mxu0
    %1624 = vmatprep.mubr.f32.mxu0 0.0
    %1625 = vmatmul.mubr.f32.gmra.mxu0 %v1543
    %v1626 = vpop.f32.mrf.mxu0
    %v1627 = vadd.f32 0.0, %v1626
    %v1628 = vpop.f32.mrf.mxu0
    %1629 = vdwg.mxu0
    %v1630 = vrot.slane %v231, 3
    %v1632 = vsel %vm245, %v1612, 0
    %v1635 = vsel %vm245, %v1617, 0
    %v1638 = vsel %vm245, %v1622, 0
    %v1641 = vsel %vm245, %v1627, 0
    %v1643 = vsel %vm513, %v1630, 0
    %1645 = vmatprep.subr.mxu0 0.0
    %1646 = vmatpush1.msra.mxu0 0.0
    %1647 = vmatprep.subr.mxu0 0.0
    %1648 = vmatpush1.msra.mxu0 0.0
    %1649 = vmatprep.subr.mxu0 0.0
    %1650 = vmatpush1.msra.mxu0 0.0
    %1651 = vmatprep.subr.mxu0 0.0
    %1652 = vmatpush1.msra.mxu0 0.0
    %1653 = vmatprep.subr.mxu0 0.0
    %1654 = vmatpush1.msra.mxu0 0.0
    %1655 = vmatprep.subr.mxu0 0.0
    %1656 = vmatpush1.msra.mxu0 0.0
    %1657 = vmatprep.subr.mxu0 0.0
    %1658 = vmatpush1.msra.mxu0 0.0
    %1659 = vmatprep.subr.mxu0 0.0
    %1660 = vmatpush1.msra.mxu0 0.0
    %1661 = vmatprep.subr.mxu0 0.0
    %1662 = vmatpush1.msra.mxu0 0.0
    %1663 = vmatprep.subr.mxu0 0.0
    %1664 = vmatpush1.msra.mxu0 0.0
    %1665 = vmatprep.subr.mxu0 0.0
    %1666 = vmatpush1.msra.mxu0 0.0
    %1667 = vmatprep.subr.mxu0 0.0
    %1668 = vmatpush1.msra.mxu0 0.0
    %1669 = vmatprep.subr.mxu0 0.0
    %1670 = vmatpush1.msra.mxu0 0.0
    %1671 = vmatprep.subr.mxu0 0.0
    %1672 = vmatpush1.msra.mxu0 0.0
    %1673 = vmatprep.subr.mxu0 0.0
    %1674 = vmatpush1.msra.mxu0 0.0
    %1675 = vmatprep.subr.mxu0 0.0
    %1676 = vmatpush1.msra.mxu0 %v1643
    %1677 = vmatprep.subr.mxu0 0.0
    %1678 = vmatpush2.msra.mxu0 0.0
    %1679 = vmatprep.subr.mxu0 0.0
    %1680 = vmatpush2.msra.mxu0 0.0
    %1681 = vmatprep.subr.mxu0 0.0
    %1682 = vmatpush2.msra.mxu0 0.0
    %1683 = vmatprep.subr.mxu0 0.0
    %1684 = vmatpush2.msra.mxu0 0.0
    %1685 = vmatprep.subr.mxu0 0.0
    %1686 = vmatpush2.msra.mxu0 0.0
    %1687 = vmatprep.subr.mxu0 0.0
    %1688 = vmatpush2.msra.mxu0 0.0
    %1689 = vmatprep.subr.mxu0 0.0
    %1690 = vmatpush2.msra.mxu0 0.0
    %1691 = vmatprep.subr.mxu0 0.0
    %1692 = vmatpush2.msra.mxu0 0.0
    %1693 = vmatprep.subr.mxu0 0.0
    %1694 = vmatpush2.msra.mxu0 0.0
    %1695 = vmatprep.subr.mxu0 0.0
    %1696 = vmatpush2.msra.mxu0 0.0
    %1697 = vmatprep.subr.mxu0 0.0
    %1698 = vmatpush2.msra.mxu0 0.0
    %1699 = vmatprep.subr.mxu0 0.0
    %1700 = vmatpush2.msra.mxu0 0.0
    %1701 = vmatprep.subr.mxu0 0.0
    %1702 = vmatpush2.msra.mxu0 0.0
    %1703 = vmatprep.subr.mxu0 0.0
    %1704 = vmatpush2.msra.mxu0 0.0
    %1705 = vmatprep.subr.mxu0 0.0
    %1706 = vmatpush2.msra.mxu0 0.0
    %1707 = vmatprep.subr.mxu0 0.0
    %1708 = vmatpush2.msra.mxu0 0.0
    %1709 = vmatprep.mubr.f32.mxu0 0.0
    %1710 = vmatmul.mubr.f32.gmra.mxu0 %v1632
    %v1711 = vpop.f32.mrf.mxu0
    %v1712 = vadd.f32 0.0, %v1711
    %v1713 = vpop.f32.mrf.mxu0
    %1714 = vmatprep.mubr.f32.mxu0 0.0
    %1715 = vmatmul.mubr.f32.gmra.mxu0 %v1635
    %v1716 = vpop.f32.mrf.mxu0
    %v1717 = vadd.f32 0.0, %v1716
    %v1718 = vpop.f32.mrf.mxu0
    %1719 = vmatprep.mubr.f32.mxu0 0.0
    %1720 = vmatmul.mubr.f32.gmra.mxu0 %v1638
    %v1721 = vpop.f32.mrf.mxu0
    %v1722 = vadd.f32 0.0, %v1721
    %v1723 = vpop.f32.mrf.mxu0
    %1724 = vmatprep.mubr.f32.mxu0 0.0
    %1725 = vmatmul.mubr.f32.gmra.mxu0 %v1641
    %v1726 = vpop.f32.mrf.mxu0
    %v1727 = vadd.f32 0.0, %v1726
    %v1728 = vpop.f32.mrf.mxu0
    %1729 = vdwg.mxu0
    %v1730 = vadd.f32 %v1356, %v1712
    %v1731 = vadd.f32 %v1357, %v1717
    %v1732 = vadd.f32 %v1358, %v1722
    %v1733 = vadd.f32 %v1359, %v1727
    %v1734 = vadd.f32 %v113, %v1730
    %v1735 = vadd.f32 %v114, %v1731
    %v1736 = vadd.f32 %v115, %v1732
    %v1737 = vadd.f32 %v116, %v1733
    %v1738 = vld [vmem:[%s9] sm:$0x1]
    %v1739 = vld [vmem:[%s10] sm:$0x1]
    %v1740 = vsel %vm129, %v1734, 0.0
    %1741 = vadd.xlane.f32.xlu0 %v1740
    %v1742 = vpop.xlane.xlu0 %1741
    %v1743 = vsel %vm129, %v1735, 0.0
    %1744 = vadd.xlane.f32.xlu0 %v1743
    %v1745 = vpop.xlane.xlu0 %1744
    %v1746 = vsel %vm129, %v1736, 0.0
    %1747 = vadd.xlane.f32.xlu0 %v1746
    %v1748 = vpop.xlane.xlu0 %1747
    %v1749 = vsel %vm129, %v1737, 0.0
    %1750 = vadd.xlane.f32.xlu0 %v1749
    %v1751 = vpop.xlane.xlu0 %1750
    %v1752 = vrcp.pop 4.0
    %v1753 = vmul.f32 %v1742, %v1752
    %v1754 = vmul.f32 %v1745, %v1752
    %v1755 = vmul.f32 %v1748, %v1752
    %v1756 = vmul.f32 %v1751, %v1752
    %v1757 = vsub.f32 %v1734, %v1753
    %v1758 = vsub.f32 %v1735, %v1754
    %v1759 = vsub.f32 %v1736, %v1755
    %v1760 = vsub.f32 %v1737, %v1756
    %v1761 = vmul.f32 %v1757, %v1757
    %v1762 = vmul.f32 %v1758, %v1758
    %v1763 = vmul.f32 %v1759, %v1759
    %v1764 = vmul.f32 %v1760, %v1760
    %v1765 = vsel %vm129, %v1761, 0.0
    %1766 = vadd.xlane.f32.xlu0 %v1765
    %v1767 = vpop.xlane.xlu0 %1766
    %v1768 = vsel %vm129, %v1762, 0.0
    %1769 = vadd.xlane.f32.xlu0 %v1768
    %v1770 = vpop.xlane.xlu0 %1769
    %v1771 = vsel %vm129, %v1763, 0.0
    %1772 = vadd.xlane.f32.xlu0 %v1771
    %v1773 = vpop.xlane.xlu0 %1772
    %v1774 = vsel %vm129, %v1764, 0.0
    %1775 = vadd.xlane.f32.xlu0 %v1774
    %v1776 = vpop.xlane.xlu0 %1775
    %v1777 = vmul.f32 %v1767, %v1752
    %v1778 = vmul.f32 %v1770, %v1752
    %v1779 = vmul.f32 %v1773, %v1752
    %v1780 = vmul.f32 %v1776, %v1752
    %v1781 = vadd.f32 %v1777, 1e-05
    %v1782 = vadd.f32 %v1778, 1e-05
    %v1783 = vadd.f32 %v1779, 1e-05
    %v1784 = vadd.f32 %v1780, 1e-05
    %v1785 = vrsqrt.pop %v1781
    %v1786 = vrsqrt.pop %v1782
    %v1787 = vrsqrt.pop %v1783
    %v1788 = vrsqrt.pop %v1784
    %v1789 = vmul.f32 %v1757, %v1785
    %v1790 = vmul.f32 %v1758, %v1786
    %v1791 = vmul.f32 %v1759, %v1787
    %v1792 = vmul.f32 %v1760, %v1788
    %v1794 = vlaneseq
    %v1795 = vshrl.u32 %v1794, 7
    %v1796 = vsub.s32 0, %v1795
    %v1797 = vrot.slane %v1738, %v1796
    %v1799 = vmul.f32 %v1789, %v1797
    %v1800 = vmul.f32 %v1790, %v1797
    %v1801 = vmul.f32 %v1791, %v1797
    %v1802 = vmul.f32 %v1792, %v1797
    %v1804 = vlaneseq
    %v1805 = vshrl.u32 %v1804, 7
    %v1806 = vsub.s32 0, %v1805
    %v1807 = vrot.slane %v1739, %v1806
    %v1809 = vadd.f32 %v1799, %v1807
    %v1810 = vadd.f32 %v1800, %v1807
    %v1811 = vadd.f32 %v1801, %v1807
    %v1812 = vadd.f32 %v1802, %v1807
    %v1813 = vld [vmem:[%s11] sm:$0xff]
    %v1814 = vld [vmem:[%s11 + $0x8] sm:$0xff]
    %v1815 = vld [vmem:[%s12] sm:$0xf]
    %v1817 = vlaneseq
    %v1818 = vshrl.u32 %v1817, 7
    %v1819 = vsub.s32 0, %v1818
    %v1820 = vrot.slane %v1815, %v1819
    %v1821 = vlaneseq
    %v1822 = vshrl.u32 %v1821, 7
    %v1823 = vsub.s32 1, %v1822
    %v1824 = vrot.slane %v1815, %v1823
    %v1825 = vlaneseq
    %v1826 = vshrl.u32 %v1825, 7
    %v1827 = vsub.s32 2, %v1826
    %v1828 = vrot.slane %v1815, %v1827
    %v1829 = vlaneseq
    %v1830 = vshrl.u32 %v1829, 7
    %v1831 = vsub.s32 3, %v1830
    %v1832 = vrot.slane %v1815, %v1831
    %v1839 = vcombine.high %v1813, %v1813
    %v1840 = vcombine.high %v1814, %v1814
    %v1842 = vsel %vm129, %v1809, 0
    %v1845 = vsel %vm129, %v1810, 0
    %v1848 = vsel %vm129, %v1811, 0
    %v1851 = vsel %vm129, %v1812, 0
    %v1853 = vsel %vm142, %v1813, 0
    %v1855 = vsel %vm142, %v1839, 0
    %v1857 = vsel %vm142, %v1814, 0
    %v1859 = vsel %vm142, %v1840, 0
    %1861 = vmatprep.subr.mxu0 0.0
    %1862 = vmatpush1.msra.mxu0 0.0
    %1863 = vmatprep.subr.mxu0 0.0
    %1864 = vmatpush1.msra.mxu0 0.0
    %1865 = vmatprep.subr.mxu0 0.0
    %1866 = vmatpush1.msra.mxu0 0.0
    %1867 = vmatprep.subr.mxu0 0.0
    %1868 = vmatpush1.msra.mxu0 0.0
    %1869 = vmatprep.subr.mxu0 0.0
    %1870 = vmatpush1.msra.mxu0 0.0
    %1871 = vmatprep.subr.mxu0 0.0
    %1872 = vmatpush1.msra.mxu0 0.0
    %1873 = vmatprep.subr.mxu0 0.0
    %1874 = vmatpush1.msra.mxu0 0.0
    %1875 = vmatprep.subr.mxu0 0.0
    %1876 = vmatpush1.msra.mxu0 0.0
    %1877 = vmatprep.subr.mxu0 0.0
    %1878 = vmatpush1.msra.mxu0 0.0
    %1879 = vmatprep.subr.mxu0 0.0
    %1880 = vmatpush1.msra.mxu0 0.0
    %1881 = vmatprep.subr.mxu0 0.0
    %1882 = vmatpush1.msra.mxu0 0.0
    %1883 = vmatprep.subr.mxu0 0.0
    %1884 = vmatpush1.msra.mxu0 0.0
    %1885 = vmatprep.subr.mxu0 0.0
    %1886 = vmatpush1.msra.mxu0 0.0
    %1887 = vmatprep.subr.mxu0 0.0
    %1888 = vmatpush1.msra.mxu0 0.0
    %1889 = vmatprep.subr.mxu0 0.0
    %1890 = vmatpush1.msra.mxu0 0.0
    %1891 = vmatprep.subr.mxu0 %v1855
    %1892 = vmatpush1.msra.mxu0 %v1853
    %1893 = vmatprep.subr.mxu0 0.0
    %1894 = vmatpush2.msra.mxu0 0.0
    %1895 = vmatprep.subr.mxu0 0.0
    %1896 = vmatpush2.msra.mxu0 0.0
    %1897 = vmatprep.subr.mxu0 0.0
    %1898 = vmatpush2.msra.mxu0 0.0
    %1899 = vmatprep.subr.mxu0 0.0
    %1900 = vmatpush2.msra.mxu0 0.0
    %1901 = vmatprep.subr.mxu0 0.0
    %1902 = vmatpush2.msra.mxu0 0.0
    %1903 = vmatprep.subr.mxu0 0.0
    %1904 = vmatpush2.msra.mxu0 0.0
    %1905 = vmatprep.subr.mxu0 0.0
    %1906 = vmatpush2.msra.mxu0 0.0
    %1907 = vmatprep.subr.mxu0 0.0
    %1908 = vmatpush2.msra.mxu0 0.0
    %1909 = vmatprep.subr.mxu0 0.0
    %1910 = vmatpush2.msra.mxu0 0.0
    %1911 = vmatprep.subr.mxu0 0.0
    %1912 = vmatpush2.msra.mxu0 0.0
    %1913 = vmatprep.subr.mxu0 0.0
    %1914 = vmatpush2.msra.mxu0 0.0
    %1915 = vmatprep.subr.mxu0 0.0
    %1916 = vmatpush2.msra.mxu0 0.0
    %1917 = vmatprep.subr.mxu0 0.0
    %1918 = vmatpush2.msra.mxu0 0.0
    %1919 = vmatprep.subr.mxu0 0.0
    %1920 = vmatpush2.msra.mxu0 0.0
    %1921 = vmatprep.subr.mxu0 0.0
    %1922 = vmatpush2.msra.mxu0 0.0
    %1923 = vmatprep.subr.mxu0 0.0
    %1924 = vmatpush2.msra.mxu0 0.0
    %1925 = vmatprep.mubr.f32.mxu0 0.0
    %1926 = vmatmul.mubr.f32.gmra.mxu0 %v1842
    %v1927 = vpop.f32.mrf.mxu0
    %v1928 = vadd.f32 %v1820, %v1927
    %v1929 = vpop.f32.mrf.mxu0
    %v1930 = vadd.f32 %v1824, %v1929
    %1931 = vmatprep.mubr.f32.mxu0 0.0
    %1932 = vmatmul.mubr.f32.gmra.mxu0 %v1845
    %v1933 = vpop.f32.mrf.mxu0
    %v1934 = vadd.f32 %v1820, %v1933
    %v1935 = vpop.f32.mrf.mxu0
    %v1936 = vadd.f32 %v1824, %v1935
    %1937 = vmatprep.mubr.f32.mxu0 0.0
    %1938 = vmatmul.mubr.f32.gmra.mxu0 %v1848
    %v1939 = vpop.f32.mrf.mxu0
    %v1940 = vadd.f32 %v1820, %v1939
    %v1941 = vpop.f32.mrf.mxu0
    %v1942 = vadd.f32 %v1824, %v1941
    %1943 = vmatprep.mubr.f32.mxu0 0.0
    %1944 = vmatmul.mubr.f32.gmra.mxu0 %v1851
    %v1945 = vpop.f32.mrf.mxu0
    %v1946 = vadd.f32 %v1820, %v1945
    %v1947 = vpop.f32.mrf.mxu0
    %v1948 = vadd.f32 %v1824, %v1947
    %1949 = vdwg.mxu0
    %1950 = vmatprep.subr.mxu0 0.0
    %1951 = vmatpush1.msra.mxu0 0.0
    %1952 = vmatprep.subr.mxu0 0.0
    %1953 = vmatpush1.msra.mxu0 0.0
    %1954 = vmatprep.subr.mxu0 0.0
    %1955 = vmatpush1.msra.mxu0 0.0
    %1956 = vmatprep.subr.mxu0 0.0
    %1957 = vmatpush1.msra.mxu0 0.0
    %1958 = vmatprep.subr.mxu0 0.0
    %1959 = vmatpush1.msra.mxu0 0.0
    %1960 = vmatprep.subr.mxu0 0.0
    %1961 = vmatpush1.msra.mxu0 0.0
    %1962 = vmatprep.subr.mxu0 0.0
    %1963 = vmatpush1.msra.mxu0 0.0
    %1964 = vmatprep.subr.mxu0 0.0
    %1965 = vmatpush1.msra.mxu0 0.0
    %1966 = vmatprep.subr.mxu0 0.0
    %1967 = vmatpush1.msra.mxu0 0.0
    %1968 = vmatprep.subr.mxu0 0.0
    %1969 = vmatpush1.msra.mxu0 0.0
    %1970 = vmatprep.subr.mxu0 0.0
    %1971 = vmatpush1.msra.mxu0 0.0
    %1972 = vmatprep.subr.mxu0 0.0
    %1973 = vmatpush1.msra.mxu0 0.0
    %1974 = vmatprep.subr.mxu0 0.0
    %1975 = vmatpush1.msra.mxu0 0.0
    %1976 = vmatprep.subr.mxu0 0.0
    %1977 = vmatpush1.msra.mxu0 0.0
    %1978 = vmatprep.subr.mxu0 0.0
    %1979 = vmatpush1.msra.mxu0 0.0
    %1980 = vmatprep.subr.mxu0 %v1859
    %1981 = vmatpush1.msra.mxu0 %v1857
    %1982 = vmatprep.subr.mxu0 0.0
    %1983 = vmatpush2.msra.mxu0 0.0
    %1984 = vmatprep.subr.mxu0 0.0
    %1985 = vmatpush2.msra.mxu0 0.0
    %1986 = vmatprep.subr.mxu0 0.0
    %1987 = vmatpush2.msra.mxu0 0.0
    %1988 = vmatprep.subr.mxu0 0.0
    %1989 = vmatpush2.msra.mxu0 0.0
    %1990 = vmatprep.subr.mxu0 0.0
    %1991 = vmatpush2.msra.mxu0 0.0
    %1992 = vmatprep.subr.mxu0 0.0
    %1993 = vmatpush2.msra.mxu0 0.0
    %1994 = vmatprep.subr.mxu0 0.0
    %1995 = vmatpush2.msra.mxu0 0.0
    %1996 = vmatprep.subr.mxu0 0.0
    %1997 = vmatpush2.msra.mxu0 0.0
    %1998 = vmatprep.subr.mxu0 0.0
    %1999 = vmatpush2.msra.mxu0 0.0
    %2000 = vmatprep.subr.mxu0 0.0
    %2001 = vmatpush2.msra.mxu0 0.0
    %2002 = vmatprep.subr.mxu0 0.0
    %2003 = vmatpush2.msra.mxu0 0.0
    %2004 = vmatprep.subr.mxu0 0.0
    %2005 = vmatpush2.msra.mxu0 0.0
    %2006 = vmatprep.subr.mxu0 0.0
    %2007 = vmatpush2.msra.mxu0 0.0
    %2008 = vmatprep.subr.mxu0 0.0
    %2009 = vmatpush2.msra.mxu0 0.0
    %2010 = vmatprep.subr.mxu0 0.0
    %2011 = vmatpush2.msra.mxu0 0.0
    %2012 = vmatprep.subr.mxu0 0.0
    %2013 = vmatpush2.msra.mxu0 0.0
    %2014 = vmatprep.mubr.f32.mxu0 0.0
    %2015 = vmatmul.mubr.f32.gmra.mxu0 %v1842
    %v2016 = vpop.f32.mrf.mxu0
    %v2017 = vadd.f32 %v1828, %v2016
    %v2018 = vpop.f32.mrf.mxu0
    %v2019 = vadd.f32 %v1832, %v2018
    %2020 = vmatprep.mubr.f32.mxu0 0.0
    %2021 = vmatmul.mubr.f32.gmra.mxu0 %v1845
    %v2022 = vpop.f32.mrf.mxu0
    %v2023 = vadd.f32 %v1828, %v2022
    %v2024 = vpop.f32.mrf.mxu0
    %v2025 = vadd.f32 %v1832, %v2024
    %2026 = vmatprep.mubr.f32.mxu0 0.0
    %2027 = vmatmul.mubr.f32.gmra.mxu0 %v1848
    %v2028 = vpop.f32.mrf.mxu0
    %v2029 = vadd.f32 %v1828, %v2028
    %v2030 = vpop.f32.mrf.mxu0
    %v2031 = vadd.f32 %v1832, %v2030
    %2032 = vmatprep.mubr.f32.mxu0 0.0
    %2033 = vmatmul.mubr.f32.gmra.mxu0 %v1851
    %v2034 = vpop.f32.mrf.mxu0
    %v2035 = vadd.f32 %v1828, %v2034
    %v2036 = vpop.f32.mrf.mxu0
    %v2037 = vadd.f32 %v1832, %v2036
    %2038 = vdwg.mxu0
    %v2039 = vmax.f32 %v1928, 0.0
    %v2040 = vmax.f32 %v1930, 0.0
    %v2041 = vmax.f32 %v2017, 0.0
    %v2042 = vmax.f32 %v2019, 0.0
    %v2043 = vmax.f32 %v1934, 0.0
    %v2044 = vmax.f32 %v1936, 0.0
    %v2045 = vmax.f32 %v2023, 0.0
    %v2046 = vmax.f32 %v2025, 0.0
    %v2047 = vmax.f32 %v1940, 0.0
    %v2048 = vmax.f32 %v1942, 0.0
    %v2049 = vmax.f32 %v2029, 0.0
    %v2050 = vmax.f32 %v2031, 0.0
    %v2051 = vmax.f32 %v1946, 0.0
    %v2052 = vmax.f32 %v1948, 0.0
    %v2053 = vmax.f32 %v2035, 0.0
    %v2054 = vmax.f32 %v2037, 0.0
    %v2055 = vld [vmem:[%s13] sm:$0xff]
    %v2056 = vld [vmem:[%s13 + $0x8] sm:$0xff]
    %v2057 = vld [vmem:[%s13 + $0x10] sm:$0xff]
    %v2058 = vld [vmem:[%s13 + $0x18] sm:$0xff]
    %v2059 = vld [vmem:[%s13 + $0x20] sm:$0xff]
    %v2060 = vld [vmem:[%s13 + $0x28] sm:$0xff]
    %v2061 = vld [vmem:[%s13 + $0x30] sm:$0xff]
    %v2062 = vld [vmem:[%s13 + $0x38] sm:$0xff]
    %v2063 = vld [vmem:[%s13 + $0x40] sm:$0xff]
    %v2064 = vld [vmem:[%s13 + $0x48] sm:$0xff]
    %v2065 = vld [vmem:[%s13 + $0x50] sm:$0xff]
    %v2066 = vld [vmem:[%s13 + $0x58] sm:$0xff]
    %v2067 = vld [vmem:[%s13 + $0x60] sm:$0xff]
    %v2068 = vld [vmem:[%s13 + $0x68] sm:$0xff]
    %v2069 = vld [vmem:[%s13 + $0x70] sm:$0xff]
    %v2070 = vld [vmem:[%s13 + $0x78] sm:$0xff]
    %v2071 = vld [vmem:[%s13 + $0x80] sm:$0xff]
    %v2072 = vld [vmem:[%s13 + $0x88] sm:$0xff]
    %v2073 = vld [vmem:[%s13 + $0x90] sm:$0xff]
    %v2074 = vld [vmem:[%s13 + $0x98] sm:$0xff]
    %v2075 = vld [vmem:[%s13 + $0xa0] sm:$0xff]
    %v2076 = vld [vmem:[%s13 + $0xa8] sm:$0xff]
    %v2077 = vld [vmem:[%s13 + $0xb0] sm:$0xff]
    %v2078 = vld [vmem:[%s13 + $0xb8] sm:$0xff]
    %v2079 = vld [vmem:[%s13 + $0xc0] sm:$0xff]
    %v2080 = vld [vmem:[%s13 + $0xc8] sm:$0xff]
    %v2081 = vld [vmem:[%s13 + $0xd0] sm:$0xff]
    %v2082 = vld [vmem:[%s13 + $0xd8] sm:$0xff]
    %v2083 = vld [vmem:[%s13 + $0xe0] sm:$0xff]
    %v2084 = vld [vmem:[%s13 + $0xe8] sm:$0xff]
    %v2085 = vld [vmem:[%s13 + $0xf0] sm:$0xff]
    %v2086 = vld [vmem:[%s13 + $0xf8] sm:$0xff]
    %v2087 = vld [vmem:[%s13 + $0x100] sm:$0xff]
    %v2088 = vld [vmem:[%s13 + $0x108] sm:$0xff]
    %v2089 = vld [vmem:[%s13 + $0x110] sm:$0xff]
    %v2090 = vld [vmem:[%s13 + $0x118] sm:$0xff]
    %v2091 = vld [vmem:[%s13 + $0x120] sm:$0xff]
    %v2092 = vld [vmem:[%s13 + $0x128] sm:$0xff]
    %v2093 = vld [vmem:[%s13 + $0x130] sm:$0xff]
    %v2094 = vld [vmem:[%s13 + $0x138] sm:$0xff]
    %v2095 = vld [vmem:[%s13 + $0x140] sm:$0xff]
    %v2096 = vld [vmem:[%s13 + $0x148] sm:$0xff]
    %v2097 = vld [vmem:[%s13 + $0x150] sm:$0xff]
    %v2098 = vld [vmem:[%s13 + $0x158] sm:$0xff]
    %v2099 = vld [vmem:[%s13 + $0x160] sm:$0xff]
    %v2100 = vld [vmem:[%s13 + $0x168] sm:$0xff]
    %v2101 = vld [vmem:[%s13 + $0x170] sm:$0xff]
    %v2102 = vld [vmem:[%s13 + $0x178] sm:$0xff]
    %v2103 = vld [vmem:[%s13 + $0x180] sm:$0xff]
    %v2104 = vld [vmem:[%s13 + $0x188] sm:$0xff]
    %v2105 = vld [vmem:[%s13 + $0x190] sm:$0xff]
    %v2106 = vld [vmem:[%s13 + $0x198] sm:$0xff]
    %v2107 = vld [vmem:[%s13 + $0x1a0] sm:$0xff]
    %v2108 = vld [vmem:[%s13 + $0x1a8] sm:$0xff]
    %v2109 = vld [vmem:[%s13 + $0x1b0] sm:$0xff]
    %v2110 = vld [vmem:[%s13 + $0x1b8] sm:$0xff]
    %v2111 = vld [vmem:[%s13 + $0x1c0] sm:$0xff]
    %v2112 = vld [vmem:[%s13 + $0x1c8] sm:$0xff]
    %v2113 = vld [vmem:[%s13 + $0x1d0] sm:$0xff]
    %v2114 = vld [vmem:[%s13 + $0x1d8] sm:$0xff]
    %v2115 = vld [vmem:[%s13 + $0x1e0] sm:$0xff]
    %v2116 = vld [vmem:[%s13 + $0x1e8] sm:$0xff]
    %v2117 = vld [vmem:[%s13 + $0x1f0] sm:$0xff]
    %v2118 = vld [vmem:[%s13 + $0x1f8] sm:$0xff]
    %v2119 = vld [vmem:[%s14] sm:$0x1]
    %v2121 = vlaneseq
    %v2122 = vshrl.u32 %v2121, 7
    %v2123 = vsub.s32 0, %v2122
    %v2124 = vrot.slane %v2119, %v2123
    %2126 = vmatprep.subr.mxu0 0.0
    %2127 = vmatpush1.msra.mxu0 %v2070
    %2128 = vmatprep.subr.mxu0 0.0
    %2129 = vmatpush1.msra.mxu0 %v2069
    %2130 = vmatprep.subr.mxu0 0.0
    %2131 = vmatpush1.msra.mxu0 %v2068
    %2132 = vmatprep.subr.mxu0 0.0
    %2133 = vmatpush1.msra.mxu0 %v2067
    %2134 = vmatprep.subr.mxu0 0.0
    %2135 = vmatpush1.msra.mxu0 %v2066
    %2136 = vmatprep.subr.mxu0 0.0
    %2137 = vmatpush1.msra.mxu0 %v2065
    %2138 = vmatprep.subr.mxu0 0.0
    %2139 = vmatpush1.msra.mxu0 %v2064
    %2140 = vmatprep.subr.mxu0 0.0
    %2141 = vmatpush1.msra.mxu0 %v2063
    %2142 = vmatprep.subr.mxu0 0.0
    %2143 = vmatpush1.msra.mxu0 %v2062
    %2144 = vmatprep.subr.mxu0 0.0
    %2145 = vmatpush1.msra.mxu0 %v2061
    %2146 = vmatprep.subr.mxu0 0.0
    %2147 = vmatpush1.msra.mxu0 %v2060
    %2148 = vmatprep.subr.mxu0 0.0
    %2149 = vmatpush1.msra.mxu0 %v2059
    %2150 = vmatprep.subr.mxu0 0.0
    %2151 = vmatpush1.msra.mxu0 %v2058
    %2152 = vmatprep.subr.mxu0 0.0
    %2153 = vmatpush1.msra.mxu0 %v2057
    %2154 = vmatprep.subr.mxu0 0.0
    %2155 = vmatpush1.msra.mxu0 %v2056
    %2156 = vmatprep.subr.mxu0 0.0
    %2157 = vmatpush1.msra.mxu0 %v2055
    %2158 = vmatprep.subr.mxu0 0.0
    %2159 = vmatpush2.msra.mxu0 %v2086
    %2160 = vmatprep.subr.mxu0 0.0
    %2161 = vmatpush2.msra.mxu0 %v2085
    %2162 = vmatprep.subr.mxu0 0.0
    %2163 = vmatpush2.msra.mxu0 %v2084
    %2164 = vmatprep.subr.mxu0 0.0
    %2165 = vmatpush2.msra.mxu0 %v2083
    %2166 = vmatprep.subr.mxu0 0.0
    %2167 = vmatpush2.msra.mxu0 %v2082
    %2168 = vmatprep.subr.mxu0 0.0
    %2169 = vmatpush2.msra.mxu0 %v2081
    %2170 = vmatprep.subr.mxu0 0.0
    %2171 = vmatpush2.msra.mxu0 %v2080
    %2172 = vmatprep.subr.mxu0 0.0
    %2173 = vmatpush2.msra.mxu0 %v2079
    %2174 = vmatprep.subr.mxu0 0.0
    %2175 = vmatpush2.msra.mxu0 %v2078
    %2176 = vmatprep.subr.mxu0 0.0
    %2177 = vmatpush2.msra.mxu0 %v2077
    %2178 = vmatprep.subr.mxu0 0.0
    %2179 = vmatpush2.msra.mxu0 %v2076
    %2180 = vmatprep.subr.mxu0 0.0
    %2181 = vmatpush2.msra.mxu0 %v2075
    %2182 = vmatprep.subr.mxu0 0.0
    %2183 = vmatpush2.msra.mxu0 %v2074
    %2184 = vmatprep.subr.mxu0 0.0
    %2185 = vmatpush2.msra.mxu0 %v2073
    %2186 = vmatprep.subr.mxu0 0.0
    %2187 = vmatpush2.msra.mxu0 %v2072
    %2188 = vmatprep.subr.mxu0 0.0
    %2189 = vmatpush2.msra.mxu0 %v2071
    %2190 = vmatprep.mubr.f32.mxu0 %v2040
    %2191 = vmatmul.mubr.f32.gmra.mxu0 %v2039
    %v2192 = vpop.f32.mrf.mxu0
    %v2193 = vadd.f32 %v2124, %v2192
    %v2194 = vpop.f32.mrf.mxu0
    %2195 = vmatprep.mubr.f32.mxu0 %v2044
    %2196 = vmatmul.mubr.f32.gmra.mxu0 %v2043
    %v2197 = vpop.f32.mrf.mxu0
    %v2198 = vadd.f32 %v2124, %v2197
    %v2199 = vpop.f32.mrf.mxu0
    %2200 = vmatprep.mubr.f32.mxu0 %v2048
    %2201 = vmatmul.mubr.f32.gmra.mxu0 %v2047
    %v2202 = vpop.f32.mrf.mxu0
    %v2203 = vadd.f32 %v2124, %v2202
    %v2204 = vpop.f32.mrf.mxu0
    %2205 = vmatprep.mubr.f32.mxu0 %v2052
    %2206 = vmatmul.mubr.f32.gmra.mxu0 %v2051
    %v2207 = vpop.f32.mrf.mxu0
    %v2208 = vadd.f32 %v2124, %v2207
    %v2209 = vpop.f32.mrf.mxu0
    %2210 = vdwg.mxu0
    %2211 = vmatprep.subr.mxu0 0.0
    %2212 = vmatpush1.msra.mxu0 %v2102
    %2213 = vmatprep.subr.mxu0 0.0
    %2214 = vmatpush1.msra.mxu0 %v2101
    %2215 = vmatprep.subr.mxu0 0.0
    %2216 = vmatpush1.msra.mxu0 %v2100
    %2217 = vmatprep.subr.mxu0 0.0
    %2218 = vmatpush1.msra.mxu0 %v2099
    %2219 = vmatprep.subr.mxu0 0.0
    %2220 = vmatpush1.msra.mxu0 %v2098
    %2221 = vmatprep.subr.mxu0 0.0
    %2222 = vmatpush1.msra.mxu0 %v2097
    %2223 = vmatprep.subr.mxu0 0.0
    %2224 = vmatpush1.msra.mxu0 %v2096
    %2225 = vmatprep.subr.mxu0 0.0
    %2226 = vmatpush1.msra.mxu0 %v2095
    %2227 = vmatprep.subr.mxu0 0.0
    %2228 = vmatpush1.msra.mxu0 %v2094
    %2229 = vmatprep.subr.mxu0 0.0
    %2230 = vmatpush1.msra.mxu0 %v2093
    %2231 = vmatprep.subr.mxu0 0.0
    %2232 = vmatpush1.msra.mxu0 %v2092
    %2233 = vmatprep.subr.mxu0 0.0
    %2234 = vmatpush1.msra.mxu0 %v2091
    %2235 = vmatprep.subr.mxu0 0.0
    %2236 = vmatpush1.msra.mxu0 %v2090
    %2237 = vmatprep.subr.mxu0 0.0
    %2238 = vmatpush1.msra.mxu0 %v2089
    %2239 = vmatprep.subr.mxu0 0.0
    %2240 = vmatpush1.msra.mxu0 %v2088
    %2241 = vmatprep.subr.mxu0 0.0
    %2242 = vmatpush1.msra.mxu0 %v2087
    %2243 = vmatprep.subr.mxu0 0.0
    %2244 = vmatpush2.msra.mxu0 %v2118
    %2245 = vmatprep.subr.mxu0 0.0
    %2246 = vmatpush2.msra.mxu0 %v2117
    %2247 = vmatprep.subr.mxu0 0.0
    %2248 = vmatpush2.msra.mxu0 %v2116
    %2249 = vmatprep.subr.mxu0 0.0
    %2250 = vmatpush2.msra.mxu0 %v2115
    %2251 = vmatprep.subr.mxu0 0.0
    %2252 = vmatpush2.msra.mxu0 %v2114
    %2253 = vmatprep.subr.mxu0 0.0
    %2254 = vmatpush2.msra.mxu0 %v2113
    %2255 = vmatprep.subr.mxu0 0.0
    %2256 = vmatpush2.msra.mxu0 %v2112
    %2257 = vmatprep.subr.mxu0 0.0
    %2258 = vmatpush2.msra.mxu0 %v2111
    %2259 = vmatprep.subr.mxu0 0.0
    %2260 = vmatpush2.msra.mxu0 %v2110
    %2261 = vmatprep.subr.mxu0 0.0
    %2262 = vmatpush2.msra.mxu0 %v2109
    %2263 = vmatprep.subr.mxu0 0.0
    %2264 = vmatpush2.msra.mxu0 %v2108
    %2265 = vmatprep.subr.mxu0 0.0
    %2266 = vmatpush2.msra.mxu0 %v2107
    %2267 = vmatprep.subr.mxu0 0.0
    %2268 = vmatpush2.msra.mxu0 %v2106
    %2269 = vmatprep.subr.mxu0 0.0
    %2270 = vmatpush2.msra.mxu0 %v2105
    %2271 = vmatprep.subr.mxu0 0.0
    %2272 = vmatpush2.msra.mxu0 %v2104
    %2273 = vmatprep.subr.mxu0 0.0
    %2274 = vmatpush2.msra.mxu0 %v2103
    %2275 = vmatprep.mubr.f32.mxu0 %v2042
    %2276 = vmatmul.mubr.f32.gmra.mxu0 %v2041
    %v2277 = vpop.f32.mrf.mxu0
    %v2278 = vadd.f32 %v2193, %v2277
    %v2279 = vpop.f32.mrf.mxu0
    %2280 = vmatprep.mubr.f32.mxu0 %v2046
    %2281 = vmatmul.mubr.f32.gmra.mxu0 %v2045
    %v2282 = vpop.f32.mrf.mxu0
    %v2283 = vadd.f32 %v2198, %v2282
    %v2284 = vpop.f32.mrf.mxu0
    %2285 = vmatprep.mubr.f32.mxu0 %v2050
    %2286 = vmatmul.mubr.f32.gmra.mxu0 %v2049
    %v2287 = vpop.f32.mrf.mxu0
    %v2288 = vadd.f32 %v2203, %v2287
    %v2289 = vpop.f32.mrf.mxu0
    %2290 = vmatprep.mubr.f32.mxu0 %v2054
    %2291 = vmatmul.mubr.f32.gmra.mxu0 %v2053
    %v2292 = vpop.f32.mrf.mxu0
    %v2293 = vadd.f32 %v2208, %v2292
    %v2294 = vpop.f32.mrf.mxu0
    %2295 = vdwg.mxu0
    %v2296 = vadd.f32 %v1809, %v2278
    %v2297 = vadd.f32 %v1810, %v2283
    %v2298 = vadd.f32 %v1811, %v2288
    %v2299 = vadd.f32 %v1812, %v2293
    %v2300 = vld [vmem:[%s15] sm:$0x1]
    %v2301 = vld [vmem:[%s16] sm:$0x1]
    %v2302 = vsel %vm129, %v2296, 0.0
    %2303 = vadd.xlane.f32.xlu0 %v2302
    %v2304 = vpop.xlane.xlu0 %2303
    %v2305 = vsel %vm129, %v2297, 0.0
    %2306 = vadd.xlane.f32.xlu0 %v2305
    %v2307 = vpop.xlane.xlu0 %2306
    %v2308 = vsel %vm129, %v2298, 0.0
    %2309 = vadd.xlane.f32.xlu0 %v2308
    %v2310 = vpop.xlane.xlu0 %2309
    %v2311 = vsel %vm129, %v2299, 0.0
    %2312 = vadd.xlane.f32.xlu0 %v2311
    %v2313 = vpop.xlane.xlu0 %2312
    %v2314 = vmul.f32 %v2304, %v1752
    %v2315 = vmul.f32 %v2307, %v1752
    %v2316 = vmul.f32 %v2310, %v1752
    %v2317 = vmul.f32 %v2313, %v1752
    %v2318 = vsub.f32 %v2296, %v2314
    %v2319 = vsub.f32 %v2297, %v2315
    %v2320 = vsub.f32 %v2298, %v2316
    %v2321 = vsub.f32 %v2299, %v2317
    %v2322 = vmul.f32 %v2318, %v2318
    %v2323 = vmul.f32 %v2319, %v2319
    %v2324 = vmul.f32 %v2320, %v2320
    %v2325 = vmul.f32 %v2321, %v2321
    %v2326 = vsel %vm129, %v2322, 0.0
    %2327 = vadd.xlane.f32.xlu0 %v2326
    %v2328 = vpop.xlane.xlu0 %2327
    %v2329 = vsel %vm129, %v2323, 0.0
    %2330 = vadd.xlane.f32.xlu0 %v2329
    %v2331 = vpop.xlane.xlu0 %2330
    %v2332 = vsel %vm129, %v2324, 0.0
    %2333 = vadd.xlane.f32.xlu0 %v2332
    %v2334 = vpop.xlane.xlu0 %2333
    %v2335 = vsel %vm129, %v2325, 0.0
    %2336 = vadd.xlane.f32.xlu0 %v2335
    %v2337 = vpop.xlane.xlu0 %2336
    %v2338 = vmul.f32 %v2328, %v1752
    %v2339 = vmul.f32 %v2331, %v1752
    %v2340 = vmul.f32 %v2334, %v1752
    %v2341 = vmul.f32 %v2337, %v1752
    %v2342 = vadd.f32 %v2338, 1e-05
    %v2343 = vadd.f32 %v2339, 1e-05
    %v2344 = vadd.f32 %v2340, 1e-05
    %v2345 = vadd.f32 %v2341, 1e-05
    %v2346 = vrsqrt.pop %v2342
    %v2347 = vrsqrt.pop %v2343
    %v2348 = vrsqrt.pop %v2344
    %v2349 = vrsqrt.pop %v2345
    %v2350 = vmul.f32 %v2318, %v2346
    %v2351 = vmul.f32 %v2319, %v2347
    %v2352 = vmul.f32 %v2320, %v2348
    %v2353 = vmul.f32 %v2321, %v2349
    %v2355 = vlaneseq
    %v2356 = vshrl.u32 %v2355, 7
    %v2357 = vsub.s32 0, %v2356
    %v2358 = vrot.slane %v2300, %v2357
    %v2360 = vmul.f32 %v2350, %v2358
    %v2361 = vmul.f32 %v2351, %v2358
    %v2362 = vmul.f32 %v2352, %v2358
    %v2363 = vmul.f32 %v2353, %v2358
    %v2365 = vlaneseq
    %v2366 = vshrl.u32 %v2365, 7
    %v2367 = vsub.s32 0, %v2366
    %v2368 = vrot.slane %v2301, %v2367
    %v2370 = vadd.f32 %v2360, %v2368
    %v2371 = vadd.f32 %v2361, %v2368
    %v2372 = vadd.f32 %v2362, %v2368
    %v2373 = vadd.f32 %v2363, %v2368
    %s2374 = scalar_lea.vmem %s5, 4
    %v2375 = vld [vmem:[%s2374] sm:$0xf]
    %s2376 = scalar_lea.vmem %s6, 1
    %v2377 = vld [vmem:[%s2376] sm:$0x1]
    %v2379 = vlaneseq
    %v2380 = vshrl.u32 %v2379, 7
    %v2381 = vsub.s32 0, %v2380
    %v2382 = vrot.slane %v2377, %v2381
    %v2385 = vsel %vm129, %v2370, 0
    %v2388 = vsel %vm129, %v2371, 0
    %v2391 = vsel %vm129, %v2372, 0
    %v2394 = vsel %vm129, %v2373, 0
    %v2397 = vsel %vm142, %v2375, 0
    %2399 = vmatprep.subr.mxu0 0.0
    %2400 = vmatpush1.msra.mxu0 0.0
    %2401 = vmatprep.subr.mxu0 0.0
    %2402 = vmatpush1.msra.mxu0 0.0
    %2403 = vmatprep.subr.mxu0 0.0
    %2404 = vmatpush1.msra.mxu0 0.0
    %2405 = vmatprep.subr.mxu0 0.0
    %2406 = vmatpush1.msra.mxu0 0.0
    %2407 = vmatprep.subr.mxu0 0.0
    %2408 = vmatpush1.msra.mxu0 0.0
    %2409 = vmatprep.subr.mxu0 0.0
    %2410 = vmatpush1.msra.mxu0 0.0
    %2411 = vmatprep.subr.mxu0 0.0
    %2412 = vmatpush1.msra.mxu0 0.0
    %2413 = vmatprep.subr.mxu0 0.0
    %2414 = vmatpush1.msra.mxu0 0.0
    %2415 = vmatprep.subr.mxu0 0.0
    %2416 = vmatpush1.msra.mxu0 0.0
    %2417 = vmatprep.subr.mxu0 0.0
    %2418 = vmatpush1.msra.mxu0 0.0
    %2419 = vmatprep.subr.mxu0 0.0
    %2420 = vmatpush1.msra.mxu0 0.0
    %2421 = vmatprep.subr.mxu0 0.0
    %2422 = vmatpush1.msra.mxu0 0.0
    %2423 = vmatprep.subr.mxu0 0.0
    %2424 = vmatpush1.msra.mxu0 0.0
    %2425 = vmatprep.subr.mxu0 0.0
    %2426 = vmatpush1.msra.mxu0 0.0
    %2427 = vmatprep.subr.mxu0 0.0
    %2428 = vmatpush1.msra.mxu0 0.0
    %2429 = vmatprep.subr.mxu0 0.0
    %2430 = vmatpush1.msra.mxu0 %v2397
    %2431 = vmatprep.subr.mxu0 0.0
    %2432 = vmatpush2.msra.mxu0 0.0
    %2433 = vmatprep.subr.mxu0 0.0
    %2434 = vmatpush2.msra.mxu0 0.0
    %2435 = vmatprep.subr.mxu0 0.0
    %2436 = vmatpush2.msra.mxu0 0.0
    %2437 = vmatprep.subr.mxu0 0.0
    %2438 = vmatpush2.msra.mxu0 0.0
    %2439 = vmatprep.subr.mxu0 0.0
    %2440 = vmatpush2.msra.mxu0 0.0
    %2441 = vmatprep.subr.mxu0 0.0
    %2442 = vmatpush2.msra.mxu0 0.0
    %2443 = vmatprep.subr.mxu0 0.0
    %2444 = vmatpush2.msra.mxu0 0.0
    %2445 = vmatprep.subr.mxu0 0.0
    %2446 = vmatpush2.msra.mxu0 0.0
    %2447 = vmatprep.subr.mxu0 0.0
    %2448 = vmatpush2.msra.mxu0 0.0
    %2449 = vmatprep.subr.mxu0 0.0
    %2450 = vmatpush2.msra.mxu0 0.0
    %2451 = vmatprep.subr.mxu0 0.0
    %2452 = vmatpush2.msra.mxu0 0.0
    %2453 = vmatprep.subr.mxu0 0.0
    %2454 = vmatpush2.msra.mxu0 0.0
    %2455 = vmatprep.subr.mxu0 0.0
    %2456 = vmatpush2.msra.mxu0 0.0
    %2457 = vmatprep.subr.mxu0 0.0
    %2458 = vmatpush2.msra.mxu0 0.0
    %2459 = vmatprep.subr.mxu0 0.0
    %2460 = vmatpush2.msra.mxu0 0.0
    %2461 = vmatprep.subr.mxu0 0.0
    %2462 = vmatpush2.msra.mxu0 0.0
    %2463 = vmatprep.mubr.f32.mxu0 0.0
    %2464 = vmatmul.mubr.f32.gmra.mxu0 %v2385
    %v2465 = vpop.f32.mrf.mxu0
    %v2466 = vadd.f32 %v2382, %v2465
    %v2467 = vpop.f32.mrf.mxu0
    %2468 = vmatprep.mubr.f32.mxu0 0.0
    %2469 = vmatmul.mubr.f32.gmra.mxu0 %v2388
    %v2470 = vpop.f32.mrf.mxu0
    %v2471 = vadd.f32 %v2382, %v2470
    %v2472 = vpop.f32.mrf.mxu0
    %2473 = vmatprep.mubr.f32.mxu0 0.0
    %2474 = vmatmul.mubr.f32.gmra.mxu0 %v2391
    %v2475 = vpop.f32.mrf.mxu0
    %v2476 = vadd.f32 %v2382, %v2475
    %v2477 = vpop.f32.mrf.mxu0
    %2478 = vmatprep.mubr.f32.mxu0 0.0
    %2479 = vmatmul.mubr.f32.gmra.mxu0 %v2394
    %v2480 = vpop.f32.mrf.mxu0
    %v2481 = vadd.f32 %v2382, %v2480
    %v2482 = vpop.f32.mrf.mxu0
    %2483 = vdwg.mxu0
    %s2484 = scalar_lea.vmem %s7, 4
    %v2485 = vld [vmem:[%s2484] sm:$0xf]
    %s2486 = scalar_lea.vmem %s8, 1
    %v2487 = vld [vmem:[%s2486] sm:$0x1]
    %2492 = vrot.lane.b32.xlu0 %v2466, 124
    %v2493 = vpop.permute.xlu0 %2492
    %2494 = vrot.lane.b32.xlu0 %v2471, 124
    %v2495 = vpop.permute.xlu0 %2494
    %2496 = vrot.lane.b32.xlu0 %v2476, 124
    %v2497 = vpop.permute.xlu0 %2496
    %2498 = vrot.lane.b32.xlu0 %v2481, 124
    %v2499 = vpop.permute.xlu0 %2498
    %v2500 = vsel %vm245, %v2466, 0
    %v2502 = vsel %vm245, %v2471, 0
    %v2504 = vsel %vm245, %v2476, 0
    %v2506 = vsel %vm245, %v2481, 0
    %v2508 = vsel %vm245, %v2493, 0
    %v2510 = vsel %vm245, %v2495, 0
    %v2512 = vsel %vm245, %v2497, 0
    %v2514 = vsel %vm245, %v2499, 0
    %2516 = vmatprep.subr.mxu0 0.0
    %2517 = vmatpush1.xpose.msra.mxu0 0.0
    %2518 = vmatprep.subr.mxu0 0.0
    %2519 = vmatpush1.xpose.msra.mxu0 0.0
    %2520 = vmatprep.subr.mxu0 0.0
    %2521 = vmatpush1.xpose.msra.mxu0 0.0
    %2522 = vmatprep.subr.mxu0 0.0
    %2523 = vmatpush1.xpose.msra.mxu0 0.0
    %2524 = vmatprep.subr.mxu0 0.0
    %2525 = vmatpush1.xpose.msra.mxu0 0.0
    %2526 = vmatprep.subr.mxu0 0.0
    %2527 = vmatpush1.xpose.msra.mxu0 0.0
    %2528 = vmatprep.subr.mxu0 0.0
    %2529 = vmatpush1.xpose.msra.mxu0 0.0
    %2530 = vmatprep.subr.mxu0 0.0
    %2531 = vmatpush1.xpose.msra.mxu0 0.0
    %2532 = vmatprep.subr.mxu0 0.0
    %2533 = vmatpush1.xpose.msra.mxu0 0.0
    %2534 = vmatprep.subr.mxu0 0.0
    %2535 = vmatpush1.xpose.msra.mxu0 0.0
    %2536 = vmatprep.subr.mxu0 0.0
    %2537 = vmatpush1.xpose.msra.mxu0 0.0
    %2538 = vmatprep.subr.mxu0 0.0
    %2539 = vmatpush1.xpose.msra.mxu0 0.0
    %2540 = vmatprep.subr.mxu0 0.0
    %2541 = vmatpush1.xpose.msra.mxu0 %v2514
    %2542 = vmatprep.subr.mxu0 0.0
    %2543 = vmatpush1.xpose.msra.mxu0 %v2512
    %2544 = vmatprep.subr.mxu0 0.0
    %2545 = vmatpush1.xpose.msra.mxu0 %v2510
    %2546 = vmatprep.subr.mxu0 0.0
    %2547 = vmatpush1.xpose.msra.mxu0 %v2508
    %2548 = vmatprep.subr.mxu0 0.0
    %2549 = vmatpush2.xpose.msra.mxu0 0.0
    %2550 = vmatprep.subr.mxu0 0.0
    %2551 = vmatpush2.xpose.msra.mxu0 0.0
    %2552 = vmatprep.subr.mxu0 0.0
    %2553 = vmatpush2.xpose.msra.mxu0 0.0
    %2554 = vmatprep.subr.mxu0 0.0
    %2555 = vmatpush2.xpose.msra.mxu0 0.0
    %2556 = vmatprep.subr.mxu0 0.0
    %2557 = vmatpush2.xpose.msra.mxu0 0.0
    %2558 = vmatprep.subr.mxu0 0.0
    %2559 = vmatpush2.xpose.msra.mxu0 0.0
    %2560 = vmatprep.subr.mxu0 0.0
    %2561 = vmatpush2.xpose.msra.mxu0 0.0
    %2562 = vmatprep.subr.mxu0 0.0
    %2563 = vmatpush2.xpose.msra.mxu0 0.0
    %2564 = vmatprep.subr.mxu0 0.0
    %2565 = vmatpush2.xpose.msra.mxu0 0.0
    %2566 = vmatprep.subr.mxu0 0.0
    %2567 = vmatpush2.xpose.msra.mxu0 0.0
    %2568 = vmatprep.subr.mxu0 0.0
    %2569 = vmatpush2.xpose.msra.mxu0 0.0
    %2570 = vmatprep.subr.mxu0 0.0
    %2571 = vmatpush2.xpose.msra.mxu0 0.0
    %2572 = vmatprep.subr.mxu0 0.0
    %2573 = vmatpush2.xpose.msra.mxu0 0.0
    %2574 = vmatprep.subr.mxu0 0.0
    %2575 = vmatpush2.xpose.msra.mxu0 0.0
    %2576 = vmatprep.subr.mxu0 0.0
    %2577 = vmatpush2.xpose.msra.mxu0 0.0
    %2578 = vmatprep.subr.mxu0 0.0
    %2579 = vmatpush2.xpose.msra.mxu0 0.0
    %2580 = vmatprep.mubr.f32.mxu0 0.0
    %2581 = vmatmul.mubr.f32.gmra.mxu0 %v2500
    %v2582 = vpop.f32.mrf.mxu0
    %v2583 = vadd.f32 %v117, %v2582
    %v2584 = vpop.f32.mrf.mxu0
    %2585 = vmatprep.mubr.f32.mxu0 0.0
    %2586 = vmatmul.mubr.f32.gmra.mxu0 %v2502
    %v2587 = vpop.f32.mrf.mxu0
    %v2588 = vadd.f32 %v118, %v2587
    %v2589 = vpop.f32.mrf.mxu0
    %2590 = vmatprep.mubr.f32.mxu0 0.0
    %2591 = vmatmul.mubr.f32.gmra.mxu0 %v2504
    %v2592 = vpop.f32.mrf.mxu0
    %v2593 = vadd.f32 %v119, %v2592
    %v2594 = vpop.f32.mrf.mxu0
    %2595 = vmatprep.mubr.f32.mxu0 0.0
    %2596 = vmatmul.mubr.f32.gmra.mxu0 %v2506
    %v2597 = vpop.f32.mrf.mxu0
    %v2598 = vadd.f32 %v120, %v2597
    %v2599 = vpop.f32.mrf.mxu0
    %2600 = vdwg.mxu0
    %v2601 = vsel %vm347, %v2583, -inf
    %2602 = vmax.xlane.f32.xlu0 %v2601
    %v2603 = vpop.xlane.xlu0 %2602
    %v2604 = vsel %vm347, %v2588, -inf
    %2605 = vmax.xlane.f32.xlu0 %v2604
    %v2606 = vpop.xlane.xlu0 %2605
    %v2607 = vsel %vm347, %v2593, -inf
    %2608 = vmax.xlane.f32.xlu0 %v2607
    %v2609 = vpop.xlane.xlu0 %2608
    %v2610 = vsel %vm347, %v2598, -inf
    %2611 = vmax.xlane.f32.xlu0 %v2610
    %v2612 = vpop.xlane.xlu0 %2611
    %v2613 = vsub.f32 %v2583, %v2603
    %v2614 = vsub.f32 %v2588, %v2606
    %v2615 = vsub.f32 %v2593, %v2609
    %v2616 = vsub.f32 %v2598, %v2612
    %v2617 = vmul.f32 %v2613, 1.442695
    %v2618 = vpow.pop %v2617
    %v2619 = vmul.f32 %v2614, 1.442695
    %v2620 = vpow.pop %v2619
    %v2621 = vmul.f32 %v2615, 1.442695
    %v2622 = vpow.pop %v2621
    %v2623 = vmul.f32 %v2616, 1.442695
    %v2624 = vpow.pop %v2623
    %v2625 = vsel %vm347, %v2618, 0.0
    %2626 = vadd.xlane.f32.xlu0 %v2625
    %v2627 = vpop.xlane.xlu0 %2626
    %v2628 = vsel %vm347, %v2620, 0.0
    %2629 = vadd.xlane.f32.xlu0 %v2628
    %v2630 = vpop.xlane.xlu0 %2629
    %v2631 = vsel %vm347, %v2622, 0.0
    %2632 = vadd.xlane.f32.xlu0 %v2631
    %v2633 = vpop.xlane.xlu0 %2632
    %v2634 = vsel %vm347, %v2624, 0.0
    %2635 = vadd.xlane.f32.xlu0 %v2634
    %v2636 = vpop.xlane.xlu0 %2635
    %v2637 = vrcp.pop %v2627
    %v2638 = vrcp.pop %v2630
    %v2639 = vrcp.pop %v2633
    %v2640 = vrcp.pop %v2636
    %v2641 = vmul.f32 %v2618, %v2637
    %v2642 = vmul.f32 %v2620, %v2638
    %v2643 = vmul.f32 %v2622, %v2639
    %v2644 = vmul.f32 %v2624, %v2640
    %2645 = vrot.lane.b32.xlu0 %v2466, 120
    %v2646 = vpop.permute.xlu0 %2645
    %2647 = vrot.lane.b32.xlu0 %v2471, 120
    %v2648 = vpop.permute.xlu0 %2647
    %2649 = vrot.lane.b32.xlu0 %v2476, 120
    %v2650 = vpop.permute.xlu0 %2649
    %2651 = vrot.lane.b32.xlu0 %v2481, 120
    %v2652 = vpop.permute.xlu0 %2651
    %v2658 = vsel %vm347, %v2641, 0
    %v2661 = vsel %vm347, %v2642, 0
    %v2664 = vsel %vm347, %v2643, 0
    %v2667 = vsel %vm347, %v2644, 0
    %2669 = vmatprep.subr.mxu0 0.0
    %2670 = vmatpush1.msra.mxu0 0.0
    %2671 = vmatprep.subr.mxu0 0.0
    %2672 = vmatpush1.msra.mxu0 0.0
    %2673 = vmatprep.subr.mxu0 0.0
    %2674 = vmatpush1.msra.mxu0 0.0
    %2675 = vmatprep.subr.mxu0 0.0
    %2676 = vmatpush1.msra.mxu0 0.0
    %2677 = vmatprep.subr.mxu0 0.0
    %2678 = vmatpush1.msra.mxu0 0.0
    %2679 = vmatprep.subr.mxu0 0.0
    %2680 = vmatpush1.msra.mxu0 0.0
    %2681 = vmatprep.subr.mxu0 0.0
    %2682 = vmatpush1.msra.mxu0 0.0
    %2683 = vmatprep.subr.mxu0 0.0
    %2684 = vmatpush1.msra.mxu0 0.0
    %2685 = vmatprep.subr.mxu0 0.0
    %2686 = vmatpush1.msra.mxu0 0.0
    %2687 = vmatprep.subr.mxu0 0.0
    %2688 = vmatpush1.msra.mxu0 0.0
    %2689 = vmatprep.subr.mxu0 0.0
    %2690 = vmatpush1.msra.mxu0 0.0
    %2691 = vmatprep.subr.mxu0 0.0
    %2692 = vmatpush1.msra.mxu0 0.0
    %2693 = vmatprep.subr.mxu0 0.0
    %2694 = vmatpush1.msra.mxu0 %v2652
    %2695 = vmatprep.subr.mxu0 0.0
    %2696 = vmatpush1.msra.mxu0 %v2650
    %2697 = vmatprep.subr.mxu0 0.0
    %2698 = vmatpush1.msra.mxu0 %v2648
    %2699 = vmatprep.subr.mxu0 0.0
    %2700 = vmatpush1.msra.mxu0 %v2646
    %2701 = vmatprep.subr.mxu0 0.0
    %2702 = vmatpush2.msra.mxu0 0.0
    %2703 = vmatprep.subr.mxu0 0.0
    %2704 = vmatpush2.msra.mxu0 0.0
    %2705 = vmatprep.subr.mxu0 0.0
    %2706 = vmatpush2.msra.mxu0 0.0
    %2707 = vmatprep.subr.mxu0 0.0
    %2708 = vmatpush2.msra.mxu0 0.0
    %2709 = vmatprep.subr.mxu0 0.0
    %2710 = vmatpush2.msra.mxu0 0.0
    %2711 = vmatprep.subr.mxu0 0.0
    %2712 = vmatpush2.msra.mxu0 0.0
    %2713 = vmatprep.subr.mxu0 0.0
    %2714 = vmatpush2.msra.mxu0 0.0
    %2715 = vmatprep.subr.mxu0 0.0
    %2716 = vmatpush2.msra.mxu0 0.0
    %2717 = vmatprep.subr.mxu0 0.0
    %2718 = vmatpush2.msra.mxu0 0.0
    %2719 = vmatprep.subr.mxu0 0.0
    %2720 = vmatpush2.msra.mxu0 0.0
    %2721 = vmatprep.subr.mxu0 0.0
    %2722 = vmatpush2.msra.mxu0 0.0
    %2723 = vmatprep.subr.mxu0 0.0
    %2724 = vmatpush2.msra.mxu0 0.0
    %2725 = vmatprep.subr.mxu0 0.0
    %2726 = vmatpush2.msra.mxu0 0.0
    %2727 = vmatprep.subr.mxu0 0.0
    %2728 = vmatpush2.msra.mxu0 0.0
    %2729 = vmatprep.subr.mxu0 0.0
    %2730 = vmatpush2.msra.mxu0 0.0
    %2731 = vmatprep.subr.mxu0 0.0
    %2732 = vmatpush2.msra.mxu0 0.0
    %2733 = vmatprep.mubr.f32.mxu0 0.0
    %2734 = vmatmul.mubr.f32.gmra.mxu0 %v2658
    %v2735 = vpop.f32.mrf.mxu0
    %v2736 = vadd.f32 0.0, %v2735
    %v2737 = vpop.f32.mrf.mxu0
    %2738 = vmatprep.mubr.f32.mxu0 0.0
    %2739 = vmatmul.mubr.f32.gmra.mxu0 %v2661
    %v2740 = vpop.f32.mrf.mxu0
    %v2741 = vadd.f32 0.0, %v2740
    %v2742 = vpop.f32.mrf.mxu0
    %2743 = vmatprep.mubr.f32.mxu0 0.0
    %2744 = vmatmul.mubr.f32.gmra.mxu0 %v2664
    %v2745 = vpop.f32.mrf.mxu0
    %v2746 = vadd.f32 0.0, %v2745
    %v2747 = vpop.f32.mrf.mxu0
    %2748 = vmatprep.mubr.f32.mxu0 0.0
    %2749 = vmatmul.mubr.f32.gmra.mxu0 %v2667
    %v2750 = vpop.f32.mrf.mxu0
    %v2751 = vadd.f32 0.0, %v2750
    %v2752 = vpop.f32.mrf.mxu0
    %2753 = vdwg.mxu0
    %v2755 = vsel %vm245, %v2736, 0
    %v2758 = vsel %vm245, %v2741, 0
    %v2761 = vsel %vm245, %v2746, 0
    %v2764 = vsel %vm245, %v2751, 0
    %v2767 = vsel %vm513, %v2485, 0
    %2769 = vmatprep.subr.mxu0 0.0
    %2770 = vmatpush1.msra.mxu0 0.0
    %2771 = vmatprep.subr.mxu0 0.0
    %2772 = vmatpush1.msra.mxu0 0.0
    %2773 = vmatprep.subr.mxu0 0.0
    %2774 = vmatpush1.msra.mxu0 0.0
    %2775 = vmatprep.subr.mxu0 0.0
    %2776 = vmatpush1.msra.mxu0 0.0
    %2777 = vmatprep.subr.mxu0 0.0
    %2778 = vmatpush1.msra.mxu0 0.0
    %2779 = vmatprep.subr.mxu0 0.0
    %2780 = vmatpush1.msra.mxu0 0.0
    %2781 = vmatprep.subr.mxu0 0.0
    %2782 = vmatpush1.msra.mxu0 0.0
    %2783 = vmatprep.subr.mxu0 0.0
    %2784 = vmatpush1.msra.mxu0 0.0
    %2785 = vmatprep.subr.mxu0 0.0
    %2786 = vmatpush1.msra.mxu0 0.0
    %2787 = vmatprep.subr.mxu0 0.0
    %2788 = vmatpush1.msra.mxu0 0.0
    %2789 = vmatprep.subr.mxu0 0.0
    %2790 = vmatpush1.msra.mxu0 0.0
    %2791 = vmatprep.subr.mxu0 0.0
    %2792 = vmatpush1.msra.mxu0 0.0
    %2793 = vmatprep.subr.mxu0 0.0
    %2794 = vmatpush1.msra.mxu0 0.0
    %2795 = vmatprep.subr.mxu0 0.0
    %2796 = vmatpush1.msra.mxu0 0.0
    %2797 = vmatprep.subr.mxu0 0.0
    %2798 = vmatpush1.msra.mxu0 0.0
    %2799 = vmatprep.subr.mxu0 0.0
    %2800 = vmatpush1.msra.mxu0 %v2767
    %2801 = vmatprep.subr.mxu0 0.0
    %2802 = vmatpush2.msra.mxu0 0.0
    %2803 = vmatprep.subr.mxu0 0.0
    %2804 = vmatpush2.msra.mxu0 0.0
    %2805 = vmatprep.subr.mxu0 0.0
    %2806 = vmatpush2.msra.mxu0 0.0
    %2807 = vmatprep.subr.mxu0 0.0
    %2808 = vmatpush2.msra.mxu0 0.0
    %2809 = vmatprep.subr.mxu0 0.0
    %2810 = vmatpush2.msra.mxu0 0.0
    %2811 = vmatprep.subr.mxu0 0.0
    %2812 = vmatpush2.msra.mxu0 0.0
    %2813 = vmatprep.subr.mxu0 0.0
    %2814 = vmatpush2.msra.mxu0 0.0
    %2815 = vmatprep.subr.mxu0 0.0
    %2816 = vmatpush2.msra.mxu0 0.0
    %2817 = vmatprep.subr.mxu0 0.0
    %2818 = vmatpush2.msra.mxu0 0.0
    %2819 = vmatprep.subr.mxu0 0.0
    %2820 = vmatpush2.msra.mxu0 0.0
    %2821 = vmatprep.subr.mxu0 0.0
    %2822 = vmatpush2.msra.mxu0 0.0
    %2823 = vmatprep.subr.mxu0 0.0
    %2824 = vmatpush2.msra.mxu0 0.0
    %2825 = vmatprep.subr.mxu0 0.0
    %2826 = vmatpush2.msra.mxu0 0.0
    %2827 = vmatprep.subr.mxu0 0.0
    %2828 = vmatpush2.msra.mxu0 0.0
    %2829 = vmatprep.subr.mxu0 0.0
    %2830 = vmatpush2.msra.mxu0 0.0
    %2831 = vmatprep.subr.mxu0 0.0
    %2832 = vmatpush2.msra.mxu0 0.0
    %2833 = vmatprep.mubr.f32.mxu0 0.0
    %2834 = vmatmul.mubr.f32.gmra.mxu0 %v2755
    %v2835 = vpop.f32.mrf.mxu0
    %v2836 = vadd.f32 0.0, %v2835
    %v2837 = vpop.f32.mrf.mxu0
    %2838 = vmatprep.mubr.f32.mxu0 0.0
    %2839 = vmatmul.mubr.f32.gmra.mxu0 %v2758
    %v2840 = vpop.f32.mrf.mxu0
    %v2841 = vadd.f32 0.0, %v2840
    %v2842 = vpop.f32.mrf.mxu0
    %2843 = vmatprep.mubr.f32.mxu0 0.0
    %2844 = vmatmul.mubr.f32.gmra.mxu0 %v2761
    %v2845 = vpop.f32.mrf.mxu0
    %v2846 = vadd.f32 0.0, %v2845
    %v2847 = vpop.f32.mrf.mxu0
    %2848 = vmatprep.mubr.f32.mxu0 0.0
    %2849 = vmatmul.mubr.f32.gmra.mxu0 %v2764
    %v2850 = vpop.f32.mrf.mxu0
    %v2851 = vadd.f32 0.0, %v2850
    %v2852 = vpop.f32.mrf.mxu0
    %2853 = vdwg.mxu0
    %v2855 = vlaneseq
    %v2856 = vshrl.u32 %v2855, 7
    %v2857 = vsub.s32 0, %v2856
    %v2858 = vrot.slane %v2487, %v2857
    %v2860 = vadd.f32 %v2858, %v2836
    %v2861 = vadd.f32 %v2858, %v2841
    %v2862 = vadd.f32 %v2858, %v2846
    %v2863 = vadd.f32 %v2858, %v2851
    %2864 = vrot.lane.b32.xlu0 %v2466, 127
    %v2865 = vpop.permute.xlu0 %2864
    %2866 = vrot.lane.b32.xlu0 %v2471, 127
    %v2867 = vpop.permute.xlu0 %2866
    %2868 = vrot.lane.b32.xlu0 %v2476, 127
    %v2869 = vpop.permute.xlu0 %2868
    %2870 = vrot.lane.b32.xlu0 %v2481, 127
    %v2871 = vpop.permute.xlu0 %2870
    %2872 = vrot.lane.b32.xlu0 %v2466, 123
    %v2873 = vpop.permute.xlu0 %2872
    %2874 = vrot.lane.b32.xlu0 %v2471, 123
    %v2875 = vpop.permute.xlu0 %2874
    %2876 = vrot.lane.b32.xlu0 %v2476, 123
    %v2877 = vpop.permute.xlu0 %2876
    %2878 = vrot.lane.b32.xlu0 %v2481, 123
    %v2879 = vpop.permute.xlu0 %2878
    %v2880 = vsel %vm245, %v2865, 0
    %v2882 = vsel %vm245, %v2867, 0
    %v2884 = vsel %vm245, %v2869, 0
    %v2886 = vsel %vm245, %v2871, 0
    %v2888 = vsel %vm245, %v2873, 0
    %v2890 = vsel %vm245, %v2875, 0
    %v2892 = vsel %vm245, %v2877, 0
    %v2894 = vsel %vm245, %v2879, 0
    %2896 = vmatprep.subr.mxu0 0.0
    %2897 = vmatpush1.xpose.msra.mxu0 0.0
    %2898 = vmatprep.subr.mxu0 0.0
    %2899 = vmatpush1.xpose.msra.mxu0 0.0
    %2900 = vmatprep.subr.mxu0 0.0
    %2901 = vmatpush1.xpose.msra.mxu0 0.0
    %2902 = vmatprep.subr.mxu0 0.0
    %2903 = vmatpush1.xpose.msra.mxu0 0.0
    %2904 = vmatprep.subr.mxu0 0.0
    %2905 = vmatpush1.xpose.msra.mxu0 0.0
    %2906 = vmatprep.subr.mxu0 0.0
    %2907 = vmatpush1.xpose.msra.mxu0 0.0
    %2908 = vmatprep.subr.mxu0 0.0
    %2909 = vmatpush1.xpose.msra.mxu0 0.0
    %2910 = vmatprep.subr.mxu0 0.0
    %2911 = vmatpush1.xpose.msra.mxu0 0.0
    %2912 = vmatprep.subr.mxu0 0.0
    %2913 = vmatpush1.xpose.msra.mxu0 0.0
    %2914 = vmatprep.subr.mxu0 0.0
    %2915 = vmatpush1.xpose.msra.mxu0 0.0
    %2916 = vmatprep.subr.mxu0 0.0
    %2917 = vmatpush1.xpose.msra.mxu0 0.0
    %2918 = vmatprep.subr.mxu0 0.0
    %2919 = vmatpush1.xpose.msra.mxu0 0.0
    %2920 = vmatprep.subr.mxu0 0.0
    %2921 = vmatpush1.xpose.msra.mxu0 %v2894
    %2922 = vmatprep.subr.mxu0 0.0
    %2923 = vmatpush1.xpose.msra.mxu0 %v2892
    %2924 = vmatprep.subr.mxu0 0.0
    %2925 = vmatpush1.xpose.msra.mxu0 %v2890
    %2926 = vmatprep.subr.mxu0 0.0
    %2927 = vmatpush1.xpose.msra.mxu0 %v2888
    %2928 = vmatprep.subr.mxu0 0.0
    %2929 = vmatpush2.xpose.msra.mxu0 0.0
    %2930 = vmatprep.subr.mxu0 0.0
    %2931 = vmatpush2.xpose.msra.mxu0 0.0
    %2932 = vmatprep.subr.mxu0 0.0
    %2933 = vmatpush2.xpose.msra.mxu0 0.0
    %2934 = vmatprep.subr.mxu0 0.0
    %2935 = vmatpush2.xpose.msra.mxu0 0.0
    %2936 = vmatprep.subr.mxu0 0.0
    %2937 = vmatpush2.xpose.msra.mxu0 0.0
    %2938 = vmatprep.subr.mxu0 0.0
    %2939 = vmatpush2.xpose.msra.mxu0 0.0
    %2940 = vmatprep.subr.mxu0 0.0
    %2941 = vmatpush2.xpose.msra.mxu0 0.0
    %2942 = vmatprep.subr.mxu0 0.0
    %2943 = vmatpush2.xpose.msra.mxu0 0.0
    %2944 = vmatprep.subr.mxu0 0.0
    %2945 = vmatpush2.xpose.msra.mxu0 0.0
    %2946 = vmatprep.subr.mxu0 0.0
    %2947 = vmatpush2.xpose.msra.mxu0 0.0
    %2948 = vmatprep.subr.mxu0 0.0
    %2949 = vmatpush2.xpose.msra.mxu0 0.0
    %2950 = vmatprep.subr.mxu0 0.0
    %2951 = vmatpush2.xpose.msra.mxu0 0.0
    %2952 = vmatprep.subr.mxu0 0.0
    %2953 = vmatpush2.xpose.msra.mxu0 0.0
    %2954 = vmatprep.subr.mxu0 0.0
    %2955 = vmatpush2.xpose.msra.mxu0 0.0
    %2956 = vmatprep.subr.mxu0 0.0
    %2957 = vmatpush2.xpose.msra.mxu0 0.0
    %2958 = vmatprep.subr.mxu0 0.0
    %2959 = vmatpush2.xpose.msra.mxu0 0.0
    %2960 = vmatprep.mubr.f32.mxu0 0.0
    %2961 = vmatmul.mubr.f32.gmra.mxu0 %v2880
    %v2962 = vpop.f32.mrf.mxu0
    %v2963 = vadd.f32 %v117, %v2962
    %v2964 = vpop.f32.mrf.mxu0
    %2965 = vmatprep.mubr.f32.mxu0 0.0
    %2966 = vmatmul.mubr.f32.gmra.mxu0 %v2882
    %v2967 = vpop.f32.mrf.mxu0
    %v2968 = vadd.f32 %v118, %v2967
    %v2969 = vpop.f32.mrf.mxu0
    %2970 = vmatprep.mubr.f32.mxu0 0.0
    %2971 = vmatmul.mubr.f32.gmra.mxu0 %v2884
    %v2972 = vpop.f32.mrf.mxu0
    %v2973 = vadd.f32 %v119, %v2972
    %v2974 = vpop.f32.mrf.mxu0
    %2975 = vmatprep.mubr.f32.mxu0 0.0
    %2976 = vmatmul.mubr.f32.gmra.mxu0 %v2886
    %v2977 = vpop.f32.mrf.mxu0
    %v2978 = vadd.f32 %v120, %v2977
    %v2979 = vpop.f32.mrf.mxu0
    %2980 = vdwg.mxu0
    %v2981 = vsel %vm347, %v2963, -inf
    %2982 = vmax.xlane.f32.xlu0 %v2981
    %v2983 = vpop.xlane.xlu0 %2982
    %v2984 = vsel %vm347, %v2968, -inf
    %2985 = vmax.xlane.f32.xlu0 %v2984
    %v2986 = vpop.xlane.xlu0 %2985
    %v2987 = vsel %vm347, %v2973, -inf
    %2988 = vmax.xlane.f32.xlu0 %v2987
    %v2989 = vpop.xlane.xlu0 %2988
    %v2990 = vsel %vm347, %v2978, -inf
    %2991 = vmax.xlane.f32.xlu0 %v2990
    %v2992 = vpop.xlane.xlu0 %2991
    %v2993 = vsub.f32 %v2963, %v2983
    %v2994 = vsub.f32 %v2968, %v2986
    %v2995 = vsub.f32 %v2973, %v2989
    %v2996 = vsub.f32 %v2978, %v2992
    %v2997 = vmul.f32 %v2993, 1.442695
    %v2998 = vpow.pop %v2997
    %v2999 = vmul.f32 %v2994, 1.442695
    %v3000 = vpow.pop %v2999
    %v3001 = vmul.f32 %v2995, 1.442695
    %v3002 = vpow.pop %v3001
    %v3003 = vmul.f32 %v2996, 1.442695
    %v3004 = vpow.pop %v3003
    %v3005 = vsel %vm347, %v2998, 0.0
    %3006 = vadd.xlane.f32.xlu0 %v3005
    %v3007 = vpop.xlane.xlu0 %3006
    %v3008 = vsel %vm347, %v3000, 0.0
    %3009 = vadd.xlane.f32.xlu0 %v3008
    %v3010 = vpop.xlane.xlu0 %3009
    %v3011 = vsel %vm347, %v3002, 0.0
    %3012 = vadd.xlane.f32.xlu0 %v3011
    %v3013 = vpop.xlane.xlu0 %3012
    %v3014 = vsel %vm347, %v3004, 0.0
    %3015 = vadd.xlane.f32.xlu0 %v3014
    %v3016 = vpop.xlane.xlu0 %3015
    %v3017 = vrcp.pop %v3007
    %v3018 = vrcp.pop %v3010
    %v3019 = vrcp.pop %v3013
    %v3020 = vrcp.pop %v3016
    %v3021 = vmul.f32 %v2998, %v3017
    %v3022 = vmul.f32 %v3000, %v3018
    %v3023 = vmul.f32 %v3002, %v3019
    %v3024 = vmul.f32 %v3004, %v3020
    %3025 = vrot.lane.b32.xlu0 %v2466, 119
    %v3026 = vpop.permute.xlu0 %3025
    %3027 = vrot.lane.b32.xlu0 %v2471, 119
    %v3028 = vpop.permute.xlu0 %3027
    %3029 = vrot.lane.b32.xlu0 %v2476, 119
    %v3030 = vpop.permute.xlu0 %3029
    %3031 = vrot.lane.b32.xlu0 %v2481, 119
    %v3032 = vpop.permute.xlu0 %3031
    %v3038 = vsel %vm347, %v3021, 0
    %v3041 = vsel %vm347, %v3022, 0
    %v3044 = vsel %vm347, %v3023, 0
    %v3047 = vsel %vm347, %v3024, 0
    %3049 = vmatprep.subr.mxu0 0.0
    %3050 = vmatpush1.msra.mxu0 0.0
    %3051 = vmatprep.subr.mxu0 0.0
    %3052 = vmatpush1.msra.mxu0 0.0
    %3053 = vmatprep.subr.mxu0 0.0
    %3054 = vmatpush1.msra.mxu0 0.0
    %3055 = vmatprep.subr.mxu0 0.0
    %3056 = vmatpush1.msra.mxu0 0.0
    %3057 = vmatprep.subr.mxu0 0.0
    %3058 = vmatpush1.msra.mxu0 0.0
    %3059 = vmatprep.subr.mxu0 0.0
    %3060 = vmatpush1.msra.mxu0 0.0
    %3061 = vmatprep.subr.mxu0 0.0
    %3062 = vmatpush1.msra.mxu0 0.0
    %3063 = vmatprep.subr.mxu0 0.0
    %3064 = vmatpush1.msra.mxu0 0.0
    %3065 = vmatprep.subr.mxu0 0.0
    %3066 = vmatpush1.msra.mxu0 0.0
    %3067 = vmatprep.subr.mxu0 0.0
    %3068 = vmatpush1.msra.mxu0 0.0
    %3069 = vmatprep.subr.mxu0 0.0
    %3070 = vmatpush1.msra.mxu0 0.0
    %3071 = vmatprep.subr.mxu0 0.0
    %3072 = vmatpush1.msra.mxu0 0.0
    %3073 = vmatprep.subr.mxu0 0.0
    %3074 = vmatpush1.msra.mxu0 %v3032
    %3075 = vmatprep.subr.mxu0 0.0
    %3076 = vmatpush1.msra.mxu0 %v3030
    %3077 = vmatprep.subr.mxu0 0.0
    %3078 = vmatpush1.msra.mxu0 %v3028
    %3079 = vmatprep.subr.mxu0 0.0
    %3080 = vmatpush1.msra.mxu0 %v3026
    %3081 = vmatprep.subr.mxu0 0.0
    %3082 = vmatpush2.msra.mxu0 0.0
    %3083 = vmatprep.subr.mxu0 0.0
    %3084 = vmatpush2.msra.mxu0 0.0
    %3085 = vmatprep.subr.mxu0 0.0
    %3086 = vmatpush2.msra.mxu0 0.0
    %3087 = vmatprep.subr.mxu0 0.0
    %3088 = vmatpush2.msra.mxu0 0.0
    %3089 = vmatprep.subr.mxu0 0.0
    %3090 = vmatpush2.msra.mxu0 0.0
    %3091 = vmatprep.subr.mxu0 0.0
    %3092 = vmatpush2.msra.mxu0 0.0
    %3093 = vmatprep.subr.mxu0 0.0
    %3094 = vmatpush2.msra.mxu0 0.0
    %3095 = vmatprep.subr.mxu0 0.0
    %3096 = vmatpush2.msra.mxu0 0.0
    %3097 = vmatprep.subr.mxu0 0.0
    %3098 = vmatpush2.msra.mxu0 0.0
    %3099 = vmatprep.subr.mxu0 0.0
    %3100 = vmatpush2.msra.mxu0 0.0
    %3101 = vmatprep.subr.mxu0 0.0
    %3102 = vmatpush2.msra.mxu0 0.0
    %3103 = vmatprep.subr.mxu0 0.0
    %3104 = vmatpush2.msra.mxu0 0.0
    %3105 = vmatprep.subr.mxu0 0.0
    %3106 = vmatpush2.msra.mxu0 0.0
    %3107 = vmatprep.subr.mxu0 0.0
    %3108 = vmatpush2.msra.mxu0 0.0
    %3109 = vmatprep.subr.mxu0 0.0
    %3110 = vmatpush2.msra.mxu0 0.0
    %3111 = vmatprep.subr.mxu0 0.0
    %3112 = vmatpush2.msra.mxu0 0.0
    %3113 = vmatprep.mubr.f32.mxu0 0.0
    %3114 = vmatmul.mubr.f32.gmra.mxu0 %v3038
    %v3115 = vpop.f32.mrf.mxu0
    %v3116 = vadd.f32 0.0, %v3115
    %v3117 = vpop.f32.mrf.mxu0
    %3118 = vmatprep.mubr.f32.mxu0 0.0
    %3119 = vmatmul.mubr.f32.gmra.mxu0 %v3041
    %v3120 = vpop.f32.mrf.mxu0
    %v3121 = vadd.f32 0.0, %v3120
    %v3122 = vpop.f32.mrf.mxu0
    %3123 = vmatprep.mubr.f32.mxu0 0.0
    %3124 = vmatmul.mubr.f32.gmra.mxu0 %v3044
    %v3125 = vpop.f32.mrf.mxu0
    %v3126 = vadd.f32 0.0, %v3125
    %v3127 = vpop.f32.mrf.mxu0
    %3128 = vmatprep.mubr.f32.mxu0 0.0
    %3129 = vmatmul.mubr.f32.gmra.mxu0 %v3047
    %v3130 = vpop.f32.mrf.mxu0
    %v3131 = vadd.f32 0.0, %v3130
    %v3132 = vpop.f32.mrf.mxu0
    %3133 = vdwg.mxu0
    %v3134 = vrot.slane %v2485, 1
    %v3136 = vsel %vm245, %v3116, 0
    %v3139 = vsel %vm245, %v3121, 0
    %v3142 = vsel %vm245, %v3126, 0
    %v3145 = vsel %vm245, %v3131, 0
    %v3147 = vsel %vm513, %v3134, 0
    %3149 = vmatprep.subr.mxu0 0.0
    %3150 = vmatpush1.msra.mxu0 0.0
    %3151 = vmatprep.subr.mxu0 0.0
    %3152 = vmatpush1.msra.mxu0 0.0
    %3153 = vmatprep.subr.mxu0 0.0
    %3154 = vmatpush1.msra.mxu0 0.0
    %3155 = vmatprep.subr.mxu0 0.0
    %3156 = vmatpush1.msra.mxu0 0.0
    %3157 = vmatprep.subr.mxu0 0.0
    %3158 = vmatpush1.msra.mxu0 0.0
    %3159 = vmatprep.subr.mxu0 0.0
    %3160 = vmatpush1.msra.mxu0 0.0
    %3161 = vmatprep.subr.mxu0 0.0
    %3162 = vmatpush1.msra.mxu0 0.0
    %3163 = vmatprep.subr.mxu0 0.0
    %3164 = vmatpush1.msra.mxu0 0.0
    %3165 = vmatprep.subr.mxu0 0.0
    %3166 = vmatpush1.msra.mxu0 0.0
    %3167 = vmatprep.subr.mxu0 0.0
    %3168 = vmatpush1.msra.mxu0 0.0
    %3169 = vmatprep.subr.mxu0 0.0
    %3170 = vmatpush1.msra.mxu0 0.0
    %3171 = vmatprep.subr.mxu0 0.0
    %3172 = vmatpush1.msra.mxu0 0.0
    %3173 = vmatprep.subr.mxu0 0.0
    %3174 = vmatpush1.msra.mxu0 0.0
    %3175 = vmatprep.subr.mxu0 0.0
    %3176 = vmatpush1.msra.mxu0 0.0
    %3177 = vmatprep.subr.mxu0 0.0
    %3178 = vmatpush1.msra.mxu0 0.0
    %3179 = vmatprep.subr.mxu0 0.0
    %3180 = vmatpush1.msra.mxu0 %v3147
    %3181 = vmatprep.subr.mxu0 0.0
    %3182 = vmatpush2.msra.mxu0 0.0
    %3183 = vmatprep.subr.mxu0 0.0
    %3184 = vmatpush2.msra.mxu0 0.0
    %3185 = vmatprep.subr.mxu0 0.0
    %3186 = vmatpush2.msra.mxu0 0.0
    %3187 = vmatprep.subr.mxu0 0.0
    %3188 = vmatpush2.msra.mxu0 0.0
    %3189 = vmatprep.subr.mxu0 0.0
    %3190 = vmatpush2.msra.mxu0 0.0
    %3191 = vmatprep.subr.mxu0 0.0
    %3192 = vmatpush2.msra.mxu0 0.0
    %3193 = vmatprep.subr.mxu0 0.0
    %3194 = vmatpush2.msra.mxu0 0.0
    %3195 = vmatprep.subr.mxu0 0.0
    %3196 = vmatpush2.msra.mxu0 0.0
    %3197 = vmatprep.subr.mxu0 0.0
    %3198 = vmatpush2.msra.mxu0 0.0
    %3199 = vmatprep.subr.mxu0 0.0
    %3200 = vmatpush2.msra.mxu0 0.0
    %3201 = vmatprep.subr.mxu0 0.0
    %3202 = vmatpush2.msra.mxu0 0.0
    %3203 = vmatprep.subr.mxu0 0.0
    %3204 = vmatpush2.msra.mxu0 0.0
    %3205 = vmatprep.subr.mxu0 0.0
    %3206 = vmatpush2.msra.mxu0 0.0
    %3207 = vmatprep.subr.mxu0 0.0
    %3208 = vmatpush2.msra.mxu0 0.0
    %3209 = vmatprep.subr.mxu0 0.0
    %3210 = vmatpush2.msra.mxu0 0.0
    %3211 = vmatprep.subr.mxu0 0.0
    %3212 = vmatpush2.msra.mxu0 0.0
    %3213 = vmatprep.mubr.f32.mxu0 0.0
    %3214 = vmatmul.mubr.f32.gmra.mxu0 %v3136
    %v3215 = vpop.f32.mrf.mxu0
    %v3216 = vadd.f32 0.0, %v3215
    %v3217 = vpop.f32.mrf.mxu0
    %3218 = vmatprep.mubr.f32.mxu0 0.0
    %3219 = vmatmul.mubr.f32.gmra.mxu0 %v3139
    %v3220 = vpop.f32.mrf.mxu0
    %v3221 = vadd.f32 0.0, %v3220
    %v3222 = vpop.f32.mrf.mxu0
    %3223 = vmatprep.mubr.f32.mxu0 0.0
    %3224 = vmatmul.mubr.f32.gmra.mxu0 %v3142
    %v3225 = vpop.f32.mrf.mxu0
    %v3226 = vadd.f32 0.0, %v3225
    %v3227 = vpop.f32.mrf.mxu0
    %3228 = vmatprep.mubr.f32.mxu0 0.0
    %3229 = vmatmul.mubr.f32.gmra.mxu0 %v3145
    %v3230 = vpop.f32.mrf.mxu0
    %v3231 = vadd.f32 0.0, %v3230
    %v3232 = vpop.f32.mrf.mxu0
    %3233 = vdwg.mxu0
    %v3234 = vadd.f32 %v2860, %v3216
    %v3235 = vadd.f32 %v2861, %v3221
    %v3236 = vadd.f32 %v2862, %v3226
    %v3237 = vadd.f32 %v2863, %v3231
    %3238 = vrot.lane.b32.xlu0 %v2466, 126
    %v3239 = vpop.permute.xlu0 %3238
    %3240 = vrot.lane.b32.xlu0 %v2471, 126
    %v3241 = vpop.permute.xlu0 %3240
    %3242 = vrot.lane.b32.xlu0 %v2476, 126
    %v3243 = vpop.permute.xlu0 %3242
    %3244 = vrot.lane.b32.xlu0 %v2481, 126
    %v3245 = vpop.permute.xlu0 %3244
    %3246 = vrot.lane.b32.xlu0 %v2466, 122
    %v3247 = vpop.permute.xlu0 %3246
    %3248 = vrot.lane.b32.xlu0 %v2471, 122
    %v3249 = vpop.permute.xlu0 %3248
    %3250 = vrot.lane.b32.xlu0 %v2476, 122
    %v3251 = vpop.permute.xlu0 %3250
    %3252 = vrot.lane.b32.xlu0 %v2481, 122
    %v3253 = vpop.permute.xlu0 %3252
    %v3254 = vsel %vm245, %v3239, 0
    %v3256 = vsel %vm245, %v3241, 0
    %v3258 = vsel %vm245, %v3243, 0
    %v3260 = vsel %vm245, %v3245, 0
    %v3262 = vsel %vm245, %v3247, 0
    %v3264 = vsel %vm245, %v3249, 0
    %v3266 = vsel %vm245, %v3251, 0
    %v3268 = vsel %vm245, %v3253, 0
    %3270 = vmatprep.subr.mxu0 0.0
    %3271 = vmatpush1.xpose.msra.mxu0 0.0
    %3272 = vmatprep.subr.mxu0 0.0
    %3273 = vmatpush1.xpose.msra.mxu0 0.0
    %3274 = vmatprep.subr.mxu0 0.0
    %3275 = vmatpush1.xpose.msra.mxu0 0.0
    %3276 = vmatprep.subr.mxu0 0.0
    %3277 = vmatpush1.xpose.msra.mxu0 0.0
    %3278 = vmatprep.subr.mxu0 0.0
    %3279 = vmatpush1.xpose.msra.mxu0 0.0
    %3280 = vmatprep.subr.mxu0 0.0
    %3281 = vmatpush1.xpose.msra.mxu0 0.0
    %3282 = vmatprep.subr.mxu0 0.0
    %3283 = vmatpush1.xpose.msra.mxu0 0.0
    %3284 = vmatprep.subr.mxu0 0.0
    %3285 = vmatpush1.xpose.msra.mxu0 0.0
    %3286 = vmatprep.subr.mxu0 0.0
    %3287 = vmatpush1.xpose.msra.mxu0 0.0
    %3288 = vmatprep.subr.mxu0 0.0
    %3289 = vmatpush1.xpose.msra.mxu0 0.0
    %3290 = vmatprep.subr.mxu0 0.0
    %3291 = vmatpush1.xpose.msra.mxu0 0.0
    %3292 = vmatprep.subr.mxu0 0.0
    %3293 = vmatpush1.xpose.msra.mxu0 0.0
    %3294 = vmatprep.subr.mxu0 0.0
    %3295 = vmatpush1.xpose.msra.mxu0 %v3268
    %3296 = vmatprep.subr.mxu0 0.0
    %3297 = vmatpush1.xpose.msra.mxu0 %v3266
    %3298 = vmatprep.subr.mxu0 0.0
    %3299 = vmatpush1.xpose.msra.mxu0 %v3264
    %3300 = vmatprep.subr.mxu0 0.0
    %3301 = vmatpush1.xpose.msra.mxu0 %v3262
    %3302 = vmatprep.subr.mxu0 0.0
    %3303 = vmatpush2.xpose.msra.mxu0 0.0
    %3304 = vmatprep.subr.mxu0 0.0
    %3305 = vmatpush2.xpose.msra.mxu0 0.0
    %3306 = vmatprep.subr.mxu0 0.0
    %3307 = vmatpush2.xpose.msra.mxu0 0.0
    %3308 = vmatprep.subr.mxu0 0.0
    %3309 = vmatpush2.xpose.msra.mxu0 0.0
    %3310 = vmatprep.subr.mxu0 0.0
    %3311 = vmatpush2.xpose.msra.mxu0 0.0
    %3312 = vmatprep.subr.mxu0 0.0
    %3313 = vmatpush2.xpose.msra.mxu0 0.0
    %3314 = vmatprep.subr.mxu0 0.0
    %3315 = vmatpush2.xpose.msra.mxu0 0.0
    %3316 = vmatprep.subr.mxu0 0.0
    %3317 = vmatpush2.xpose.msra.mxu0 0.0
    %3318 = vmatprep.subr.mxu0 0.0
    %3319 = vmatpush2.xpose.msra.mxu0 0.0
    %3320 = vmatprep.subr.mxu0 0.0
    %3321 = vmatpush2.xpose.msra.mxu0 0.0
    %3322 = vmatprep.subr.mxu0 0.0
    %3323 = vmatpush2.xpose.msra.mxu0 0.0
    %3324 = vmatprep.subr.mxu0 0.0
    %3325 = vmatpush2.xpose.msra.mxu0 0.0
    %3326 = vmatprep.subr.mxu0 0.0
    %3327 = vmatpush2.xpose.msra.mxu0 0.0
    %3328 = vmatprep.subr.mxu0 0.0
    %3329 = vmatpush2.xpose.msra.mxu0 0.0
    %3330 = vmatprep.subr.mxu0 0.0
    %3331 = vmatpush2.xpose.msra.mxu0 0.0
    %3332 = vmatprep.subr.mxu0 0.0
    %3333 = vmatpush2.xpose.msra.mxu0 0.0
    %3334 = vmatprep.mubr.f32.mxu0 0.0
    %3335 = vmatmul.mubr.f32.gmra.mxu0 %v3254
    %v3336 = vpop.f32.mrf.mxu0
    %v3337 = vadd.f32 %v117, %v3336
    %v3338 = vpop.f32.mrf.mxu0
    %3339 = vmatprep.mubr.f32.mxu0 0.0
    %3340 = vmatmul.mubr.f32.gmra.mxu0 %v3256
    %v3341 = vpop.f32.mrf.mxu0
    %v3342 = vadd.f32 %v118, %v3341
    %v3343 = vpop.f32.mrf.mxu0
    %3344 = vmatprep.mubr.f32.mxu0 0.0
    %3345 = vmatmul.mubr.f32.gmra.mxu0 %v3258
    %v3346 = vpop.f32.mrf.mxu0
    %v3347 = vadd.f32 %v119, %v3346
    %v3348 = vpop.f32.mrf.mxu0
    %3349 = vmatprep.mubr.f32.mxu0 0.0
    %3350 = vmatmul.mubr.f32.gmra.mxu0 %v3260
    %v3351 = vpop.f32.mrf.mxu0
    %v3352 = vadd.f32 %v120, %v3351
    %v3353 = vpop.f32.mrf.mxu0
    %3354 = vdwg.mxu0
    %v3355 = vsel %vm347, %v3337, -inf
    %3356 = vmax.xlane.f32.xlu0 %v3355
    %v3357 = vpop.xlane.xlu0 %3356
    %v3358 = vsel %vm347, %v3342, -inf
    %3359 = vmax.xlane.f32.xlu0 %v3358
    %v3360 = vpop.xlane.xlu0 %3359
    %v3361 = vsel %vm347, %v3347, -inf
    %3362 = vmax.xlane.f32.xlu0 %v3361
    %v3363 = vpop.xlane.xlu0 %3362
    %v3364 = vsel %vm347, %v3352, -inf
    %3365 = vmax.xlane.f32.xlu0 %v3364
    %v3366 = vpop.xlane.xlu0 %3365
    %v3367 = vsub.f32 %v3337, %v3357
    %v3368 = vsub.f32 %v3342, %v3360
    %v3369 = vsub.f32 %v3347, %v3363
    %v3370 = vsub.f32 %v3352, %v3366
    %v3371 = vmul.f32 %v3367, 1.442695
    %v3372 = vpow.pop %v3371
    %v3373 = vmul.f32 %v3368, 1.442695
    %v3374 = vpow.pop %v3373
    %v3375 = vmul.f32 %v3369, 1.442695
    %v3376 = vpow.pop %v3375
    %v3377 = vmul.f32 %v3370, 1.442695
    %v3378 = vpow.pop %v3377
    %v3379 = vsel %vm347, %v3372, 0.0
    %3380 = vadd.xlane.f32.xlu0 %v3379
    %v3381 = vpop.xlane.xlu0 %3380
    %v3382 = vsel %vm347, %v3374, 0.0
    %3383 = vadd.xlane.f32.xlu0 %v3382
    %v3384 = vpop.xlane.xlu0 %3383
    %v3385 = vsel %vm347, %v3376, 0.0
    %3386 = vadd.xlane.f32.xlu0 %v3385
    %v3387 = vpop.xlane.xlu0 %3386
    %v3388 = vsel %vm347, %v3378, 0.0
    %3389 = vadd.xlane.f32.xlu0 %v3388
    %v3390 = vpop.xlane.xlu0 %3389
    %v3391 = vrcp.pop %v3381
    %v3392 = vrcp.pop %v3384
    %v3393 = vrcp.pop %v3387
    %v3394 = vrcp.pop %v3390
    %v3395 = vmul.f32 %v3372, %v3391
    %v3396 = vmul.f32 %v3374, %v3392
    %v3397 = vmul.f32 %v3376, %v3393
    %v3398 = vmul.f32 %v3378, %v3394
    %3399 = vrot.lane.b32.xlu0 %v2466, 118
    %v3400 = vpop.permute.xlu0 %3399
    %3401 = vrot.lane.b32.xlu0 %v2471, 118
    %v3402 = vpop.permute.xlu0 %3401
    %3403 = vrot.lane.b32.xlu0 %v2476, 118
    %v3404 = vpop.permute.xlu0 %3403
    %3405 = vrot.lane.b32.xlu0 %v2481, 118
    %v3406 = vpop.permute.xlu0 %3405
    %v3412 = vsel %vm347, %v3395, 0
    %v3415 = vsel %vm347, %v3396, 0
    %v3418 = vsel %vm347, %v3397, 0
    %v3421 = vsel %vm347, %v3398, 0
    %3423 = vmatprep.subr.mxu0 0.0
    %3424 = vmatpush1.msra.mxu0 0.0
    %3425 = vmatprep.subr.mxu0 0.0
    %3426 = vmatpush1.msra.mxu0 0.0
    %3427 = vmatprep.subr.mxu0 0.0
    %3428 = vmatpush1.msra.mxu0 0.0
    %3429 = vmatprep.subr.mxu0 0.0
    %3430 = vmatpush1.msra.mxu0 0.0
    %3431 = vmatprep.subr.mxu0 0.0
    %3432 = vmatpush1.msra.mxu0 0.0
    %3433 = vmatprep.subr.mxu0 0.0
    %3434 = vmatpush1.msra.mxu0 0.0
    %3435 = vmatprep.subr.mxu0 0.0
    %3436 = vmatpush1.msra.mxu0 0.0
    %3437 = vmatprep.subr.mxu0 0.0
    %3438 = vmatpush1.msra.mxu0 0.0
    %3439 = vmatprep.subr.mxu0 0.0
    %3440 = vmatpush1.msra.mxu0 0.0
    %3441 = vmatprep.subr.mxu0 0.0
    %3442 = vmatpush1.msra.mxu0 0.0
    %3443 = vmatprep.subr.mxu0 0.0
    %3444 = vmatpush1.msra.mxu0 0.0
    %3445 = vmatprep.subr.mxu0 0.0
    %3446 = vmatpush1.msra.mxu0 0.0
    %3447 = vmatprep.subr.mxu0 0.0
    %3448 = vmatpush1.msra.mxu0 %v3406
    %3449 = vmatprep.subr.mxu0 0.0
    %3450 = vmatpush1.msra.mxu0 %v3404
    %3451 = vmatprep.subr.mxu0 0.0
    %3452 = vmatpush1.msra.mxu0 %v3402
    %3453 = vmatprep.subr.mxu0 0.0
    %3454 = vmatpush1.msra.mxu0 %v3400
    %3455 = vmatprep.subr.mxu0 0.0
    %3456 = vmatpush2.msra.mxu0 0.0
    %3457 = vmatprep.subr.mxu0 0.0
    %3458 = vmatpush2.msra.mxu0 0.0
    %3459 = vmatprep.subr.mxu0 0.0
    %3460 = vmatpush2.msra.mxu0 0.0
    %3461 = vmatprep.subr.mxu0 0.0
    %3462 = vmatpush2.msra.mxu0 0.0
    %3463 = vmatprep.subr.mxu0 0.0
    %3464 = vmatpush2.msra.mxu0 0.0
    %3465 = vmatprep.subr.mxu0 0.0
    %3466 = vmatpush2.msra.mxu0 0.0
    %3467 = vmatprep.subr.mxu0 0.0
    %3468 = vmatpush2.msra.mxu0 0.0
    %3469 = vmatprep.subr.mxu0 0.0
    %3470 = vmatpush2.msra.mxu0 0.0
    %3471 = vmatprep.subr.mxu0 0.0
    %3472 = vmatpush2.msra.mxu0 0.0
    %3473 = vmatprep.subr.mxu0 0.0
    %3474 = vmatpush2.msra.mxu0 0.0
    %3475 = vmatprep.subr.mxu0 0.0
    %3476 = vmatpush2.msra.mxu0 0.0
    %3477 = vmatprep.subr.mxu0 0.0
    %3478 = vmatpush2.msra.mxu0 0.0
    %3479 = vmatprep.subr.mxu0 0.0
    %3480 = vmatpush2.msra.mxu0 0.0
    %3481 = vmatprep.subr.mxu0 0.0
    %3482 = vmatpush2.msra.mxu0 0.0
    %3483 = vmatprep.subr.mxu0 0.0
    %3484 = vmatpush2.msra.mxu0 0.0
    %3485 = vmatprep.subr.mxu0 0.0
    %3486 = vmatpush2.msra.mxu0 0.0
    %3487 = vmatprep.mubr.f32.mxu0 0.0
    %3488 = vmatmul.mubr.f32.gmra.mxu0 %v3412
    %v3489 = vpop.f32.mrf.mxu0
    %v3490 = vadd.f32 0.0, %v3489
    %v3491 = vpop.f32.mrf.mxu0
    %3492 = vmatprep.mubr.f32.mxu0 0.0
    %3493 = vmatmul.mubr.f32.gmra.mxu0 %v3415
    %v3494 = vpop.f32.mrf.mxu0
    %v3495 = vadd.f32 0.0, %v3494
    %v3496 = vpop.f32.mrf.mxu0
    %3497 = vmatprep.mubr.f32.mxu0 0.0
    %3498 = vmatmul.mubr.f32.gmra.mxu0 %v3418
    %v3499 = vpop.f32.mrf.mxu0
    %v3500 = vadd.f32 0.0, %v3499
    %v3501 = vpop.f32.mrf.mxu0
    %3502 = vmatprep.mubr.f32.mxu0 0.0
    %3503 = vmatmul.mubr.f32.gmra.mxu0 %v3421
    %v3504 = vpop.f32.mrf.mxu0
    %v3505 = vadd.f32 0.0, %v3504
    %v3506 = vpop.f32.mrf.mxu0
    %3507 = vdwg.mxu0
    %v3508 = vrot.slane %v2485, 2
    %v3510 = vsel %vm245, %v3490, 0
    %v3513 = vsel %vm245, %v3495, 0
    %v3516 = vsel %vm245, %v3500, 0
    %v3519 = vsel %vm245, %v3505, 0
    %v3521 = vsel %vm513, %v3508, 0
    %3523 = vmatprep.subr.mxu0 0.0
    %3524 = vmatpush1.msra.mxu0 0.0
    %3525 = vmatprep.subr.mxu0 0.0
    %3526 = vmatpush1.msra.mxu0 0.0
    %3527 = vmatprep.subr.mxu0 0.0
    %3528 = vmatpush1.msra.mxu0 0.0
    %3529 = vmatprep.subr.mxu0 0.0
    %3530 = vmatpush1.msra.mxu0 0.0
    %3531 = vmatprep.subr.mxu0 0.0
    %3532 = vmatpush1.msra.mxu0 0.0
    %3533 = vmatprep.subr.mxu0 0.0
    %3534 = vmatpush1.msra.mxu0 0.0
    %3535 = vmatprep.subr.mxu0 0.0
    %3536 = vmatpush1.msra.mxu0 0.0
    %3537 = vmatprep.subr.mxu0 0.0
    %3538 = vmatpush1.msra.mxu0 0.0
    %3539 = vmatprep.subr.mxu0 0.0
    %3540 = vmatpush1.msra.mxu0 0.0
    %3541 = vmatprep.subr.mxu0 0.0
    %3542 = vmatpush1.msra.mxu0 0.0
    %3543 = vmatprep.subr.mxu0 0.0
    %3544 = vmatpush1.msra.mxu0 0.0
    %3545 = vmatprep.subr.mxu0 0.0
    %3546 = vmatpush1.msra.mxu0 0.0
    %3547 = vmatprep.subr.mxu0 0.0
    %3548 = vmatpush1.msra.mxu0 0.0
    %3549 = vmatprep.subr.mxu0 0.0
    %3550 = vmatpush1.msra.mxu0 0.0
    %3551 = vmatprep.subr.mxu0 0.0
    %3552 = vmatpush1.msra.mxu0 0.0
    %3553 = vmatprep.subr.mxu0 0.0
    %3554 = vmatpush1.msra.mxu0 %v3521
    %3555 = vmatprep.subr.mxu0 0.0
    %3556 = vmatpush2.msra.mxu0 0.0
    %3557 = vmatprep.subr.mxu0 0.0
    %3558 = vmatpush2.msra.mxu0 0.0
    %3559 = vmatprep.subr.mxu0 0.0
    %3560 = vmatpush2.msra.mxu0 0.0
    %3561 = vmatprep.subr.mxu0 0.0
    %3562 = vmatpush2.msra.mxu0 0.0
    %3563 = vmatprep.subr.mxu0 0.0
    %3564 = vmatpush2.msra.mxu0 0.0
    %3565 = vmatprep.subr.mxu0 0.0
    %3566 = vmatpush2.msra.mxu0 0.0
    %3567 = vmatprep.subr.mxu0 0.0
    %3568 = vmatpush2.msra.mxu0 0.0
    %3569 = vmatprep.subr.mxu0 0.0
    %3570 = vmatpush2.msra.mxu0 0.0
    %3571 = vmatprep.subr.mxu0 0.0
    %3572 = vmatpush2.msra.mxu0 0.0
    %3573 = vmatprep.subr.mxu0 0.0
    %3574 = vmatpush2.msra.mxu0 0.0
    %3575 = vmatprep.subr.mxu0 0.0
    %3576 = vmatpush2.msra.mxu0 0.0
    %3577 = vmatprep.subr.mxu0 0.0
    %3578 = vmatpush2.msra.mxu0 0.0
    %3579 = vmatprep.subr.mxu0 0.0
    %3580 = vmatpush2.msra.mxu0 0.0
    %3581 = vmatprep.subr.mxu0 0.0
    %3582 = vmatpush2.msra.mxu0 0.0
    %3583 = vmatprep.subr.mxu0 0.0
    %3584 = vmatpush2.msra.mxu0 0.0
    %3585 = vmatprep.subr.mxu0 0.0
    %3586 = vmatpush2.msra.mxu0 0.0
    %3587 = vmatprep.mubr.f32.mxu0 0.0
    %3588 = vmatmul.mubr.f32.gmra.mxu0 %v3510
    %v3589 = vpop.f32.mrf.mxu0
    %v3590 = vadd.f32 0.0, %v3589
    %v3591 = vpop.f32.mrf.mxu0
    %3592 = vmatprep.mubr.f32.mxu0 0.0
    %3593 = vmatmul.mubr.f32.gmra.mxu0 %v3513
    %v3594 = vpop.f32.mrf.mxu0
    %v3595 = vadd.f32 0.0, %v3594
    %v3596 = vpop.f32.mrf.mxu0
    %3597 = vmatprep.mubr.f32.mxu0 0.0
    %3598 = vmatmul.mubr.f32.gmra.mxu0 %v3516
    %v3599 = vpop.f32.mrf.mxu0
    %v3600 = vadd.f32 0.0, %v3599
    %v3601 = vpop.f32.mrf.mxu0
    %3602 = vmatprep.mubr.f32.mxu0 0.0
    %3603 = vmatmul.mubr.f32.gmra.mxu0 %v3519
    %v3604 = vpop.f32.mrf.mxu0
    %v3605 = vadd.f32 0.0, %v3604
    %v3606 = vpop.f32.mrf.mxu0
    %3607 = vdwg.mxu0
    %v3608 = vadd.f32 %v3234, %v3590
    %v3609 = vadd.f32 %v3235, %v3595
    %v3610 = vadd.f32 %v3236, %v3600
    %v3611 = vadd.f32 %v3237, %v3605
    %3612 = vrot.lane.b32.xlu0 %v2466, 125
    %v3613 = vpop.permute.xlu0 %3612
    %3614 = vrot.lane.b32.xlu0 %v2471, 125
    %v3615 = vpop.permute.xlu0 %3614
    %3616 = vrot.lane.b32.xlu0 %v2476, 125
    %v3617 = vpop.permute.xlu0 %3616
    %3618 = vrot.lane.b32.xlu0 %v2481, 125
    %v3619 = vpop.permute.xlu0 %3618
    %3620 = vrot.lane.b32.xlu0 %v2466, 121
    %v3621 = vpop.permute.xlu0 %3620
    %3622 = vrot.lane.b32.xlu0 %v2471, 121
    %v3623 = vpop.permute.xlu0 %3622
    %3624 = vrot.lane.b32.xlu0 %v2476, 121
    %v3625 = vpop.permute.xlu0 %3624
    %3626 = vrot.lane.b32.xlu0 %v2481, 121
    %v3627 = vpop.permute.xlu0 %3626
    %v3628 = vsel %vm245, %v3613, 0
    %v3630 = vsel %vm245, %v3615, 0
    %v3632 = vsel %vm245, %v3617, 0
    %v3634 = vsel %vm245, %v3619, 0
    %v3636 = vsel %vm245, %v3621, 0
    %v3638 = vsel %vm245, %v3623, 0
    %v3640 = vsel %vm245, %v3625, 0
    %v3642 = vsel %vm245, %v3627, 0
    %3644 = vmatprep.subr.mxu0 0.0
    %3645 = vmatpush1.xpose.msra.mxu0 0.0
    %3646 = vmatprep.subr.mxu0 0.0
    %3647 = vmatpush1.xpose.msra.mxu0 0.0
    %3648 = vmatprep.subr.mxu0 0.0
    %3649 = vmatpush1.xpose.msra.mxu0 0.0
    %3650 = vmatprep.subr.mxu0 0.0
    %3651 = vmatpush1.xpose.msra.mxu0 0.0
    %3652 = vmatprep.subr.mxu0 0.0
    %3653 = vmatpush1.xpose.msra.mxu0 0.0
    %3654 = vmatprep.subr.mxu0 0.0
    %3655 = vmatpush1.xpose.msra.mxu0 0.0
    %3656 = vmatprep.subr.mxu0 0.0
    %3657 = vmatpush1.xpose.msra.mxu0 0.0
    %3658 = vmatprep.subr.mxu0 0.0
    %3659 = vmatpush1.xpose.msra.mxu0 0.0
    %3660 = vmatprep.subr.mxu0 0.0
    %3661 = vmatpush1.xpose.msra.mxu0 0.0
    %3662 = vmatprep.subr.mxu0 0.0
    %3663 = vmatpush1.xpose.msra.mxu0 0.0
    %3664 = vmatprep.subr.mxu0 0.0
    %3665 = vmatpush1.xpose.msra.mxu0 0.0
    %3666 = vmatprep.subr.mxu0 0.0
    %3667 = vmatpush1.xpose.msra.mxu0 0.0
    %3668 = vmatprep.subr.mxu0 0.0
    %3669 = vmatpush1.xpose.msra.mxu0 %v3642
    %3670 = vmatprep.subr.mxu0 0.0
    %3671 = vmatpush1.xpose.msra.mxu0 %v3640
    %3672 = vmatprep.subr.mxu0 0.0
    %3673 = vmatpush1.xpose.msra.mxu0 %v3638
    %3674 = vmatprep.subr.mxu0 0.0
    %3675 = vmatpush1.xpose.msra.mxu0 %v3636
    %3676 = vmatprep.subr.mxu0 0.0
    %3677 = vmatpush2.xpose.msra.mxu0 0.0
    %3678 = vmatprep.subr.mxu0 0.0
    %3679 = vmatpush2.xpose.msra.mxu0 0.0
    %3680 = vmatprep.subr.mxu0 0.0
    %3681 = vmatpush2.xpose.msra.mxu0 0.0
    %3682 = vmatprep.subr.mxu0 0.0
    %3683 = vmatpush2.xpose.msra.mxu0 0.0
    %3684 = vmatprep.subr.mxu0 0.0
    %3685 = vmatpush2.xpose.msra.mxu0 0.0
    %3686 = vmatprep.subr.mxu0 0.0
    %3687 = vmatpush2.xpose.msra.mxu0 0.0
    %3688 = vmatprep.subr.mxu0 0.0
    %3689 = vmatpush2.xpose.msra.mxu0 0.0
    %3690 = vmatprep.subr.mxu0 0.0
    %3691 = vmatpush2.xpose.msra.mxu0 0.0
    %3692 = vmatprep.subr.mxu0 0.0
    %3693 = vmatpush2.xpose.msra.mxu0 0.0
    %3694 = vmatprep.subr.mxu0 0.0
    %3695 = vmatpush2.xpose.msra.mxu0 0.0
    %3696 = vmatprep.subr.mxu0 0.0
    %3697 = vmatpush2.xpose.msra.mxu0 0.0
    %3698 = vmatprep.subr.mxu0 0.0
    %3699 = vmatpush2.xpose.msra.mxu0 0.0
    %3700 = vmatprep.subr.mxu0 0.0
    %3701 = vmatpush2.xpose.msra.mxu0 0.0
    %3702 = vmatprep.subr.mxu0 0.0
    %3703 = vmatpush2.xpose.msra.mxu0 0.0
    %3704 = vmatprep.subr.mxu0 0.0
    %3705 = vmatpush2.xpose.msra.mxu0 0.0
    %3706 = vmatprep.subr.mxu0 0.0
    %3707 = vmatpush2.xpose.msra.mxu0 0.0
    %3708 = vmatprep.mubr.f32.mxu0 0.0
    %3709 = vmatmul.mubr.f32.gmra.mxu0 %v3628
    %v3710 = vpop.f32.mrf.mxu0
    %v3711 = vadd.f32 %v117, %v3710
    %v3712 = vpop.f32.mrf.mxu0
    %3713 = vmatprep.mubr.f32.mxu0 0.0
    %3714 = vmatmul.mubr.f32.gmra.mxu0 %v3630
    %v3715 = vpop.f32.mrf.mxu0
    %v3716 = vadd.f32 %v118, %v3715
    %v3717 = vpop.f32.mrf.mxu0
    %3718 = vmatprep.mubr.f32.mxu0 0.0
    %3719 = vmatmul.mubr.f32.gmra.mxu0 %v3632
    %v3720 = vpop.f32.mrf.mxu0
    %v3721 = vadd.f32 %v119, %v3720
    %v3722 = vpop.f32.mrf.mxu0
    %3723 = vmatprep.mubr.f32.mxu0 0.0
    %3724 = vmatmul.mubr.f32.gmra.mxu0 %v3634
    %v3725 = vpop.f32.mrf.mxu0
    %v3726 = vadd.f32 %v120, %v3725
    %v3727 = vpop.f32.mrf.mxu0
    %3728 = vdwg.mxu0
    %v3729 = vsel %vm347, %v3711, -inf
    %3730 = vmax.xlane.f32.xlu0 %v3729
    %v3731 = vpop.xlane.xlu0 %3730
    %v3732 = vsel %vm347, %v3716, -inf
    %3733 = vmax.xlane.f32.xlu0 %v3732
    %v3734 = vpop.xlane.xlu0 %3733
    %v3735 = vsel %vm347, %v3721, -inf
    %3736 = vmax.xlane.f32.xlu0 %v3735
    %v3737 = vpop.xlane.xlu0 %3736
    %v3738 = vsel %vm347, %v3726, -inf
    %3739 = vmax.xlane.f32.xlu0 %v3738
    %v3740 = vpop.xlane.xlu0 %3739
    %v3741 = vsub.f32 %v3711, %v3731
    %v3742 = vsub.f32 %v3716, %v3734
    %v3743 = vsub.f32 %v3721, %v3737
    %v3744 = vsub.f32 %v3726, %v3740
    %v3745 = vmul.f32 %v3741, 1.442695
    %v3746 = vpow.pop %v3745
    %v3747 = vmul.f32 %v3742, 1.442695
    %v3748 = vpow.pop %v3747
    %v3749 = vmul.f32 %v3743, 1.442695
    %v3750 = vpow.pop %v3749
    %v3751 = vmul.f32 %v3744, 1.442695
    %v3752 = vpow.pop %v3751
    %v3753 = vsel %vm347, %v3746, 0.0
    %3754 = vadd.xlane.f32.xlu0 %v3753
    %v3755 = vpop.xlane.xlu0 %3754
    %v3756 = vsel %vm347, %v3748, 0.0
    %3757 = vadd.xlane.f32.xlu0 %v3756
    %v3758 = vpop.xlane.xlu0 %3757
    %v3759 = vsel %vm347, %v3750, 0.0
    %3760 = vadd.xlane.f32.xlu0 %v3759
    %v3761 = vpop.xlane.xlu0 %3760
    %v3762 = vsel %vm347, %v3752, 0.0
    %3763 = vadd.xlane.f32.xlu0 %v3762
    %v3764 = vpop.xlane.xlu0 %3763
    %v3765 = vrcp.pop %v3755
    %v3766 = vrcp.pop %v3758
    %v3767 = vrcp.pop %v3761
    %v3768 = vrcp.pop %v3764
    %v3769 = vmul.f32 %v3746, %v3765
    %v3770 = vmul.f32 %v3748, %v3766
    %v3771 = vmul.f32 %v3750, %v3767
    %v3772 = vmul.f32 %v3752, %v3768
    %3773 = vrot.lane.b32.xlu0 %v2466, 117
    %v3774 = vpop.permute.xlu0 %3773
    %3775 = vrot.lane.b32.xlu0 %v2471, 117
    %v3776 = vpop.permute.xlu0 %3775
    %3777 = vrot.lane.b32.xlu0 %v2476, 117
    %v3778 = vpop.permute.xlu0 %3777
    %3779 = vrot.lane.b32.xlu0 %v2481, 117
    %v3780 = vpop.permute.xlu0 %3779
    %v3786 = vsel %vm347, %v3769, 0
    %v3789 = vsel %vm347, %v3770, 0
    %v3792 = vsel %vm347, %v3771, 0
    %v3795 = vsel %vm347, %v3772, 0
    %3797 = vmatprep.subr.mxu0 0.0
    %3798 = vmatpush1.msra.mxu0 0.0
    %3799 = vmatprep.subr.mxu0 0.0
    %3800 = vmatpush1.msra.mxu0 0.0
    %3801 = vmatprep.subr.mxu0 0.0
    %3802 = vmatpush1.msra.mxu0 0.0
    %3803 = vmatprep.subr.mxu0 0.0
    %3804 = vmatpush1.msra.mxu0 0.0
    %3805 = vmatprep.subr.mxu0 0.0
    %3806 = vmatpush1.msra.mxu0 0.0
    %3807 = vmatprep.subr.mxu0 0.0
    %3808 = vmatpush1.msra.mxu0 0.0
    %3809 = vmatprep.subr.mxu0 0.0
    %3810 = vmatpush1.msra.mxu0 0.0
    %3811 = vmatprep.subr.mxu0 0.0
    %3812 = vmatpush1.msra.mxu0 0.0
    %3813 = vmatprep.subr.mxu0 0.0
    %3814 = vmatpush1.msra.mxu0 0.0
    %3815 = vmatprep.subr.mxu0 0.0
    %3816 = vmatpush1.msra.mxu0 0.0
    %3817 = vmatprep.subr.mxu0 0.0
    %3818 = vmatpush1.msra.mxu0 0.0
    %3819 = vmatprep.subr.mxu0 0.0
    %3820 = vmatpush1.msra.mxu0 0.0
    %3821 = vmatprep.subr.mxu0 0.0
    %3822 = vmatpush1.msra.mxu0 %v3780
    %3823 = vmatprep.subr.mxu0 0.0
    %3824 = vmatpush1.msra.mxu0 %v3778
    %3825 = vmatprep.subr.mxu0 0.0
    %3826 = vmatpush1.msra.mxu0 %v3776
    %3827 = vmatprep.subr.mxu0 0.0
    %3828 = vmatpush1.msra.mxu0 %v3774
    %3829 = vmatprep.subr.mxu0 0.0
    %3830 = vmatpush2.msra.mxu0 0.0
    %3831 = vmatprep.subr.mxu0 0.0
    %3832 = vmatpush2.msra.mxu0 0.0
    %3833 = vmatprep.subr.mxu0 0.0
    %3834 = vmatpush2.msra.mxu0 0.0
    %3835 = vmatprep.subr.mxu0 0.0
    %3836 = vmatpush2.msra.mxu0 0.0
    %3837 = vmatprep.subr.mxu0 0.0
    %3838 = vmatpush2.msra.mxu0 0.0
    %3839 = vmatprep.subr.mxu0 0.0
    %3840 = vmatpush2.msra.mxu0 0.0
    %3841 = vmatprep.subr.mxu0 0.0
    %3842 = vmatpush2.msra.mxu0 0.0
    %3843 = vmatprep.subr.mxu0 0.0
    %3844 = vmatpush2.msra.mxu0 0.0
    %3845 = vmatprep.subr.mxu0 0.0
    %3846 = vmatpush2.msra.mxu0 0.0
    %3847 = vmatprep.subr.mxu0 0.0
    %3848 = vmatpush2.msra.mxu0 0.0
    %3849 = vmatprep.subr.mxu0 0.0
    %3850 = vmatpush2.msra.mxu0 0.0
    %3851 = vmatprep.subr.mxu0 0.0
    %3852 = vmatpush2.msra.mxu0 0.0
    %3853 = vmatprep.subr.mxu0 0.0
    %3854 = vmatpush2.msra.mxu0 0.0
    %3855 = vmatprep.subr.mxu0 0.0
    %3856 = vmatpush2.msra.mxu0 0.0
    %3857 = vmatprep.subr.mxu0 0.0
    %3858 = vmatpush2.msra.mxu0 0.0
    %3859 = vmatprep.subr.mxu0 0.0
    %3860 = vmatpush2.msra.mxu0 0.0
    %3861 = vmatprep.mubr.f32.mxu0 0.0
    %3862 = vmatmul.mubr.f32.gmra.mxu0 %v3786
    %v3863 = vpop.f32.mrf.mxu0
    %v3864 = vadd.f32 0.0, %v3863
    %v3865 = vpop.f32.mrf.mxu0
    %3866 = vmatprep.mubr.f32.mxu0 0.0
    %3867 = vmatmul.mubr.f32.gmra.mxu0 %v3789
    %v3868 = vpop.f32.mrf.mxu0
    %v3869 = vadd.f32 0.0, %v3868
    %v3870 = vpop.f32.mrf.mxu0
    %3871 = vmatprep.mubr.f32.mxu0 0.0
    %3872 = vmatmul.mubr.f32.gmra.mxu0 %v3792
    %v3873 = vpop.f32.mrf.mxu0
    %v3874 = vadd.f32 0.0, %v3873
    %v3875 = vpop.f32.mrf.mxu0
    %3876 = vmatprep.mubr.f32.mxu0 0.0
    %3877 = vmatmul.mubr.f32.gmra.mxu0 %v3795
    %v3878 = vpop.f32.mrf.mxu0
    %v3879 = vadd.f32 0.0, %v3878
    %v3880 = vpop.f32.mrf.mxu0
    %3881 = vdwg.mxu0
    %v3882 = vrot.slane %v2485, 3
    %v3884 = vsel %vm245, %v3864, 0
    %v3887 = vsel %vm245, %v3869, 0
    %v3890 = vsel %vm245, %v3874, 0
    %v3893 = vsel %vm245, %v3879, 0
    %v3895 = vsel %vm513, %v3882, 0
    %3897 = vmatprep.subr.mxu0 0.0
    %3898 = vmatpush1.msra.mxu0 0.0
    %3899 = vmatprep.subr.mxu0 0.0
    %3900 = vmatpush1.msra.mxu0 0.0
    %3901 = vmatprep.subr.mxu0 0.0
    %3902 = vmatpush1.msra.mxu0 0.0
    %3903 = vmatprep.subr.mxu0 0.0
    %3904 = vmatpush1.msra.mxu0 0.0
    %3905 = vmatprep.subr.mxu0 0.0
    %3906 = vmatpush1.msra.mxu0 0.0
    %3907 = vmatprep.subr.mxu0 0.0
    %3908 = vmatpush1.msra.mxu0 0.0
    %3909 = vmatprep.subr.mxu0 0.0
    %3910 = vmatpush1.msra.mxu0 0.0
    %3911 = vmatprep.subr.mxu0 0.0
    %3912 = vmatpush1.msra.mxu0 0.0
    %3913 = vmatprep.subr.mxu0 0.0
    %3914 = vmatpush1.msra.mxu0 0.0
    %3915 = vmatprep.subr.mxu0 0.0
    %3916 = vmatpush1.msra.mxu0 0.0
    %3917 = vmatprep.subr.mxu0 0.0
    %3918 = vmatpush1.msra.mxu0 0.0
    %3919 = vmatprep.subr.mxu0 0.0
    %3920 = vmatpush1.msra.mxu0 0.0
    %3921 = vmatprep.subr.mxu0 0.0
    %3922 = vmatpush1.msra.mxu0 0.0
    %3923 = vmatprep.subr.mxu0 0.0
    %3924 = vmatpush1.msra.mxu0 0.0
    %3925 = vmatprep.subr.mxu0 0.0
    %3926 = vmatpush1.msra.mxu0 0.0
    %3927 = vmatprep.subr.mxu0 0.0
    %3928 = vmatpush1.msra.mxu0 %v3895
    %3929 = vmatprep.subr.mxu0 0.0
    %3930 = vmatpush2.msra.mxu0 0.0
    %3931 = vmatprep.subr.mxu0 0.0
    %3932 = vmatpush2.msra.mxu0 0.0
    %3933 = vmatprep.subr.mxu0 0.0
    %3934 = vmatpush2.msra.mxu0 0.0
    %3935 = vmatprep.subr.mxu0 0.0
    %3936 = vmatpush2.msra.mxu0 0.0
    %3937 = vmatprep.subr.mxu0 0.0
    %3938 = vmatpush2.msra.mxu0 0.0
    %3939 = vmatprep.subr.mxu0 0.0
    %3940 = vmatpush2.msra.mxu0 0.0
    %3941 = vmatprep.subr.mxu0 0.0
    %3942 = vmatpush2.msra.mxu0 0.0
    %3943 = vmatprep.subr.mxu0 0.0
    %3944 = vmatpush2.msra.mxu0 0.0
    %3945 = vmatprep.subr.mxu0 0.0
    %3946 = vmatpush2.msra.mxu0 0.0
    %3947 = vmatprep.subr.mxu0 0.0
    %3948 = vmatpush2.msra.mxu0 0.0
    %3949 = vmatprep.subr.mxu0 0.0
    %3950 = vmatpush2.msra.mxu0 0.0
    %3951 = vmatprep.subr.mxu0 0.0
    %3952 = vmatpush2.msra.mxu0 0.0
    %3953 = vmatprep.subr.mxu0 0.0
    %3954 = vmatpush2.msra.mxu0 0.0
    %3955 = vmatprep.subr.mxu0 0.0
    %3956 = vmatpush2.msra.mxu0 0.0
    %3957 = vmatprep.subr.mxu0 0.0
    %3958 = vmatpush2.msra.mxu0 0.0
    %3959 = vmatprep.subr.mxu0 0.0
    %3960 = vmatpush2.msra.mxu0 0.0
    %3961 = vmatprep.mubr.f32.mxu0 0.0
    %3962 = vmatmul.mubr.f32.gmra.mxu0 %v3884
    %v3963 = vpop.f32.mrf.mxu0
    %v3964 = vadd.f32 0.0, %v3963
    %v3965 = vpop.f32.mrf.mxu0
    %3966 = vmatprep.mubr.f32.mxu0 0.0
    %3967 = vmatmul.mubr.f32.gmra.mxu0 %v3887
    %v3968 = vpop.f32.mrf.mxu0
    %v3969 = vadd.f32 0.0, %v3968
    %v3970 = vpop.f32.mrf.mxu0
    %3971 = vmatprep.mubr.f32.mxu0 0.0
    %3972 = vmatmul.mubr.f32.gmra.mxu0 %v3890
    %v3973 = vpop.f32.mrf.mxu0
    %v3974 = vadd.f32 0.0, %v3973
    %v3975 = vpop.f32.mrf.mxu0
    %3976 = vmatprep.mubr.f32.mxu0 0.0
    %3977 = vmatmul.mubr.f32.gmra.mxu0 %v3893
    %v3978 = vpop.f32.mrf.mxu0
    %v3979 = vadd.f32 0.0, %v3978
    %v3980 = vpop.f32.mrf.mxu0
    %3981 = vdwg.mxu0
    %v3982 = vadd.f32 %v3608, %v3964
    %v3983 = vadd.f32 %v3609, %v3969
    %v3984 = vadd.f32 %v3610, %v3974
    %v3985 = vadd.f32 %v3611, %v3979
    %v3986 = vadd.f32 %v2370, %v3982
    %v3987 = vadd.f32 %v2371, %v3983
    %v3988 = vadd.f32 %v2372, %v3984
    %v3989 = vadd.f32 %v2373, %v3985
    %s3990 = scalar_lea.vmem %s9, 1
    %v3991 = vld [vmem:[%s3990] sm:$0x1]
    %s3992 = scalar_lea.vmem %s10, 1
    %v3993 = vld [vmem:[%s3992] sm:$0x1]
    %v3994 = vsel %vm129, %v3986, 0.0
    %3995 = vadd.xlane.f32.xlu0 %v3994
    %v3996 = vpop.xlane.xlu0 %3995
    %v3997 = vsel %vm129, %v3987, 0.0
    %3998 = vadd.xlane.f32.xlu0 %v3997
    %v3999 = vpop.xlane.xlu0 %3998
    %v4000 = vsel %vm129, %v3988, 0.0
    %4001 = vadd.xlane.f32.xlu0 %v4000
    %v4002 = vpop.xlane.xlu0 %4001
    %v4003 = vsel %vm129, %v3989, 0.0
    %4004 = vadd.xlane.f32.xlu0 %v4003
    %v4005 = vpop.xlane.xlu0 %4004
    %v4006 = vmul.f32 %v3996, %v1752
    %v4007 = vmul.f32 %v3999, %v1752
    %v4008 = vmul.f32 %v4002, %v1752
    %v4009 = vmul.f32 %v4005, %v1752
    %v4010 = vsub.f32 %v3986, %v4006
    %v4011 = vsub.f32 %v3987, %v4007
    %v4012 = vsub.f32 %v3988, %v4008
    %v4013 = vsub.f32 %v3989, %v4009
    %v4014 = vmul.f32 %v4010, %v4010
    %v4015 = vmul.f32 %v4011, %v4011
    %v4016 = vmul.f32 %v4012, %v4012
    %v4017 = vmul.f32 %v4013, %v4013
    %v4018 = vsel %vm129, %v4014, 0.0
    %4019 = vadd.xlane.f32.xlu0 %v4018
    %v4020 = vpop.xlane.xlu0 %4019
    %v4021 = vsel %vm129, %v4015, 0.0
    %4022 = vadd.xlane.f32.xlu0 %v4021
    %v4023 = vpop.xlane.xlu0 %4022
    %v4024 = vsel %vm129, %v4016, 0.0
    %4025 = vadd.xlane.f32.xlu0 %v4024
    %v4026 = vpop.xlane.xlu0 %4025
    %v4027 = vsel %vm129, %v4017, 0.0
    %4028 = vadd.xlane.f32.xlu0 %v4027
    %v4029 = vpop.xlane.xlu0 %4028
    %v4030 = vmul.f32 %v4020, %v1752
    %v4031 = vmul.f32 %v4023, %v1752
    %v4032 = vmul.f32 %v4026, %v1752
    %v4033 = vmul.f32 %v4029, %v1752
    %v4034 = vadd.f32 %v4030, 1e-05
    %v4035 = vadd.f32 %v4031, 1e-05
    %v4036 = vadd.f32 %v4032, 1e-05
    %v4037 = vadd.f32 %v4033, 1e-05
    %v4038 = vrsqrt.pop %v4034
    %v4039 = vrsqrt.pop %v4035
    %v4040 = vrsqrt.pop %v4036
    %v4041 = vrsqrt.pop %v4037
    %v4042 = vmul.f32 %v4010, %v4038
    %v4043 = vmul.f32 %v4011, %v4039
    %v4044 = vmul.f32 %v4012, %v4040
    %v4045 = vmul.f32 %v4013, %v4041
    %v4047 = vlaneseq
    %v4048 = vshrl.u32 %v4047, 7
    %v4049 = vsub.s32 0, %v4048
    %v4050 = vrot.slane %v3991, %v4049
    %v4052 = vmul.f32 %v4042, %v4050
    %v4053 = vmul.f32 %v4043, %v4050
    %v4054 = vmul.f32 %v4044, %v4050
    %v4055 = vmul.f32 %v4045, %v4050
    %v4057 = vlaneseq
    %v4058 = vshrl.u32 %v4057, 7
    %v4059 = vsub.s32 0, %v4058
    %v4060 = vrot.slane %v3993, %v4059
    %v4062 = vadd.f32 %v4052, %v4060
    %v4063 = vadd.f32 %v4053, %v4060
    %v4064 = vadd.f32 %v4054, %v4060
    %v4065 = vadd.f32 %v4055, %v4060
    %s4066 = scalar_lea.vmem %s11, 16
    %v4067 = vld [vmem:[%s4066] sm:$0xff]
    %v4068 = vld [vmem:[%s4066 + $0x8] sm:$0xff]
    %s4069 = scalar_lea.vmem %s12, 4
    %v4070 = vld [vmem:[%s4069] sm:$0xf]
    %v4072 = vlaneseq
    %v4073 = vshrl.u32 %v4072, 7
    %v4074 = vsub.s32 0, %v4073
    %v4075 = vrot.slane %v4070, %v4074
    %v4076 = vlaneseq
    %v4077 = vshrl.u32 %v4076, 7
    %v4078 = vsub.s32 1, %v4077
    %v4079 = vrot.slane %v4070, %v4078
    %v4080 = vlaneseq
    %v4081 = vshrl.u32 %v4080, 7
    %v4082 = vsub.s32 2, %v4081
    %v4083 = vrot.slane %v4070, %v4082
    %v4084 = vlaneseq
    %v4085 = vshrl.u32 %v4084, 7
    %v4086 = vsub.s32 3, %v4085
    %v4087 = vrot.slane %v4070, %v4086
    %v4094 = vcombine.high %v4067, %v4067
    %v4095 = vcombine.high %v4068, %v4068
    %v4097 = vsel %vm129, %v4062, 0
    %v4100 = vsel %vm129, %v4063, 0
    %v4103 = vsel %vm129, %v4064, 0
    %v4106 = vsel %vm129, %v4065, 0
    %v4108 = vsel %vm142, %v4067, 0
    %v4110 = vsel %vm142, %v4094, 0
    %v4112 = vsel %vm142, %v4068, 0
    %v4114 = vsel %vm142, %v4095, 0
    %4116 = vmatprep.subr.mxu0 0.0
    %4117 = vmatpush1.msra.mxu0 0.0
    %4118 = vmatprep.subr.mxu0 0.0
    %4119 = vmatpush1.msra.mxu0 0.0
    %4120 = vmatprep.subr.mxu0 0.0
    %4121 = vmatpush1.msra.mxu0 0.0
    %4122 = vmatprep.subr.mxu0 0.0
    %4123 = vmatpush1.msra.mxu0 0.0
    %4124 = vmatprep.subr.mxu0 0.0
    %4125 = vmatpush1.msra.mxu0 0.0
    %4126 = vmatprep.subr.mxu0 0.0
    %4127 = vmatpush1.msra.mxu0 0.0
    %4128 = vmatprep.subr.mxu0 0.0
    %4129 = vmatpush1.msra.mxu0 0.0
    %4130 = vmatprep.subr.mxu0 0.0
    %4131 = vmatpush1.msra.mxu0 0.0
    %4132 = vmatprep.subr.mxu0 0.0
    %4133 = vmatpush1.msra.mxu0 0.0
    %4134 = vmatprep.subr.mxu0 0.0
    %4135 = vmatpush1.msra.mxu0 0.0
    %4136 = vmatprep.subr.mxu0 0.0
    %4137 = vmatpush1.msra.mxu0 0.0
    %4138 = vmatprep.subr.mxu0 0.0
    %4139 = vmatpush1.msra.mxu0 0.0
    %4140 = vmatprep.subr.mxu0 0.0
    %4141 = vmatpush1.msra.mxu0 0.0
    %4142 = vmatprep.subr.mxu0 0.0
    %4143 = vmatpush1.msra.mxu0 0.0
    %4144 = vmatprep.subr.mxu0 0.0
    %4145 = vmatpush1.msra.mxu0 0.0
    %4146 = vmatprep.subr.mxu0 %v4110
    %4147 = vmatpush1.msra.mxu0 %v4108
    %4148 = vmatprep.subr.mxu0 0.0
    %4149 = vmatpush2.msra.mxu0 0.0
    %4150 = vmatprep.subr.mxu0 0.0
    %4151 = vmatpush2.msra.mxu0 0.0
    %4152 = vmatprep.subr.mxu0 0.0
    %4153 = vmatpush2.msra.mxu0 0.0
    %4154 = vmatprep.subr.mxu0 0.0
    %4155 = vmatpush2.msra.mxu0 0.0
    %4156 = vmatprep.subr.mxu0 0.0
    %4157 = vmatpush2.msra.mxu0 0.0
    %4158 = vmatprep.subr.mxu0 0.0
    %4159 = vmatpush2.msra.mxu0 0.0
    %4160 = vmatprep.subr.mxu0 0.0
    %4161 = vmatpush2.msra.mxu0 0.0
    %4162 = vmatprep.subr.mxu0 0.0
    %4163 = vmatpush2.msra.mxu0 0.0
    %4164 = vmatprep.subr.mxu0 0.0
    %4165 = vmatpush2.msra.mxu0 0.0
    %4166 = vmatprep.subr.mxu0 0.0
    %4167 = vmatpush2.msra.mxu0 0.0
    %4168 = vmatprep.subr.mxu0 0.0
    %4169 = vmatpush2.msra.mxu0 0.0
    %4170 = vmatprep.subr.mxu0 0.0
    %4171 = vmatpush2.msra.mxu0 0.0
    %4172 = vmatprep.subr.mxu0 0.0
    %4173 = vmatpush2.msra.mxu0 0.0
    %4174 = vmatprep.subr.mxu0 0.0
    %4175 = vmatpush2.msra.mxu0 0.0
    %4176 = vmatprep.subr.mxu0 0.0
    %4177 = vmatpush2.msra.mxu0 0.0
    %4178 = vmatprep.subr.mxu0 0.0
    %4179 = vmatpush2.msra.mxu0 0.0
    %4180 = vmatprep.mubr.f32.mxu0 0.0
    %4181 = vmatmul.mubr.f32.gmra.mxu0 %v4097
    %v4182 = vpop.f32.mrf.mxu0
    %v4183 = vadd.f32 %v4075, %v4182
    %v4184 = vpop.f32.mrf.mxu0
    %v4185 = vadd.f32 %v4079, %v4184
    %4186 = vmatprep.mubr.f32.mxu0 0.0
    %4187 = vmatmul.mubr.f32.gmra.mxu0 %v4100
    %v4188 = vpop.f32.mrf.mxu0
    %v4189 = vadd.f32 %v4075, %v4188
    %v4190 = vpop.f32.mrf.mxu0
    %v4191 = vadd.f32 %v4079, %v4190
    %4192 = vmatprep.mubr.f32.mxu0 0.0
    %4193 = vmatmul.mubr.f32.gmra.mxu0 %v4103
    %v4194 = vpop.f32.mrf.mxu0
    %v4195 = vadd.f32 %v4075, %v4194
    %v4196 = vpop.f32.mrf.mxu0
    %v4197 = vadd.f32 %v4079, %v4196
    %4198 = vmatprep.mubr.f32.mxu0 0.0
    %4199 = vmatmul.mubr.f32.gmra.mxu0 %v4106
    %v4200 = vpop.f32.mrf.mxu0
    %v4201 = vadd.f32 %v4075, %v4200
    %v4202 = vpop.f32.mrf.mxu0
    %v4203 = vadd.f32 %v4079, %v4202
    %4204 = vdwg.mxu0
    %4205 = vmatprep.subr.mxu0 0.0
    %4206 = vmatpush1.msra.mxu0 0.0
    %4207 = vmatprep.subr.mxu0 0.0
    %4208 = vmatpush1.msra.mxu0 0.0
    %4209 = vmatprep.subr.mxu0 0.0
    %4210 = vmatpush1.msra.mxu0 0.0
    %4211 = vmatprep.subr.mxu0 0.0
    %4212 = vmatpush1.msra.mxu0 0.0
    %4213 = vmatprep.subr.mxu0 0.0
    %4214 = vmatpush1.msra.mxu0 0.0
    %4215 = vmatprep.subr.mxu0 0.0
    %4216 = vmatpush1.msra.mxu0 0.0
    %4217 = vmatprep.subr.mxu0 0.0
    %4218 = vmatpush1.msra.mxu0 0.0
    %4219 = vmatprep.subr.mxu0 0.0
    %4220 = vmatpush1.msra.mxu0 0.0
    %4221 = vmatprep.subr.mxu0 0.0
    %4222 = vmatpush1.msra.mxu0 0.0
    %4223 = vmatprep.subr.mxu0 0.0
    %4224 = vmatpush1.msra.mxu0 0.0
    %4225 = vmatprep.subr.mxu0 0.0
    %4226 = vmatpush1.msra.mxu0 0.0
    %4227 = vmatprep.subr.mxu0 0.0
    %4228 = vmatpush1.msra.mxu0 0.0
    %4229 = vmatprep.subr.mxu0 0.0
    %4230 = vmatpush1.msra.mxu0 0.0
    %4231 = vmatprep.subr.mxu0 0.0
    %4232 = vmatpush1.msra.mxu0 0.0
    %4233 = vmatprep.subr.mxu0 0.0
    %4234 = vmatpush1.msra.mxu0 0.0
    %4235 = vmatprep.subr.mxu0 %v4114
    %4236 = vmatpush1.msra.mxu0 %v4112
    %4237 = vmatprep.subr.mxu0 0.0
    %4238 = vmatpush2.msra.mxu0 0.0
    %4239 = vmatprep.subr.mxu0 0.0
    %4240 = vmatpush2.msra.mxu0 0.0
    %4241 = vmatprep.subr.mxu0 0.0
    %4242 = vmatpush2.msra.mxu0 0.0
    %4243 = vmatprep.subr.mxu0 0.0
    %4244 = vmatpush2.msra.mxu0 0.0
    %4245 = vmatprep.subr.mxu0 0.0
    %4246 = vmatpush2.msra.mxu0 0.0
    %4247 = vmatprep.subr.mxu0 0.0
    %4248 = vmatpush2.msra.mxu0 0.0
    %4249 = vmatprep.subr.mxu0 0.0
    %4250 = vmatpush2.msra.mxu0 0.0
    %4251 = vmatprep.subr.mxu0 0.0
    %4252 = vmatpush2.msra.mxu0 0.0
    %4253 = vmatprep.subr.mxu0 0.0
    %4254 = vmatpush2.msra.mxu0 0.0
    %4255 = vmatprep.subr.mxu0 0.0
    %4256 = vmatpush2.msra.mxu0 0.0
    %4257 = vmatprep.subr.mxu0 0.0
    %4258 = vmatpush2.msra.mxu0 0.0
    %4259 = vmatprep.subr.mxu0 0.0
    %4260 = vmatpush2.msra.mxu0 0.0
    %4261 = vmatprep.subr.mxu0 0.0
    %4262 = vmatpush2.msra.mxu0 0.0
    %4263 = vmatprep.subr.mxu0 0.0
    %4264 = vmatpush2.msra.mxu0 0.0
    %4265 = vmatprep.subr.mxu0 0.0
    %4266 = vmatpush2.msra.mxu0 0.0
    %4267 = vmatprep.subr.mxu0 0.0
    %4268 = vmatpush2.msra.mxu0 0.0
    %4269 = vmatprep.mubr.f32.mxu0 0.0
    %4270 = vmatmul.mubr.f32.gmra.mxu0 %v4097
    %v4271 = vpop.f32.mrf.mxu0
    %v4272 = vadd.f32 %v4083, %v4271
    %v4273 = vpop.f32.mrf.mxu0
    %v4274 = vadd.f32 %v4087, %v4273
    %4275 = vmatprep.mubr.f32.mxu0 0.0
    %4276 = vmatmul.mubr.f32.gmra.mxu0 %v4100
    %v4277 = vpop.f32.mrf.mxu0
    %v4278 = vadd.f32 %v4083, %v4277
    %v4279 = vpop.f32.mrf.mxu0
    %v4280 = vadd.f32 %v4087, %v4279
    %4281 = vmatprep.mubr.f32.mxu0 0.0
    %4282 = vmatmul.mubr.f32.gmra.mxu0 %v4103
    %v4283 = vpop.f32.mrf.mxu0
    %v4284 = vadd.f32 %v4083, %v4283
    %v4285 = vpop.f32.mrf.mxu0
    %v4286 = vadd.f32 %v4087, %v4285
    %4287 = vmatprep.mubr.f32.mxu0 0.0
    %4288 = vmatmul.mubr.f32.gmra.mxu0 %v4106
    %v4289 = vpop.f32.mrf.mxu0
    %v4290 = vadd.f32 %v4083, %v4289
    %v4291 = vpop.f32.mrf.mxu0
    %v4292 = vadd.f32 %v4087, %v4291
    %4293 = vdwg.mxu0
    %v4294 = vmax.f32 %v4183, 0.0
    %v4295 = vmax.f32 %v4185, 0.0
    %v4296 = vmax.f32 %v4272, 0.0
    %v4297 = vmax.f32 %v4274, 0.0
    %v4298 = vmax.f32 %v4189, 0.0
    %v4299 = vmax.f32 %v4191, 0.0
    %v4300 = vmax.f32 %v4278, 0.0
    %v4301 = vmax.f32 %v4280, 0.0
    %v4302 = vmax.f32 %v4195, 0.0
    %v4303 = vmax.f32 %v4197, 0.0
    %v4304 = vmax.f32 %v4284, 0.0
    %v4305 = vmax.f32 %v4286, 0.0
    %v4306 = vmax.f32 %v4201, 0.0
    %v4307 = vmax.f32 %v4203, 0.0
    %v4308 = vmax.f32 %v4290, 0.0
    %v4309 = vmax.f32 %v4292, 0.0
    %s4310 = scalar_lea.vmem %s13, 512
    %v4311 = vld [vmem:[%s4310] sm:$0xff]
    %v4312 = vld [vmem:[%s4310 + $0x8] sm:$0xff]
    %v4313 = vld [vmem:[%s4310 + $0x10] sm:$0xff]
    %v4314 = vld [vmem:[%s4310 + $0x18] sm:$0xff]
    %v4315 = vld [vmem:[%s4310 + $0x20] sm:$0xff]
    %v4316 = vld [vmem:[%s4310 + $0x28] sm:$0xff]
    %v4317 = vld [vmem:[%s4310 + $0x30] sm:$0xff]
    %v4318 = vld [vmem:[%s4310 + $0x38] sm:$0xff]
    %v4319 = vld [vmem:[%s4310 + $0x40] sm:$0xff]
    %v4320 = vld [vmem:[%s4310 + $0x48] sm:$0xff]
    %v4321 = vld [vmem:[%s4310 + $0x50] sm:$0xff]
    %v4322 = vld [vmem:[%s4310 + $0x58] sm:$0xff]
    %v4323 = vld [vmem:[%s4310 + $0x60] sm:$0xff]
    %v4324 = vld [vmem:[%s4310 + $0x68] sm:$0xff]
    %v4325 = vld [vmem:[%s4310 + $0x70] sm:$0xff]
    %v4326 = vld [vmem:[%s4310 + $0x78] sm:$0xff]
    %v4327 = vld [vmem:[%s4310 + $0x80] sm:$0xff]
    %v4328 = vld [vmem:[%s4310 + $0x88] sm:$0xff]
    %v4329 = vld [vmem:[%s4310 + $0x90] sm:$0xff]
    %v4330 = vld [vmem:[%s4310 + $0x98] sm:$0xff]
    %v4331 = vld [vmem:[%s4310 + $0xa0] sm:$0xff]
    %v4332 = vld [vmem:[%s4310 + $0xa8] sm:$0xff]
    %v4333 = vld [vmem:[%s4310 + $0xb0] sm:$0xff]
    %v4334 = vld [vmem:[%s4310 + $0xb8] sm:$0xff]
    %v4335 = vld [vmem:[%s4310 + $0xc0] sm:$0xff]
    %v4336 = vld [vmem:[%s4310 + $0xc8] sm:$0xff]
    %v4337 = vld [vmem:[%s4310 + $0xd0] sm:$0xff]
    %v4338 = vld [vmem:[%s4310 + $0xd8] sm:$0xff]
    %v4339 = vld [vmem:[%s4310 + $0xe0] sm:$0xff]
    %v4340 = vld [vmem:[%s4310 + $0xe8] sm:$0xff]
    %v4341 = vld [vmem:[%s4310 + $0xf0] sm:$0xff]
    %v4342 = vld [vmem:[%s4310 + $0xf8] sm:$0xff]
    %v4343 = vld [vmem:[%s4310 + $0x100] sm:$0xff]
    %v4344 = vld [vmem:[%s4310 + $0x108] sm:$0xff]
    %v4345 = vld [vmem:[%s4310 + $0x110] sm:$0xff]
    %v4346 = vld [vmem:[%s4310 + $0x118] sm:$0xff]
    %v4347 = vld [vmem:[%s4310 + $0x120] sm:$0xff]
    %v4348 = vld [vmem:[%s4310 + $0x128] sm:$0xff]
    %v4349 = vld [vmem:[%s4310 + $0x130] sm:$0xff]
    %v4350 = vld [vmem:[%s4310 + $0x138] sm:$0xff]
    %v4351 = vld [vmem:[%s4310 + $0x140] sm:$0xff]
    %v4352 = vld [vmem:[%s4310 + $0x148] sm:$0xff]
    %v4353 = vld [vmem:[%s4310 + $0x150] sm:$0xff]
    %v4354 = vld [vmem:[%s4310 + $0x158] sm:$0xff]
    %v4355 = vld [vmem:[%s4310 + $0x160] sm:$0xff]
    %v4356 = vld [vmem:[%s4310 + $0x168] sm:$0xff]
    %v4357 = vld [vmem:[%s4310 + $0x170] sm:$0xff]
    %v4358 = vld [vmem:[%s4310 + $0x178] sm:$0xff]
    %v4359 = vld [vmem:[%s4310 + $0x180] sm:$0xff]
    %v4360 = vld [vmem:[%s4310 + $0x188] sm:$0xff]
    %v4361 = vld [vmem:[%s4310 + $0x190] sm:$0xff]
    %v4362 = vld [vmem:[%s4310 + $0x198] sm:$0xff]
    %v4363 = vld [vmem:[%s4310 + $0x1a0] sm:$0xff]
    %v4364 = vld [vmem:[%s4310 + $0x1a8] sm:$0xff]
    %v4365 = vld [vmem:[%s4310 + $0x1b0] sm:$0xff]
    %v4366 = vld [vmem:[%s4310 + $0x1b8] sm:$0xff]
    %v4367 = vld [vmem:[%s4310 + $0x1c0] sm:$0xff]
    %v4368 = vld [vmem:[%s4310 + $0x1c8] sm:$0xff]
    %v4369 = vld [vmem:[%s4310 + $0x1d0] sm:$0xff]
    %v4370 = vld [vmem:[%s4310 + $0x1d8] sm:$0xff]
    %v4371 = vld [vmem:[%s4310 + $0x1e0] sm:$0xff]
    %v4372 = vld [vmem:[%s4310 + $0x1e8] sm:$0xff]
    %v4373 = vld [vmem:[%s4310 + $0x1f0] sm:$0xff]
    %v4374 = vld [vmem:[%s4310 + $0x1f8] sm:$0xff]
    %s4375 = scalar_lea.vmem %s14, 1
    %v4376 = vld [vmem:[%s4375] sm:$0x1]
    %v4378 = vlaneseq
    %v4379 = vshrl.u32 %v4378, 7
    %v4380 = vsub.s32 0, %v4379
    %v4381 = vrot.slane %v4376, %v4380
    %4383 = vmatprep.subr.mxu0 0.0
    %4384 = vmatpush1.msra.mxu0 %v4326
    %4385 = vmatprep.subr.mxu0 0.0
    %4386 = vmatpush1.msra.mxu0 %v4325
    %4387 = vmatprep.subr.mxu0 0.0
    %4388 = vmatpush1.msra.mxu0 %v4324
    %4389 = vmatprep.subr.mxu0 0.0
    %4390 = vmatpush1.msra.mxu0 %v4323
    %4391 = vmatprep.subr.mxu0 0.0
    %4392 = vmatpush1.msra.mxu0 %v4322
    %4393 = vmatprep.subr.mxu0 0.0
    %4394 = vmatpush1.msra.mxu0 %v4321
    %4395 = vmatprep.subr.mxu0 0.0
    %4396 = vmatpush1.msra.mxu0 %v4320
    %4397 = vmatprep.subr.mxu0 0.0
    %4398 = vmatpush1.msra.mxu0 %v4319
    %4399 = vmatprep.subr.mxu0 0.0
    %4400 = vmatpush1.msra.mxu0 %v4318
    %4401 = vmatprep.subr.mxu0 0.0
    %4402 = vmatpush1.msra.mxu0 %v4317
    %4403 = vmatprep.subr.mxu0 0.0
    %4404 = vmatpush1.msra.mxu0 %v4316
    %4405 = vmatprep.subr.mxu0 0.0
    %4406 = vmatpush1.msra.mxu0 %v4315
    %4407 = vmatprep.subr.mxu0 0.0
    %4408 = vmatpush1.msra.mxu0 %v4314
    %4409 = vmatprep.subr.mxu0 0.0
    %4410 = vmatpush1.msra.mxu0 %v4313
    %4411 = vmatprep.subr.mxu0 0.0
    %4412 = vmatpush1.msra.mxu0 %v4312
    %4413 = vmatprep.subr.mxu0 0.0
    %4414 = vmatpush1.msra.mxu0 %v4311
    %4415 = vmatprep.subr.mxu0 0.0
    %4416 = vmatpush2.msra.mxu0 %v4342
    %4417 = vmatprep.subr.mxu0 0.0
    %4418 = vmatpush2.msra.mxu0 %v4341
    %4419 = vmatprep.subr.mxu0 0.0
    %4420 = vmatpush2.msra.mxu0 %v4340
    %4421 = vmatprep.subr.mxu0 0.0
    %4422 = vmatpush2.msra.mxu0 %v4339
    %4423 = vmatprep.subr.mxu0 0.0
    %4424 = vmatpush2.msra.mxu0 %v4338
    %4425 = vmatprep.subr.mxu0 0.0
    %4426 = vmatpush2.msra.mxu0 %v4337
    %4427 = vmatprep.subr.mxu0 0.0
    %4428 = vmatpush2.msra.mxu0 %v4336
    %4429 = vmatprep.subr.mxu0 0.0
    %4430 = vmatpush2.msra.mxu0 %v4335
    %4431 = vmatprep.subr.mxu0 0.0
    %4432 = vmatpush2.msra.mxu0 %v4334
    %4433 = vmatprep.subr.mxu0 0.0
    %4434 = vmatpush2.msra.mxu0 %v4333
    %4435 = vmatprep.subr.mxu0 0.0
    %4436 = vmatpush2.msra.mxu0 %v4332
    %4437 = vmatprep.subr.mxu0 0.0
    %4438 = vmatpush2.msra.mxu0 %v4331
    %4439 = vmatprep.subr.mxu0 0.0
    %4440 = vmatpush2.msra.mxu0 %v4330
    %4441 = vmatprep.subr.mxu0 0.0
    %4442 = vmatpush2.msra.mxu0 %v4329
    %4443 = vmatprep.subr.mxu0 0.0
    %4444 = vmatpush2.msra.mxu0 %v4328
    %4445 = vmatprep.subr.mxu0 0.0
    %4446 = vmatpush2.msra.mxu0 %v4327
    %4447 = vmatprep.mubr.f32.mxu0 %v4295
    %4448 = vmatmul.mubr.f32.gmra.mxu0 %v4294
    %v4449 = vpop.f32.mrf.mxu0
    %v4450 = vadd.f32 %v4381, %v4449
    %v4451 = vpop.f32.mrf.mxu0
    %4452 = vmatprep.mubr.f32.mxu0 %v4299
    %4453 = vmatmul.mubr.f32.gmra.mxu0 %v4298
    %v4454 = vpop.f32.mrf.mxu0
    %v4455 = vadd.f32 %v4381, %v4454
    %v4456 = vpop.f32.mrf.mxu0
    %4457 = vmatprep.mubr.f32.mxu0 %v4303
    %4458 = vmatmul.mubr.f32.gmra.mxu0 %v4302
    %v4459 = vpop.f32.mrf.mxu0
    %v4460 = vadd.f32 %v4381, %v4459
    %v4461 = vpop.f32.mrf.mxu0
    %4462 = vmatprep.mubr.f32.mxu0 %v4307
    %4463 = vmatmul.mubr.f32.gmra.mxu0 %v4306
    %v4464 = vpop.f32.mrf.mxu0
    %v4465 = vadd.f32 %v4381, %v4464
    %v4466 = vpop.f32.mrf.mxu0
    %4467 = vdwg.mxu0
    %4468 = vmatprep.subr.mxu0 0.0
    %4469 = vmatpush1.msra.mxu0 %v4358
    %4470 = vmatprep.subr.mxu0 0.0
    %4471 = vmatpush1.msra.mxu0 %v4357
    %4472 = vmatprep.subr.mxu0 0.0
    %4473 = vmatpush1.msra.mxu0 %v4356
    %4474 = vmatprep.subr.mxu0 0.0
    %4475 = vmatpush1.msra.mxu0 %v4355
    %4476 = vmatprep.subr.mxu0 0.0
    %4477 = vmatpush1.msra.mxu0 %v4354
    %4478 = vmatprep.subr.mxu0 0.0
    %4479 = vmatpush1.msra.mxu0 %v4353
    %4480 = vmatprep.subr.mxu0 0.0
    %4481 = vmatpush1.msra.mxu0 %v4352
    %4482 = vmatprep.subr.mxu0 0.0
    %4483 = vmatpush1.msra.mxu0 %v4351
    %4484 = vmatprep.subr.mxu0 0.0
    %4485 = vmatpush1.msra.mxu0 %v4350
    %4486 = vmatprep.subr.mxu0 0.0
    %4487 = vmatpush1.msra.mxu0 %v4349
    %4488 = vmatprep.subr.mxu0 0.0
    %4489 = vmatpush1.msra.mxu0 %v4348
    %4490 = vmatprep.subr.mxu0 0.0
    %4491 = vmatpush1.msra.mxu0 %v4347
    %4492 = vmatprep.subr.mxu0 0.0
    %4493 = vmatpush1.msra.mxu0 %v4346
    %4494 = vmatprep.subr.mxu0 0.0
    %4495 = vmatpush1.msra.mxu0 %v4345
    %4496 = vmatprep.subr.mxu0 0.0
    %4497 = vmatpush1.msra.mxu0 %v4344
    %4498 = vmatprep.subr.mxu0 0.0
    %4499 = vmatpush1.msra.mxu0 %v4343
    %4500 = vmatprep.subr.mxu0 0.0
    %4501 = vmatpush2.msra.mxu0 %v4374
    %4502 = vmatprep.subr.mxu0 0.0
    %4503 = vmatpush2.msra.mxu0 %v4373
    %4504 = vmatprep.subr.mxu0 0.0
    %4505 = vmatpush2.msra.mxu0 %v4372
    %4506 = vmatprep.subr.mxu0 0.0
    %4507 = vmatpush2.msra.mxu0 %v4371
    %4508 = vmatprep.subr.mxu0 0.0
    %4509 = vmatpush2.msra.mxu0 %v4370
    %4510 = vmatprep.subr.mxu0 0.0
    %4511 = vmatpush2.msra.mxu0 %v4369
    %4512 = vmatprep.subr.mxu0 0.0
    %4513 = vmatpush2.msra.mxu0 %v4368
    %4514 = vmatprep.subr.mxu0 0.0
    %4515 = vmatpush2.msra.mxu0 %v4367
    %4516 = vmatprep.subr.mxu0 0.0
    %4517 = vmatpush2.msra.mxu0 %v4366
    %4518 = vmatprep.subr.mxu0 0.0
    %4519 = vmatpush2.msra.mxu0 %v4365
    %4520 = vmatprep.subr.mxu0 0.0
    %4521 = vmatpush2.msra.mxu0 %v4364
    %4522 = vmatprep.subr.mxu0 0.0
    %4523 = vmatpush2.msra.mxu0 %v4363
    %4524 = vmatprep.subr.mxu0 0.0
    %4525 = vmatpush2.msra.mxu0 %v4362
    %4526 = vmatprep.subr.mxu0 0.0
    %4527 = vmatpush2.msra.mxu0 %v4361
    %4528 = vmatprep.subr.mxu0 0.0
    %4529 = vmatpush2.msra.mxu0 %v4360
    %4530 = vmatprep.subr.mxu0 0.0
    %4531 = vmatpush2.msra.mxu0 %v4359
    %4532 = vmatprep.mubr.f32.mxu0 %v4297
    %4533 = vmatmul.mubr.f32.gmra.mxu0 %v4296
    %v4534 = vpop.f32.mrf.mxu0
    %v4535 = vadd.f32 %v4450, %v4534
    %v4536 = vpop.f32.mrf.mxu0
    %4537 = vmatprep.mubr.f32.mxu0 %v4301
    %4538 = vmatmul.mubr.f32.gmra.mxu0 %v4300
    %v4539 = vpop.f32.mrf.mxu0
    %v4540 = vadd.f32 %v4455, %v4539
    %v4541 = vpop.f32.mrf.mxu0
    %4542 = vmatprep.mubr.f32.mxu0 %v4305
    %4543 = vmatmul.mubr.f32.gmra.mxu0 %v4304
    %v4544 = vpop.f32.mrf.mxu0
    %v4545 = vadd.f32 %v4460, %v4544
    %v4546 = vpop.f32.mrf.mxu0
    %4547 = vmatprep.mubr.f32.mxu0 %v4309
    %4548 = vmatmul.mubr.f32.gmra.mxu0 %v4308
    %v4549 = vpop.f32.mrf.mxu0
    %v4550 = vadd.f32 %v4465, %v4549
    %v4551 = vpop.f32.mrf.mxu0
    %4552 = vdwg.mxu0
    %v4553 = vadd.f32 %v4062, %v4535
    %v4554 = vadd.f32 %v4063, %v4540
    %v4555 = vadd.f32 %v4064, %v4545
    %v4556 = vadd.f32 %v4065, %v4550
    %s4557 = scalar_lea.vmem %s15, 1
    %v4558 = vld [vmem:[%s4557] sm:$0x1]
    %s4559 = scalar_lea.vmem %s16, 1
    %v4560 = vld [vmem:[%s4559] sm:$0x1]
    %v4561 = vsel %vm129, %v4553, 0.0
    %4562 = vadd.xlane.f32.xlu0 %v4561
    %v4563 = vpop.xlane.xlu0 %4562
    %v4564 = vsel %vm129, %v4554, 0.0
    %4565 = vadd.xlane.f32.xlu0 %v4564
    %v4566 = vpop.xlane.xlu0 %4565
    %v4567 = vsel %vm129, %v4555, 0.0
    %4568 = vadd.xlane.f32.xlu0 %v4567
    %v4569 = vpop.xlane.xlu0 %4568
    %v4570 = vsel %vm129, %v4556, 0.0
    %4571 = vadd.xlane.f32.xlu0 %v4570
    %v4572 = vpop.xlane.xlu0 %4571
    %v4573 = vmul.f32 %v4563, %v1752
    %v4574 = vmul.f32 %v4566, %v1752
    %v4575 = vmul.f32 %v4569, %v1752
    %v4576 = vmul.f32 %v4572, %v1752
    %v4577 = vsub.f32 %v4553, %v4573
    %v4578 = vsub.f32 %v4554, %v4574
    %v4579 = vsub.f32 %v4555, %v4575
    %v4580 = vsub.f32 %v4556, %v4576
    %v4581 = vmul.f32 %v4577, %v4577
    %v4582 = vmul.f32 %v4578, %v4578
    %v4583 = vmul.f32 %v4579, %v4579
    %v4584 = vmul.f32 %v4580, %v4580
    %v4585 = vsel %vm129, %v4581, 0.0
    %4586 = vadd.xlane.f32.xlu0 %v4585
    %v4587 = vpop.xlane.xlu0 %4586
    %v4588 = vsel %vm129, %v4582, 0.0
    %4589 = vadd.xlane.f32.xlu0 %v4588
    %v4590 = vpop.xlane.xlu0 %4589
    %v4591 = vsel %vm129, %v4583, 0.0
    %4592 = vadd.xlane.f32.xlu0 %v4591
    %v4593 = vpop.xlane.xlu0 %4592
    %v4594 = vsel %vm129, %v4584, 0.0
    %4595 = vadd.xlane.f32.xlu0 %v4594
    %v4596 = vpop.xlane.xlu0 %4595
    %v4597 = vmul.f32 %v4587, %v1752
    %v4598 = vmul.f32 %v4590, %v1752
    %v4599 = vmul.f32 %v4593, %v1752
    %v4600 = vmul.f32 %v4596, %v1752
    %v4601 = vadd.f32 %v4597, 1e-05
    %v4602 = vadd.f32 %v4598, 1e-05
    %v4603 = vadd.f32 %v4599, 1e-05
    %v4604 = vadd.f32 %v4600, 1e-05
    %v4605 = vrsqrt.pop %v4601
    %v4606 = vrsqrt.pop %v4602
    %v4607 = vrsqrt.pop %v4603
    %v4608 = vrsqrt.pop %v4604
    %v4609 = vmul.f32 %v4577, %v4605
    %v4610 = vmul.f32 %v4578, %v4606
    %v4611 = vmul.f32 %v4579, %v4607
    %v4612 = vmul.f32 %v4580, %v4608
    %v4614 = vlaneseq
    %v4615 = vshrl.u32 %v4614, 7
    %v4616 = vsub.s32 0, %v4615
    %v4617 = vrot.slane %v4558, %v4616
    %v4619 = vmul.f32 %v4609, %v4617
    %v4620 = vmul.f32 %v4610, %v4617
    %v4621 = vmul.f32 %v4611, %v4617
    %v4622 = vmul.f32 %v4612, %v4617
    %v4624 = vlaneseq
    %v4625 = vshrl.u32 %v4624, 7
    %v4626 = vsub.s32 0, %v4625
    %v4627 = vrot.slane %v4560, %v4626
    %v4629 = vadd.f32 %v4619, %v4627
    %v4630 = vadd.f32 %v4620, %v4627
    %v4631 = vadd.f32 %v4621, %v4627
    %v4632 = vadd.f32 %v4622, %v4627
    %s4633 = scalar_lea.vmem %s5, 8
    %v4634 = vld [vmem:[%s4633] sm:$0xf]
    %s4635 = scalar_lea.vmem %s6, 2
    %v4636 = vld [vmem:[%s4635] sm:$0x1]
    %v4638 = vlaneseq
    %v4639 = vshrl.u32 %v4638, 7
    %v4640 = vsub.s32 0, %v4639
    %v4641 = vrot.slane %v4636, %v4640
    %v4644 = vsel %vm129, %v4629, 0
    %v4647 = vsel %vm129, %v4630, 0
    %v4650 = vsel %vm129, %v4631, 0
    %v4653 = vsel %vm129, %v4632, 0
    %v4656 = vsel %vm142, %v4634, 0
    %4658 = vmatprep.subr.mxu0 0.0
    %4659 = vmatpush1.msra.mxu0 0.0
    %4660 = vmatprep.subr.mxu0 0.0
    %4661 = vmatpush1.msra.mxu0 0.0
    %4662 = vmatprep.subr.mxu0 0.0
    %4663 = vmatpush1.msra.mxu0 0.0
    %4664 = vmatprep.subr.mxu0 0.0
    %4665 = vmatpush1.msra.mxu0 0.0
    %4666 = vmatprep.subr.mxu0 0.0
    %4667 = vmatpush1.msra.mxu0 0.0
    %4668 = vmatprep.subr.mxu0 0.0
    %4669 = vmatpush1.msra.mxu0 0.0
    %4670 = vmatprep.subr.mxu0 0.0
    %4671 = vmatpush1.msra.mxu0 0.0
    %4672 = vmatprep.subr.mxu0 0.0
    %4673 = vmatpush1.msra.mxu0 0.0
    %4674 = vmatprep.subr.mxu0 0.0
    %4675 = vmatpush1.msra.mxu0 0.0
    %4676 = vmatprep.subr.mxu0 0.0
    %4677 = vmatpush1.msra.mxu0 0.0
    %4678 = vmatprep.subr.mxu0 0.0
    %4679 = vmatpush1.msra.mxu0 0.0
    %4680 = vmatprep.subr.mxu0 0.0
    %4681 = vmatpush1.msra.mxu0 0.0
    %4682 = vmatprep.subr.mxu0 0.0
    %4683 = vmatpush1.msra.mxu0 0.0
    %4684 = vmatprep.subr.mxu0 0.0
    %4685 = vmatpush1.msra.mxu0 0.0
    %4686 = vmatprep.subr.mxu0 0.0
    %4687 = vmatpush1.msra.mxu0 0.0
    %4688 = vmatprep.subr.mxu0 0.0
    %4689 = vmatpush1.msra.mxu0 %v4656
    %4690 = vmatprep.subr.mxu0 0.0
    %4691 = vmatpush2.msra.mxu0 0.0
    %4692 = vmatprep.subr.mxu0 0.0
    %4693 = vmatpush2.msra.mxu0 0.0
    %4694 = vmatprep.subr.mxu0 0.0
    %4695 = vmatpush2.msra.mxu0 0.0
    %4696 = vmatprep.subr.mxu0 0.0
    %4697 = vmatpush2.msra.mxu0 0.0
    %4698 = vmatprep.subr.mxu0 0.0
    %4699 = vmatpush2.msra.mxu0 0.0
    %4700 = vmatprep.subr.mxu0 0.0
    %4701 = vmatpush2.msra.mxu0 0.0
    %4702 = vmatprep.subr.mxu0 0.0
    %4703 = vmatpush2.msra.mxu0 0.0
    %4704 = vmatprep.subr.mxu0 0.0
    %4705 = vmatpush2.msra.mxu0 0.0
    %4706 = vmatprep.subr.mxu0 0.0
    %4707 = vmatpush2.msra.mxu0 0.0
    %4708 = vmatprep.subr.mxu0 0.0
    %4709 = vmatpush2.msra.mxu0 0.0
    %4710 = vmatprep.subr.mxu0 0.0
    %4711 = vmatpush2.msra.mxu0 0.0
    %4712 = vmatprep.subr.mxu0 0.0
    %4713 = vmatpush2.msra.mxu0 0.0
    %4714 = vmatprep.subr.mxu0 0.0
    %4715 = vmatpush2.msra.mxu0 0.0
    %4716 = vmatprep.subr.mxu0 0.0
    %4717 = vmatpush2.msra.mxu0 0.0
    %4718 = vmatprep.subr.mxu0 0.0
    %4719 = vmatpush2.msra.mxu0 0.0
    %4720 = vmatprep.subr.mxu0 0.0
    %4721 = vmatpush2.msra.mxu0 0.0
    %4722 = vmatprep.mubr.f32.mxu0 0.0
    %4723 = vmatmul.mubr.f32.gmra.mxu0 %v4644
    %v4724 = vpop.f32.mrf.mxu0
    %v4725 = vadd.f32 %v4641, %v4724
    %v4726 = vpop.f32.mrf.mxu0
    %4727 = vmatprep.mubr.f32.mxu0 0.0
    %4728 = vmatmul.mubr.f32.gmra.mxu0 %v4647
    %v4729 = vpop.f32.mrf.mxu0
    %v4730 = vadd.f32 %v4641, %v4729
    %v4731 = vpop.f32.mrf.mxu0
    %4732 = vmatprep.mubr.f32.mxu0 0.0
    %4733 = vmatmul.mubr.f32.gmra.mxu0 %v4650
    %v4734 = vpop.f32.mrf.mxu0
    %v4735 = vadd.f32 %v4641, %v4734
    %v4736 = vpop.f32.mrf.mxu0
    %4737 = vmatprep.mubr.f32.mxu0 0.0
    %4738 = vmatmul.mubr.f32.gmra.mxu0 %v4653
    %v4739 = vpop.f32.mrf.mxu0
    %v4740 = vadd.f32 %v4641, %v4739
    %v4741 = vpop.f32.mrf.mxu0
    %4742 = vdwg.mxu0
    %s4743 = scalar_lea.vmem %s7, 8
    %v4744 = vld [vmem:[%s4743] sm:$0xf]
    %s4745 = scalar_lea.vmem %s8, 2
    %v4746 = vld [vmem:[%s4745] sm:$0x1]
    %4751 = vrot.lane.b32.xlu0 %v4725, 124
    %v4752 = vpop.permute.xlu0 %4751
    %4753 = vrot.lane.b32.xlu0 %v4730, 124
    %v4754 = vpop.permute.xlu0 %4753
    %4755 = vrot.lane.b32.xlu0 %v4735, 124
    %v4756 = vpop.permute.xlu0 %4755
    %4757 = vrot.lane.b32.xlu0 %v4740, 124
    %v4758 = vpop.permute.xlu0 %4757
    %v4759 = vsel %vm245, %v4725, 0
    %v4761 = vsel %vm245, %v4730, 0
    %v4763 = vsel %vm245, %v4735, 0
    %v4765 = vsel %vm245, %v4740, 0
    %v4767 = vsel %vm245, %v4752, 0
    %v4769 = vsel %vm245, %v4754, 0
    %v4771 = vsel %vm245, %v4756, 0
    %v4773 = vsel %vm245, %v4758, 0
    %4775 = vmatprep.subr.mxu0 0.0
    %4776 = vmatpush1.xpose.msra.mxu0 0.0
    %4777 = vmatprep.subr.mxu0 0.0
    %4778 = vmatpush1.xpose.msra.mxu0 0.0
    %4779 = vmatprep.subr.mxu0 0.0
    %4780 = vmatpush1.xpose.msra.mxu0 0.0
    %4781 = vmatprep.subr.mxu0 0.0
    %4782 = vmatpush1.xpose.msra.mxu0 0.0
    %4783 = vmatprep.subr.mxu0 0.0
    %4784 = vmatpush1.xpose.msra.mxu0 0.0
    %4785 = vmatprep.subr.mxu0 0.0
    %4786 = vmatpush1.xpose.msra.mxu0 0.0
    %4787 = vmatprep.subr.mxu0 0.0
    %4788 = vmatpush1.xpose.msra.mxu0 0.0
    %4789 = vmatprep.subr.mxu0 0.0
    %4790 = vmatpush1.xpose.msra.mxu0 0.0
    %4791 = vmatprep.subr.mxu0 0.0
    %4792 = vmatpush1.xpose.msra.mxu0 0.0
    %4793 = vmatprep.subr.mxu0 0.0
    %4794 = vmatpush1.xpose.msra.mxu0 0.0
    %4795 = vmatprep.subr.mxu0 0.0
    %4796 = vmatpush1.xpose.msra.mxu0 0.0
    %4797 = vmatprep.subr.mxu0 0.0
    %4798 = vmatpush1.xpose.msra.mxu0 0.0
    %4799 = vmatprep.subr.mxu0 0.0
    %4800 = vmatpush1.xpose.msra.mxu0 %v4773
    %4801 = vmatprep.subr.mxu0 0.0
    %4802 = vmatpush1.xpose.msra.mxu0 %v4771
    %4803 = vmatprep.subr.mxu0 0.0
    %4804 = vmatpush1.xpose.msra.mxu0 %v4769
    %4805 = vmatprep.subr.mxu0 0.0
    %4806 = vmatpush1.xpose.msra.mxu0 %v4767
    %4807 = vmatprep.subr.mxu0 0.0
    %4808 = vmatpush2.xpose.msra.mxu0 0.0
    %4809 = vmatprep.subr.mxu0 0.0
    %4810 = vmatpush2.xpose.msra.mxu0 0.0
    %4811 = vmatprep.subr.mxu0 0.0
    %4812 = vmatpush2.xpose.msra.mxu0 0.0
    %4813 = vmatprep.subr.mxu0 0.0
    %4814 = vmatpush2.xpose.msra.mxu0 0.0
    %4815 = vmatprep.subr.mxu0 0.0
    %4816 = vmatpush2.xpose.msra.mxu0 0.0
    %4817 = vmatprep.subr.mxu0 0.0
    %4818 = vmatpush2.xpose.msra.mxu0 0.0
    %4819 = vmatprep.subr.mxu0 0.0
    %4820 = vmatpush2.xpose.msra.mxu0 0.0
    %4821 = vmatprep.subr.mxu0 0.0
    %4822 = vmatpush2.xpose.msra.mxu0 0.0
    %4823 = vmatprep.subr.mxu0 0.0
    %4824 = vmatpush2.xpose.msra.mxu0 0.0
    %4825 = vmatprep.subr.mxu0 0.0
    %4826 = vmatpush2.xpose.msra.mxu0 0.0
    %4827 = vmatprep.subr.mxu0 0.0
    %4828 = vmatpush2.xpose.msra.mxu0 0.0
    %4829 = vmatprep.subr.mxu0 0.0
    %4830 = vmatpush2.xpose.msra.mxu0 0.0
    %4831 = vmatprep.subr.mxu0 0.0
    %4832 = vmatpush2.xpose.msra.mxu0 0.0
    %4833 = vmatprep.subr.mxu0 0.0
    %4834 = vmatpush2.xpose.msra.mxu0 0.0
    %4835 = vmatprep.subr.mxu0 0.0
    %4836 = vmatpush2.xpose.msra.mxu0 0.0
    %4837 = vmatprep.subr.mxu0 0.0
    %4838 = vmatpush2.xpose.msra.mxu0 0.0
    %4839 = vmatprep.mubr.f32.mxu0 0.0
    %4840 = vmatmul.mubr.f32.gmra.mxu0 %v4759
    %v4841 = vpop.f32.mrf.mxu0
    %v4842 = vadd.f32 %v117, %v4841
    %v4843 = vpop.f32.mrf.mxu0
    %4844 = vmatprep.mubr.f32.mxu0 0.0
    %4845 = vmatmul.mubr.f32.gmra.mxu0 %v4761
    %v4846 = vpop.f32.mrf.mxu0
    %v4847 = vadd.f32 %v118, %v4846
    %v4848 = vpop.f32.mrf.mxu0
    %4849 = vmatprep.mubr.f32.mxu0 0.0
    %4850 = vmatmul.mubr.f32.gmra.mxu0 %v4763
    %v4851 = vpop.f32.mrf.mxu0
    %v4852 = vadd.f32 %v119, %v4851
    %v4853 = vpop.f32.mrf.mxu0
    %4854 = vmatprep.mubr.f32.mxu0 0.0
    %4855 = vmatmul.mubr.f32.gmra.mxu0 %v4765
    %v4856 = vpop.f32.mrf.mxu0
    %v4857 = vadd.f32 %v120, %v4856
    %v4858 = vpop.f32.mrf.mxu0
    %4859 = vdwg.mxu0
    %v4860 = vsel %vm347, %v4842, -inf
    %4861 = vmax.xlane.f32.xlu0 %v4860
    %v4862 = vpop.xlane.xlu0 %4861
    %v4863 = vsel %vm347, %v4847, -inf
    %4864 = vmax.xlane.f32.xlu0 %v4863
    %v4865 = vpop.xlane.xlu0 %4864
    %v4866 = vsel %vm347, %v4852, -inf
    %4867 = vmax.xlane.f32.xlu0 %v4866
    %v4868 = vpop.xlane.xlu0 %4867
    %v4869 = vsel %vm347, %v4857, -inf
    %4870 = vmax.xlane.f32.xlu0 %v4869
    %v4871 = vpop.xlane.xlu0 %4870
    %v4872 = vsub.f32 %v4842, %v4862
    %v4873 = vsub.f32 %v4847, %v4865
    %v4874 = vsub.f32 %v4852, %v4868
    %v4875 = vsub.f32 %v4857, %v4871
    %v4876 = vmul.f32 %v4872, 1.442695
    %v4877 = vpow.pop %v4876
    %v4878 = vmul.f32 %v4873, 1.442695
    %v4879 = vpow.pop %v4878
    %v4880 = vmul.f32 %v4874, 1.442695
    %v4881 = vpow.pop %v4880
    %v4882 = vmul.f32 %v4875, 1.442695
    %v4883 = vpow.pop %v4882
    %v4884 = vsel %vm347, %v4877, 0.0
    %4885 = vadd.xlane.f32.xlu0 %v4884
    %v4886 = vpop.xlane.xlu0 %4885
    %v4887 = vsel %vm347, %v4879, 0.0
    %4888 = vadd.xlane.f32.xlu0 %v4887
    %v4889 = vpop.xlane.xlu0 %4888
    %v4890 = vsel %vm347, %v4881, 0.0
    %4891 = vadd.xlane.f32.xlu0 %v4890
    %v4892 = vpop.xlane.xlu0 %4891
    %v4893 = vsel %vm347, %v4883, 0.0
    %4894 = vadd.xlane.f32.xlu0 %v4893
    %v4895 = vpop.xlane.xlu0 %4894
    %v4896 = vrcp.pop %v4886
    %v4897 = vrcp.pop %v4889
    %v4898 = vrcp.pop %v4892
    %v4899 = vrcp.pop %v4895
    %v4900 = vmul.f32 %v4877, %v4896
    %v4901 = vmul.f32 %v4879, %v4897
    %v4902 = vmul.f32 %v4881, %v4898
    %v4903 = vmul.f32 %v4883, %v4899
    %4904 = vrot.lane.b32.xlu0 %v4725, 120
    %v4905 = vpop.permute.xlu0 %4904
    %4906 = vrot.lane.b32.xlu0 %v4730, 120
    %v4907 = vpop.permute.xlu0 %4906
    %4908 = vrot.lane.b32.xlu0 %v4735, 120
    %v4909 = vpop.permute.xlu0 %4908
    %4910 = vrot.lane.b32.xlu0 %v4740, 120
    %v4911 = vpop.permute.xlu0 %4910
    %v4917 = vsel %vm347, %v4900, 0
    %v4920 = vsel %vm347, %v4901, 0
    %v4923 = vsel %vm347, %v4902, 0
    %v4926 = vsel %vm347, %v4903, 0
    %4928 = vmatprep.subr.mxu0 0.0
    %4929 = vmatpush1.msra.mxu0 0.0
    %4930 = vmatprep.subr.mxu0 0.0
    %4931 = vmatpush1.msra.mxu0 0.0
    %4932 = vmatprep.subr.mxu0 0.0
    %4933 = vmatpush1.msra.mxu0 0.0
    %4934 = vmatprep.subr.mxu0 0.0
    %4935 = vmatpush1.msra.mxu0 0.0
    %4936 = vmatprep.subr.mxu0 0.0
    %4937 = vmatpush1.msra.mxu0 0.0
    %4938 = vmatprep.subr.mxu0 0.0
    %4939 = vmatpush1.msra.mxu0 0.0
    %4940 = vmatprep.subr.mxu0 0.0
    %4941 = vmatpush1.msra.mxu0 0.0
    %4942 = vmatprep.subr.mxu0 0.0
    %4943 = vmatpush1.msra.mxu0 0.0
    %4944 = vmatprep.subr.mxu0 0.0
    %4945 = vmatpush1.msra.mxu0 0.0
    %4946 = vmatprep.subr.mxu0 0.0
    %4947 = vmatpush1.msra.mxu0 0.0
    %4948 = vmatprep.subr.mxu0 0.0
    %4949 = vmatpush1.msra.mxu0 0.0
    %4950 = vmatprep.subr.mxu0 0.0
    %4951 = vmatpush1.msra.mxu0 0.0
    %4952 = vmatprep.subr.mxu0 0.0
    %4953 = vmatpush1.msra.mxu0 %v4911
    %4954 = vmatprep.subr.mxu0 0.0
    %4955 = vmatpush1.msra.mxu0 %v4909
    %4956 = vmatprep.subr.mxu0 0.0
    %4957 = vmatpush1.msra.mxu0 %v4907
    %4958 = vmatprep.subr.mxu0 0.0
    %4959 = vmatpush1.msra.mxu0 %v4905
    %4960 = vmatprep.subr.mxu0 0.0
    %4961 = vmatpush2.msra.mxu0 0.0
    %4962 = vmatprep.subr.mxu0 0.0
    %4963 = vmatpush2.msra.mxu0 0.0
    %4964 = vmatprep.subr.mxu0 0.0
    %4965 = vmatpush2.msra.mxu0 0.0
    %4966 = vmatprep.subr.mxu0 0.0
    %4967 = vmatpush2.msra.mxu0 0.0
    %4968 = vmatprep.subr.mxu0 0.0
    %4969 = vmatpush2.msra.mxu0 0.0
    %4970 = vmatprep.subr.mxu0 0.0
    %4971 = vmatpush2.msra.mxu0 0.0
    %4972 = vmatprep.subr.mxu0 0.0
    %4973 = vmatpush2.msra.mxu0 0.0
    %4974 = vmatprep.subr.mxu0 0.0
    %4975 = vmatpush2.msra.mxu0 0.0
    %4976 = vmatprep.subr.mxu0 0.0
    %4977 = vmatpush2.msra.mxu0 0.0
    %4978 = vmatprep.subr.mxu0 0.0
    %4979 = vmatpush2.msra.mxu0 0.0
    %4980 = vmatprep.subr.mxu0 0.0
    %4981 = vmatpush2.msra.mxu0 0.0
    %4982 = vmatprep.subr.mxu0 0.0
    %4983 = vmatpush2.msra.mxu0 0.0
    %4984 = vmatprep.subr.mxu0 0.0
    %4985 = vmatpush2.msra.mxu0 0.0
    %4986 = vmatprep.subr.mxu0 0.0
    %4987 = vmatpush2.msra.mxu0 0.0
    %4988 = vmatprep.subr.mxu0 0.0
    %4989 = vmatpush2.msra.mxu0 0.0
    %4990 = vmatprep.subr.mxu0 0.0
    %4991 = vmatpush2.msra.mxu0 0.0
    %4992 = vmatprep.mubr.f32.mxu0 0.0
    %4993 = vmatmul.mubr.f32.gmra.mxu0 %v4917
    %v4994 = vpop.f32.mrf.mxu0
    %v4995 = vadd.f32 0.0, %v4994
    %v4996 = vpop.f32.mrf.mxu0
    %4997 = vmatprep.mubr.f32.mxu0 0.0
    %4998 = vmatmul.mubr.f32.gmra.mxu0 %v4920
    %v4999 = vpop.f32.mrf.mxu0
    %v5000 = vadd.f32 0.0, %v4999
    %v5001 = vpop.f32.mrf.mxu0
    %5002 = vmatprep.mubr.f32.mxu0 0.0
    %5003 = vmatmul.mubr.f32.gmra.mxu0 %v4923
    %v5004 = vpop.f32.mrf.mxu0
    %v5005 = vadd.f32 0.0, %v5004
    %v5006 = vpop.f32.mrf.mxu0
    %5007 = vmatprep.mubr.f32.mxu0 0.0
    %5008 = vmatmul.mubr.f32.gmra.mxu0 %v4926
    %v5009 = vpop.f32.mrf.mxu0
    %v5010 = vadd.f32 0.0, %v5009
    %v5011 = vpop.f32.mrf.mxu0
    %5012 = vdwg.mxu0
    %v5014 = vsel %vm245, %v4995, 0
    %v5017 = vsel %vm245, %v5000, 0
    %v5020 = vsel %vm245, %v5005, 0
    %v5023 = vsel %vm245, %v5010, 0
    %v5026 = vsel %vm513, %v4744, 0
    %5028 = vmatprep.subr.mxu0 0.0
    %5029 = vmatpush1.msra.mxu0 0.0
    %5030 = vmatprep.subr.mxu0 0.0
    %5031 = vmatpush1.msra.mxu0 0.0
    %5032 = vmatprep.subr.mxu0 0.0
    %5033 = vmatpush1.msra.mxu0 0.0
    %5034 = vmatprep.subr.mxu0 0.0
    %5035 = vmatpush1.msra.mxu0 0.0
    %5036 = vmatprep.subr.mxu0 0.0
    %5037 = vmatpush1.msra.mxu0 0.0
    %5038 = vmatprep.subr.mxu0 0.0
    %5039 = vmatpush1.msra.mxu0 0.0
    %5040 = vmatprep.subr.mxu0 0.0
    %5041 = vmatpush1.msra.mxu0 0.0
    %5042 = vmatprep.subr.mxu0 0.0
    %5043 = vmatpush1.msra.mxu0 0.0
    %5044 = vmatprep.subr.mxu0 0.0
    %5045 = vmatpush1.msra.mxu0 0.0
    %5046 = vmatprep.subr.mxu0 0.0
    %5047 = vmatpush1.msra.mxu0 0.0
    %5048 = vmatprep.subr.mxu0 0.0
    %5049 = vmatpush1.msra.mxu0 0.0
    %5050 = vmatprep.subr.mxu0 0.0
    %5051 = vmatpush1.msra.mxu0 0.0
    %5052 = vmatprep.subr.mxu0 0.0
    %5053 = vmatpush1.msra.mxu0 0.0
    %5054 = vmatprep.subr.mxu0 0.0
    %5055 = vmatpush1.msra.mxu0 0.0
    %5056 = vmatprep.subr.mxu0 0.0
    %5057 = vmatpush1.msra.mxu0 0.0
    %5058 = vmatprep.subr.mxu0 0.0
    %5059 = vmatpush1.msra.mxu0 %v5026
    %5060 = vmatprep.subr.mxu0 0.0
    %5061 = vmatpush2.msra.mxu0 0.0
    %5062 = vmatprep.subr.mxu0 0.0
    %5063 = vmatpush2.msra.mxu0 0.0
    %5064 = vmatprep.subr.mxu0 0.0
    %5065 = vmatpush2.msra.mxu0 0.0
    %5066 = vmatprep.subr.mxu0 0.0
    %5067 = vmatpush2.msra.mxu0 0.0
    %5068 = vmatprep.subr.mxu0 0.0
    %5069 = vmatpush2.msra.mxu0 0.0
    %5070 = vmatprep.subr.mxu0 0.0
    %5071 = vmatpush2.msra.mxu0 0.0
    %5072 = vmatprep.subr.mxu0 0.0
    %5073 = vmatpush2.msra.mxu0 0.0
    %5074 = vmatprep.subr.mxu0 0.0
    %5075 = vmatpush2.msra.mxu0 0.0
    %5076 = vmatprep.subr.mxu0 0.0
    %5077 = vmatpush2.msra.mxu0 0.0
    %5078 = vmatprep.subr.mxu0 0.0
    %5079 = vmatpush2.msra.mxu0 0.0
    %5080 = vmatprep.subr.mxu0 0.0
    %5081 = vmatpush2.msra.mxu0 0.0
    %5082 = vmatprep.subr.mxu0 0.0
    %5083 = vmatpush2.msra.mxu0 0.0
    %5084 = vmatprep.subr.mxu0 0.0
    %5085 = vmatpush2.msra.mxu0 0.0
    %5086 = vmatprep.subr.mxu0 0.0
    %5087 = vmatpush2.msra.mxu0 0.0
    %5088 = vmatprep.subr.mxu0 0.0
    %5089 = vmatpush2.msra.mxu0 0.0
    %5090 = vmatprep.subr.mxu0 0.0
    %5091 = vmatpush2.msra.mxu0 0.0
    %5092 = vmatprep.mubr.f32.mxu0 0.0
    %5093 = vmatmul.mubr.f32.gmra.mxu0 %v5014
    %v5094 = vpop.f32.mrf.mxu0
    %v5095 = vadd.f32 0.0, %v5094
    %v5096 = vpop.f32.mrf.mxu0
    %5097 = vmatprep.mubr.f32.mxu0 0.0
    %5098 = vmatmul.mubr.f32.gmra.mxu0 %v5017
    %v5099 = vpop.f32.mrf.mxu0
    %v5100 = vadd.f32 0.0, %v5099
    %v5101 = vpop.f32.mrf.mxu0
    %5102 = vmatprep.mubr.f32.mxu0 0.0
    %5103 = vmatmul.mubr.f32.gmra.mxu0 %v5020
    %v5104 = vpop.f32.mrf.mxu0
    %v5105 = vadd.f32 0.0, %v5104
    %v5106 = vpop.f32.mrf.mxu0
    %5107 = vmatprep.mubr.f32.mxu0 0.0
    %5108 = vmatmul.mubr.f32.gmra.mxu0 %v5023
    %v5109 = vpop.f32.mrf.mxu0
    %v5110 = vadd.f32 0.0, %v5109
    %v5111 = vpop.f32.mrf.mxu0
    %5112 = vdwg.mxu0
    %v5114 = vlaneseq
    %v5115 = vshrl.u32 %v5114, 7
    %v5116 = vsub.s32 0, %v5115
    %v5117 = vrot.slane %v4746, %v5116
    %v5119 = vadd.f32 %v5117, %v5095
    %v5120 = vadd.f32 %v5117, %v5100
    %v5121 = vadd.f32 %v5117, %v5105
    %v5122 = vadd.f32 %v5117, %v5110
    %5123 = vrot.lane.b32.xlu0 %v4725, 127
    %v5124 = vpop.permute.xlu0 %5123
    %5125 = vrot.lane.b32.xlu0 %v4730, 127
    %v5126 = vpop.permute.xlu0 %5125
    %5127 = vrot.lane.b32.xlu0 %v4735, 127
    %v5128 = vpop.permute.xlu0 %5127
    %5129 = vrot.lane.b32.xlu0 %v4740, 127
    %v5130 = vpop.permute.xlu0 %5129
    %5131 = vrot.lane.b32.xlu0 %v4725, 123
    %v5132 = vpop.permute.xlu0 %5131
    %5133 = vrot.lane.b32.xlu0 %v4730, 123
    %v5134 = vpop.permute.xlu0 %5133
    %5135 = vrot.lane.b32.xlu0 %v4735, 123
    %v5136 = vpop.permute.xlu0 %5135
    %5137 = vrot.lane.b32.xlu0 %v4740, 123
    %v5138 = vpop.permute.xlu0 %5137
    %v5139 = vsel %vm245, %v5124, 0
    %v5141 = vsel %vm245, %v5126, 0
    %v5143 = vsel %vm245, %v5128, 0
    %v5145 = vsel %vm245, %v5130, 0
    %v5147 = vsel %vm245, %v5132, 0
    %v5149 = vsel %vm245, %v5134, 0
    %v5151 = vsel %vm245, %v5136, 0
    %v5153 = vsel %vm245, %v5138, 0
    %5155 = vmatprep.subr.mxu0 0.0
    %5156 = vmatpush1.xpose.msra.mxu0 0.0
    %5157 = vmatprep.subr.mxu0 0.0
    %5158 = vmatpush1.xpose.msra.mxu0 0.0
    %5159 = vmatprep.subr.mxu0 0.0
    %5160 = vmatpush1.xpose.msra.mxu0 0.0
    %5161 = vmatprep.subr.mxu0 0.0
    %5162 = vmatpush1.xpose.msra.mxu0 0.0
    %5163 = vmatprep.subr.mxu0 0.0
    %5164 = vmatpush1.xpose.msra.mxu0 0.0
    %5165 = vmatprep.subr.mxu0 0.0
    %5166 = vmatpush1.xpose.msra.mxu0 0.0
    %5167 = vmatprep.subr.mxu0 0.0
    %5168 = vmatpush1.xpose.msra.mxu0 0.0
    %5169 = vmatprep.subr.mxu0 0.0
    %5170 = vmatpush1.xpose.msra.mxu0 0.0
    %5171 = vmatprep.subr.mxu0 0.0
    %5172 = vmatpush1.xpose.msra.mxu0 0.0
    %5173 = vmatprep.subr.mxu0 0.0
    %5174 = vmatpush1.xpose.msra.mxu0 0.0
    %5175 = vmatprep.subr.mxu0 0.0
    %5176 = vmatpush1.xpose.msra.mxu0 0.0
    %5177 = vmatprep.subr.mxu0 0.0
    %5178 = vmatpush1.xpose.msra.mxu0 0.0
    %5179 = vmatprep.subr.mxu0 0.0
    %5180 = vmatpush1.xpose.msra.mxu0 %v5153
    %5181 = vmatprep.subr.mxu0 0.0
    %5182 = vmatpush1.xpose.msra.mxu0 %v5151
    %5183 = vmatprep.subr.mxu0 0.0
    %5184 = vmatpush1.xpose.msra.mxu0 %v5149
    %5185 = vmatprep.subr.mxu0 0.0
    %5186 = vmatpush1.xpose.msra.mxu0 %v5147
    %5187 = vmatprep.subr.mxu0 0.0
    %5188 = vmatpush2.xpose.msra.mxu0 0.0
    %5189 = vmatprep.subr.mxu0 0.0
    %5190 = vmatpush2.xpose.msra.mxu0 0.0
    %5191 = vmatprep.subr.mxu0 0.0
    %5192 = vmatpush2.xpose.msra.mxu0 0.0
    %5193 = vmatprep.subr.mxu0 0.0
    %5194 = vmatpush2.xpose.msra.mxu0 0.0
    %5195 = vmatprep.subr.mxu0 0.0
    %5196 = vmatpush2.xpose.msra.mxu0 0.0
    %5197 = vmatprep.subr.mxu0 0.0
    %5198 = vmatpush2.xpose.msra.mxu0 0.0
    %5199 = vmatprep.subr.mxu0 0.0
    %5200 = vmatpush2.xpose.msra.mxu0 0.0
    %5201 = vmatprep.subr.mxu0 0.0
    %5202 = vmatpush2.xpose.msra.mxu0 0.0
    %5203 = vmatprep.subr.mxu0 0.0
    %5204 = vmatpush2.xpose.msra.mxu0 0.0
    %5205 = vmatprep.subr.mxu0 0.0
    %5206 = vmatpush2.xpose.msra.mxu0 0.0
    %5207 = vmatprep.subr.mxu0 0.0
    %5208 = vmatpush2.xpose.msra.mxu0 0.0
    %5209 = vmatprep.subr.mxu0 0.0
    %5210 = vmatpush2.xpose.msra.mxu0 0.0
    %5211 = vmatprep.subr.mxu0 0.0
    %5212 = vmatpush2.xpose.msra.mxu0 0.0
    %5213 = vmatprep.subr.mxu0 0.0
    %5214 = vmatpush2.xpose.msra.mxu0 0.0
    %5215 = vmatprep.subr.mxu0 0.0
    %5216 = vmatpush2.xpose.msra.mxu0 0.0
    %5217 = vmatprep.subr.mxu0 0.0
    %5218 = vmatpush2.xpose.msra.mxu0 0.0
    %5219 = vmatprep.mubr.f32.mxu0 0.0
    %5220 = vmatmul.mubr.f32.gmra.mxu0 %v5139
    %v5221 = vpop.f32.mrf.mxu0
    %v5222 = vadd.f32 %v117, %v5221
    %v5223 = vpop.f32.mrf.mxu0
    %5224 = vmatprep.mubr.f32.mxu0 0.0
    %5225 = vmatmul.mubr.f32.gmra.mxu0 %v5141
    %v5226 = vpop.f32.mrf.mxu0
    %v5227 = vadd.f32 %v118, %v5226
    %v5228 = vpop.f32.mrf.mxu0
    %5229 = vmatprep.mubr.f32.mxu0 0.0
    %5230 = vmatmul.mubr.f32.gmra.mxu0 %v5143
    %v5231 = vpop.f32.mrf.mxu0
    %v5232 = vadd.f32 %v119, %v5231
    %v5233 = vpop.f32.mrf.mxu0
    %5234 = vmatprep.mubr.f32.mxu0 0.0
    %5235 = vmatmul.mubr.f32.gmra.mxu0 %v5145
    %v5236 = vpop.f32.mrf.mxu0
    %v5237 = vadd.f32 %v120, %v5236
    %v5238 = vpop.f32.mrf.mxu0
    %5239 = vdwg.mxu0
    %v5240 = vsel %vm347, %v5222, -inf
    %5241 = vmax.xlane.f32.xlu0 %v5240
    %v5242 = vpop.xlane.xlu0 %5241
    %v5243 = vsel %vm347, %v5227, -inf
    %5244 = vmax.xlane.f32.xlu0 %v5243
    %v5245 = vpop.xlane.xlu0 %5244
    %v5246 = vsel %vm347, %v5232, -inf
    %5247 = vmax.xlane.f32.xlu0 %v5246
    %v5248 = vpop.xlane.xlu0 %5247
    %v5249 = vsel %vm347, %v5237, -inf
    %5250 = vmax.xlane.f32.xlu0 %v5249
    %v5251 = vpop.xlane.xlu0 %5250
    %v5252 = vsub.f32 %v5222, %v5242
    %v5253 = vsub.f32 %v5227, %v5245
    %v5254 = vsub.f32 %v5232, %v5248
    %v5255 = vsub.f32 %v5237, %v5251
    %v5256 = vmul.f32 %v5252, 1.442695
    %v5257 = vpow.pop %v5256
    %v5258 = vmul.f32 %v5253, 1.442695
    %v5259 = vpow.pop %v5258
    %v5260 = vmul.f32 %v5254, 1.442695
    %v5261 = vpow.pop %v5260
    %v5262 = vmul.f32 %v5255, 1.442695
    %v5263 = vpow.pop %v5262
    %v5264 = vsel %vm347, %v5257, 0.0
    %5265 = vadd.xlane.f32.xlu0 %v5264
    %v5266 = vpop.xlane.xlu0 %5265
    %v5267 = vsel %vm347, %v5259, 0.0
    %5268 = vadd.xlane.f32.xlu0 %v5267
    %v5269 = vpop.xlane.xlu0 %5268
    %v5270 = vsel %vm347, %v5261, 0.0
    %5271 = vadd.xlane.f32.xlu0 %v5270
    %v5272 = vpop.xlane.xlu0 %5271
    %v5273 = vsel %vm347, %v5263, 0.0
    %5274 = vadd.xlane.f32.xlu0 %v5273
    %v5275 = vpop.xlane.xlu0 %5274
    %v5276 = vrcp.pop %v5266
    %v5277 = vrcp.pop %v5269
    %v5278 = vrcp.pop %v5272
    %v5279 = vrcp.pop %v5275
    %v5280 = vmul.f32 %v5257, %v5276
    %v5281 = vmul.f32 %v5259, %v5277
    %v5282 = vmul.f32 %v5261, %v5278
    %v5283 = vmul.f32 %v5263, %v5279
    %5284 = vrot.lane.b32.xlu0 %v4725, 119
    %v5285 = vpop.permute.xlu0 %5284
    %5286 = vrot.lane.b32.xlu0 %v4730, 119
    %v5287 = vpop.permute.xlu0 %5286
    %5288 = vrot.lane.b32.xlu0 %v4735, 119
    %v5289 = vpop.permute.xlu0 %5288
    %5290 = vrot.lane.b32.xlu0 %v4740, 119
    %v5291 = vpop.permute.xlu0 %5290
    %v5297 = vsel %vm347, %v5280, 0
    %v5300 = vsel %vm347, %v5281, 0
    %v5303 = vsel %vm347, %v5282, 0
    %v5306 = vsel %vm347, %v5283, 0
    %5308 = vmatprep.subr.mxu0 0.0
    %5309 = vmatpush1.msra.mxu0 0.0
    %5310 = vmatprep.subr.mxu0 0.0
    %5311 = vmatpush1.msra.mxu0 0.0
    %5312 = vmatprep.subr.mxu0 0.0
    %5313 = vmatpush1.msra.mxu0 0.0
    %5314 = vmatprep.subr.mxu0 0.0
    %5315 = vmatpush1.msra.mxu0 0.0
    %5316 = vmatprep.subr.mxu0 0.0
    %5317 = vmatpush1.msra.mxu0 0.0
    %5318 = vmatprep.subr.mxu0 0.0
    %5319 = vmatpush1.msra.mxu0 0.0
    %5320 = vmatprep.subr.mxu0 0.0
    %5321 = vmatpush1.msra.mxu0 0.0
    %5322 = vmatprep.subr.mxu0 0.0
    %5323 = vmatpush1.msra.mxu0 0.0
    %5324 = vmatprep.subr.mxu0 0.0
    %5325 = vmatpush1.msra.mxu0 0.0
    %5326 = vmatprep.subr.mxu0 0.0
    %5327 = vmatpush1.msra.mxu0 0.0
    %5328 = vmatprep.subr.mxu0 0.0
    %5329 = vmatpush1.msra.mxu0 0.0
    %5330 = vmatprep.subr.mxu0 0.0
    %5331 = vmatpush1.msra.mxu0 0.0
    %5332 = vmatprep.subr.mxu0 0.0
    %5333 = vmatpush1.msra.mxu0 %v5291
    %5334 = vmatprep.subr.mxu0 0.0
    %5335 = vmatpush1.msra.mxu0 %v5289
    %5336 = vmatprep.subr.mxu0 0.0
    %5337 = vmatpush1.msra.mxu0 %v5287
    %5338 = vmatprep.subr.mxu0 0.0
    %5339 = vmatpush1.msra.mxu0 %v5285
    %5340 = vmatprep.subr.mxu0 0.0
    %5341 = vmatpush2.msra.mxu0 0.0
    %5342 = vmatprep.subr.mxu0 0.0
    %5343 = vmatpush2.msra.mxu0 0.0
    %5344 = vmatprep.subr.mxu0 0.0
    %5345 = vmatpush2.msra.mxu0 0.0
    %5346 = vmatprep.subr.mxu0 0.0
    %5347 = vmatpush2.msra.mxu0 0.0
    %5348 = vmatprep.subr.mxu0 0.0
    %5349 = vmatpush2.msra.mxu0 0.0
    %5350 = vmatprep.subr.mxu0 0.0
    %5351 = vmatpush2.msra.mxu0 0.0
    %5352 = vmatprep.subr.mxu0 0.0
    %5353 = vmatpush2.msra.mxu0 0.0
    %5354 = vmatprep.subr.mxu0 0.0
    %5355 = vmatpush2.msra.mxu0 0.0
    %5356 = vmatprep.subr.mxu0 0.0
    %5357 = vmatpush2.msra.mxu0 0.0
    %5358 = vmatprep.subr.mxu0 0.0
    %5359 = vmatpush2.msra.mxu0 0.0
    %5360 = vmatprep.subr.mxu0 0.0
    %5361 = vmatpush2.msra.mxu0 0.0
    %5362 = vmatprep.subr.mxu0 0.0
    %5363 = vmatpush2.msra.mxu0 0.0
    %5364 = vmatprep.subr.mxu0 0.0
    %5365 = vmatpush2.msra.mxu0 0.0
    %5366 = vmatprep.subr.mxu0 0.0
    %5367 = vmatpush2.msra.mxu0 0.0
    %5368 = vmatprep.subr.mxu0 0.0
    %5369 = vmatpush2.msra.mxu0 0.0
    %5370 = vmatprep.subr.mxu0 0.0
    %5371 = vmatpush2.msra.mxu0 0.0
    %5372 = vmatprep.mubr.f32.mxu0 0.0
    %5373 = vmatmul.mubr.f32.gmra.mxu0 %v5297
    %v5374 = vpop.f32.mrf.mxu0
    %v5375 = vadd.f32 0.0, %v5374
    %v5376 = vpop.f32.mrf.mxu0
    %5377 = vmatprep.mubr.f32.mxu0 0.0
    %5378 = vmatmul.mubr.f32.gmra.mxu0 %v5300
    %v5379 = vpop.f32.mrf.mxu0
    %v5380 = vadd.f32 0.0, %v5379
    %v5381 = vpop.f32.mrf.mxu0
    %5382 = vmatprep.mubr.f32.mxu0 0.0
    %5383 = vmatmul.mubr.f32.gmra.mxu0 %v5303
    %v5384 = vpop.f32.mrf.mxu0
    %v5385 = vadd.f32 0.0, %v5384
    %v5386 = vpop.f32.mrf.mxu0
    %5387 = vmatprep.mubr.f32.mxu0 0.0
    %5388 = vmatmul.mubr.f32.gmra.mxu0 %v5306
    %v5389 = vpop.f32.mrf.mxu0
    %v5390 = vadd.f32 0.0, %v5389
    %v5391 = vpop.f32.mrf.mxu0
    %5392 = vdwg.mxu0
    %v5393 = vrot.slane %v4744, 1
    %v5395 = vsel %vm245, %v5375, 0
    %v5398 = vsel %vm245, %v5380, 0
    %v5401 = vsel %vm245, %v5385, 0
    %v5404 = vsel %vm245, %v5390, 0
    %v5406 = vsel %vm513, %v5393, 0
    %5408 = vmatprep.subr.mxu0 0.0
    %5409 = vmatpush1.msra.mxu0 0.0
    %5410 = vmatprep.subr.mxu0 0.0
    %5411 = vmatpush1.msra.mxu0 0.0
    %5412 = vmatprep.subr.mxu0 0.0
    %5413 = vmatpush1.msra.mxu0 0.0
    %5414 = vmatprep.subr.mxu0 0.0
    %5415 = vmatpush1.msra.mxu0 0.0
    %5416 = vmatprep.subr.mxu0 0.0
    %5417 = vmatpush1.msra.mxu0 0.0
    %5418 = vmatprep.subr.mxu0 0.0
    %5419 = vmatpush1.msra.mxu0 0.0
    %5420 = vmatprep.subr.mxu0 0.0
    %5421 = vmatpush1.msra.mxu0 0.0
    %5422 = vmatprep.subr.mxu0 0.0
    %5423 = vmatpush1.msra.mxu0 0.0
    %5424 = vmatprep.subr.mxu0 0.0
    %5425 = vmatpush1.msra.mxu0 0.0
    %5426 = vmatprep.subr.mxu0 0.0
    %5427 = vmatpush1.msra.mxu0 0.0
    %5428 = vmatprep.subr.mxu0 0.0
    %5429 = vmatpush1.msra.mxu0 0.0
    %5430 = vmatprep.subr.mxu0 0.0
    %5431 = vmatpush1.msra.mxu0 0.0
    %5432 = vmatprep.subr.mxu0 0.0
    %5433 = vmatpush1.msra.mxu0 0.0
    %5434 = vmatprep.subr.mxu0 0.0
    %5435 = vmatpush1.msra.mxu0 0.0
    %5436 = vmatprep.subr.mxu0 0.0
    %5437 = vmatpush1.msra.mxu0 0.0
    %5438 = vmatprep.subr.mxu0 0.0
    %5439 = vmatpush1.msra.mxu0 %v5406
    %5440 = vmatprep.subr.mxu0 0.0
    %5441 = vmatpush2.msra.mxu0 0.0
    %5442 = vmatprep.subr.mxu0 0.0
    %5443 = vmatpush2.msra.mxu0 0.0
    %5444 = vmatprep.subr.mxu0 0.0
    %5445 = vmatpush2.msra.mxu0 0.0
    %5446 = vmatprep.subr.mxu0 0.0
    %5447 = vmatpush2.msra.mxu0 0.0
    %5448 = vmatprep.subr.mxu0 0.0
    %5449 = vmatpush2.msra.mxu0 0.0
    %5450 = vmatprep.subr.mxu0 0.0
    %5451 = vmatpush2.msra.mxu0 0.0
    %5452 = vmatprep.subr.mxu0 0.0
    %5453 = vmatpush2.msra.mxu0 0.0
    %5454 = vmatprep.subr.mxu0 0.0
    %5455 = vmatpush2.msra.mxu0 0.0
    %5456 = vmatprep.subr.mxu0 0.0
    %5457 = vmatpush2.msra.mxu0 0.0
    %5458 = vmatprep.subr.mxu0 0.0
    %5459 = vmatpush2.msra.mxu0 0.0
    %5460 = vmatprep.subr.mxu0 0.0
    %5461 = vmatpush2.msra.mxu0 0.0
    %5462 = vmatprep.subr.mxu0 0.0
    %5463 = vmatpush2.msra.mxu0 0.0
    %5464 = vmatprep.subr.mxu0 0.0
    %5465 = vmatpush2.msra.mxu0 0.0
    %5466 = vmatprep.subr.mxu0 0.0
    %5467 = vmatpush2.msra.mxu0 0.0
    %5468 = vmatprep.subr.mxu0 0.0
    %5469 = vmatpush2.msra.mxu0 0.0
    %5470 = vmatprep.subr.mxu0 0.0
    %5471 = vmatpush2.msra.mxu0 0.0
    %5472 = vmatprep.mubr.f32.mxu0 0.0
    %5473 = vmatmul.mubr.f32.gmra.mxu0 %v5395
    %v5474 = vpop.f32.mrf.mxu0
    %v5475 = vadd.f32 0.0, %v5474
    %v5476 = vpop.f32.mrf.mxu0
    %5477 = vmatprep.mubr.f32.mxu0 0.0
    %5478 = vmatmul.mubr.f32.gmra.mxu0 %v5398
    %v5479 = vpop.f32.mrf.mxu0
    %v5480 = vadd.f32 0.0, %v5479
    %v5481 = vpop.f32.mrf.mxu0
    %5482 = vmatprep.mubr.f32.mxu0 0.0
    %5483 = vmatmul.mubr.f32.gmra.mxu0 %v5401
    %v5484 = vpop.f32.mrf.mxu0
    %v5485 = vadd.f32 0.0, %v5484
    %v5486 = vpop.f32.mrf.mxu0
    %5487 = vmatprep.mubr.f32.mxu0 0.0
    %5488 = vmatmul.mubr.f32.gmra.mxu0 %v5404
    %v5489 = vpop.f32.mrf.mxu0
    %v5490 = vadd.f32 0.0, %v5489
    %v5491 = vpop.f32.mrf.mxu0
    %5492 = vdwg.mxu0
    %v5493 = vadd.f32 %v5119, %v5475
    %v5494 = vadd.f32 %v5120, %v5480
    %v5495 = vadd.f32 %v5121, %v5485
    %v5496 = vadd.f32 %v5122, %v5490
    %5497 = vrot.lane.b32.xlu0 %v4725, 126
    %v5498 = vpop.permute.xlu0 %5497
    %5499 = vrot.lane.b32.xlu0 %v4730, 126
    %v5500 = vpop.permute.xlu0 %5499
    %5501 = vrot.lane.b32.xlu0 %v4735, 126
    %v5502 = vpop.permute.xlu0 %5501
    %5503 = vrot.lane.b32.xlu0 %v4740, 126
    %v5504 = vpop.permute.xlu0 %5503
    %5505 = vrot.lane.b32.xlu0 %v4725, 122
    %v5506 = vpop.permute.xlu0 %5505
    %5507 = vrot.lane.b32.xlu0 %v4730, 122
    %v5508 = vpop.permute.xlu0 %5507
    %5509 = vrot.lane.b32.xlu0 %v4735, 122
    %v5510 = vpop.permute.xlu0 %5509
    %5511 = vrot.lane.b32.xlu0 %v4740, 122
    %v5512 = vpop.permute.xlu0 %5511
    %v5513 = vsel %vm245, %v5498, 0
    %v5515 = vsel %vm245, %v5500, 0
    %v5517 = vsel %vm245, %v5502, 0
    %v5519 = vsel %vm245, %v5504, 0
    %v5521 = vsel %vm245, %v5506, 0
    %v5523 = vsel %vm245, %v5508, 0
    %v5525 = vsel %vm245, %v5510, 0
    %v5527 = vsel %vm245, %v5512, 0
    %5529 = vmatprep.subr.mxu0 0.0
    %5530 = vmatpush1.xpose.msra.mxu0 0.0
    %5531 = vmatprep.subr.mxu0 0.0
    %5532 = vmatpush1.xpose.msra.mxu0 0.0
    %5533 = vmatprep.subr.mxu0 0.0
    %5534 = vmatpush1.xpose.msra.mxu0 0.0
    %5535 = vmatprep.subr.mxu0 0.0
    %5536 = vmatpush1.xpose.msra.mxu0 0.0
    %5537 = vmatprep.subr.mxu0 0.0
    %5538 = vmatpush1.xpose.msra.mxu0 0.0
    %5539 = vmatprep.subr.mxu0 0.0
    %5540 = vmatpush1.xpose.msra.mxu0 0.0
    %5541 = vmatprep.subr.mxu0 0.0
    %5542 = vmatpush1.xpose.msra.mxu0 0.0
    %5543 = vmatprep.subr.mxu0 0.0
    %5544 = vmatpush1.xpose.msra.mxu0 0.0
    %5545 = vmatprep.subr.mxu0 0.0
    %5546 = vmatpush1.xpose.msra.mxu0 0.0
    %5547 = vmatprep.subr.mxu0 0.0
    %5548 = vmatpush1.xpose.msra.mxu0 0.0
    %5549 = vmatprep.subr.mxu0 0.0
    %5550 = vmatpush1.xpose.msra.mxu0 0.0
    %5551 = vmatprep.subr.mxu0 0.0
    %5552 = vmatpush1.xpose.msra.mxu0 0.0
    %5553 = vmatprep.subr.mxu0 0.0
    %5554 = vmatpush1.xpose.msra.mxu0 %v5527
    %5555 = vmatprep.subr.mxu0 0.0
    %5556 = vmatpush1.xpose.msra.mxu0 %v5525
    %5557 = vmatprep.subr.mxu0 0.0
    %5558 = vmatpush1.xpose.msra.mxu0 %v5523
    %5559 = vmatprep.subr.mxu0 0.0
    %5560 = vmatpush1.xpose.msra.mxu0 %v5521
    %5561 = vmatprep.subr.mxu0 0.0
    %5562 = vmatpush2.xpose.msra.mxu0 0.0
    %5563 = vmatprep.subr.mxu0 0.0
    %5564 = vmatpush2.xpose.msra.mxu0 0.0
    %5565 = vmatprep.subr.mxu0 0.0
    %5566 = vmatpush2.xpose.msra.mxu0 0.0
    %5567 = vmatprep.subr.mxu0 0.0
    %5568 = vmatpush2.xpose.msra.mxu0 0.0
    %5569 = vmatprep.subr.mxu0 0.0
    %5570 = vmatpush2.xpose.msra.mxu0 0.0
    %5571 = vmatprep.subr.mxu0 0.0
    %5572 = vmatpush2.xpose.msra.mxu0 0.0
    %5573 = vmatprep.subr.mxu0 0.0
    %5574 = vmatpush2.xpose.msra.mxu0 0.0
    %5575 = vmatprep.subr.mxu0 0.0
    %5576 = vmatpush2.xpose.msra.mxu0 0.0
    %5577 = vmatprep.subr.mxu0 0.0
    %5578 = vmatpush2.xpose.msra.mxu0 0.0
    %5579 = vmatprep.subr.mxu0 0.0
    %5580 = vmatpush2.xpose.msra.mxu0 0.0
    %5581 = vmatprep.subr.mxu0 0.0
    %5582 = vmatpush2.xpose.msra.mxu0 0.0
    %5583 = vmatprep.subr.mxu0 0.0
    %5584 = vmatpush2.xpose.msra.mxu0 0.0
    %5585 = vmatprep.subr.mxu0 0.0
    %5586 = vmatpush2.xpose.msra.mxu0 0.0
    %5587 = vmatprep.subr.mxu0 0.0
    %5588 = vmatpush2.xpose.msra.mxu0 0.0
    %5589 = vmatprep.subr.mxu0 0.0
    %5590 = vmatpush2.xpose.msra.mxu0 0.0
    %5591 = vmatprep.subr.mxu0 0.0
    %5592 = vmatpush2.xpose.msra.mxu0 0.0
    %5593 = vmatprep.mubr.f32.mxu0 0.0
    %5594 = vmatmul.mubr.f32.gmra.mxu0 %v5513
    %v5595 = vpop.f32.mrf.mxu0
    %v5596 = vadd.f32 %v117, %v5595
    %v5597 = vpop.f32.mrf.mxu0
    %5598 = vmatprep.mubr.f32.mxu0 0.0
    %5599 = vmatmul.mubr.f32.gmra.mxu0 %v5515
    %v5600 = vpop.f32.mrf.mxu0
    %v5601 = vadd.f32 %v118, %v5600
    %v5602 = vpop.f32.mrf.mxu0
    %5603 = vmatprep.mubr.f32.mxu0 0.0
    %5604 = vmatmul.mubr.f32.gmra.mxu0 %v5517
    %v5605 = vpop.f32.mrf.mxu0
    %v5606 = vadd.f32 %v119, %v5605
    %v5607 = vpop.f32.mrf.mxu0
    %5608 = vmatprep.mubr.f32.mxu0 0.0
    %5609 = vmatmul.mubr.f32.gmra.mxu0 %v5519
    %v5610 = vpop.f32.mrf.mxu0
    %v5611 = vadd.f32 %v120, %v5610
    %v5612 = vpop.f32.mrf.mxu0
    %5613 = vdwg.mxu0
    %v5614 = vsel %vm347, %v5596, -inf
    %5615 = vmax.xlane.f32.xlu0 %v5614
    %v5616 = vpop.xlane.xlu0 %5615
    %v5617 = vsel %vm347, %v5601, -inf
    %5618 = vmax.xlane.f32.xlu0 %v5617
    %v5619 = vpop.xlane.xlu0 %5618
    %v5620 = vsel %vm347, %v5606, -inf
    %5621 = vmax.xlane.f32.xlu0 %v5620
    %v5622 = vpop.xlane.xlu0 %5621
    %v5623 = vsel %vm347, %v5611, -inf
    %5624 = vmax.xlane.f32.xlu0 %v5623
    %v5625 = vpop.xlane.xlu0 %5624
    %v5626 = vsub.f32 %v5596, %v5616
    %v5627 = vsub.f32 %v5601, %v5619
    %v5628 = vsub.f32 %v5606, %v5622
    %v5629 = vsub.f32 %v5611, %v5625
    %v5630 = vmul.f32 %v5626, 1.442695
    %v5631 = vpow.pop %v5630
    %v5632 = vmul.f32 %v5627, 1.442695
    %v5633 = vpow.pop %v5632
    %v5634 = vmul.f32 %v5628, 1.442695
    %v5635 = vpow.pop %v5634
    %v5636 = vmul.f32 %v5629, 1.442695
    %v5637 = vpow.pop %v5636
    %v5638 = vsel %vm347, %v5631, 0.0
    %5639 = vadd.xlane.f32.xlu0 %v5638
    %v5640 = vpop.xlane.xlu0 %5639
    %v5641 = vsel %vm347, %v5633, 0.0
    %5642 = vadd.xlane.f32.xlu0 %v5641
    %v5643 = vpop.xlane.xlu0 %5642
    %v5644 = vsel %vm347, %v5635, 0.0
    %5645 = vadd.xlane.f32.xlu0 %v5644
    %v5646 = vpop.xlane.xlu0 %5645
    %v5647 = vsel %vm347, %v5637, 0.0
    %5648 = vadd.xlane.f32.xlu0 %v5647
    %v5649 = vpop.xlane.xlu0 %5648
    %v5650 = vrcp.pop %v5640
    %v5651 = vrcp.pop %v5643
    %v5652 = vrcp.pop %v5646
    %v5653 = vrcp.pop %v5649
    %v5654 = vmul.f32 %v5631, %v5650
    %v5655 = vmul.f32 %v5633, %v5651
    %v5656 = vmul.f32 %v5635, %v5652
    %v5657 = vmul.f32 %v5637, %v5653
    %5658 = vrot.lane.b32.xlu0 %v4725, 118
    %v5659 = vpop.permute.xlu0 %5658
    %5660 = vrot.lane.b32.xlu0 %v4730, 118
    %v5661 = vpop.permute.xlu0 %5660
    %5662 = vrot.lane.b32.xlu0 %v4735, 118
    %v5663 = vpop.permute.xlu0 %5662
    %5664 = vrot.lane.b32.xlu0 %v4740, 118
    %v5665 = vpop.permute.xlu0 %5664
    %v5671 = vsel %vm347, %v5654, 0
    %v5674 = vsel %vm347, %v5655, 0
    %v5677 = vsel %vm347, %v5656, 0
    %v5680 = vsel %vm347, %v5657, 0
    %5682 = vmatprep.subr.mxu0 0.0
    %5683 = vmatpush1.msra.mxu0 0.0
    %5684 = vmatprep.subr.mxu0 0.0
    %5685 = vmatpush1.msra.mxu0 0.0
    %5686 = vmatprep.subr.mxu0 0.0
    %5687 = vmatpush1.msra.mxu0 0.0
    %5688 = vmatprep.subr.mxu0 0.0
    %5689 = vmatpush1.msra.mxu0 0.0
    %5690 = vmatprep.subr.mxu0 0.0
    %5691 = vmatpush1.msra.mxu0 0.0
    %5692 = vmatprep.subr.mxu0 0.0
    %5693 = vmatpush1.msra.mxu0 0.0
    %5694 = vmatprep.subr.mxu0 0.0
    %5695 = vmatpush1.msra.mxu0 0.0
    %5696 = vmatprep.subr.mxu0 0.0
    %5697 = vmatpush1.msra.mxu0 0.0
    %5698 = vmatprep.subr.mxu0 0.0
    %5699 = vmatpush1.msra.mxu0 0.0
    %5700 = vmatprep.subr.mxu0 0.0
    %5701 = vmatpush1.msra.mxu0 0.0
    %5702 = vmatprep.subr.mxu0 0.0
    %5703 = vmatpush1.msra.mxu0 0.0
    %5704 = vmatprep.subr.mxu0 0.0
    %5705 = vmatpush1.msra.mxu0 0.0
    %5706 = vmatprep.subr.mxu0 0.0
    %5707 = vmatpush1.msra.mxu0 %v5665
    %5708 = vmatprep.subr.mxu0 0.0
    %5709 = vmatpush1.msra.mxu0 %v5663
    %5710 = vmatprep.subr.mxu0 0.0
    %5711 = vmatpush1.msra.mxu0 %v5661
    %5712 = vmatprep.subr.mxu0 0.0
    %5713 = vmatpush1.msra.mxu0 %v5659
    %5714 = vmatprep.subr.mxu0 0.0
    %5715 = vmatpush2.msra.mxu0 0.0
    %5716 = vmatprep.subr.mxu0 0.0
    %5717 = vmatpush2.msra.mxu0 0.0
    %5718 = vmatprep.subr.mxu0 0.0
    %5719 = vmatpush2.msra.mxu0 0.0
    %5720 = vmatprep.subr.mxu0 0.0
    %5721 = vmatpush2.msra.mxu0 0.0
    %5722 = vmatprep.subr.mxu0 0.0
    %5723 = vmatpush2.msra.mxu0 0.0
    %5724 = vmatprep.subr.mxu0 0.0
    %5725 = vmatpush2.msra.mxu0 0.0
    %5726 = vmatprep.subr.mxu0 0.0
    %5727 = vmatpush2.msra.mxu0 0.0
    %5728 = vmatprep.subr.mxu0 0.0
    %5729 = vmatpush2.msra.mxu0 0.0
    %5730 = vmatprep.subr.mxu0 0.0
    %5731 = vmatpush2.msra.mxu0 0.0
    %5732 = vmatprep.subr.mxu0 0.0
    %5733 = vmatpush2.msra.mxu0 0.0
    %5734 = vmatprep.subr.mxu0 0.0
    %5735 = vmatpush2.msra.mxu0 0.0
    %5736 = vmatprep.subr.mxu0 0.0
    %5737 = vmatpush2.msra.mxu0 0.0
    %5738 = vmatprep.subr.mxu0 0.0
    %5739 = vmatpush2.msra.mxu0 0.0
    %5740 = vmatprep.subr.mxu0 0.0
    %5741 = vmatpush2.msra.mxu0 0.0
    %5742 = vmatprep.subr.mxu0 0.0
    %5743 = vmatpush2.msra.mxu0 0.0
    %5744 = vmatprep.subr.mxu0 0.0
    %5745 = vmatpush2.msra.mxu0 0.0
    %5746 = vmatprep.mubr.f32.mxu0 0.0
    %5747 = vmatmul.mubr.f32.gmra.mxu0 %v5671
    %v5748 = vpop.f32.mrf.mxu0
    %v5749 = vadd.f32 0.0, %v5748
    %v5750 = vpop.f32.mrf.mxu0
    %5751 = vmatprep.mubr.f32.mxu0 0.0
    %5752 = vmatmul.mubr.f32.gmra.mxu0 %v5674
    %v5753 = vpop.f32.mrf.mxu0
    %v5754 = vadd.f32 0.0, %v5753
    %v5755 = vpop.f32.mrf.mxu0
    %5756 = vmatprep.mubr.f32.mxu0 0.0
    %5757 = vmatmul.mubr.f32.gmra.mxu0 %v5677
    %v5758 = vpop.f32.mrf.mxu0
    %v5759 = vadd.f32 0.0, %v5758
    %v5760 = vpop.f32.mrf.mxu0
    %5761 = vmatprep.mubr.f32.mxu0 0.0
    %5762 = vmatmul.mubr.f32.gmra.mxu0 %v5680
    %v5763 = vpop.f32.mrf.mxu0
    %v5764 = vadd.f32 0.0, %v5763
    %v5765 = vpop.f32.mrf.mxu0
    %5766 = vdwg.mxu0
    %v5767 = vrot.slane %v4744, 2
    %v5769 = vsel %vm245, %v5749, 0
    %v5772 = vsel %vm245, %v5754, 0
    %v5775 = vsel %vm245, %v5759, 0
    %v5778 = vsel %vm245, %v5764, 0
    %v5780 = vsel %vm513, %v5767, 0
    %5782 = vmatprep.subr.mxu0 0.0
    %5783 = vmatpush1.msra.mxu0 0.0
    %5784 = vmatprep.subr.mxu0 0.0
    %5785 = vmatpush1.msra.mxu0 0.0
    %5786 = vmatprep.subr.mxu0 0.0
    %5787 = vmatpush1.msra.mxu0 0.0
    %5788 = vmatprep.subr.mxu0 0.0
    %5789 = vmatpush1.msra.mxu0 0.0
    %5790 = vmatprep.subr.mxu0 0.0
    %5791 = vmatpush1.msra.mxu0 0.0
    %5792 = vmatprep.subr.mxu0 0.0
    %5793 = vmatpush1.msra.mxu0 0.0
    %5794 = vmatprep.subr.mxu0 0.0
    %5795 = vmatpush1.msra.mxu0 0.0
    %5796 = vmatprep.subr.mxu0 0.0
    %5797 = vmatpush1.msra.mxu0 0.0
    %5798 = vmatprep.subr.mxu0 0.0
    %5799 = vmatpush1.msra.mxu0 0.0
    %5800 = vmatprep.subr.mxu0 0.0
    %5801 = vmatpush1.msra.mxu0 0.0
    %5802 = vmatprep.subr.mxu0 0.0
    %5803 = vmatpush1.msra.mxu0 0.0
    %5804 = vmatprep.subr.mxu0 0.0
    %5805 = vmatpush1.msra.mxu0 0.0
    %5806 = vmatprep.subr.mxu0 0.0
    %5807 = vmatpush1.msra.mxu0 0.0
    %5808 = vmatprep.subr.mxu0 0.0
    %5809 = vmatpush1.msra.mxu0 0.0
    %5810 = vmatprep.subr.mxu0 0.0
    %5811 = vmatpush1.msra.mxu0 0.0
    %5812 = vmatprep.subr.mxu0 0.0
    %5813 = vmatpush1.msra.mxu0 %v5780
    %5814 = vmatprep.subr.mxu0 0.0
    %5815 = vmatpush2.msra.mxu0 0.0
    %5816 = vmatprep.subr.mxu0 0.0
    %5817 = vmatpush2.msra.mxu0 0.0
    %5818 = vmatprep.subr.mxu0 0.0
    %5819 = vmatpush2.msra.mxu0 0.0
    %5820 = vmatprep.subr.mxu0 0.0
    %5821 = vmatpush2.msra.mxu0 0.0
    %5822 = vmatprep.subr.mxu0 0.0
    %5823 = vmatpush2.msra.mxu0 0.0
    %5824 = vmatprep.subr.mxu0 0.0
    %5825 = vmatpush2.msra.mxu0 0.0
    %5826 = vmatprep.subr.mxu0 0.0
    %5827 = vmatpush2.msra.mxu0 0.0
    %5828 = vmatprep.subr.mxu0 0.0
    %5829 = vmatpush2.msra.mxu0 0.0
    %5830 = vmatprep.subr.mxu0 0.0
    %5831 = vmatpush2.msra.mxu0 0.0
    %5832 = vmatprep.subr.mxu0 0.0
    %5833 = vmatpush2.msra.mxu0 0.0
    %5834 = vmatprep.subr.mxu0 0.0
    %5835 = vmatpush2.msra.mxu0 0.0
    %5836 = vmatprep.subr.mxu0 0.0
    %5837 = vmatpush2.msra.mxu0 0.0
    %5838 = vmatprep.subr.mxu0 0.0
    %5839 = vmatpush2.msra.mxu0 0.0
    %5840 = vmatprep.subr.mxu0 0.0
    %5841 = vmatpush2.msra.mxu0 0.0
    %5842 = vmatprep.subr.mxu0 0.0
    %5843 = vmatpush2.msra.mxu0 0.0
    %5844 = vmatprep.subr.mxu0 0.0
    %5845 = vmatpush2.msra.mxu0 0.0
    %5846 = vmatprep.mubr.f32.mxu0 0.0
    %5847 = vmatmul.mubr.f32.gmra.mxu0 %v5769
    %v5848 = vpop.f32.mrf.mxu0
    %v5849 = vadd.f32 0.0, %v5848
    %v5850 = vpop.f32.mrf.mxu0
    %5851 = vmatprep.mubr.f32.mxu0 0.0
    %5852 = vmatmul.mubr.f32.gmra.mxu0 %v5772
    %v5853 = vpop.f32.mrf.mxu0
    %v5854 = vadd.f32 0.0, %v5853
    %v5855 = vpop.f32.mrf.mxu0
    %5856 = vmatprep.mubr.f32.mxu0 0.0
    %5857 = vmatmul.mubr.f32.gmra.mxu0 %v5775
    %v5858 = vpop.f32.mrf.mxu0
    %v5859 = vadd.f32 0.0, %v5858
    %v5860 = vpop.f32.mrf.mxu0
    %5861 = vmatprep.mubr.f32.mxu0 0.0
    %5862 = vmatmul.mubr.f32.gmra.mxu0 %v5778
    %v5863 = vpop.f32.mrf.mxu0
    %v5864 = vadd.f32 0.0, %v5863
    %v5865 = vpop.f32.mrf.mxu0
    %5866 = vdwg.mxu0
    %v5867 = vadd.f32 %v5493, %v5849
    %v5868 = vadd.f32 %v5494, %v5854
    %v5869 = vadd.f32 %v5495, %v5859
    %v5870 = vadd.f32 %v5496, %v5864
    %5871 = vrot.lane.b32.xlu0 %v4725, 125
    %v5872 = vpop.permute.xlu0 %5871
    %5873 = vrot.lane.b32.xlu0 %v4730, 125
    %v5874 = vpop.permute.xlu0 %5873
    %5875 = vrot.lane.b32.xlu0 %v4735, 125
    %v5876 = vpop.permute.xlu0 %5875
    %5877 = vrot.lane.b32.xlu0 %v4740, 125
    %v5878 = vpop.permute.xlu0 %5877
    %5879 = vrot.lane.b32.xlu0 %v4725, 121
    %v5880 = vpop.permute.xlu0 %5879
    %5881 = vrot.lane.b32.xlu0 %v4730, 121
    %v5882 = vpop.permute.xlu0 %5881
    %5883 = vrot.lane.b32.xlu0 %v4735, 121
    %v5884 = vpop.permute.xlu0 %5883
    %5885 = vrot.lane.b32.xlu0 %v4740, 121
    %v5886 = vpop.permute.xlu0 %5885
    %v5887 = vsel %vm245, %v5872, 0
    %v5889 = vsel %vm245, %v5874, 0
    %v5891 = vsel %vm245, %v5876, 0
    %v5893 = vsel %vm245, %v5878, 0
    %v5895 = vsel %vm245, %v5880, 0
    %v5897 = vsel %vm245, %v5882, 0
    %v5899 = vsel %vm245, %v5884, 0
    %v5901 = vsel %vm245, %v5886, 0
    %5903 = vmatprep.subr.mxu0 0.0
    %5904 = vmatpush1.xpose.msra.mxu0 0.0
    %5905 = vmatprep.subr.mxu0 0.0
    %5906 = vmatpush1.xpose.msra.mxu0 0.0
    %5907 = vmatprep.subr.mxu0 0.0
    %5908 = vmatpush1.xpose.msra.mxu0 0.0
    %5909 = vmatprep.subr.mxu0 0.0
    %5910 = vmatpush1.xpose.msra.mxu0 0.0
    %5911 = vmatprep.subr.mxu0 0.0
    %5912 = vmatpush1.xpose.msra.mxu0 0.0
    %5913 = vmatprep.subr.mxu0 0.0
    %5914 = vmatpush1.xpose.msra.mxu0 0.0
    %5915 = vmatprep.subr.mxu0 0.0
    %5916 = vmatpush1.xpose.msra.mxu0 0.0
    %5917 = vmatprep.subr.mxu0 0.0
    %5918 = vmatpush1.xpose.msra.mxu0 0.0
    %5919 = vmatprep.subr.mxu0 0.0
    %5920 = vmatpush1.xpose.msra.mxu0 0.0
    %5921 = vmatprep.subr.mxu0 0.0
    %5922 = vmatpush1.xpose.msra.mxu0 0.0
    %5923 = vmatprep.subr.mxu0 0.0
    %5924 = vmatpush1.xpose.msra.mxu0 0.0
    %5925 = vmatprep.subr.mxu0 0.0
    %5926 = vmatpush1.xpose.msra.mxu0 0.0
    %5927 = vmatprep.subr.mxu0 0.0
    %5928 = vmatpush1.xpose.msra.mxu0 %v5901
    %5929 = vmatprep.subr.mxu0 0.0
    %5930 = vmatpush1.xpose.msra.mxu0 %v5899
    %5931 = vmatprep.subr.mxu0 0.0
    %5932 = vmatpush1.xpose.msra.mxu0 %v5897
    %5933 = vmatprep.subr.mxu0 0.0
    %5934 = vmatpush1.xpose.msra.mxu0 %v5895
    %5935 = vmatprep.subr.mxu0 0.0
    %5936 = vmatpush2.xpose.msra.mxu0 0.0
    %5937 = vmatprep.subr.mxu0 0.0
    %5938 = vmatpush2.xpose.msra.mxu0 0.0
    %5939 = vmatprep.subr.mxu0 0.0
    %5940 = vmatpush2.xpose.msra.mxu0 0.0
    %5941 = vmatprep.subr.mxu0 0.0
    %5942 = vmatpush2.xpose.msra.mxu0 0.0
    %5943 = vmatprep.subr.mxu0 0.0
    %5944 = vmatpush2.xpose.msra.mxu0 0.0
    %5945 = vmatprep.subr.mxu0 0.0
    %5946 = vmatpush2.xpose.msra.mxu0 0.0
    %5947 = vmatprep.subr.mxu0 0.0
    %5948 = vmatpush2.xpose.msra.mxu0 0.0
    %5949 = vmatprep.subr.mxu0 0.0
    %5950 = vmatpush2.xpose.msra.mxu0 0.0
    %5951 = vmatprep.subr.mxu0 0.0
    %5952 = vmatpush2.xpose.msra.mxu0 0.0
    %5953 = vmatprep.subr.mxu0 0.0
    %5954 = vmatpush2.xpose.msra.mxu0 0.0
    %5955 = vmatprep.subr.mxu0 0.0
    %5956 = vmatpush2.xpose.msra.mxu0 0.0
    %5957 = vmatprep.subr.mxu0 0.0
    %5958 = vmatpush2.xpose.msra.mxu0 0.0
    %5959 = vmatprep.subr.mxu0 0.0
    %5960 = vmatpush2.xpose.msra.mxu0 0.0
    %5961 = vmatprep.subr.mxu0 0.0
    %5962 = vmatpush2.xpose.msra.mxu0 0.0
    %5963 = vmatprep.subr.mxu0 0.0
    %5964 = vmatpush2.xpose.msra.mxu0 0.0
    %5965 = vmatprep.subr.mxu0 0.0
    %5966 = vmatpush2.xpose.msra.mxu0 0.0
    %5967 = vmatprep.mubr.f32.mxu0 0.0
    %5968 = vmatmul.mubr.f32.gmra.mxu0 %v5887
    %v5969 = vpop.f32.mrf.mxu0
    %v5970 = vadd.f32 %v117, %v5969
    %v5971 = vpop.f32.mrf.mxu0
    %5972 = vmatprep.mubr.f32.mxu0 0.0
    %5973 = vmatmul.mubr.f32.gmra.mxu0 %v5889
    %v5974 = vpop.f32.mrf.mxu0
    %v5975 = vadd.f32 %v118, %v5974
    %v5976 = vpop.f32.mrf.mxu0
    %5977 = vmatprep.mubr.f32.mxu0 0.0
    %5978 = vmatmul.mubr.f32.gmra.mxu0 %v5891
    %v5979 = vpop.f32.mrf.mxu0
    %v5980 = vadd.f32 %v119, %v5979
    %v5981 = vpop.f32.mrf.mxu0
    %5982 = vmatprep.mubr.f32.mxu0 0.0
    %5983 = vmatmul.mubr.f32.gmra.mxu0 %v5893
    %v5984 = vpop.f32.mrf.mxu0
    %v5985 = vadd.f32 %v120, %v5984
    %v5986 = vpop.f32.mrf.mxu0
    %5987 = vdwg.mxu0
    %v5988 = vsel %vm347, %v5970, -inf
    %5989 = vmax.xlane.f32.xlu0 %v5988
    %v5990 = vpop.xlane.xlu0 %5989
    %v5991 = vsel %vm347, %v5975, -inf
    %5992 = vmax.xlane.f32.xlu0 %v5991
    %v5993 = vpop.xlane.xlu0 %5992
    %v5994 = vsel %vm347, %v5980, -inf
    %5995 = vmax.xlane.f32.xlu0 %v5994
    %v5996 = vpop.xlane.xlu0 %5995
    %v5997 = vsel %vm347, %v5985, -inf
    %5998 = vmax.xlane.f32.xlu0 %v5997
    %v5999 = vpop.xlane.xlu0 %5998
    %v6000 = vsub.f32 %v5970, %v5990
    %v6001 = vsub.f32 %v5975, %v5993
    %v6002 = vsub.f32 %v5980, %v5996
    %v6003 = vsub.f32 %v5985, %v5999
    %v6004 = vmul.f32 %v6000, 1.442695
    %v6005 = vpow.pop %v6004
    %v6006 = vmul.f32 %v6001, 1.442695
    %v6007 = vpow.pop %v6006
    %v6008 = vmul.f32 %v6002, 1.442695
    %v6009 = vpow.pop %v6008
    %v6010 = vmul.f32 %v6003, 1.442695
    %v6011 = vpow.pop %v6010
    %v6012 = vsel %vm347, %v6005, 0.0
    %6013 = vadd.xlane.f32.xlu0 %v6012
    %v6014 = vpop.xlane.xlu0 %6013
    %v6015 = vsel %vm347, %v6007, 0.0
    %6016 = vadd.xlane.f32.xlu0 %v6015
    %v6017 = vpop.xlane.xlu0 %6016
    %v6018 = vsel %vm347, %v6009, 0.0
    %6019 = vadd.xlane.f32.xlu0 %v6018
    %v6020 = vpop.xlane.xlu0 %6019
    %v6021 = vsel %vm347, %v6011, 0.0
    %6022 = vadd.xlane.f32.xlu0 %v6021
    %v6023 = vpop.xlane.xlu0 %6022
    %v6024 = vrcp.pop %v6014
    %v6025 = vrcp.pop %v6017
    %v6026 = vrcp.pop %v6020
    %v6027 = vrcp.pop %v6023
    %v6028 = vmul.f32 %v6005, %v6024
    %v6029 = vmul.f32 %v6007, %v6025
    %v6030 = vmul.f32 %v6009, %v6026
    %v6031 = vmul.f32 %v6011, %v6027
    %6032 = vrot.lane.b32.xlu0 %v4725, 117
    %v6033 = vpop.permute.xlu0 %6032
    %6034 = vrot.lane.b32.xlu0 %v4730, 117
    %v6035 = vpop.permute.xlu0 %6034
    %6036 = vrot.lane.b32.xlu0 %v4735, 117
    %v6037 = vpop.permute.xlu0 %6036
    %6038 = vrot.lane.b32.xlu0 %v4740, 117
    %v6039 = vpop.permute.xlu0 %6038
    %v6045 = vsel %vm347, %v6028, 0
    %v6048 = vsel %vm347, %v6029, 0
    %v6051 = vsel %vm347, %v6030, 0
    %v6054 = vsel %vm347, %v6031, 0
    %6056 = vmatprep.subr.mxu0 0.0
    %6057 = vmatpush1.msra.mxu0 0.0
    %6058 = vmatprep.subr.mxu0 0.0
    %6059 = vmatpush1.msra.mxu0 0.0
    %6060 = vmatprep.subr.mxu0 0.0
    %6061 = vmatpush1.msra.mxu0 0.0
    %6062 = vmatprep.subr.mxu0 0.0
    %6063 = vmatpush1.msra.mxu0 0.0
    %6064 = vmatprep.subr.mxu0 0.0
    %6065 = vmatpush1.msra.mxu0 0.0
    %6066 = vmatprep.subr.mxu0 0.0
    %6067 = vmatpush1.msra.mxu0 0.0
    %6068 = vmatprep.subr.mxu0 0.0
    %6069 = vmatpush1.msra.mxu0 0.0
    %6070 = vmatprep.subr.mxu0 0.0
    %6071 = vmatpush1.msra.mxu0 0.0
    %6072 = vmatprep.subr.mxu0 0.0
    %6073 = vmatpush1.msra.mxu0 0.0
    %6074 = vmatprep.subr.mxu0 0.0
    %6075 = vmatpush1.msra.mxu0 0.0
    %6076 = vmatprep.subr.mxu0 0.0
    %6077 = vmatpush1.msra.mxu0 0.0
    %6078 = vmatprep.subr.mxu0 0.0
    %6079 = vmatpush1.msra.mxu0 0.0
    %6080 = vmatprep.subr.mxu0 0.0
    %6081 = vmatpush1.msra.mxu0 %v6039
    %6082 = vmatprep.subr.mxu0 0.0
    %6083 = vmatpush1.msra.mxu0 %v6037
    %6084 = vmatprep.subr.mxu0 0.0
    %6085 = vmatpush1.msra.mxu0 %v6035
    %6086 = vmatprep.subr.mxu0 0.0
    %6087 = vmatpush1.msra.mxu0 %v6033
    %6088 = vmatprep.subr.mxu0 0.0
    %6089 = vmatpush2.msra.mxu0 0.0
    %6090 = vmatprep.subr.mxu0 0.0
    %6091 = vmatpush2.msra.mxu0 0.0
    %6092 = vmatprep.subr.mxu0 0.0
    %6093 = vmatpush2.msra.mxu0 0.0
    %6094 = vmatprep.subr.mxu0 0.0
    %6095 = vmatpush2.msra.mxu0 0.0
    %6096 = vmatprep.subr.mxu0 0.0
    %6097 = vmatpush2.msra.mxu0 0.0
    %6098 = vmatprep.subr.mxu0 0.0
    %6099 = vmatpush2.msra.mxu0 0.0
    %6100 = vmatprep.subr.mxu0 0.0
    %6101 = vmatpush2.msra.mxu0 0.0
    %6102 = vmatprep.subr.mxu0 0.0
    %6103 = vmatpush2.msra.mxu0 0.0
    %6104 = vmatprep.subr.mxu0 0.0
    %6105 = vmatpush2.msra.mxu0 0.0
    %6106 = vmatprep.subr.mxu0 0.0
    %6107 = vmatpush2.msra.mxu0 0.0
    %6108 = vmatprep.subr.mxu0 0.0
    %6109 = vmatpush2.msra.mxu0 0.0
    %6110 = vmatprep.subr.mxu0 0.0
    %6111 = vmatpush2.msra.mxu0 0.0
    %6112 = vmatprep.subr.mxu0 0.0
    %6113 = vmatpush2.msra.mxu0 0.0
    %6114 = vmatprep.subr.mxu0 0.0
    %6115 = vmatpush2.msra.mxu0 0.0
    %6116 = vmatprep.subr.mxu0 0.0
    %6117 = vmatpush2.msra.mxu0 0.0
    %6118 = vmatprep.subr.mxu0 0.0
    %6119 = vmatpush2.msra.mxu0 0.0
    %6120 = vmatprep.mubr.f32.mxu0 0.0
    %6121 = vmatmul.mubr.f32.gmra.mxu0 %v6045
    %v6122 = vpop.f32.mrf.mxu0
    %v6123 = vadd.f32 0.0, %v6122
    %v6124 = vpop.f32.mrf.mxu0
    %6125 = vmatprep.mubr.f32.mxu0 0.0
    %6126 = vmatmul.mubr.f32.gmra.mxu0 %v6048
    %v6127 = vpop.f32.mrf.mxu0
    %v6128 = vadd.f32 0.0, %v6127
    %v6129 = vpop.f32.mrf.mxu0
    %6130 = vmatprep.mubr.f32.mxu0 0.0
    %6131 = vmatmul.mubr.f32.gmra.mxu0 %v6051
    %v6132 = vpop.f32.mrf.mxu0
    %v6133 = vadd.f32 0.0, %v6132
    %v6134 = vpop.f32.mrf.mxu0
    %6135 = vmatprep.mubr.f32.mxu0 0.0
    %6136 = vmatmul.mubr.f32.gmra.mxu0 %v6054
    %v6137 = vpop.f32.mrf.mxu0
    %v6138 = vadd.f32 0.0, %v6137
    %v6139 = vpop.f32.mrf.mxu0
    %6140 = vdwg.mxu0
    %v6141 = vrot.slane %v4744, 3
    %v6143 = vsel %vm245, %v6123, 0
    %v6146 = vsel %vm245, %v6128, 0
    %v6149 = vsel %vm245, %v6133, 0
    %v6152 = vsel %vm245, %v6138, 0
    %v6154 = vsel %vm513, %v6141, 0
    %6156 = vmatprep.subr.mxu0 0.0
    %6157 = vmatpush1.msra.mxu0 0.0
    %6158 = vmatprep.subr.mxu0 0.0
    %6159 = vmatpush1.msra.mxu0 0.0
    %6160 = vmatprep.subr.mxu0 0.0
    %6161 = vmatpush1.msra.mxu0 0.0
    %6162 = vmatprep.subr.mxu0 0.0
    %6163 = vmatpush1.msra.mxu0 0.0
    %6164 = vmatprep.subr.mxu0 0.0
    %6165 = vmatpush1.msra.mxu0 0.0
    %6166 = vmatprep.subr.mxu0 0.0
    %6167 = vmatpush1.msra.mxu0 0.0
    %6168 = vmatprep.subr.mxu0 0.0
    %6169 = vmatpush1.msra.mxu0 0.0
    %6170 = vmatprep.subr.mxu0 0.0
    %6171 = vmatpush1.msra.mxu0 0.0
    %6172 = vmatprep.subr.mxu0 0.0
    %6173 = vmatpush1.msra.mxu0 0.0
    %6174 = vmatprep.subr.mxu0 0.0
    %6175 = vmatpush1.msra.mxu0 0.0
    %6176 = vmatprep.subr.mxu0 0.0
    %6177 = vmatpush1.msra.mxu0 0.0
    %6178 = vmatprep.subr.mxu0 0.0
    %6179 = vmatpush1.msra.mxu0 0.0
    %6180 = vmatprep.subr.mxu0 0.0
    %6181 = vmatpush1.msra.mxu0 0.0
    %6182 = vmatprep.subr.mxu0 0.0
    %6183 = vmatpush1.msra.mxu0 0.0
    %6184 = vmatprep.subr.mxu0 0.0
    %6185 = vmatpush1.msra.mxu0 0.0
    %6186 = vmatprep.subr.mxu0 0.0
    %6187 = vmatpush1.msra.mxu0 %v6154
    %6188 = vmatprep.subr.mxu0 0.0
    %6189 = vmatpush2.msra.mxu0 0.0
    %6190 = vmatprep.subr.mxu0 0.0
    %6191 = vmatpush2.msra.mxu0 0.0
    %6192 = vmatprep.subr.mxu0 0.0
    %6193 = vmatpush2.msra.mxu0 0.0
    %6194 = vmatprep.subr.mxu0 0.0
    %6195 = vmatpush2.msra.mxu0 0.0
    %6196 = vmatprep.subr.mxu0 0.0
    %6197 = vmatpush2.msra.mxu0 0.0
    %6198 = vmatprep.subr.mxu0 0.0
    %6199 = vmatpush2.msra.mxu0 0.0
    %6200 = vmatprep.subr.mxu0 0.0
    %6201 = vmatpush2.msra.mxu0 0.0
    %6202 = vmatprep.subr.mxu0 0.0
    %6203 = vmatpush2.msra.mxu0 0.0
    %6204 = vmatprep.subr.mxu0 0.0
    %6205 = vmatpush2.msra.mxu0 0.0
    %6206 = vmatprep.subr.mxu0 0.0
    %6207 = vmatpush2.msra.mxu0 0.0
    %6208 = vmatprep.subr.mxu0 0.0
    %6209 = vmatpush2.msra.mxu0 0.0
    %6210 = vmatprep.subr.mxu0 0.0
    %6211 = vmatpush2.msra.mxu0 0.0
    %6212 = vmatprep.subr.mxu0 0.0
    %6213 = vmatpush2.msra.mxu0 0.0
    %6214 = vmatprep.subr.mxu0 0.0
    %6215 = vmatpush2.msra.mxu0 0.0
    %6216 = vmatprep.subr.mxu0 0.0
    %6217 = vmatpush2.msra.mxu0 0.0
    %6218 = vmatprep.subr.mxu0 0.0
    %6219 = vmatpush2.msra.mxu0 0.0
    %6220 = vmatprep.mubr.f32.mxu0 0.0
    %6221 = vmatmul.mubr.f32.gmra.mxu0 %v6143
    %v6222 = vpop.f32.mrf.mxu0
    %v6223 = vadd.f32 0.0, %v6222
    %v6224 = vpop.f32.mrf.mxu0
    %6225 = vmatprep.mubr.f32.mxu0 0.0
    %6226 = vmatmul.mubr.f32.gmra.mxu0 %v6146
    %v6227 = vpop.f32.mrf.mxu0
    %v6228 = vadd.f32 0.0, %v6227
    %v6229 = vpop.f32.mrf.mxu0
    %6230 = vmatprep.mubr.f32.mxu0 0.0
    %6231 = vmatmul.mubr.f32.gmra.mxu0 %v6149
    %v6232 = vpop.f32.mrf.mxu0
    %v6233 = vadd.f32 0.0, %v6232
    %v6234 = vpop.f32.mrf.mxu0
    %6235 = vmatprep.mubr.f32.mxu0 0.0
    %6236 = vmatmul.mubr.f32.gmra.mxu0 %v6152
    %v6237 = vpop.f32.mrf.mxu0
    %v6238 = vadd.f32 0.0, %v6237
    %v6239 = vpop.f32.mrf.mxu0
    %6240 = vdwg.mxu0
    %v6241 = vadd.f32 %v5867, %v6223
    %v6242 = vadd.f32 %v5868, %v6228
    %v6243 = vadd.f32 %v5869, %v6233
    %v6244 = vadd.f32 %v5870, %v6238
    %v6245 = vadd.f32 %v4629, %v6241
    %v6246 = vadd.f32 %v4630, %v6242
    %v6247 = vadd.f32 %v4631, %v6243
    %v6248 = vadd.f32 %v4632, %v6244
    %s6249 = scalar_lea.vmem %s9, 2
    %v6250 = vld [vmem:[%s6249] sm:$0x1]
    %s6251 = scalar_lea.vmem %s10, 2
    %v6252 = vld [vmem:[%s6251] sm:$0x1]
    %v6253 = vsel %vm129, %v6245, 0.0
    %6254 = vadd.xlane.f32.xlu0 %v6253
    %v6255 = vpop.xlane.xlu0 %6254
    %v6256 = vsel %vm129, %v6246, 0.0
    %6257 = vadd.xlane.f32.xlu0 %v6256
    %v6258 = vpop.xlane.xlu0 %6257
    %v6259 = vsel %vm129, %v6247, 0.0
    %6260 = vadd.xlane.f32.xlu0 %v6259
    %v6261 = vpop.xlane.xlu0 %6260
    %v6262 = vsel %vm129, %v6248, 0.0
    %6263 = vadd.xlane.f32.xlu0 %v6262
    %v6264 = vpop.xlane.xlu0 %6263
    %v6265 = vmul.f32 %v6255, %v1752
    %v6266 = vmul.f32 %v6258, %v1752
    %v6267 = vmul.f32 %v6261, %v1752
    %v6268 = vmul.f32 %v6264, %v1752
    %v6269 = vsub.f32 %v6245, %v6265
    %v6270 = vsub.f32 %v6246, %v6266
    %v6271 = vsub.f32 %v6247, %v6267
    %v6272 = vsub.f32 %v6248, %v6268
    %v6273 = vmul.f32 %v6269, %v6269
    %v6274 = vmul.f32 %v6270, %v6270
    %v6275 = vmul.f32 %v6271, %v6271
    %v6276 = vmul.f32 %v6272, %v6272
    %v6277 = vsel %vm129, %v6273, 0.0
    %6278 = vadd.xlane.f32.xlu0 %v6277
    %v6279 = vpop.xlane.xlu0 %6278
    %v6280 = vsel %vm129, %v6274, 0.0
    %6281 = vadd.xlane.f32.xlu0 %v6280
    %v6282 = vpop.xlane.xlu0 %6281
    %v6283 = vsel %vm129, %v6275, 0.0
    %6284 = vadd.xlane.f32.xlu0 %v6283
    %v6285 = vpop.xlane.xlu0 %6284
    %v6286 = vsel %vm129, %v6276, 0.0
    %6287 = vadd.xlane.f32.xlu0 %v6286
    %v6288 = vpop.xlane.xlu0 %6287
    %v6289 = vmul.f32 %v6279, %v1752
    %v6290 = vmul.f32 %v6282, %v1752
    %v6291 = vmul.f32 %v6285, %v1752
    %v6292 = vmul.f32 %v6288, %v1752
    %v6293 = vadd.f32 %v6289, 1e-05
    %v6294 = vadd.f32 %v6290, 1e-05
    %v6295 = vadd.f32 %v6291, 1e-05
    %v6296 = vadd.f32 %v6292, 1e-05
    %v6297 = vrsqrt.pop %v6293
    %v6298 = vrsqrt.pop %v6294
    %v6299 = vrsqrt.pop %v6295
    %v6300 = vrsqrt.pop %v6296
    %v6301 = vmul.f32 %v6269, %v6297
    %v6302 = vmul.f32 %v6270, %v6298
    %v6303 = vmul.f32 %v6271, %v6299
    %v6304 = vmul.f32 %v6272, %v6300
    %v6306 = vlaneseq
    %v6307 = vshrl.u32 %v6306, 7
    %v6308 = vsub.s32 0, %v6307
    %v6309 = vrot.slane %v6250, %v6308
    %v6311 = vmul.f32 %v6301, %v6309
    %v6312 = vmul.f32 %v6302, %v6309
    %v6313 = vmul.f32 %v6303, %v6309
    %v6314 = vmul.f32 %v6304, %v6309
    %v6316 = vlaneseq
    %v6317 = vshrl.u32 %v6316, 7
    %v6318 = vsub.s32 0, %v6317
    %v6319 = vrot.slane %v6252, %v6318
    %v6321 = vadd.f32 %v6311, %v6319
    %v6322 = vadd.f32 %v6312, %v6319
    %v6323 = vadd.f32 %v6313, %v6319
    %v6324 = vadd.f32 %v6314, %v6319
    %s6325 = scalar_lea.vmem %s11, 32
    %v6326 = vld [vmem:[%s6325] sm:$0xff]
    %v6327 = vld [vmem:[%s6325 + $0x8] sm:$0xff]
    %s6328 = scalar_lea.vmem %s12, 8
    %v6329 = vld [vmem:[%s6328] sm:$0xf]
    %v6331 = vlaneseq
    %v6332 = vshrl.u32 %v6331, 7
    %v6333 = vsub.s32 0, %v6332
    %v6334 = vrot.slane %v6329, %v6333
    %v6335 = vlaneseq
    %v6336 = vshrl.u32 %v6335, 7
    %v6337 = vsub.s32 1, %v6336
    %v6338 = vrot.slane %v6329, %v6337
    %v6339 = vlaneseq
    %v6340 = vshrl.u32 %v6339, 7
    %v6341 = vsub.s32 2, %v6340
    %v6342 = vrot.slane %v6329, %v6341
    %v6343 = vlaneseq
    %v6344 = vshrl.u32 %v6343, 7
    %v6345 = vsub.s32 3, %v6344
    %v6346 = vrot.slane %v6329, %v6345
    %v6353 = vcombine.high %v6326, %v6326
    %v6354 = vcombine.high %v6327, %v6327
    %v6356 = vsel %vm129, %v6321, 0
    %v6359 = vsel %vm129, %v6322, 0
    %v6362 = vsel %vm129, %v6323, 0
    %v6365 = vsel %vm129, %v6324, 0
    %v6367 = vsel %vm142, %v6326, 0
    %v6369 = vsel %vm142, %v6353, 0
    %v6371 = vsel %vm142, %v6327, 0
    %v6373 = vsel %vm142, %v6354, 0
    %6375 = vmatprep.subr.mxu0 0.0
    %6376 = vmatpush1.msra.mxu0 0.0
    %6377 = vmatprep.subr.mxu0 0.0
    %6378 = vmatpush1.msra.mxu0 0.0
    %6379 = vmatprep.subr.mxu0 0.0
    %6380 = vmatpush1.msra.mxu0 0.0
    %6381 = vmatprep.subr.mxu0 0.0
    %6382 = vmatpush1.msra.mxu0 0.0
    %6383 = vmatprep.subr.mxu0 0.0
    %6384 = vmatpush1.msra.mxu0 0.0
    %6385 = vmatprep.subr.mxu0 0.0
    %6386 = vmatpush1.msra.mxu0 0.0
    %6387 = vmatprep.subr.mxu0 0.0
    %6388 = vmatpush1.msra.mxu0 0.0
    %6389 = vmatprep.subr.mxu0 0.0
    %6390 = vmatpush1.msra.mxu0 0.0
    %6391 = vmatprep.subr.mxu0 0.0
    %6392 = vmatpush1.msra.mxu0 0.0
    %6393 = vmatprep.subr.mxu0 0.0
    %6394 = vmatpush1.msra.mxu0 0.0
    %6395 = vmatprep.subr.mxu0 0.0
    %6396 = vmatpush1.msra.mxu0 0.0
    %6397 = vmatprep.subr.mxu0 0.0
    %6398 = vmatpush1.msra.mxu0 0.0
    %6399 = vmatprep.subr.mxu0 0.0
    %6400 = vmatpush1.msra.mxu0 0.0
    %6401 = vmatprep.subr.mxu0 0.0
    %6402 = vmatpush1.msra.mxu0 0.0
    %6403 = vmatprep.subr.mxu0 0.0
    %6404 = vmatpush1.msra.mxu0 0.0
    %6405 = vmatprep.subr.mxu0 %v6369
    %6406 = vmatpush1.msra.mxu0 %v6367
    %6407 = vmatprep.subr.mxu0 0.0
    %6408 = vmatpush2.msra.mxu0 0.0
    %6409 = vmatprep.subr.mxu0 0.0
    %6410 = vmatpush2.msra.mxu0 0.0
    %6411 = vmatprep.subr.mxu0 0.0
    %6412 = vmatpush2.msra.mxu0 0.0
    %6413 = vmatprep.subr.mxu0 0.0
    %6414 = vmatpush2.msra.mxu0 0.0
    %6415 = vmatprep.subr.mxu0 0.0
    %6416 = vmatpush2.msra.mxu0 0.0
    %6417 = vmatprep.subr.mxu0 0.0
    %6418 = vmatpush2.msra.mxu0 0.0
    %6419 = vmatprep.subr.mxu0 0.0
    %6420 = vmatpush2.msra.mxu0 0.0
    %6421 = vmatprep.subr.mxu0 0.0
    %6422 = vmatpush2.msra.mxu0 0.0
    %6423 = vmatprep.subr.mxu0 0.0
    %6424 = vmatpush2.msra.mxu0 0.0
    %6425 = vmatprep.subr.mxu0 0.0
    %6426 = vmatpush2.msra.mxu0 0.0
    %6427 = vmatprep.subr.mxu0 0.0
    %6428 = vmatpush2.msra.mxu0 0.0
    %6429 = vmatprep.subr.mxu0 0.0
    %6430 = vmatpush2.msra.mxu0 0.0
    %6431 = vmatprep.subr.mxu0 0.0
    %6432 = vmatpush2.msra.mxu0 0.0
    %6433 = vmatprep.subr.mxu0 0.0
    %6434 = vmatpush2.msra.mxu0 0.0
    %6435 = vmatprep.subr.mxu0 0.0
    %6436 = vmatpush2.msra.mxu0 0.0
    %6437 = vmatprep.subr.mxu0 0.0
    %6438 = vmatpush2.msra.mxu0 0.0
    %6439 = vmatprep.mubr.f32.mxu0 0.0
    %6440 = vmatmul.mubr.f32.gmra.mxu0 %v6356
    %v6441 = vpop.f32.mrf.mxu0
    %v6442 = vadd.f32 %v6334, %v6441
    %v6443 = vpop.f32.mrf.mxu0
    %v6444 = vadd.f32 %v6338, %v6443
    %6445 = vmatprep.mubr.f32.mxu0 0.0
    %6446 = vmatmul.mubr.f32.gmra.mxu0 %v6359
    %v6447 = vpop.f32.mrf.mxu0
    %v6448 = vadd.f32 %v6334, %v6447
    %v6449 = vpop.f32.mrf.mxu0
    %v6450 = vadd.f32 %v6338, %v6449
    %6451 = vmatprep.mubr.f32.mxu0 0.0
    %6452 = vmatmul.mubr.f32.gmra.mxu0 %v6362
    %v6453 = vpop.f32.mrf.mxu0
    %v6454 = vadd.f32 %v6334, %v6453
    %v6455 = vpop.f32.mrf.mxu0
    %v6456 = vadd.f32 %v6338, %v6455
    %6457 = vmatprep.mubr.f32.mxu0 0.0
    %6458 = vmatmul.mubr.f32.gmra.mxu0 %v6365
    %v6459 = vpop.f32.mrf.mxu0
    %v6460 = vadd.f32 %v6334, %v6459
    %v6461 = vpop.f32.mrf.mxu0
    %v6462 = vadd.f32 %v6338, %v6461
    %6463 = vdwg.mxu0
    %6464 = vmatprep.subr.mxu0 0.0
    %6465 = vmatpush1.msra.mxu0 0.0
    %6466 = vmatprep.subr.mxu0 0.0
    %6467 = vmatpush1.msra.mxu0 0.0
    %6468 = vmatprep.subr.mxu0 0.0
    %6469 = vmatpush1.msra.mxu0 0.0
    %6470 = vmatprep.subr.mxu0 0.0
    %6471 = vmatpush1.msra.mxu0 0.0
    %6472 = vmatprep.subr.mxu0 0.0
    %6473 = vmatpush1.msra.mxu0 0.0
    %6474 = vmatprep.subr.mxu0 0.0
    %6475 = vmatpush1.msra.mxu0 0.0
    %6476 = vmatprep.subr.mxu0 0.0
    %6477 = vmatpush1.msra.mxu0 0.0
    %6478 = vmatprep.subr.mxu0 0.0
    %6479 = vmatpush1.msra.mxu0 0.0
    %6480 = vmatprep.subr.mxu0 0.0
    %6481 = vmatpush1.msra.mxu0 0.0
    %6482 = vmatprep.subr.mxu0 0.0
    %6483 = vmatpush1.msra.mxu0 0.0
    %6484 = vmatprep.subr.mxu0 0.0
    %6485 = vmatpush1.msra.mxu0 0.0
    %6486 = vmatprep.subr.mxu0 0.0
    %6487 = vmatpush1.msra.mxu0 0.0
    %6488 = vmatprep.subr.mxu0 0.0
    %6489 = vmatpush1.msra.mxu0 0.0
    %6490 = vmatprep.subr.mxu0 0.0
    %6491 = vmatpush1.msra.mxu0 0.0
    %6492 = vmatprep.subr.mxu0 0.0
    %6493 = vmatpush1.msra.mxu0 0.0
    %6494 = vmatprep.subr.mxu0 %v6373
    %6495 = vmatpush1.msra.mxu0 %v6371
    %6496 = vmatprep.subr.mxu0 0.0
    %6497 = vmatpush2.msra.mxu0 0.0
    %6498 = vmatprep.subr.mxu0 0.0
    %6499 = vmatpush2.msra.mxu0 0.0
    %6500 = vmatprep.subr.mxu0 0.0
    %6501 = vmatpush2.msra.mxu0 0.0
    %6502 = vmatprep.subr.mxu0 0.0
    %6503 = vmatpush2.msra.mxu0 0.0
    %6504 = vmatprep.subr.mxu0 0.0
    %6505 = vmatpush2.msra.mxu0 0.0
    %6506 = vmatprep.subr.mxu0 0.0
    %6507 = vmatpush2.msra.mxu0 0.0
    %6508 = vmatprep.subr.mxu0 0.0
    %6509 = vmatpush2.msra.mxu0 0.0
    %6510 = vmatprep.subr.mxu0 0.0
    %6511 = vmatpush2.msra.mxu0 0.0
    %6512 = vmatprep.subr.mxu0 0.0
    %6513 = vmatpush2.msra.mxu0 0.0
    %6514 = vmatprep.subr.mxu0 0.0
    %6515 = vmatpush2.msra.mxu0 0.0
    %6516 = vmatprep.subr.mxu0 0.0
    %6517 = vmatpush2.msra.mxu0 0.0
    %6518 = vmatprep.subr.mxu0 0.0
    %6519 = vmatpush2.msra.mxu0 0.0
    %6520 = vmatprep.subr.mxu0 0.0
    %6521 = vmatpush2.msra.mxu0 0.0
    %6522 = vmatprep.subr.mxu0 0.0
    %6523 = vmatpush2.msra.mxu0 0.0
    %6524 = vmatprep.subr.mxu0 0.0
    %6525 = vmatpush2.msra.mxu0 0.0
    %6526 = vmatprep.subr.mxu0 0.0
    %6527 = vmatpush2.msra.mxu0 0.0
    %6528 = vmatprep.mubr.f32.mxu0 0.0
    %6529 = vmatmul.mubr.f32.gmra.mxu0 %v6356
    %v6530 = vpop.f32.mrf.mxu0
    %v6531 = vadd.f32 %v6342, %v6530
    %v6532 = vpop.f32.mrf.mxu0
    %v6533 = vadd.f32 %v6346, %v6532
    %6534 = vmatprep.mubr.f32.mxu0 0.0
    %6535 = vmatmul.mubr.f32.gmra.mxu0 %v6359
    %v6536 = vpop.f32.mrf.mxu0
    %v6537 = vadd.f32 %v6342, %v6536
    %v6538 = vpop.f32.mrf.mxu0
    %v6539 = vadd.f32 %v6346, %v6538
    %6540 = vmatprep.mubr.f32.mxu0 0.0
    %6541 = vmatmul.mubr.f32.gmra.mxu0 %v6362
    %v6542 = vpop.f32.mrf.mxu0
    %v6543 = vadd.f32 %v6342, %v6542
    %v6544 = vpop.f32.mrf.mxu0
    %v6545 = vadd.f32 %v6346, %v6544
    %6546 = vmatprep.mubr.f32.mxu0 0.0
    %6547 = vmatmul.mubr.f32.gmra.mxu0 %v6365
    %v6548 = vpop.f32.mrf.mxu0
    %v6549 = vadd.f32 %v6342, %v6548
    %v6550 = vpop.f32.mrf.mxu0
    %v6551 = vadd.f32 %v6346, %v6550
    %6552 = vdwg.mxu0
    %v6553 = vmax.f32 %v6442, 0.0
    %v6554 = vmax.f32 %v6444, 0.0
    %v6555 = vmax.f32 %v6531, 0.0
    %v6556 = vmax.f32 %v6533, 0.0
    %v6557 = vmax.f32 %v6448, 0.0
    %v6558 = vmax.f32 %v6450, 0.0
    %v6559 = vmax.f32 %v6537, 0.0
    %v6560 = vmax.f32 %v6539, 0.0
    %v6561 = vmax.f32 %v6454, 0.0
    %v6562 = vmax.f32 %v6456, 0.0
    %v6563 = vmax.f32 %v6543, 0.0
    %v6564 = vmax.f32 %v6545, 0.0
    %v6565 = vmax.f32 %v6460, 0.0
    %v6566 = vmax.f32 %v6462, 0.0
    %v6567 = vmax.f32 %v6549, 0.0
    %v6568 = vmax.f32 %v6551, 0.0
    %s6569 = scalar_lea.vmem %s13, 1024
    %v6570 = vld [vmem:[%s6569] sm:$0xff]
    %v6571 = vld [vmem:[%s6569 + $0x8] sm:$0xff]
    %v6572 = vld [vmem:[%s6569 + $0x10] sm:$0xff]
    %v6573 = vld [vmem:[%s6569 + $0x18] sm:$0xff]
    %v6574 = vld [vmem:[%s6569 + $0x20] sm:$0xff]
    %v6575 = vld [vmem:[%s6569 + $0x28] sm:$0xff]
    %v6576 = vld [vmem:[%s6569 + $0x30] sm:$0xff]
    %v6577 = vld [vmem:[%s6569 + $0x38] sm:$0xff]
    %v6578 = vld [vmem:[%s6569 + $0x40] sm:$0xff]
    %v6579 = vld [vmem:[%s6569 + $0x48] sm:$0xff]
    %v6580 = vld [vmem:[%s6569 + $0x50] sm:$0xff]
    %v6581 = vld [vmem:[%s6569 + $0x58] sm:$0xff]
    %v6582 = vld [vmem:[%s6569 + $0x60] sm:$0xff]
    %v6583 = vld [vmem:[%s6569 + $0x68] sm:$0xff]
    %v6584 = vld [vmem:[%s6569 + $0x70] sm:$0xff]
    %v6585 = vld [vmem:[%s6569 + $0x78] sm:$0xff]
    %v6586 = vld [vmem:[%s6569 + $0x80] sm:$0xff]
    %v6587 = vld [vmem:[%s6569 + $0x88] sm:$0xff]
    %v6588 = vld [vmem:[%s6569 + $0x90] sm:$0xff]
    %v6589 = vld [vmem:[%s6569 + $0x98] sm:$0xff]
    %v6590 = vld [vmem:[%s6569 + $0xa0] sm:$0xff]
    %v6591 = vld [vmem:[%s6569 + $0xa8] sm:$0xff]
    %v6592 = vld [vmem:[%s6569 + $0xb0] sm:$0xff]
    %v6593 = vld [vmem:[%s6569 + $0xb8] sm:$0xff]
    %v6594 = vld [vmem:[%s6569 + $0xc0] sm:$0xff]
    %v6595 = vld [vmem:[%s6569 + $0xc8] sm:$0xff]
    %v6596 = vld [vmem:[%s6569 + $0xd0] sm:$0xff]
    %v6597 = vld [vmem:[%s6569 + $0xd8] sm:$0xff]
    %v6598 = vld [vmem:[%s6569 + $0xe0] sm:$0xff]
    %v6599 = vld [vmem:[%s6569 + $0xe8] sm:$0xff]
    %v6600 = vld [vmem:[%s6569 + $0xf0] sm:$0xff]
    %v6601 = vld [vmem:[%s6569 + $0xf8] sm:$0xff]
    %v6602 = vld [vmem:[%s6569 + $0x100] sm:$0xff]
    %v6603 = vld [vmem:[%s6569 + $0x108] sm:$0xff]
    %v6604 = vld [vmem:[%s6569 + $0x110] sm:$0xff]
    %v6605 = vld [vmem:[%s6569 + $0x118] sm:$0xff]
    %v6606 = vld [vmem:[%s6569 + $0x120] sm:$0xff]
    %v6607 = vld [vmem:[%s6569 + $0x128] sm:$0xff]
    %v6608 = vld [vmem:[%s6569 + $0x130] sm:$0xff]
    %v6609 = vld [vmem:[%s6569 + $0x138] sm:$0xff]
    %v6610 = vld [vmem:[%s6569 + $0x140] sm:$0xff]
    %v6611 = vld [vmem:[%s6569 + $0x148] sm:$0xff]
    %v6612 = vld [vmem:[%s6569 + $0x150] sm:$0xff]
    %v6613 = vld [vmem:[%s6569 + $0x158] sm:$0xff]
    %v6614 = vld [vmem:[%s6569 + $0x160] sm:$0xff]
    %v6615 = vld [vmem:[%s6569 + $0x168] sm:$0xff]
    %v6616 = vld [vmem:[%s6569 + $0x170] sm:$0xff]
    %v6617 = vld [vmem:[%s6569 + $0x178] sm:$0xff]
    %v6618 = vld [vmem:[%s6569 + $0x180] sm:$0xff]
    %v6619 = vld [vmem:[%s6569 + $0x188] sm:$0xff]
    %v6620 = vld [vmem:[%s6569 + $0x190] sm:$0xff]
    %v6621 = vld [vmem:[%s6569 + $0x198] sm:$0xff]
    %v6622 = vld [vmem:[%s6569 + $0x1a0] sm:$0xff]
    %v6623 = vld [vmem:[%s6569 + $0x1a8] sm:$0xff]
    %v6624 = vld [vmem:[%s6569 + $0x1b0] sm:$0xff]
    %v6625 = vld [vmem:[%s6569 + $0x1b8] sm:$0xff]
    %v6626 = vld [vmem:[%s6569 + $0x1c0] sm:$0xff]
    %v6627 = vld [vmem:[%s6569 + $0x1c8] sm:$0xff]
    %v6628 = vld [vmem:[%s6569 + $0x1d0] sm:$0xff]
    %v6629 = vld [vmem:[%s6569 + $0x1d8] sm:$0xff]
    %v6630 = vld [vmem:[%s6569 + $0x1e0] sm:$0xff]
    %v6631 = vld [vmem:[%s6569 + $0x1e8] sm:$0xff]
    %v6632 = vld [vmem:[%s6569 + $0x1f0] sm:$0xff]
    %v6633 = vld [vmem:[%s6569 + $0x1f8] sm:$0xff]
    %s6634 = scalar_lea.vmem %s14, 2
    %v6635 = vld [vmem:[%s6634] sm:$0x1]
    %v6637 = vlaneseq
    %v6638 = vshrl.u32 %v6637, 7
    %v6639 = vsub.s32 0, %v6638
    %v6640 = vrot.slane %v6635, %v6639
    %6642 = vmatprep.subr.mxu0 0.0
    %6643 = vmatpush1.msra.mxu0 %v6585
    %6644 = vmatprep.subr.mxu0 0.0
    %6645 = vmatpush1.msra.mxu0 %v6584
    %6646 = vmatprep.subr.mxu0 0.0
    %6647 = vmatpush1.msra.mxu0 %v6583
    %6648 = vmatprep.subr.mxu0 0.0
    %6649 = vmatpush1.msra.mxu0 %v6582
    %6650 = vmatprep.subr.mxu0 0.0
    %6651 = vmatpush1.msra.mxu0 %v6581
    %6652 = vmatprep.subr.mxu0 0.0
    %6653 = vmatpush1.msra.mxu0 %v6580
    %6654 = vmatprep.subr.mxu0 0.0
    %6655 = vmatpush1.msra.mxu0 %v6579
    %6656 = vmatprep.subr.mxu0 0.0
    %6657 = vmatpush1.msra.mxu0 %v6578
    %6658 = vmatprep.subr.mxu0 0.0
    %6659 = vmatpush1.msra.mxu0 %v6577
    %6660 = vmatprep.subr.mxu0 0.0
    %6661 = vmatpush1.msra.mxu0 %v6576
    %6662 = vmatprep.subr.mxu0 0.0
    %6663 = vmatpush1.msra.mxu0 %v6575
    %6664 = vmatprep.subr.mxu0 0.0
    %6665 = vmatpush1.msra.mxu0 %v6574
    %6666 = vmatprep.subr.mxu0 0.0
    %6667 = vmatpush1.msra.mxu0 %v6573
    %6668 = vmatprep.subr.mxu0 0.0
    %6669 = vmatpush1.msra.mxu0 %v6572
    %6670 = vmatprep.subr.mxu0 0.0
    %6671 = vmatpush1.msra.mxu0 %v6571
    %6672 = vmatprep.subr.mxu0 0.0
    %6673 = vmatpush1.msra.mxu0 %v6570
    %6674 = vmatprep.subr.mxu0 0.0
    %6675 = vmatpush2.msra.mxu0 %v6601
    %6676 = vmatprep.subr.mxu0 0.0
    %6677 = vmatpush2.msra.mxu0 %v6600
    %6678 = vmatprep.subr.mxu0 0.0
    %6679 = vmatpush2.msra.mxu0 %v6599
    %6680 = vmatprep.subr.mxu0 0.0
    %6681 = vmatpush2.msra.mxu0 %v6598
    %6682 = vmatprep.subr.mxu0 0.0
    %6683 = vmatpush2.msra.mxu0 %v6597
    %6684 = vmatprep.subr.mxu0 0.0
    %6685 = vmatpush2.msra.mxu0 %v6596
    %6686 = vmatprep.subr.mxu0 0.0
    %6687 = vmatpush2.msra.mxu0 %v6595
    %6688 = vmatprep.subr.mxu0 0.0
    %6689 = vmatpush2.msra.mxu0 %v6594
    %6690 = vmatprep.subr.mxu0 0.0
    %6691 = vmatpush2.msra.mxu0 %v6593
    %6692 = vmatprep.subr.mxu0 0.0
    %6693 = vmatpush2.msra.mxu0 %v6592
    %6694 = vmatprep.subr.mxu0 0.0
    %6695 = vmatpush2.msra.mxu0 %v6591
    %6696 = vmatprep.subr.mxu0 0.0
    %6697 = vmatpush2.msra.mxu0 %v6590
    %6698 = vmatprep.subr.mxu0 0.0
    %6699 = vmatpush2.msra.mxu0 %v6589
    %6700 = vmatprep.subr.mxu0 0.0
    %6701 = vmatpush2.msra.mxu0 %v6588
    %6702 = vmatprep.subr.mxu0 0.0
    %6703 = vmatpush2.msra.mxu0 %v6587
    %6704 = vmatprep.subr.mxu0 0.0
    %6705 = vmatpush2.msra.mxu0 %v6586
    %6706 = vmatprep.mubr.f32.mxu0 %v6554
    %6707 = vmatmul.mubr.f32.gmra.mxu0 %v6553
    %v6708 = vpop.f32.mrf.mxu0
    %v6709 = vpop.f32.mrf.mxu0
    %6710 = vmatprep.mubr.f32.mxu0 %v6558
    %6711 = vmatmul.mubr.f32.gmra.mxu0 %v6557
    %v6712 = vpop.f32.mrf.mxu0
    %v6713 = vpop.f32.mrf.mxu0
    %6714 = vmatprep.mubr.f32.mxu0 %v6562
    %6715 = vmatmul.mubr.f32.gmra.mxu0 %v6561
    %v6716 = vpop.f32.mrf.mxu0
    %v6717 = vpop.f32.mrf.mxu0
    %6718 = vmatprep.mubr.f32.mxu0 %v6566
    %6719 = vmatmul.mubr.f32.gmra.mxu0 %v6565
    %v6720 = vpop.f32.mrf.mxu0
    %v6721 = vadd.f32 %v6640, %v6720
    %v6722 = vpop.f32.mrf.mxu0
    %6723 = vdwg.mxu0
    %6724 = vmatprep.subr.mxu0 0.0
    %6725 = vmatpush1.msra.mxu0 %v6617
    %6726 = vmatprep.subr.mxu0 0.0
    %6727 = vmatpush1.msra.mxu0 %v6616
    %6728 = vmatprep.subr.mxu0 0.0
    %6729 = vmatpush1.msra.mxu0 %v6615
    %6730 = vmatprep.subr.mxu0 0.0
    %6731 = vmatpush1.msra.mxu0 %v6614
    %6732 = vmatprep.subr.mxu0 0.0
    %6733 = vmatpush1.msra.mxu0 %v6613
    %6734 = vmatprep.subr.mxu0 0.0
    %6735 = vmatpush1.msra.mxu0 %v6612
    %6736 = vmatprep.subr.mxu0 0.0
    %6737 = vmatpush1.msra.mxu0 %v6611
    %6738 = vmatprep.subr.mxu0 0.0
    %6739 = vmatpush1.msra.mxu0 %v6610
    %6740 = vmatprep.subr.mxu0 0.0
    %6741 = vmatpush1.msra.mxu0 %v6609
    %6742 = vmatprep.subr.mxu0 0.0
    %6743 = vmatpush1.msra.mxu0 %v6608
    %6744 = vmatprep.subr.mxu0 0.0
    %6745 = vmatpush1.msra.mxu0 %v6607
    %6746 = vmatprep.subr.mxu0 0.0
    %6747 = vmatpush1.msra.mxu0 %v6606
    %6748 = vmatprep.subr.mxu0 0.0
    %6749 = vmatpush1.msra.mxu0 %v6605
    %6750 = vmatprep.subr.mxu0 0.0
    %6751 = vmatpush1.msra.mxu0 %v6604
    %6752 = vmatprep.subr.mxu0 0.0
    %6753 = vmatpush1.msra.mxu0 %v6603
    %6754 = vmatprep.subr.mxu0 0.0
    %6755 = vmatpush1.msra.mxu0 %v6602
    %6756 = vmatprep.subr.mxu0 0.0
    %6757 = vmatpush2.msra.mxu0 %v6633
    %6758 = vmatprep.subr.mxu0 0.0
    %6759 = vmatpush2.msra.mxu0 %v6632
    %6760 = vmatprep.subr.mxu0 0.0
    %6761 = vmatpush2.msra.mxu0 %v6631
    %6762 = vmatprep.subr.mxu0 0.0
    %6763 = vmatpush2.msra.mxu0 %v6630
    %6764 = vmatprep.subr.mxu0 0.0
    %6765 = vmatpush2.msra.mxu0 %v6629
    %6766 = vmatprep.subr.mxu0 0.0
    %6767 = vmatpush2.msra.mxu0 %v6628
    %6768 = vmatprep.subr.mxu0 0.0
    %6769 = vmatpush2.msra.mxu0 %v6627
    %6770 = vmatprep.subr.mxu0 0.0
    %6771 = vmatpush2.msra.mxu0 %v6626
    %6772 = vmatprep.subr.mxu0 0.0
    %6773 = vmatpush2.msra.mxu0 %v6625
    %6774 = vmatprep.subr.mxu0 0.0
    %6775 = vmatpush2.msra.mxu0 %v6624
    %6776 = vmatprep.subr.mxu0 0.0
    %6777 = vmatpush2.msra.mxu0 %v6623
    %6778 = vmatprep.subr.mxu0 0.0
    %6779 = vmatpush2.msra.mxu0 %v6622
    %6780 = vmatprep.subr.mxu0 0.0
    %6781 = vmatpush2.msra.mxu0 %v6621
    %6782 = vmatprep.subr.mxu0 0.0
    %6783 = vmatpush2.msra.mxu0 %v6620
    %6784 = vmatprep.subr.mxu0 0.0
    %6785 = vmatpush2.msra.mxu0 %v6619
    %6786 = vmatprep.subr.mxu0 0.0
    %6787 = vmatpush2.msra.mxu0 %v6618
    %6788 = vmatprep.mubr.f32.mxu0 %v6556
    %6789 = vmatmul.mubr.f32.gmra.mxu0 %v6555
    %v6790 = vpop.f32.mrf.mxu0
    %v6791 = vpop.f32.mrf.mxu0
    %6792 = vmatprep.mubr.f32.mxu0 %v6560
    %6793 = vmatmul.mubr.f32.gmra.mxu0 %v6559
    %v6794 = vpop.f32.mrf.mxu0
    %v6795 = vpop.f32.mrf.mxu0
    %6796 = vmatprep.mubr.f32.mxu0 %v6564
    %6797 = vmatmul.mubr.f32.gmra.mxu0 %v6563
    %v6798 = vpop.f32.mrf.mxu0
    %v6799 = vpop.f32.mrf.mxu0
    %6800 = vmatprep.mubr.f32.mxu0 %v6568
    %6801 = vmatmul.mubr.f32.gmra.mxu0 %v6567
    %v6802 = vpop.f32.mrf.mxu0
    %v6803 = vadd.f32 %v6721, %v6802
    %v6804 = vpop.f32.mrf.mxu0
    %6805 = vdwg.mxu0
    %v6806 = vadd.f32 %v6324, %v6803
    %s6807 = scalar_lea.vmem %s15, 2
    %v6808 = vld [vmem:[%s6807] sm:$0x1]
    %s6809 = scalar_lea.vmem %s16, 2
    %v6810 = vld [vmem:[%s6809] sm:$0x1]
    %v6811 = vsel %vm129, %v6806, 0.0
    %6812 = vadd.xlane.f32.xlu0 %v6811
    %v6813 = vpop.xlane.xlu0 %6812
    %v6814 = vmul.f32 %v6813, %v1752
    %v6815 = vsub.f32 %v6806, %v6814
    %v6816 = vmul.f32 %v6815, %v6815
    %v6817 = vsel %vm129, %v6816, 0.0
    %6818 = vadd.xlane.f32.xlu0 %v6817
    %v6819 = vpop.xlane.xlu0 %6818
    %v6820 = vmul.f32 %v6819, %v1752
    %v6821 = vadd.f32 %v6820, 1e-05
    %v6822 = vrsqrt.pop %v6821
    %v6823 = vmul.f32 %v6815, %v6822
    %v6825 = vlaneseq
    %v6826 = vshrl.u32 %v6825, 7
    %v6827 = vsub.s32 0, %v6826
    %v6828 = vrot.slane %v6808, %v6827
    %v6830 = vmul.f32 %v6823, %v6828
    %v6832 = vlaneseq
    %v6833 = vshrl.u32 %v6832, 7
    %v6834 = vsub.s32 0, %v6833
    %v6835 = vrot.slane %v6810, %v6834
    %v6837 = vadd.f32 %v6830, %v6835
    %v6838 = vld [vmem:[%s17] sm:$0xf]
    %v6839 = vld [vmem:[%s18] sm:$0x1]
    %v6841 = vlaneseq
    %v6842 = vshrl.u32 %v6841, 7
    %v6843 = vsub.s32 0, %v6842
    %v6844 = vrot.slane %v6839, %v6843
    %v6847 = vrot.slane %v6837, 6
    %v6848 = vsel %vm129, %v6847, 0
    %v6851 = vsel %vm142, %v6838, 0
    %6853 = vmatprep.subr.mxu0 0.0
    %6854 = vmatpush1.msra.mxu0 0.0
    %6855 = vmatprep.subr.mxu0 0.0
    %6856 = vmatpush1.msra.mxu0 0.0
    %6857 = vmatprep.subr.mxu0 0.0
    %6858 = vmatpush1.msra.mxu0 0.0
    %6859 = vmatprep.subr.mxu0 0.0
    %6860 = vmatpush1.msra.mxu0 0.0
    %6861 = vmatprep.subr.mxu0 0.0
    %6862 = vmatpush1.msra.mxu0 0.0
    %6863 = vmatprep.subr.mxu0 0.0
    %6864 = vmatpush1.msra.mxu0 0.0
    %6865 = vmatprep.subr.mxu0 0.0
    %6866 = vmatpush1.msra.mxu0 0.0
    %6867 = vmatprep.subr.mxu0 0.0
    %6868 = vmatpush1.msra.mxu0 0.0
    %6869 = vmatprep.subr.mxu0 0.0
    %6870 = vmatpush1.msra.mxu0 0.0
    %6871 = vmatprep.subr.mxu0 0.0
    %6872 = vmatpush1.msra.mxu0 0.0
    %6873 = vmatprep.subr.mxu0 0.0
    %6874 = vmatpush1.msra.mxu0 0.0
    %6875 = vmatprep.subr.mxu0 0.0
    %6876 = vmatpush1.msra.mxu0 0.0
    %6877 = vmatprep.subr.mxu0 0.0
    %6878 = vmatpush1.msra.mxu0 0.0
    %6879 = vmatprep.subr.mxu0 0.0
    %6880 = vmatpush1.msra.mxu0 0.0
    %6881 = vmatprep.subr.mxu0 0.0
    %6882 = vmatpush1.msra.mxu0 0.0
    %6883 = vmatprep.subr.mxu0 0.0
    %6884 = vmatpush1.msra.mxu0 %v6851
    %6885 = vmatprep.subr.mxu0 0.0
    %6886 = vmatpush2.msra.mxu0 0.0
    %6887 = vmatprep.subr.mxu0 0.0
    %6888 = vmatpush2.msra.mxu0 0.0
    %6889 = vmatprep.subr.mxu0 0.0
    %6890 = vmatpush2.msra.mxu0 0.0
    %6891 = vmatprep.subr.mxu0 0.0
    %6892 = vmatpush2.msra.mxu0 0.0
    %6893 = vmatprep.subr.mxu0 0.0
    %6894 = vmatpush2.msra.mxu0 0.0
    %6895 = vmatprep.subr.mxu0 0.0
    %6896 = vmatpush2.msra.mxu0 0.0
    %6897 = vmatprep.subr.mxu0 0.0
    %6898 = vmatpush2.msra.mxu0 0.0
    %6899 = vmatprep.subr.mxu0 0.0
    %6900 = vmatpush2.msra.mxu0 0.0
    %6901 = vmatprep.subr.mxu0 0.0
    %6902 = vmatpush2.msra.mxu0 0.0
    %6903 = vmatprep.subr.mxu0 0.0
    %6904 = vmatpush2.msra.mxu0 0.0
    %6905 = vmatprep.subr.mxu0 0.0
    %6906 = vmatpush2.msra.mxu0 0.0
    %6907 = vmatprep.subr.mxu0 0.0
    %6908 = vmatpush2.msra.mxu0 0.0
    %6909 = vmatprep.subr.mxu0 0.0
    %6910 = vmatpush2.msra.mxu0 0.0
    %6911 = vmatprep.subr.mxu0 0.0
    %6912 = vmatpush2.msra.mxu0 0.0
    %6913 = vmatprep.subr.mxu0 0.0
    %6914 = vmatpush2.msra.mxu0 0.0
    %6915 = vmatprep.subr.mxu0 0.0
    %6916 = vmatpush2.msra.mxu0 0.0
    %6917 = vmatprep.mubr.f32.mxu0 0.0
    %6918 = vmatmul.mubr.f32.gmra.mxu0 %v6848
    %v6919 = vpop.f32.mrf.mxu0
    %v6920 = vadd.f32 %v6844, %v6919
    %v6921 = vpop.f32.mrf.mxu0
    %6922 = vdwg.mxu0
    %vm6923 = vcmask 41984
    %6924 = vst.msk [vmem:[#allocation2] sm:$0x3] %vm6923, %v6920
    // Predicated region
    $region78: #{tpu_custom_call.1} parent=1 // pred_check
      _
    $region79: #{tpu_custom_call.1} parent=1 // pred_check_branch
      %6926 = sbr.rel (0) target = $region81
    $region80: #{tpu_custom_call.1} parent=1 // pred_region
      %s6928 = ssub.s32 32, 32
      %6929 = vsyncadd [#allocation3], %s6928
      %s6931 = sshll.u32 [#allocation2], 4
      %s6932 = int_to_ptr.vmem [resolvable:$true] %s6931
      %6934 = dma.vmem_to_hbm [thread:$0]  %s6932, 32, %s19, [#allocation3]
    $region81: #{tpu_custom_call.1} parent=1 // pred_fallthru
      _
    // Predicated region
    $region82: #{tpu_custom_call.1} parent=1 // pred_check
      _
    $region83: #{tpu_custom_call.1} parent=1 // pred_check_branch
      %6936 = sbr.rel (0) target = $region85
    $region84: #{tpu_custom_call.1} parent=1 // pred_region
      %6937 = dma.done [#allocation3], 32
    $region85: #{tpu_custom_call.1} parent=1 // pred_fallthru
      _
    %6938 = vsyncpa [#allocation3], 1

</llo_original>
